<compile_context>
chip_gen: v7x
topology: tpu7x:2x2x1
jax: 0.10.0
libtpu: 0.0.40
codegen_flags: <defaults>
</compile_context>

<pallas_src>
import numpy as np
import jax
import jax.numpy as jnp
from jax import lax
from jax.experimental import pallas as pl
from jax.experimental.pallas import tpu as pltpu


def _round_up(x, m):
    return (x + m - 1) // m * m


def _cin_padded(cin):
    # One extra constant-1 channel (for bias folding), rounded up so the
    # packed (W, CinP) lane axis stays 128-aligned for W = 16.
    return _round_up(cin + 1, 8)


# ---------------------------------------------------------------------------
# Kernel
# ---------------------------------------------------------------------------
def valuenet_kernel(x_ref, w1f_ref, w2f_ref, fw1_ref, fb1_ref, fw2_ref,
                    fb2_ref, fw3_ref, fb3_ref, out_ref):
    x = x_ref[...]                               # (TB, H, W*CinP) bf16
    TB, H, WC = x.shape
    H1, H2 = H - 1, H - 2
    P1 = w1f_ref.shape[1]                        # padded conv1 out lanes (128)
    P2 = w2f_ref.shape[1]                        # padded conv2 out lanes (256)

    # ---- conv1 (2x2, valid) : one fused banded bf16 MXU matmul -------------
    # Rows carry (w, cin) packed in lanes; concatenating the h and h+1 rows
    # gives a 256-lane input whose single matmul against the stacked banded
    # weight performs the whole conv.  Bias is folded via the constant-1
    # input lane; lane 120 of the output carries a propagated constant 1.0.
    cat1 = jnp.concatenate([x[:, 0:H1, :], x[:, 1:H, :]], axis=-1)
    cat1 = cat1.reshape(TB * H1, 2 * WC)
    y1 = jnp.dot(cat1, w1f_ref[...], preferred_element_type=jnp.float32)
    y1 = jnp.maximum(y1, 0.0).astype(jnp.bfloat16).reshape(TB, H1, P1)

    # ---- conv2 (2x2, valid) : one fused banded bf16 MXU matmul -------------
    # Bias folded via y1's constant-1 lane (survives ReLU since relu(1)=1).
    cat2 = jnp.concatenate([y1[:, 0:H2, :], y1[:, 1:H1, :]], axis=-1)
    cat2 = cat2.reshape(TB * H2, 2 * P1)
    y2 = jnp.dot(cat2, w2f_ref[...], preferred_element_type=jnp.float32)
    # torch order: conv2 (incl. bias) -> flatten -> relu -> fc1.  With P2=256
    # the flatten is a contiguous lane-aligned relayout; the 32 padded lanes
    # per h are zero and fc1 has matching zero rows.
    y2 = jnp.maximum(y2, 0.0).astype(jnp.bfloat16).reshape(TB, H2 * P2)

    # ---- MLP value head (bf16 weights/activations, f32 accumulation) -------
    h = jnp.dot(y2, fw1_ref[...], preferred_element_type=jnp.float32) + fb1_ref[...]
    h = jnp.maximum(h, 0.0).astype(jnp.bfloat16)
    h = jnp.dot(h, fw2_ref[...], preferred_element_type=jnp.float32) + fb2_ref[...]
    h = jnp.maximum(h, 0.0)

    # fc3 has N=1: VPU multiply + lane reduction, stored as a lane-dense row.
    v = jnp.sum(h * fw3_ref[...], axis=-1, keepdims=True) + fb3_ref[...]   # (TB, 1)
    out_ref[...] = v.reshape(1, 1, TB)


# ---------------------------------------------------------------------------
# One-time parameter preparation (hoisted out of the per-call path)
# ---------------------------------------------------------------------------
def prepare_params(params, obs_shape):
    """Convert PyTorch-layout params to kernel layout.  Call ONCE and reuse."""
    (w1, b1, w2, b2, fw1, fb1, fw2, fb2, fw3, fb3) = params
    Cin, H, W = obs_shape
    W1, W2, H2 = W - 1, W - 2, H - 2
    C1, C2 = int(w1.shape[0]), int(w2.shape[0])       # 8, 16
    N1, N2 = int(fw1.shape[0]), int(fw2.shape[0])     # 256, 256
    assert tuple(w1.shape[2:]) == (2, 2) and tuple(w2.shape[2:]) == (2, 2)

    CinP = _cin_padded(Cin)                           # 8  (channel Cin = const 1)
    K1 = W * CinP                                     # 128
    P1 = _round_up(W1 * C1, 128)                      # 120 -> 128
    P2 = _round_up(W2 * C2, 128)                      # 224 -> 256
    const_col = W1 * C1                               # y1 lane carrying constant 1.0
    assert const_col < P1

    w1_np = np.asarray(w1, np.float32)                # (C1, Cin, 2, 2) OIHW
    b1_np = np.asarray(b1, np.float32)
    w2_np = np.asarray(w2, np.float32)                # (C2, C1, 2, 2)
    b2_np = np.asarray(b2, np.float32)

    # Fused banded conv1 weight: rows = [kh=0 | kh=1] x (W*CinP), cols padded.
    w1f = np.zeros((2 * K1, P1), np.float32)
    for kh in range(2):
        for kw in range(2):
            for j in range(W1):
                for ci in range(Cin):
                    w1f[kh * K1 + (j + kw) * CinP + ci,
                        j * C1:(j + 1) * C1] = w1_np[:, ci, kh, kw]
    # Fold conv1 bias through the constant-1 input channel (row kh=0,w=0,ci=Cin);
    # also propagate the constant into output lane `const_col` for conv2's bias.
    const_in_row = Cin
    for j in range(W1):
        w1f[const_in_row, j * C1:(j + 1) * C1] = b1_np
    w1f[const_in_row, const_col] = 1.0

    # Fused banded conv2 weight: rows = [kh=0 | kh=1] x P1, cols padded to P2.
    w2f = np.zeros((2 * P1, P2), np.float32)
    for kh in range(2):
        for kw in range(2):
            for j in range(W2):
                for ci in range(C1):
                    w2f[kh * P1 + (j + kw) * C1 + ci,
                        j * C2:(j + 1) * C2] = w2_np[:, ci, kh, kw]
    # Fold conv2 bias via y1's constant-1 lane (top row section only: once).
    for j in range(W2):
        w2f[const_col, j * C2:(j + 1) * C2] = b2_np

    # fc1 expects torch flatten order (c, h, w); kernel flattens (h, padded (w, c)).
    fw1_np = np.asarray(fw1, np.float32).reshape(N1, C2, H2, W2)
    fw1_hwc = np.transpose(fw1_np, (0, 2, 3, 1)).reshape(N1, H2, W2 * C2)
    fw1_pad = np.zeros((N1, H2, P2), np.float32)
    fw1_pad[:, :, :W2 * C2] = fw1_hwc                 # zero rows for padded lanes
    fw1_mat = np.ascontiguousarray(fw1_pad.reshape(N1, H2 * P2).T)   # (3584, 256)

    fw2_mat = np.ascontiguousarray(np.asarray(fw2, np.float32).T)
    fw3_row = np.asarray(fw3, np.float32).reshape(1, N2)

    return (
        jnp.asarray(w1f, dtype=jnp.bfloat16),
        jnp.asarray(w2f, dtype=jnp.bfloat16),
        jnp.asarray(fw1_mat, dtype=jnp.bfloat16),
        jnp.asarray(np.asarray(fb1, np.float32).reshape(1, N1)),
        jnp.asarray(fw2_mat, dtype=jnp.bfloat16),
        jnp.asarray(np.asarray(fb2, np.float32).reshape(1, N2)),
        jnp.asarray(fw3_row),
        jnp.asarray(np.asarray(fb3, np.float32).reshape(1, 1)),
    )


# ---------------------------------------------------------------------------
# Per-call forward (activation glue + pallas_call only)
# ---------------------------------------------------------------------------
def value_net_forward(x_nchw, kparams, *, batch_tile=128):
    B, Cin, H, W = x_nchw.shape
    CinP = _cin_padded(Cin)

    # Glue: NCHW -> NHWC, append constant-1 channel + zero pad channels,
    # flatten (W, CinP) into the lane axis, cast to bf16 (halves activation DMA).
    x_nhwc = jnp.transpose(x_nchw, (0, 2, 3, 1))
    ones = jnp.ones((B, H, W, 1), x_nhwc.dtype)
    zeros = jnp.zeros((B, H, W, CinP - Cin - 1), x_nhwc.dtype)
    x_k = jnp.concatenate([x_nhwc, ones, zeros], axis=-1)
    x_k = x_k.reshape(B, H, W * CinP).astype(jnp.bfloat16)

    TB = batch_tile if B >= batch_tile else _round_up(B, 8)
    Bp = _round_up(B, TB)
    if Bp != B:
        x_k = jnp.pad(x_k, ((0, Bp - B), (0, 0), (0, 0)))
    nt = Bp // TB

    def full_spec(shape):
        nd = len(shape)
        return pl.BlockSpec(shape, lambda i, _n=nd: (0,) * _n)   # VMEM-resident

    in_specs = ([pl.BlockSpec((TB, H, W * CinP), lambda i: (i, 0, 0))] +
                [full_spec(p.shape) for p in kparams])
    out_spec = pl.BlockSpec((1, 1, TB), lambda i: (i, 0, 0))     # lane-dense row

    out = pl.pallas_call(
        valuenet_kernel,
        out_shape=jax.ShapeDtypeStruct((nt, 1, TB), jnp.float32),
        grid=(nt,),
        in_specs=in_specs,
        out_specs=out_spec,
        compiler_params=pltpu.CompilerParams(
            dimension_semantics=("parallel",),   # v7x: batch tiles split over TCs
            vmem_limit_bytes=32 << 20),
    )(x_k, *kparams)
    return out.reshape(Bp, 1)[:B]


# ---------------------------------------------------------------------------
# Pure-JAX reference mirroring the PyTorch forward exactly (NCHW, f32)
# ---------------------------------------------------------------------------
def value_net_reference(x_nchw, params):
    (w1, b1, w2, b2, fw1, fb1, fw2, fb2, fw3, fb3) = params
    dn = ('NCHW', 'OIHW', 'NCHW')
    y = lax.conv_general_dilated(x_nchw, w1, (1, 1), 'VALID',
                                 dimension_numbers=dn) + b1[None, :, None, None]
    y = jnp.maximum(y, 0.0)
    y = lax.conv_general_dilated(y, w2, (1, 1), 'VALID',
                                 dimension_numbers=dn) + b2[None, :, None, None]
    y = y.reshape(y.shape[0], -1)
    y = jnp.maximum(y, 0.0)
    y = jnp.maximum(y @ fw1.T + fb1, 0.0)
    y = jnp.maximum(y @ fw2.T + fb2, 0.0)
    return y @ fw3.T + fb3


def init_params(key, obs_shape):
    """Deterministic synthetic params in PyTorch layouts.
    # TODO(synk): orthogonal init (init_orthogonal) not reproduced; scaled
    # Gaussian init used instead — forward semantics are unaffected.
    """
    Cin, H, W = obs_shape
    H2, W2 = H - 2, W - 2
    flat = H2 * W2 * 16
    ks = jax.random.split(key, 10)

    def g(k, shape, fan_in):
        return jax.random.normal(k, shape, jnp.float32) / jnp.sqrt(float(fan_in))

    w1 = g(ks[0], (8, Cin, 2, 2), Cin * 4)
    b1 = 0.05 * jax.random.normal(ks[1], (8,), jnp.float32)
    w2 = g(ks[2], (16, 8, 2, 2), 8 * 4)
    b2 = 0.05 * jax.random.normal(ks[3], (16,), jnp.float32)
    fw1 = g(ks[4], (256, flat), flat)
    fb1 = 0.05 * jax.random.normal(ks[5], (256,), jnp.float32)
    fw2 = g(ks[6], (256, 256), 256)
    fb2 = 0.05 * jax.random.normal(ks[7], (256,), jnp.float32)
    fw3 = g(ks[8], (1, 256), 256)
    fb3 = 0.05 * jax.random.normal(ks[9], (1,), jnp.float32)
    return (w1, b1, w2, b2, fw1, fb1, fw2, fb2, fw3, fb3)


if __name__ == "__main__":
    key = jax.random.PRNGKey(0)
    k_x, k_p, k_x2 = jax.random.split(key, 3)

    obs_shape = (4, 16, 16)                      # (C, H, W) -> flat_dim = 14*14*16
    params = init_params(k_p, obs_shape)
    kparams = prepare_params(params, obs_shape)  # hoisted: weight layout done ONCE

    fwd = jax.jit(value_net_forward)

    # Small batch (matches the example shape [2,4,16,16]); exercises padding.
    x_small = jax.random.normal(k_x, (2,) + obs_shape, jnp.float32)
    out_small = jax.block_until_ready(fwd(x_small, kparams))
    ref_small = jax.block_until_ready(value_net_reference(x_small, params))
    assert out_small.shape == (2, 1)
    assert jnp.all(jnp.isfinite(out_small))
    assert jnp.allclose(out_small, ref_small, rtol=2.5e-2, atol=2.5e-2), (
        out_small, ref_small)

    # PPO-sized batch (num_envs = 256); exercises the parallel batch grid.
    x_big = jax.random.normal(k_x2, (256,) + obs_shape, jnp.float32)
    out_big = jax.block_until_ready(fwd(x_big, kparams))
    ref_big = jax.block_until_ready(value_net_reference(x_big, params))
    assert out_big.shape == (256, 1)
    assert jnp.all(jnp.isfinite(out_big))
    assert jnp.allclose(out_big, ref_big, rtol=2.5e-2, atol=2.5e-2), (
        float(jnp.max(jnp.abs(out_big - ref_big))))

    print("KERNEL_OK")
</pallas_src>

<mosaic_0001>
module attributes {stable_mosaic.version = 11 : i64} {
  func.func @valuenet_kernel(%arg0: i32, %arg1: memref<8x16x128xbf16, #tpu.memory_space<vmem>>, %arg2: memref<256x128xbf16, #tpu.memory_space<vmem>>, %arg3: memref<256x256xbf16, #tpu.memory_space<vmem>>, %arg4: memref<3584x256xbf16, #tpu.memory_space<vmem>>, %arg5: memref<1x256xf32, #tpu.memory_space<vmem>>, %arg6: memref<256x256xbf16, #tpu.memory_space<vmem>>, %arg7: memref<1x256xf32, #tpu.memory_space<vmem>>, %arg8: memref<1x256xf32, #tpu.memory_space<vmem>>, %arg9: memref<1x1xf32, #tpu.memory_space<vmem>>, %arg10: memref<1x1x8xf32, #tpu.memory_space<vmem>>) attributes {dimension_semantics = [#tpu.dimension_semantics<parallel>], iteration_bounds = array<i64: 1>, scalar_prefetch = 0 : i64, scratch_operands = 0 : i64, tpu.core_type = #tpu.core_type<tc>, window_params = [{transform_indices = @transform_0, window_bounds = array<i64: 8, 16, 128>}, {pipeline_mode = #tpu.pipeline_mode<synchronous>, transform_indices = @transform_1, window_bounds = array<i64: 256, 128>}, {pipeline_mode = #tpu.pipeline_mode<synchronous>, transform_indices = @transform_2, window_bounds = array<i64: 256, 256>}, {pipeline_mode = #tpu.pipeline_mode<synchronous>, transform_indices = @transform_3, window_bounds = array<i64: 3584, 256>}, {pipeline_mode = #tpu.pipeline_mode<synchronous>, transform_indices = @transform_4, window_bounds = array<i64: 1, 256>}, {pipeline_mode = #tpu.pipeline_mode<synchronous>, transform_indices = @transform_5, window_bounds = array<i64: 256, 256>}, {pipeline_mode = #tpu.pipeline_mode<synchronous>, transform_indices = @transform_6, window_bounds = array<i64: 1, 256>}, {pipeline_mode = #tpu.pipeline_mode<synchronous>, transform_indices = @transform_7, window_bounds = array<i64: 1, 256>}, {pipeline_mode = #tpu.pipeline_mode<synchronous>, transform_indices = @transform_8, window_bounds = array<i64: 1, 1>}, {transform_indices = @transform_9, window_bounds = array<i64: 1, 1, 8>}]} {
    %c0 = arith.constant 0 : index
    %c0_0 = arith.constant 0 : index
    %c0_1 = arith.constant 0 : index
    %0 = vector.load %arg1[%c0, %c0_0, %c0_1] : memref<8x16x128xbf16, #tpu.memory_space<vmem>>, vector<8x16x128xbf16>
    %1 = vector.extract_strided_slice %0 {offsets = [0, 0, 0], sizes = [8, 15, 128], strides = [1, 1, 1]} : vector<8x16x128xbf16> to vector<8x15x128xbf16>
    %2 = vector.extract_strided_slice %0 {offsets = [0, 1, 0], sizes = [8, 15, 128], strides = [1, 1, 1]} : vector<8x16x128xbf16> to vector<8x15x128xbf16>
    %3 = tpu.concatenate %1, %2 in 2 : vector<8x15x128xbf16>, vector<8x15x128xbf16> -> vector<8x15x256xbf16>
    %4 = vector.shape_cast %3 : vector<8x15x256xbf16> to vector<120x256xbf16>
    %c0_2 = arith.constant 0 : index
    %c0_3 = arith.constant 0 : index
    %5 = vector.load %arg2[%c0_2, %c0_3] : memref<256x128xbf16, #tpu.memory_space<vmem>>, vector<256x128xbf16>
    %cst = arith.constant dense<0.000000e+00> : vector<120x128xf32>
    %6 = tpu.matmul %4, %5, %cst {dimension_numbers = #tpu.dot_dimension_numbers<[1], [0], [0], [1], [0, 0, 1, 1], [], []>} : vector<120x256xbf16>, vector<256x128xbf16>, vector<120x128xf32> -> vector<120x128xf32>
    %cst_4 = arith.constant 0.000000e+00 : f32
    %7 = vector.broadcast %cst_4 : f32 to vector<120x128xf32>
    %8 = arith.maximumf %6, %7 : vector<120x128xf32>
    %9 = arith.truncf %8 : vector<120x128xf32> to vector<120x128xbf16>
    %10 = vector.shape_cast %9 : vector<120x128xbf16> to vector<8x15x128xbf16>
    %11 = vector.extract_strided_slice %10 {offsets = [0, 0, 0], sizes = [8, 14, 128], strides = [1, 1, 1]} : vector<8x15x128xbf16> to vector<8x14x128xbf16>
    %12 = vector.extract_strided_slice %10 {offsets = [0, 1, 0], sizes = [8, 14, 128], strides = [1, 1, 1]} : vector<8x15x128xbf16> to vector<8x14x128xbf16>
    %13 = tpu.concatenate %11, %12 in 2 : vector<8x14x128xbf16>, vector<8x14x128xbf16> -> vector<8x14x256xbf16>
    %14 = vector.shape_cast %13 : vector<8x14x256xbf16> to vector<112x256xbf16>
    %c0_5 = arith.constant 0 : index
    %c0_6 = arith.constant 0 : index
    %15 = vector.load %arg3[%c0_5, %c0_6] : memref<256x256xbf16, #tpu.memory_space<vmem>>, vector<256x256xbf16>
    %cst_7 = arith.constant dense<0.000000e+00> : vector<112x256xf32>
    %16 = tpu.matmul %14, %15, %cst_7 {dimension_numbers = #tpu.dot_dimension_numbers<[1], [0], [0], [1], [0, 0, 1, 1], [], []>} : vector<112x256xbf16>, vector<256x256xbf16>, vector<112x256xf32> -> vector<112x256xf32>
    %cst_8 = arith.constant 0.000000e+00 : f32
    %17 = vector.broadcast %cst_8 : f32 to vector<112x256xf32>
    %18 = arith.maximumf %16, %17 : vector<112x256xf32>
    %19 = arith.truncf %18 : vector<112x256xf32> to vector<112x256xbf16>
    %20 = vector.shape_cast %19 : vector<112x256xbf16> to vector<8x3584xbf16>
    %c0_9 = arith.constant 0 : index
    %c0_10 = arith.constant 0 : index
    %21 = vector.load %arg4[%c0_9, %c0_10] : memref<3584x256xbf16, #tpu.memory_space<vmem>>, vector<3584x256xbf16>
    %cst_11 = arith.constant dense<0.000000e+00> : vector<8x256xf32>
    %22 = tpu.matmul %20, %21, %cst_11 {dimension_numbers = #tpu.dot_dimension_numbers<[1], [0], [0], [1], [0, 0, 1, 1], [], []>} : vector<8x3584xbf16>, vector<3584x256xbf16>, vector<8x256xf32> -> vector<8x256xf32>
    %c0_12 = arith.constant 0 : index
    %c0_13 = arith.constant 0 : index
    %23 = vector.load %arg5[%c0_12, %c0_13] : memref<1x256xf32, #tpu.memory_space<vmem>>, vector<1x256xf32>
    %24 = vector.broadcast %23 : vector<1x256xf32> to vector<8x256xf32>
    %25 = arith.addf %22, %24 : vector<8x256xf32>
    %cst_14 = arith.constant 0.000000e+00 : f32
    %26 = vector.broadcast %cst_14 : f32 to vector<8x256xf32>
    %27 = arith.maximumf %25, %26 : vector<8x256xf32>
    %28 = arith.truncf %27 : vector<8x256xf32> to vector<8x256xbf16>
    %c0_15 = arith.constant 0 : index
    %c0_16 = arith.constant 0 : index
    %29 = vector.load %arg6[%c0_15, %c0_16] : memref<256x256xbf16, #tpu.memory_space<vmem>>, vector<256x256xbf16>
    %cst_17 = arith.constant dense<0.000000e+00> : vector<8x256xf32>
    %30 = tpu.matmul %28, %29, %cst_17 {dimension_numbers = #tpu.dot_dimension_numbers<[1], [0], [0], [1], [0, 0, 1, 1], [], []>} : vector<8x256xbf16>, vector<256x256xbf16>, vector<8x256xf32> -> vector<8x256xf32>
    %c0_18 = arith.constant 0 : index
    %c0_19 = arith.constant 0 : index
    %31 = vector.load %arg7[%c0_18, %c0_19] : memref<1x256xf32, #tpu.memory_space<vmem>>, vector<1x256xf32>
    %32 = vector.broadcast %31 : vector<1x256xf32> to vector<8x256xf32>
    %33 = arith.addf %30, %32 : vector<8x256xf32>
    %cst_20 = arith.constant 0.000000e+00 : f32
    %34 = vector.broadcast %cst_20 : f32 to vector<8x256xf32>
    %35 = arith.maximumf %33, %34 : vector<8x256xf32>
    %c0_21 = arith.constant 0 : index
    %c0_22 = arith.constant 0 : index
    %36 = vector.load %arg8[%c0_21, %c0_22] : memref<1x256xf32, #tpu.memory_space<vmem>>, vector<1x256xf32>
    %37 = vector.broadcast %36 : vector<1x256xf32> to vector<8x256xf32>
    %38 = arith.mulf %35, %37 : vector<8x256xf32>
    %cst_23 = arith.constant dense<0.000000e+00> : vector<8xf32>
    %39 = vector.multi_reduction <add>, %38, %cst_23 [1] : vector<8x256xf32> to vector<8xf32>
    %40 = vector.shape_cast %39 : vector<8xf32> to vector<8x1xf32>
    %c0_24 = arith.constant 0 : index
    %c0_25 = arith.constant 0 : index
    %41 = vector.load %arg9[%c0_24, %c0_25] : memref<1x1xf32, #tpu.memory_space<vmem>>, vector<1x1xf32>
    %42 = vector.broadcast %41 : vector<1x1xf32> to vector<8x1xf32>
    %43 = arith.addf %40, %42 : vector<8x1xf32>
    %44 = vector.shape_cast %43 : vector<8x1xf32> to vector<1x1x8xf32>
    %c0_26 = arith.constant 0 : index
    %c0_27 = arith.constant 0 : index
    %c0_28 = arith.constant 0 : index
    %45 = vector.load %arg10[%c0_26, %c0_27, %c0_28] : memref<1x1x8xf32, #tpu.memory_space<vmem>>, vector<1x1x8xf32>
    tpu.vector_store %arg10[%c0_26, %c0_27, %c0_28], %44 {strides = array<i32>} : memref<1x1x8xf32, #tpu.memory_space<vmem>>, vector<1x1x8xf32>,
    return
  }
  func.func @transform_0(%arg0: i32) -> (i32, i32, i32) {
    %c0_i32 = arith.constant 0 : i32
    %c0_i32_0 = arith.constant 0 : i32
    %c0_i32_1 = arith.constant 0 : i32
    return %arg0, %c0_i32, %c0_i32_0 : i32, i32, i32
  }
  func.func @transform_1(%arg0: i32) -> (i32, i32) {
    %c0_i32 = arith.constant 0 : i32
    %c0_i32_0 = arith.constant 0 : i32
    %c0_i32_1 = arith.constant 0 : i32
    return %c0_i32, %c0_i32_0 : i32, i32
  }
  func.func @transform_2(%arg0: i32) -> (i32, i32) {
    %c0_i32 = arith.constant 0 : i32
    %c0_i32_0 = arith.constant 0 : i32
    %c0_i32_1 = arith.constant 0 : i32
    return %c0_i32, %c0_i32_0 : i32, i32
  }
  func.func @transform_3(%arg0: i32) -> (i32, i32) {
    %c0_i32 = arith.constant 0 : i32
    %c0_i32_0 = arith.constant 0 : i32
    %c0_i32_1 = arith.constant 0 : i32
    return %c0_i32, %c0_i32_0 : i32, i32
  }
  func.func @transform_4(%arg0: i32) -> (i32, i32) {
    %c0_i32 = arith.constant 0 : i32
    %c0_i32_0 = arith.constant 0 : i32
    %c0_i32_1 = arith.constant 0 : i32
    return %c0_i32, %c0_i32_0 : i32, i32
  }
  func.func @transform_5(%arg0: i32) -> (i32, i32) {
    %c0_i32 = arith.constant 0 : i32
    %c0_i32_0 = arith.constant 0 : i32
    %c0_i32_1 = arith.constant 0 : i32
    return %c0_i32, %c0_i32_0 : i32, i32
  }
  func.func @transform_6(%arg0: i32) -> (i32, i32) {
    %c0_i32 = arith.constant 0 : i32
    %c0_i32_0 = arith.constant 0 : i32
    %c0_i32_1 = arith.constant 0 : i32
    return %c0_i32, %c0_i32_0 : i32, i32
  }
  func.func @transform_7(%arg0: i32) -> (i32, i32) {
    %c0_i32 = arith.constant 0 : i32
    %c0_i32_0 = arith.constant 0 : i32
    %c0_i32_1 = arith.constant 0 : i32
    return %c0_i32, %c0_i32_0 : i32, i32
  }
  func.func @transform_8(%arg0: i32) -> (i32, i32) {
    %c0_i32 = arith.constant 0 : i32
    %c0_i32_0 = arith.constant 0 : i32
    %c0_i32_1 = arith.constant 0 : i32
    return %c0_i32, %c0_i32_0 : i32, i32
  }
  func.func @transform_9(%arg0: i32) -> (i32, i32, i32) {
    %c0_i32 = arith.constant 0 : i32
    %c0_i32_0 = arith.constant 0 : i32
    %c0_i32_1 = arith.constant 0 : i32
    return %arg0, %c0_i32, %c0_i32_0 : i32, i32, i32
  }
}

</mosaic_0001>

<llo_original>
// kernel: value_net_forward.1
$region0: #{value_net_forward.1}
  #allocation0 [shape = 'u32[]', space=smem, size = 0x4, offset = 0x4, fixed_abs, tag = 'smem constant byte address 0x4 - core index']
  #allocation1 [shape = 'u32[144,128]{1,0:T(1,128)}', space=vmem, size = 0x12000, scoped, tag = 'internal scratch']
  #allocation2 [shape = 'f32[1,1]{1,0:T(1,128)S(1)}', space=vmem, size = 0x200, scoped, tag = 'scoped memory for value_net_forward.1']
  %s0 = inlined_call_operand.vmem [shape: bf16[8,16,128], index: 0, kind: input, shape index: {}]
  %s1 = inlined_call_operand.hbm [shape: bf16[256,128], index: 1, kind: input, shape index: {}]
  %s2 = inlined_call_operand.hbm [shape: bf16[256,256], index: 2, kind: input, shape index: {}]
  %s3 = inlined_call_operand.hbm [shape: bf16[3584,256], index: 3, kind: input, shape index: {}]
  %s4 = inlined_call_operand.hbm [shape: f32[1,256], index: 4, kind: input, shape index: {}]
  %s5 = inlined_call_operand.hbm [shape: bf16[256,256], index: 5, kind: input, shape index: {}]
  %s6 = inlined_call_operand.hbm [shape: f32[1,256], index: 6, kind: input, shape index: {}]
  %s7 = inlined_call_operand.hbm [shape: f32[1,256], index: 7, kind: input, shape index: {}]
  %s8 = inlined_call_operand.<no memory space> [shape: f32[1,1], index: 8, kind: input, shape index: {}]
  %s9 = inlined_call_operand.vmem [shape: f32[1,1,8], index: 9, kind: output, shape index: {}]
  %s10 = sld [smem:[#allocation0]]
  $region74: #{value_net_forward.1} parent=0
    _
  %s12 = ssub.s32 1, %s10
  %s13 = scalar_select 0, %s12, %s10
  %v14 = vstv %s8
  %15 = vst [vmem:[#allocation2] sm:$0x1] %v14
  $region1: #{value_net_forward.1} parent=0
    #allocation3 [shape = 'u8[65536]{0}', space=vmem, size = 0x10000, scoped, tag = 'input window, operand 1, single buffered']
    #allocation4 [shape = 's32[1]{0}', space=sflag, size = 0x4, scoped, tag = 'scoped memory for value_net_forward.1']
    #allocation5 [shape = 'u8[131072]{0}', space=vmem, size = 0x20000, scoped, tag = 'input window, operand 2, single buffered']
    #allocation6 [shape = 's32[1]{0}', space=sflag, size = 0x4, scoped, tag = 'scoped memory for value_net_forward.1']
    #allocation7 [shape = 'u8[1835008]{0}', space=vmem, size = 0x1c0000, scoped, tag = 'input window, operand 3, single buffered']
    #allocation8 [shape = 'u8[1024]{0}', space=vmem, size = 0x400, scoped, tag = 'input window, operand 4, single buffered']
    #allocation9 [shape = 's32[1]{0}', space=sflag, size = 0x4, scoped, tag = 'scoped memory for value_net_forward.1']
    #allocation10 [shape = 'u8[131072]{0}', space=vmem, size = 0x20000, scoped, tag = 'input window, operand 5, single buffered']
    #allocation11 [shape = 'u8[1024]{0}', space=vmem, size = 0x400, scoped, tag = 'input window, operand 6, single buffered']
    #allocation12 [shape = 's32[1]{0}', space=sflag, size = 0x4, scoped, tag = 'scoped memory for value_net_forward.1']
    #allocation13 [shape = 'u8[1024]{0}', space=vmem, size = 0x400, scoped, tag = 'input window, operand 7, single buffered']
    %16 = vsyncpa [#allocation4], 0
    %17 = vsyncpa [#allocation6], 0
    %18 = vsyncpa [#allocation9], 0
    %19 = vsyncpa [#allocation12], 0
    // Predicated region
    $region2: #{value_net_forward.1} parent=1 // pred_check
      _
    $region3: #{value_net_forward.1} parent=1 // pred_check_branch
      %21 = sbr.rel (0) target = $region5
    $region4: #{value_net_forward.1} parent=1 // pred_region
      _
    $region5: #{value_net_forward.1} parent=1 // pred_fallthru
      _
    // Predicated region
    $region6: #{value_net_forward.1} parent=1 // pred_check
      _
    $region7: #{value_net_forward.1} parent=1 // pred_check_branch
      %23 = sbr.rel (0) target = $region9
    $region8: #{value_net_forward.1} parent=1 // pred_region
      %s25 = ssub.s32 2048, 2048
      %26 = vsyncadd [#allocation4], %s25
      %s27 = sshll.u32 [#allocation3], 4
      %s28 = int_to_ptr.vmem [resolvable:$true] %s27
      %33 = dma.hbm_to_vmem [thread:$0]  %s1, 2048, %s28, [#allocation4], 64, 64, 4
    $region9: #{value_net_forward.1} parent=1 // pred_fallthru
      _
    // Predicated region
    $region10: #{value_net_forward.1} parent=1 // pred_check
      _
    $region11: #{value_net_forward.1} parent=1 // pred_check_branch
      %35 = sbr.rel (0) target = $region13
    $region12: #{value_net_forward.1} parent=1 // pred_region
      %s37 = ssub.s32 4096, 4096
      %38 = vsyncadd [#allocation6], %s37
      %s39 = sshll.u32 [#allocation5], 4
      %s40 = int_to_ptr.vmem [resolvable:$true] %s39
      %45 = dma.hbm_to_vmem [thread:$0]  %s2, 4096, %s40, [#allocation6], 128, 128, 8
    $region13: #{value_net_forward.1} parent=1 // pred_fallthru
      _
    // Predicated region
    $region14: #{value_net_forward.1} parent=1 // pred_check
      _
    $region15: #{value_net_forward.1} parent=1 // pred_check_branch
      %47 = sbr.rel (0) target = $region17
    $region16: #{value_net_forward.1} parent=1 // pred_region
      %s49 = ssub.s32 57344, 57344
      %50 = vsyncadd [#allocation6], %s49
      %s51 = sshll.u32 [#allocation7], 4
      %s52 = int_to_ptr.vmem [resolvable:$true] %s51
      %57 = dma.hbm_to_vmem [thread:$0]  %s3, 57344, %s52, [#allocation6], 128, 128, 8
    $region17: #{value_net_forward.1} parent=1 // pred_fallthru
      _
    // Predicated region
    $region18: #{value_net_forward.1} parent=1 // pred_check
      _
    $region19: #{value_net_forward.1} parent=1 // pred_check_branch
      %59 = sbr.rel (0) target = $region21
    $region20: #{value_net_forward.1} parent=1 // pred_region
      %s61 = ssub.s32 32, 32
      %62 = vsyncadd [#allocation9], %s61
      %s64 = sshll.u32 [#allocation8], 4
      %s65 = int_to_ptr.vmem [resolvable:$true] %s64
      %67 = dma.hbm_to_vmem [thread:$0]  %s4, 32, %s65, [#allocation9]
    $region21: #{value_net_forward.1} parent=1 // pred_fallthru
      _
    // Predicated region
    $region22: #{value_net_forward.1} parent=1 // pred_check
      _
    $region23: #{value_net_forward.1} parent=1 // pred_check_branch
      %69 = sbr.rel (0) target = $region25
    $region24: #{value_net_forward.1} parent=1 // pred_region
      %s71 = ssub.s32 4096, 4096
      %72 = vsyncadd [#allocation9], %s71
      %s73 = sshll.u32 [#allocation10], 4
      %s74 = int_to_ptr.vmem [resolvable:$true] %s73
      %79 = dma.hbm_to_vmem [thread:$0]  %s5, 4096, %s74, [#allocation9], 128, 128, 8
    $region25: #{value_net_forward.1} parent=1 // pred_fallthru
      _
    // Predicated region
    $region26: #{value_net_forward.1} parent=1 // pred_check
      _
    $region27: #{value_net_forward.1} parent=1 // pred_check_branch
      %81 = sbr.rel (0) target = $region29
    $region28: #{value_net_forward.1} parent=1 // pred_region
      %s83 = ssub.s32 32, 32
      %84 = vsyncadd [#allocation12], %s83
      %s86 = sshll.u32 [#allocation11], 4
      %s87 = int_to_ptr.vmem [resolvable:$true] %s86
      %89 = dma.hbm_to_vmem [thread:$0]  %s6, 32, %s87, [#allocation12]
    $region29: #{value_net_forward.1} parent=1 // pred_fallthru
      _
    // Predicated region
    $region30: #{value_net_forward.1} parent=1 // pred_check
      _
    $region31: #{value_net_forward.1} parent=1 // pred_check_branch
      %91 = sbr.rel (0) target = $region33
    $region32: #{value_net_forward.1} parent=1 // pred_region
      %s93 = ssub.s32 32, 32
      %94 = vsyncadd [#allocation12], %s93
      %s96 = sshll.u32 [#allocation13], 4
      %s97 = int_to_ptr.vmem [resolvable:$true] %s96
      %99 = dma.hbm_to_vmem [thread:$0]  %s7, 32, %s97, [#allocation12]
    $region33: #{value_net_forward.1} parent=1 // pred_fallthru
      _
    // Predicated region
    $region34: #{value_net_forward.1} parent=1 // pred_check
      _
    $region35: #{value_net_forward.1} parent=1 // pred_check_branch
      %101 = sbr.rel (0) target = $region37
    $region36: #{value_net_forward.1} parent=1 // pred_region
      _
    $region37: #{value_net_forward.1} parent=1 // pred_fallthru
      _
    // Predicated region
    $region38: #{value_net_forward.1} parent=1 // pred_check
      _
    $region39: #{value_net_forward.1} parent=1 // pred_check_branch
      %103 = sbr.rel (0) target = $region41
    $region40: #{value_net_forward.1} parent=1 // pred_region
      %104 = dma.done [#allocation4], 2048
    $region41: #{value_net_forward.1} parent=1 // pred_fallthru
      _
    // Predicated region
    $region42: #{value_net_forward.1} parent=1 // pred_check
      _
    $region43: #{value_net_forward.1} parent=1 // pred_check_branch
      %106 = sbr.rel (0) target = $region45
    $region44: #{value_net_forward.1} parent=1 // pred_region
      %107 = dma.done [#allocation6], 4096
    $region45: #{value_net_forward.1} parent=1 // pred_fallthru
      _
    // Predicated region
    $region46: #{value_net_forward.1} parent=1 // pred_check
      _
    $region47: #{value_net_forward.1} parent=1 // pred_check_branch
      %109 = sbr.rel (0) target = $region49
    $region48: #{value_net_forward.1} parent=1 // pred_region
      %110 = dma.done [#allocation6], 57344
    $region49: #{value_net_forward.1} parent=1 // pred_fallthru
      _
    // Predicated region
    $region50: #{value_net_forward.1} parent=1 // pred_check
      _
    $region51: #{value_net_forward.1} parent=1 // pred_check_branch
      %112 = sbr.rel (0) target = $region53
    $region52: #{value_net_forward.1} parent=1 // pred_region
      %113 = dma.done [#allocation9], 32
    $region53: #{value_net_forward.1} parent=1 // pred_fallthru
      _
    // Predicated region
    $region54: #{value_net_forward.1} parent=1 // pred_check
      _
    $region55: #{value_net_forward.1} parent=1 // pred_check_branch
      %115 = sbr.rel (0) target = $region57
    $region56: #{value_net_forward.1} parent=1 // pred_region
      %116 = dma.done [#allocation9], 4096
    $region57: #{value_net_forward.1} parent=1 // pred_fallthru
      _
    // Predicated region
    $region58: #{value_net_forward.1} parent=1 // pred_check
      _
    $region59: #{value_net_forward.1} parent=1 // pred_check_branch
      %118 = sbr.rel (0) target = $region61
    $region60: #{value_net_forward.1} parent=1 // pred_region
      %119 = dma.done [#allocation12], 32
    $region61: #{value_net_forward.1} parent=1 // pred_fallthru
      _
    // Predicated region
    $region62: #{value_net_forward.1} parent=1 // pred_check
      _
    $region63: #{value_net_forward.1} parent=1 // pred_check_branch
      %121 = sbr.rel (0) target = $region65
    $region64: #{value_net_forward.1} parent=1 // pred_region
      %122 = dma.done [#allocation12], 32
    $region65: #{value_net_forward.1} parent=1 // pred_fallthru
      _
    %v124 = vld [vmem:[%s0] sm:$0xf]
    %v125 = vld [vmem:[%s0 + $0x4] sm:$0xf]
    %v126 = vld [vmem:[%s0 + $0x8] sm:$0xf]
    %v127 = vld [vmem:[%s0 + $0xc] sm:$0xf]
    %v128 = vld [vmem:[%s0 + $0x10] sm:$0xf]
    %v129 = vld [vmem:[%s0 + $0x14] sm:$0xf]
    %v130 = vld [vmem:[%s0 + $0x18] sm:$0xf]
    %v131 = vld [vmem:[%s0 + $0x1c] sm:$0xf]
    %v132 = vld [vmem:[%s0 + $0x20] sm:$0xf]
    %v133 = vld [vmem:[%s0 + $0x24] sm:$0xf]
    %v134 = vld [vmem:[%s0 + $0x28] sm:$0xf]
    %v135 = vld [vmem:[%s0 + $0x2c] sm:$0xf]
    %v136 = vld [vmem:[%s0 + $0x30] sm:$0xf]
    %v137 = vld [vmem:[%s0 + $0x34] sm:$0xf]
    %v138 = vld [vmem:[%s0 + $0x38] sm:$0xf]
    %v139 = vld [vmem:[%s0 + $0x3c] sm:$0xf]
    %v156 = vunpack.c.l.b16 %v124
    %v157 = vunpack.c.l.b16 %v125
    %v158 = vunpack.c.l.b16 %v126
    %v159 = vunpack.c.l.b16 %v127
    %v160 = vunpack.c.l.b16 %v128
    %v161 = vunpack.c.l.b16 %v129
    %v162 = vunpack.c.l.b16 %v130
    %v163 = vunpack.c.l.b16 %v131
    %v164 = vunpack.c.l.b16 %v132
    %v165 = vunpack.c.l.b16 %v133
    %v166 = vunpack.c.l.b16 %v134
    %v167 = vunpack.c.l.b16 %v135
    %v168 = vunpack.c.l.b16 %v136
    %v169 = vunpack.c.l.b16 %v137
    %v170 = vunpack.c.l.b16 %v138
    %v171 = vunpack.c.l.b16 %v139
    %v172 = vpack.c.b16 %v157, %v156
    %v173 = vpack.c.b16 %v159, %v158
    %v174 = vpack.c.b16 %v161, %v160
    %v175 = vpack.c.b16 %v163, %v162
    %v176 = vpack.c.b16 %v165, %v164
    %v177 = vpack.c.b16 %v167, %v166
    %v178 = vpack.c.b16 %v169, %v168
    %v179 = vpack.c.b16 %v171, %v170
    %v181 = vshrl.u32 %v172, 16
    %v183 = vshll.u32 %v172, 16
    %v185 = vrot.slane %v183, 1
    %v186 = vor.u32 %v181, %v185
    %v188 = vshrl.u32 %v173, 16
    %v190 = vshll.u32 %v173, 16
    %v192 = vrot.slane %v190, 1
    %v193 = vor.u32 %v188, %v192
    %v195 = vshrl.u32 %v174, 16
    %v197 = vshll.u32 %v174, 16
    %v199 = vrot.slane %v197, 1
    %v200 = vor.u32 %v195, %v199
    %v202 = vshrl.u32 %v175, 16
    %v204 = vshll.u32 %v175, 16
    %v206 = vrot.slane %v204, 1
    %v207 = vor.u32 %v202, %v206
    %v209 = vshrl.u32 %v176, 16
    %v211 = vshll.u32 %v176, 16
    %v213 = vrot.slane %v211, 1
    %v214 = vor.u32 %v209, %v213
    %v216 = vshrl.u32 %v177, 16
    %v218 = vshll.u32 %v177, 16
    %v220 = vrot.slane %v218, 1
    %v221 = vor.u32 %v216, %v220
    %v223 = vshrl.u32 %v178, 16
    %v225 = vshll.u32 %v178, 16
    %v227 = vrot.slane %v225, 1
    %v228 = vor.u32 %v223, %v227
    %v230 = vshrl.u32 %v179, 16
    %v232 = vshll.u32 %v179, 16
    %v234 = vrot.slane %v232, 1
    %v235 = vor.u32 %v230, %v234
    %v236 = vcombine.low %v172, %v186
    %v237 = vcombine.high %v172, %v186
    %v239 = vunpack.c.l.s4 1966171168
    %v240 = vunpack.c.0.s8 %v239
    %v241 = vlaneseq
    %v242 = vshrl.u32 %v241, 7
    %v243 = vsub.s32 %v240, %v242
    %v244 = vrot.slane %v236, %v243
    %v246 = vunpack.c.l.s4 1966171168
    %v247 = vunpack.c.0.s8 %v246
    %v248 = vlaneseq
    %v249 = vshrl.u32 %v248, 7
    %v250 = vsub.s32 %v247, %v249
    %v251 = vrot.slane %v237, %v250
    %v252 = vcombine.high %v244, %v244
    %v253 = vcombine.high %v251, %v251
    %v255 = vunpack.c.l.s4 1966171168
    %v256 = vunpack.c.0.s8 %v255
    %v257 = vlaneseq
    %v258 = vshrl.u32 %v257, 7
    %v259 = vsub.s32 %v256, %v258
    %v260 = vrot.slane %v244, %v259
    %v262 = vunpack.c.l.s4 1966171168
    %v263 = vunpack.c.0.s8 %v262
    %v264 = vlaneseq
    %v265 = vshrl.u32 %v264, 7
    %v266 = vsub.s32 %v263, %v265
    %v267 = vrot.slane %v251, %v266
    %v269 = vunpack.c.l.s4 1966171168
    %v270 = vunpack.c.0.s8 %v269
    %v271 = vlaneseq
    %v272 = vshrl.u32 %v271, 7
    %v273 = vsub.s32 %v270, %v272
    %v274 = vrot.slane %v252, %v273
    %v276 = vunpack.c.l.s4 1966171168
    %v277 = vunpack.c.0.s8 %v276
    %v278 = vlaneseq
    %v279 = vshrl.u32 %v278, 7
    %v280 = vsub.s32 %v277, %v279
    %v281 = vrot.slane %v253, %v280
    %v282 = vcombine.high %v260, %v260
    %v283 = vcombine.high %v267, %v267
    %v284 = vcombine.high %v274, %v274
    %v285 = vcombine.high %v281, %v281
    %v286 = vcombine.low %v173, %v193
    %v287 = vcombine.high %v173, %v193
    %v289 = vunpack.c.l.s4 1966171168
    %v290 = vunpack.c.0.s8 %v289
    %v291 = vlaneseq
    %v292 = vshrl.u32 %v291, 7
    %v293 = vsub.s32 %v290, %v292
    %v294 = vrot.slane %v286, %v293
    %v296 = vunpack.c.l.s4 1966171168
    %v297 = vunpack.c.0.s8 %v296
    %v298 = vlaneseq
    %v299 = vshrl.u32 %v298, 7
    %v300 = vsub.s32 %v297, %v299
    %v301 = vrot.slane %v287, %v300
    %v302 = vcombine.high %v294, %v294
    %v303 = vcombine.high %v301, %v301
    %v305 = vunpack.c.l.s4 1966171168
    %v306 = vunpack.c.0.s8 %v305
    %v307 = vlaneseq
    %v308 = vshrl.u32 %v307, 7
    %v309 = vsub.s32 %v306, %v308
    %v310 = vrot.slane %v294, %v309
    %v312 = vunpack.c.l.s4 1966171168
    %v313 = vunpack.c.0.s8 %v312
    %v314 = vlaneseq
    %v315 = vshrl.u32 %v314, 7
    %v316 = vsub.s32 %v313, %v315
    %v317 = vrot.slane %v301, %v316
    %v319 = vunpack.c.l.s4 1966171168
    %v320 = vunpack.c.0.s8 %v319
    %v321 = vlaneseq
    %v322 = vshrl.u32 %v321, 7
    %v323 = vsub.s32 %v320, %v322
    %v324 = vrot.slane %v302, %v323
    %v326 = vunpack.c.l.s4 1966171168
    %v327 = vunpack.c.0.s8 %v326
    %v328 = vlaneseq
    %v329 = vshrl.u32 %v328, 7
    %v330 = vsub.s32 %v327, %v329
    %v331 = vrot.slane %v303, %v330
    %v332 = vcombine.high %v310, %v310
    %v333 = vcombine.high %v317, %v317
    %v334 = vcombine.high %v324, %v324
    %v335 = vcombine.high %v331, %v331
    %v336 = vcombine.low %v174, %v200
    %v337 = vcombine.high %v174, %v200
    %v339 = vunpack.c.l.s4 1966171168
    %v340 = vunpack.c.0.s8 %v339
    %v341 = vlaneseq
    %v342 = vshrl.u32 %v341, 7
    %v343 = vsub.s32 %v340, %v342
    %v344 = vrot.slane %v336, %v343
    %v346 = vunpack.c.l.s4 1966171168
    %v347 = vunpack.c.0.s8 %v346
    %v348 = vlaneseq
    %v349 = vshrl.u32 %v348, 7
    %v350 = vsub.s32 %v347, %v349
    %v351 = vrot.slane %v337, %v350
    %v352 = vcombine.high %v344, %v344
    %v353 = vcombine.high %v351, %v351
    %v355 = vunpack.c.l.s4 1966171168
    %v356 = vunpack.c.0.s8 %v355
    %v357 = vlaneseq
    %v358 = vshrl.u32 %v357, 7
    %v359 = vsub.s32 %v356, %v358
    %v360 = vrot.slane %v344, %v359
    %v362 = vunpack.c.l.s4 1966171168
    %v363 = vunpack.c.0.s8 %v362
    %v364 = vlaneseq
    %v365 = vshrl.u32 %v364, 7
    %v366 = vsub.s32 %v363, %v365
    %v367 = vrot.slane %v351, %v366
    %v369 = vunpack.c.l.s4 1966171168
    %v370 = vunpack.c.0.s8 %v369
    %v371 = vlaneseq
    %v372 = vshrl.u32 %v371, 7
    %v373 = vsub.s32 %v370, %v372
    %v374 = vrot.slane %v352, %v373
    %v376 = vunpack.c.l.s4 1966171168
    %v377 = vunpack.c.0.s8 %v376
    %v378 = vlaneseq
    %v379 = vshrl.u32 %v378, 7
    %v380 = vsub.s32 %v377, %v379
    %v381 = vrot.slane %v353, %v380
    %v382 = vcombine.high %v360, %v360
    %v383 = vcombine.high %v367, %v367
    %v384 = vcombine.high %v374, %v374
    %v385 = vcombine.high %v381, %v381
    %v386 = vcombine.low %v175, %v207
    %v387 = vcombine.high %v175, %v207
    %v389 = vunpack.c.l.s4 1966171168
    %v390 = vunpack.c.0.s8 %v389
    %v391 = vlaneseq
    %v392 = vshrl.u32 %v391, 7
    %v393 = vsub.s32 %v390, %v392
    %v394 = vrot.slane %v386, %v393
    %v396 = vunpack.c.l.s4 1966171168
    %v397 = vunpack.c.0.s8 %v396
    %v398 = vlaneseq
    %v399 = vshrl.u32 %v398, 7
    %v400 = vsub.s32 %v397, %v399
    %v401 = vrot.slane %v387, %v400
    %v402 = vcombine.high %v394, %v394
    %v403 = vcombine.high %v401, %v401
    %v405 = vunpack.c.l.s4 1966171168
    %v406 = vunpack.c.0.s8 %v405
    %v407 = vlaneseq
    %v408 = vshrl.u32 %v407, 7
    %v409 = vsub.s32 %v406, %v408
    %v410 = vrot.slane %v394, %v409
    %v412 = vunpack.c.l.s4 1966171168
    %v413 = vunpack.c.0.s8 %v412
    %v414 = vlaneseq
    %v415 = vshrl.u32 %v414, 7
    %v416 = vsub.s32 %v413, %v415
    %v417 = vrot.slane %v401, %v416
    %v419 = vunpack.c.l.s4 1966171168
    %v420 = vunpack.c.0.s8 %v419
    %v421 = vlaneseq
    %v422 = vshrl.u32 %v421, 7
    %v423 = vsub.s32 %v420, %v422
    %v424 = vrot.slane %v402, %v423
    %v426 = vunpack.c.l.s4 1966171168
    %v427 = vunpack.c.0.s8 %v426
    %v428 = vlaneseq
    %v429 = vshrl.u32 %v428, 7
    %v430 = vsub.s32 %v427, %v429
    %v431 = vrot.slane %v403, %v430
    %v432 = vcombine.high %v410, %v410
    %v433 = vcombine.high %v417, %v417
    %v434 = vcombine.high %v424, %v424
    %v435 = vcombine.high %v431, %v431
    %v436 = vcombine.low %v176, %v214
    %v437 = vcombine.high %v176, %v214
    %v439 = vunpack.c.l.s4 1966171168
    %v440 = vunpack.c.0.s8 %v439
    %v441 = vlaneseq
    %v442 = vshrl.u32 %v441, 7
    %v443 = vsub.s32 %v440, %v442
    %v444 = vrot.slane %v436, %v443
    %v446 = vunpack.c.l.s4 1966171168
    %v447 = vunpack.c.0.s8 %v446
    %v448 = vlaneseq
    %v449 = vshrl.u32 %v448, 7
    %v450 = vsub.s32 %v447, %v449
    %v451 = vrot.slane %v437, %v450
    %v452 = vcombine.high %v444, %v444
    %v453 = vcombine.high %v451, %v451
    %v455 = vunpack.c.l.s4 1966171168
    %v456 = vunpack.c.0.s8 %v455
    %v457 = vlaneseq
    %v458 = vshrl.u32 %v457, 7
    %v459 = vsub.s32 %v456, %v458
    %v460 = vrot.slane %v444, %v459
    %v462 = vunpack.c.l.s4 1966171168
    %v463 = vunpack.c.0.s8 %v462
    %v464 = vlaneseq
    %v465 = vshrl.u32 %v464, 7
    %v466 = vsub.s32 %v463, %v465
    %v467 = vrot.slane %v451, %v466
    %v469 = vunpack.c.l.s4 1966171168
    %v470 = vunpack.c.0.s8 %v469
    %v471 = vlaneseq
    %v472 = vshrl.u32 %v471, 7
    %v473 = vsub.s32 %v470, %v472
    %v474 = vrot.slane %v452, %v473
    %v476 = vunpack.c.l.s4 1966171168
    %v477 = vunpack.c.0.s8 %v476
    %v478 = vlaneseq
    %v479 = vshrl.u32 %v478, 7
    %v480 = vsub.s32 %v477, %v479
    %v481 = vrot.slane %v453, %v480
    %v482 = vcombine.high %v460, %v460
    %v483 = vcombine.high %v467, %v467
    %v484 = vcombine.high %v474, %v474
    %v485 = vcombine.high %v481, %v481
    %v486 = vcombine.low %v177, %v221
    %v487 = vcombine.high %v177, %v221
    %v489 = vunpack.c.l.s4 1966171168
    %v490 = vunpack.c.0.s8 %v489
    %v491 = vlaneseq
    %v492 = vshrl.u32 %v491, 7
    %v493 = vsub.s32 %v490, %v492
    %v494 = vrot.slane %v486, %v493
    %v496 = vunpack.c.l.s4 1966171168
    %v497 = vunpack.c.0.s8 %v496
    %v498 = vlaneseq
    %v499 = vshrl.u32 %v498, 7
    %v500 = vsub.s32 %v497, %v499
    %v501 = vrot.slane %v487, %v500
    %v502 = vcombine.high %v494, %v494
    %v503 = vcombine.high %v501, %v501
    %v505 = vunpack.c.l.s4 1966171168
    %v506 = vunpack.c.0.s8 %v505
    %v507 = vlaneseq
    %v508 = vshrl.u32 %v507, 7
    %v509 = vsub.s32 %v506, %v508
    %v510 = vrot.slane %v494, %v509
    %v512 = vunpack.c.l.s4 1966171168
    %v513 = vunpack.c.0.s8 %v512
    %v514 = vlaneseq
    %v515 = vshrl.u32 %v514, 7
    %v516 = vsub.s32 %v513, %v515
    %v517 = vrot.slane %v501, %v516
    %v519 = vunpack.c.l.s4 1966171168
    %v520 = vunpack.c.0.s8 %v519
    %v521 = vlaneseq
    %v522 = vshrl.u32 %v521, 7
    %v523 = vsub.s32 %v520, %v522
    %v524 = vrot.slane %v502, %v523
    %v526 = vunpack.c.l.s4 1966171168
    %v527 = vunpack.c.0.s8 %v526
    %v528 = vlaneseq
    %v529 = vshrl.u32 %v528, 7
    %v530 = vsub.s32 %v527, %v529
    %v531 = vrot.slane %v503, %v530
    %v532 = vcombine.high %v510, %v510
    %v533 = vcombine.high %v517, %v517
    %v534 = vcombine.high %v524, %v524
    %v535 = vcombine.high %v531, %v531
    %v536 = vcombine.low %v178, %v228
    %v537 = vcombine.high %v178, %v228
    %v539 = vunpack.c.l.s4 1966171168
    %v540 = vunpack.c.0.s8 %v539
    %v541 = vlaneseq
    %v542 = vshrl.u32 %v541, 7
    %v543 = vsub.s32 %v540, %v542
    %v544 = vrot.slane %v536, %v543
    %v546 = vunpack.c.l.s4 1966171168
    %v547 = vunpack.c.0.s8 %v546
    %v548 = vlaneseq
    %v549 = vshrl.u32 %v548, 7
    %v550 = vsub.s32 %v547, %v549
    %v551 = vrot.slane %v537, %v550
    %v552 = vcombine.high %v544, %v544
    %v553 = vcombine.high %v551, %v551
    %v555 = vunpack.c.l.s4 1966171168
    %v556 = vunpack.c.0.s8 %v555
    %v557 = vlaneseq
    %v558 = vshrl.u32 %v557, 7
    %v559 = vsub.s32 %v556, %v558
    %v560 = vrot.slane %v544, %v559
    %v562 = vunpack.c.l.s4 1966171168
    %v563 = vunpack.c.0.s8 %v562
    %v564 = vlaneseq
    %v565 = vshrl.u32 %v564, 7
    %v566 = vsub.s32 %v563, %v565
    %v567 = vrot.slane %v551, %v566
    %v569 = vunpack.c.l.s4 1966171168
    %v570 = vunpack.c.0.s8 %v569
    %v571 = vlaneseq
    %v572 = vshrl.u32 %v571, 7
    %v573 = vsub.s32 %v570, %v572
    %v574 = vrot.slane %v552, %v573
    %v576 = vunpack.c.l.s4 1966171168
    %v577 = vunpack.c.0.s8 %v576
    %v578 = vlaneseq
    %v579 = vshrl.u32 %v578, 7
    %v580 = vsub.s32 %v577, %v579
    %v581 = vrot.slane %v553, %v580
    %v582 = vcombine.high %v560, %v560
    %v583 = vcombine.high %v567, %v567
    %v584 = vcombine.high %v574, %v574
    %v585 = vcombine.high %v581, %v581
    %v586 = vcombine.low %v179, %v235
    %v587 = vcombine.high %v179, %v235
    %v589 = vunpack.c.l.s4 1966171168
    %v590 = vunpack.c.0.s8 %v589
    %v591 = vlaneseq
    %v592 = vshrl.u32 %v591, 7
    %v593 = vsub.s32 %v590, %v592
    %v594 = vrot.slane %v586, %v593
    %v596 = vunpack.c.l.s4 1966171168
    %v597 = vunpack.c.0.s8 %v596
    %v598 = vlaneseq
    %v599 = vshrl.u32 %v598, 7
    %v600 = vsub.s32 %v597, %v599
    %v601 = vrot.slane %v587, %v600
    %v602 = vcombine.high %v594, %v594
    %v603 = vcombine.high %v601, %v601
    %v605 = vunpack.c.l.s4 1966171168
    %v606 = vunpack.c.0.s8 %v605
    %v607 = vlaneseq
    %v608 = vshrl.u32 %v607, 7
    %v609 = vsub.s32 %v606, %v608
    %v610 = vrot.slane %v594, %v609
    %v612 = vunpack.c.l.s4 1966171168
    %v613 = vunpack.c.0.s8 %v612
    %v614 = vlaneseq
    %v615 = vshrl.u32 %v614, 7
    %v616 = vsub.s32 %v613, %v615
    %v617 = vrot.slane %v601, %v616
    %v619 = vunpack.c.l.s4 1966171168
    %v620 = vunpack.c.0.s8 %v619
    %v621 = vlaneseq
    %v622 = vshrl.u32 %v621, 7
    %v623 = vsub.s32 %v620, %v622
    %v624 = vrot.slane %v602, %v623
    %v626 = vunpack.c.l.s4 1966171168
    %v627 = vunpack.c.0.s8 %v626
    %v628 = vlaneseq
    %v629 = vshrl.u32 %v628, 7
    %v630 = vsub.s32 %v627, %v629
    %v631 = vrot.slane %v603, %v630
    %v632 = vcombine.high %v610, %v610
    %v633 = vcombine.high %v617, %v617
    %v634 = vcombine.high %v624, %v624
    %v635 = vcombine.high %v631, %v631
    %v636 = vunpack.i.l.s16 %v260
    %v637 = vunpack.i.h.s16 %v260
    %v638 = vunpack.i.l.s16 %v274
    %v639 = vunpack.i.h.s16 %v274
    %v640 = vunpack.i.l.s16 %v282
    %v641 = vunpack.i.h.s16 %v282
    %v642 = vunpack.i.l.s16 %v284
    %v643 = vunpack.i.h.s16 %v284
    %v644 = vunpack.i.l.s16 %v267
    %v645 = vunpack.i.h.s16 %v267
    %v646 = vunpack.i.l.s16 %v281
    %v647 = vunpack.i.h.s16 %v281
    %v648 = vunpack.i.l.s16 %v283
    %v649 = vunpack.i.h.s16 %v283
    %v650 = vunpack.i.l.s16 %v285
    %v651 = vunpack.i.l.s16 %v310
    %v652 = vunpack.i.h.s16 %v310
    %v653 = vunpack.i.l.s16 %v324
    %v654 = vunpack.i.h.s16 %v324
    %v655 = vunpack.i.l.s16 %v332
    %v656 = vunpack.i.h.s16 %v332
    %v657 = vunpack.i.l.s16 %v334
    %v658 = vunpack.i.h.s16 %v334
    %v659 = vunpack.i.l.s16 %v317
    %v660 = vunpack.i.h.s16 %v317
    %v661 = vunpack.i.l.s16 %v331
    %v662 = vunpack.i.h.s16 %v331
    %v663 = vunpack.i.l.s16 %v333
    %v664 = vunpack.i.h.s16 %v333
    %v665 = vunpack.i.l.s16 %v335
    %v666 = vunpack.i.l.s16 %v360
    %v667 = vunpack.i.h.s16 %v360
    %v668 = vunpack.i.l.s16 %v374
    %v669 = vunpack.i.h.s16 %v374
    %v670 = vunpack.i.l.s16 %v382
    %v671 = vunpack.i.h.s16 %v382
    %v672 = vunpack.i.l.s16 %v384
    %v673 = vunpack.i.h.s16 %v384
    %v674 = vunpack.i.l.s16 %v367
    %v675 = vunpack.i.h.s16 %v367
    %v676 = vunpack.i.l.s16 %v381
    %v677 = vunpack.i.h.s16 %v381
    %v678 = vunpack.i.l.s16 %v383
    %v679 = vunpack.i.h.s16 %v383
    %v680 = vunpack.i.l.s16 %v385
    %v681 = vunpack.i.l.s16 %v410
    %v682 = vunpack.i.h.s16 %v410
    %v683 = vunpack.i.l.s16 %v424
    %v684 = vunpack.i.h.s16 %v424
    %v685 = vunpack.i.l.s16 %v432
    %v686 = vunpack.i.h.s16 %v432
    %v687 = vunpack.i.l.s16 %v434
    %v688 = vunpack.i.h.s16 %v434
    %v689 = vunpack.i.l.s16 %v417
    %v690 = vunpack.i.h.s16 %v417
    %v691 = vunpack.i.l.s16 %v431
    %v692 = vunpack.i.h.s16 %v431
    %v693 = vunpack.i.l.s16 %v433
    %v694 = vunpack.i.h.s16 %v433
    %v695 = vunpack.i.l.s16 %v435
    %v696 = vunpack.i.l.s16 %v460
    %v697 = vunpack.i.h.s16 %v460
    %v698 = vunpack.i.l.s16 %v474
    %v699 = vunpack.i.h.s16 %v474
    %v700 = vunpack.i.l.s16 %v482
    %v701 = vunpack.i.h.s16 %v482
    %v702 = vunpack.i.l.s16 %v484
    %v703 = vunpack.i.h.s16 %v484
    %v704 = vunpack.i.l.s16 %v467
    %v705 = vunpack.i.h.s16 %v467
    %v706 = vunpack.i.l.s16 %v481
    %v707 = vunpack.i.h.s16 %v481
    %v708 = vunpack.i.l.s16 %v483
    %v709 = vunpack.i.h.s16 %v483
    %v710 = vunpack.i.l.s16 %v485
    %v711 = vunpack.i.l.s16 %v510
    %v712 = vunpack.i.h.s16 %v510
    %v713 = vunpack.i.l.s16 %v524
    %v714 = vunpack.i.h.s16 %v524
    %v715 = vunpack.i.l.s16 %v532
    %v716 = vunpack.i.h.s16 %v532
    %v717 = vunpack.i.l.s16 %v534
    %v718 = vunpack.i.h.s16 %v534
    %v719 = vunpack.i.l.s16 %v517
    %v720 = vunpack.i.h.s16 %v517
    %v721 = vunpack.i.l.s16 %v531
    %v722 = vunpack.i.h.s16 %v531
    %v723 = vunpack.i.l.s16 %v533
    %v724 = vunpack.i.h.s16 %v533
    %v725 = vunpack.i.l.s16 %v535
    %v726 = vunpack.i.l.s16 %v560
    %v727 = vunpack.i.h.s16 %v560
    %v728 = vunpack.i.l.s16 %v574
    %v729 = vunpack.i.h.s16 %v574
    %v730 = vunpack.i.l.s16 %v582
    %v731 = vunpack.i.h.s16 %v582
    %v732 = vunpack.i.l.s16 %v584
    %v733 = vunpack.i.h.s16 %v584
    %v734 = vunpack.i.l.s16 %v567
    %v735 = vunpack.i.h.s16 %v567
    %v736 = vunpack.i.l.s16 %v581
    %v737 = vunpack.i.h.s16 %v581
    %v738 = vunpack.i.l.s16 %v583
    %v739 = vunpack.i.h.s16 %v583
    %v740 = vunpack.i.l.s16 %v585
    %v741 = vunpack.i.l.s16 %v610
    %v742 = vunpack.i.h.s16 %v610
    %v743 = vunpack.i.l.s16 %v624
    %v744 = vunpack.i.h.s16 %v624
    %v745 = vunpack.i.l.s16 %v632
    %v746 = vunpack.i.h.s16 %v632
    %v747 = vunpack.i.l.s16 %v634
    %v748 = vunpack.i.h.s16 %v634
    %v749 = vunpack.i.l.s16 %v617
    %v750 = vunpack.i.h.s16 %v617
    %v751 = vunpack.i.l.s16 %v631
    %v752 = vunpack.i.h.s16 %v631
    %v753 = vunpack.i.l.s16 %v633
    %v754 = vunpack.i.h.s16 %v633
    %v755 = vunpack.i.l.s16 %v635
    %v756 = vld [vmem:[#allocation3] sm:$0xf]
    %v757 = vld [vmem:[#allocation3 + $0x4] sm:$0xf]
    %v758 = vld [vmem:[#allocation3 + $0x8] sm:$0xf]
    %v759 = vld [vmem:[#allocation3 + $0xc] sm:$0xf]
    %v760 = vld [vmem:[#allocation3 + $0x10] sm:$0xf]
    %v761 = vld [vmem:[#allocation3 + $0x14] sm:$0xf]
    %v762 = vld [vmem:[#allocation3 + $0x18] sm:$0xf]
    %v763 = vld [vmem:[#allocation3 + $0x1c] sm:$0xf]
    %v764 = vld [vmem:[#allocation3 + $0x20] sm:$0xf]
    %v765 = vld [vmem:[#allocation3 + $0x24] sm:$0xf]
    %v766 = vld [vmem:[#allocation3 + $0x28] sm:$0xf]
    %v767 = vld [vmem:[#allocation3 + $0x2c] sm:$0xf]
    %v768 = vld [vmem:[#allocation3 + $0x30] sm:$0xf]
    %v769 = vld [vmem:[#allocation3 + $0x34] sm:$0xf]
    %v770 = vld [vmem:[#allocation3 + $0x38] sm:$0xf]
    %v771 = vld [vmem:[#allocation3 + $0x3c] sm:$0xf]
    %v772 = vld [vmem:[#allocation3 + $0x40] sm:$0xf]
    %v773 = vld [vmem:[#allocation3 + $0x44] sm:$0xf]
    %v774 = vld [vmem:[#allocation3 + $0x48] sm:$0xf]
    %v775 = vld [vmem:[#allocation3 + $0x4c] sm:$0xf]
    %v776 = vld [vmem:[#allocation3 + $0x50] sm:$0xf]
    %v777 = vld [vmem:[#allocation3 + $0x54] sm:$0xf]
    %v778 = vld [vmem:[#allocation3 + $0x58] sm:$0xf]
    %v779 = vld [vmem:[#allocation3 + $0x5c] sm:$0xf]
    %v780 = vld [vmem:[#allocation3 + $0x60] sm:$0xf]
    %v781 = vld [vmem:[#allocation3 + $0x64] sm:$0xf]
    %v782 = vld [vmem:[#allocation3 + $0x68] sm:$0xf]
    %v783 = vld [vmem:[#allocation3 + $0x6c] sm:$0xf]
    %v784 = vld [vmem:[#allocation3 + $0x70] sm:$0xf]
    %v785 = vld [vmem:[#allocation3 + $0x74] sm:$0xf]
    %v786 = vld [vmem:[#allocation3 + $0x78] sm:$0xf]
    %v787 = vld [vmem:[#allocation3 + $0x7c] sm:$0xf]
    %v788 = vpack.i.b16 %v637, %v636
    %v789 = vpack.i.b16 %v639, %v638
    %v790 = vpack.i.b16 %v641, %v640
    %v791 = vpack.i.b16 %v643, %v642
    %v792 = vpack.i.b16 %v645, %v644
    %v793 = vpack.i.b16 %v647, %v646
    %v794 = vpack.i.b16 %v649, %v648
    %v795 = vpack.i.b16 %v651, %v650
    %v796 = vpack.i.b16 %v653, %v652
    %v797 = vpack.i.b16 %v655, %v654
    %v798 = vpack.i.b16 %v657, %v656
    %v799 = vpack.i.b16 %v659, %v658
    %v800 = vpack.i.b16 %v661, %v660
    %v801 = vpack.i.b16 %v663, %v662
    %v802 = vpack.i.b16 %v665, %v664
    %v803 = vpack.i.b16 %v667, %v666
    %v804 = vpack.i.b16 %v669, %v668
    %v805 = vpack.i.b16 %v671, %v670
    %v806 = vpack.i.b16 %v673, %v672
    %v807 = vpack.i.b16 %v675, %v674
    %v808 = vpack.i.b16 %v677, %v676
    %v809 = vpack.i.b16 %v679, %v678
    %v810 = vpack.i.b16 %v681, %v680
    %v811 = vpack.i.b16 %v683, %v682
    %v812 = vpack.i.b16 %v685, %v684
    %v813 = vpack.i.b16 %v687, %v686
    %v814 = vpack.i.b16 %v689, %v688
    %v815 = vpack.i.b16 %v691, %v690
    %v816 = vpack.i.b16 %v693, %v692
    %v817 = vpack.i.b16 %v695, %v694
    %v818 = vpack.i.b16 %v697, %v696
    %v819 = vpack.i.b16 %v699, %v698
    %v820 = vpack.i.b16 %v701, %v700
    %v821 = vpack.i.b16 %v703, %v702
    %v822 = vpack.i.b16 %v705, %v704
    %v823 = vpack.i.b16 %v707, %v706
    %v824 = vpack.i.b16 %v709, %v708
    %v825 = vpack.i.b16 %v711, %v710
    %v826 = vpack.i.b16 %v713, %v712
    %v827 = vpack.i.b16 %v715, %v714
    %v828 = vpack.i.b16 %v717, %v716
    %v829 = vpack.i.b16 %v719, %v718
    %v830 = vpack.i.b16 %v721, %v720
    %v831 = vpack.i.b16 %v723, %v722
    %v832 = vpack.i.b16 %v725, %v724
    %v833 = vpack.i.b16 %v727, %v726
    %v834 = vpack.i.b16 %v729, %v728
    %v835 = vpack.i.b16 %v731, %v730
    %v836 = vpack.i.b16 %v733, %v732
    %v837 = vpack.i.b16 %v735, %v734
    %v838 = vpack.i.b16 %v737, %v736
    %v839 = vpack.i.b16 %v739, %v738
    %v840 = vpack.i.b16 %v741, %v740
    %v841 = vpack.i.b16 %v743, %v742
    %v842 = vpack.i.b16 %v745, %v744
    %v843 = vpack.i.b16 %v747, %v746
    %v844 = vpack.i.b16 %v749, %v748
    %v845 = vpack.i.b16 %v751, %v750
    %v846 = vpack.i.b16 %v753, %v752
    %v847 = vpack.i.b16 %v755, %v754
    %v848 = vcombine.low %v788, %v789
    %v849 = vcombine.low %v790, %v791
    %v850 = vcombine.low %v792, %v793
    %v851 = vcombine.low %v794, %v795
    %v853 = vunpack.c.l.s4 1966171168
    %v854 = vunpack.c.0.s8 %v853
    %v855 = vlaneseq
    %v856 = vshrl.u32 %v855, 7
    %v857 = vsub.s32 %v854, %v856
    %v858 = vrot.slane %v848, %v857
    %v860 = vunpack.c.l.s4 1966171168
    %v861 = vunpack.c.0.s8 %v860
    %v862 = vlaneseq
    %v863 = vshrl.u32 %v862, 7
    %v864 = vsub.s32 %v861, %v863
    %v865 = vrot.slane %v849, %v864
    %v867 = vunpack.c.l.s4 1966171168
    %v868 = vunpack.c.0.s8 %v867
    %v869 = vlaneseq
    %v870 = vshrl.u32 %v869, 7
    %v871 = vsub.s32 %v868, %v870
    %v872 = vrot.slane %v850, %v871
    %v874 = vunpack.c.l.s4 1966171168
    %v875 = vunpack.c.0.s8 %v874
    %v876 = vlaneseq
    %v877 = vshrl.u32 %v876, 7
    %v878 = vsub.s32 %v875, %v877
    %v879 = vrot.slane %v851, %v878
    %v880 = vcombine.low %v858, %v865
    %v881 = vcombine.high %v858, %v865
    %v882 = vcombine.low %v872, %v879
    %v883 = vcombine.high %v872, %v879
    %v885 = vunpack.c.l.s4 1966171168
    %v886 = vunpack.c.0.s8 %v885
    %v887 = vlaneseq
    %v888 = vshrl.u32 %v887, 7
    %v889 = vsub.s32 %v886, %v888
    %v890 = vrot.slane %v880, %v889
    %v892 = vunpack.c.l.s4 1966171168
    %v893 = vunpack.c.0.s8 %v892
    %v894 = vlaneseq
    %v895 = vshrl.u32 %v894, 7
    %v896 = vsub.s32 %v893, %v895
    %v897 = vrot.slane %v881, %v896
    %v899 = vunpack.c.l.s4 1966171168
    %v900 = vunpack.c.0.s8 %v899
    %v901 = vlaneseq
    %v902 = vshrl.u32 %v901, 7
    %v903 = vsub.s32 %v900, %v902
    %v904 = vrot.slane %v882, %v903
    %v906 = vunpack.c.l.s4 1966171168
    %v907 = vunpack.c.0.s8 %v906
    %v908 = vlaneseq
    %v909 = vshrl.u32 %v908, 7
    %v910 = vsub.s32 %v907, %v909
    %v911 = vrot.slane %v883, %v910
    %v912 = vcombine.low %v890, %v904
    %v913 = vcombine.low %v897, %v911
    %v914 = vcombine.low %v796, %v797
    %v915 = vcombine.low %v798, %v799
    %v916 = vcombine.low %v800, %v801
    %v917 = vcombine.low %v802, %v803
    %v919 = vunpack.c.l.s4 1966171168
    %v920 = vunpack.c.0.s8 %v919
    %v921 = vlaneseq
    %v922 = vshrl.u32 %v921, 7
    %v923 = vsub.s32 %v920, %v922
    %v924 = vrot.slane %v914, %v923
    %v926 = vunpack.c.l.s4 1966171168
    %v927 = vunpack.c.0.s8 %v926
    %v928 = vlaneseq
    %v929 = vshrl.u32 %v928, 7
    %v930 = vsub.s32 %v927, %v929
    %v931 = vrot.slane %v915, %v930
    %v933 = vunpack.c.l.s4 1966171168
    %v934 = vunpack.c.0.s8 %v933
    %v935 = vlaneseq
    %v936 = vshrl.u32 %v935, 7
    %v937 = vsub.s32 %v934, %v936
    %v938 = vrot.slane %v916, %v937
    %v940 = vunpack.c.l.s4 1966171168
    %v941 = vunpack.c.0.s8 %v940
    %v942 = vlaneseq
    %v943 = vshrl.u32 %v942, 7
    %v944 = vsub.s32 %v941, %v943
    %v945 = vrot.slane %v917, %v944
    %v946 = vcombine.low %v924, %v931
    %v947 = vcombine.high %v924, %v931
    %v948 = vcombine.low %v938, %v945
    %v949 = vcombine.high %v938, %v945
    %v951 = vunpack.c.l.s4 1966171168
    %v952 = vunpack.c.0.s8 %v951
    %v953 = vlaneseq
    %v954 = vshrl.u32 %v953, 7
    %v955 = vsub.s32 %v952, %v954
    %v956 = vrot.slane %v946, %v955
    %v958 = vunpack.c.l.s4 1966171168
    %v959 = vunpack.c.0.s8 %v958
    %v960 = vlaneseq
    %v961 = vshrl.u32 %v960, 7
    %v962 = vsub.s32 %v959, %v961
    %v963 = vrot.slane %v947, %v962
    %v965 = vunpack.c.l.s4 1966171168
    %v966 = vunpack.c.0.s8 %v965
    %v967 = vlaneseq
    %v968 = vshrl.u32 %v967, 7
    %v969 = vsub.s32 %v966, %v968
    %v970 = vrot.slane %v948, %v969
    %v972 = vunpack.c.l.s4 1966171168
    %v973 = vunpack.c.0.s8 %v972
    %v974 = vlaneseq
    %v975 = vshrl.u32 %v974, 7
    %v976 = vsub.s32 %v973, %v975
    %v977 = vrot.slane %v949, %v976
    %v978 = vcombine.low %v956, %v970
    %v979 = vcombine.low %v963, %v977
    %v980 = vcombine.low %v804, %v805
    %v981 = vcombine.low %v806, %v807
    %v982 = vcombine.low %v808, %v809
    %v983 = vcombine.low %v810, %v811
    %v985 = vunpack.c.l.s4 1966171168
    %v986 = vunpack.c.0.s8 %v985
    %v987 = vlaneseq
    %v988 = vshrl.u32 %v987, 7
    %v989 = vsub.s32 %v986, %v988
    %v990 = vrot.slane %v980, %v989
    %v992 = vunpack.c.l.s4 1966171168
    %v993 = vunpack.c.0.s8 %v992
    %v994 = vlaneseq
    %v995 = vshrl.u32 %v994, 7
    %v996 = vsub.s32 %v993, %v995
    %v997 = vrot.slane %v981, %v996
    %v999 = vunpack.c.l.s4 1966171168
    %v1000 = vunpack.c.0.s8 %v999
    %v1001 = vlaneseq
    %v1002 = vshrl.u32 %v1001, 7
    %v1003 = vsub.s32 %v1000, %v1002
    %v1004 = vrot.slane %v982, %v1003
    %v1006 = vunpack.c.l.s4 1966171168
    %v1007 = vunpack.c.0.s8 %v1006
    %v1008 = vlaneseq
    %v1009 = vshrl.u32 %v1008, 7
    %v1010 = vsub.s32 %v1007, %v1009
    %v1011 = vrot.slane %v983, %v1010
    %v1012 = vcombine.low %v990, %v997
    %v1013 = vcombine.high %v990, %v997
    %v1014 = vcombine.low %v1004, %v1011
    %v1015 = vcombine.high %v1004, %v1011
    %v1017 = vunpack.c.l.s4 1966171168
    %v1018 = vunpack.c.0.s8 %v1017
    %v1019 = vlaneseq
    %v1020 = vshrl.u32 %v1019, 7
    %v1021 = vsub.s32 %v1018, %v1020
    %v1022 = vrot.slane %v1012, %v1021
    %v1024 = vunpack.c.l.s4 1966171168
    %v1025 = vunpack.c.0.s8 %v1024
    %v1026 = vlaneseq
    %v1027 = vshrl.u32 %v1026, 7
    %v1028 = vsub.s32 %v1025, %v1027
    %v1029 = vrot.slane %v1013, %v1028
    %v1031 = vunpack.c.l.s4 1966171168
    %v1032 = vunpack.c.0.s8 %v1031
    %v1033 = vlaneseq
    %v1034 = vshrl.u32 %v1033, 7
    %v1035 = vsub.s32 %v1032, %v1034
    %v1036 = vrot.slane %v1014, %v1035
    %v1038 = vunpack.c.l.s4 1966171168
    %v1039 = vunpack.c.0.s8 %v1038
    %v1040 = vlaneseq
    %v1041 = vshrl.u32 %v1040, 7
    %v1042 = vsub.s32 %v1039, %v1041
    %v1043 = vrot.slane %v1015, %v1042
    %v1044 = vcombine.low %v1022, %v1036
    %v1045 = vcombine.low %v1029, %v1043
    %v1046 = vcombine.low %v812, %v813
    %v1047 = vcombine.low %v814, %v815
    %v1048 = vcombine.low %v816, %v817
    %v1049 = vcombine.low %v818, %v819
    %v1051 = vunpack.c.l.s4 1966171168
    %v1052 = vunpack.c.0.s8 %v1051
    %v1053 = vlaneseq
    %v1054 = vshrl.u32 %v1053, 7
    %v1055 = vsub.s32 %v1052, %v1054
    %v1056 = vrot.slane %v1046, %v1055
    %v1058 = vunpack.c.l.s4 1966171168
    %v1059 = vunpack.c.0.s8 %v1058
    %v1060 = vlaneseq
    %v1061 = vshrl.u32 %v1060, 7
    %v1062 = vsub.s32 %v1059, %v1061
    %v1063 = vrot.slane %v1047, %v1062
    %v1065 = vunpack.c.l.s4 1966171168
    %v1066 = vunpack.c.0.s8 %v1065
    %v1067 = vlaneseq
    %v1068 = vshrl.u32 %v1067, 7
    %v1069 = vsub.s32 %v1066, %v1068
    %v1070 = vrot.slane %v1048, %v1069
    %v1072 = vunpack.c.l.s4 1966171168
    %v1073 = vunpack.c.0.s8 %v1072
    %v1074 = vlaneseq
    %v1075 = vshrl.u32 %v1074, 7
    %v1076 = vsub.s32 %v1073, %v1075
    %v1077 = vrot.slane %v1049, %v1076
    %v1078 = vcombine.low %v1056, %v1063
    %v1079 = vcombine.high %v1056, %v1063
    %v1080 = vcombine.low %v1070, %v1077
    %v1081 = vcombine.high %v1070, %v1077
    %v1083 = vunpack.c.l.s4 1966171168
    %v1084 = vunpack.c.0.s8 %v1083
    %v1085 = vlaneseq
    %v1086 = vshrl.u32 %v1085, 7
    %v1087 = vsub.s32 %v1084, %v1086
    %v1088 = vrot.slane %v1078, %v1087
    %v1090 = vunpack.c.l.s4 1966171168
    %v1091 = vunpack.c.0.s8 %v1090
    %v1092 = vlaneseq
    %v1093 = vshrl.u32 %v1092, 7
    %v1094 = vsub.s32 %v1091, %v1093
    %v1095 = vrot.slane %v1079, %v1094
    %v1097 = vunpack.c.l.s4 1966171168
    %v1098 = vunpack.c.0.s8 %v1097
    %v1099 = vlaneseq
    %v1100 = vshrl.u32 %v1099, 7
    %v1101 = vsub.s32 %v1098, %v1100
    %v1102 = vrot.slane %v1080, %v1101
    %v1104 = vunpack.c.l.s4 1966171168
    %v1105 = vunpack.c.0.s8 %v1104
    %v1106 = vlaneseq
    %v1107 = vshrl.u32 %v1106, 7
    %v1108 = vsub.s32 %v1105, %v1107
    %v1109 = vrot.slane %v1081, %v1108
    %v1110 = vcombine.low %v1088, %v1102
    %v1111 = vcombine.low %v1095, %v1109
    %v1112 = vcombine.low %v820, %v821
    %v1113 = vcombine.low %v822, %v823
    %v1114 = vcombine.low %v824, %v825
    %v1115 = vcombine.low %v826, %v827
    %v1117 = vunpack.c.l.s4 1966171168
    %v1118 = vunpack.c.0.s8 %v1117
    %v1119 = vlaneseq
    %v1120 = vshrl.u32 %v1119, 7
    %v1121 = vsub.s32 %v1118, %v1120
    %v1122 = vrot.slane %v1112, %v1121
    %v1124 = vunpack.c.l.s4 1966171168
    %v1125 = vunpack.c.0.s8 %v1124
    %v1126 = vlaneseq
    %v1127 = vshrl.u32 %v1126, 7
    %v1128 = vsub.s32 %v1125, %v1127
    %v1129 = vrot.slane %v1113, %v1128
    %v1131 = vunpack.c.l.s4 1966171168
    %v1132 = vunpack.c.0.s8 %v1131
    %v1133 = vlaneseq
    %v1134 = vshrl.u32 %v1133, 7
    %v1135 = vsub.s32 %v1132, %v1134
    %v1136 = vrot.slane %v1114, %v1135
    %v1138 = vunpack.c.l.s4 1966171168
    %v1139 = vunpack.c.0.s8 %v1138
    %v1140 = vlaneseq
    %v1141 = vshrl.u32 %v1140, 7
    %v1142 = vsub.s32 %v1139, %v1141
    %v1143 = vrot.slane %v1115, %v1142
    %v1144 = vcombine.low %v1122, %v1129
    %v1145 = vcombine.high %v1122, %v1129
    %v1146 = vcombine.low %v1136, %v1143
    %v1147 = vcombine.high %v1136, %v1143
    %v1149 = vunpack.c.l.s4 1966171168
    %v1150 = vunpack.c.0.s8 %v1149
    %v1151 = vlaneseq
    %v1152 = vshrl.u32 %v1151, 7
    %v1153 = vsub.s32 %v1150, %v1152
    %v1154 = vrot.slane %v1144, %v1153
    %v1156 = vunpack.c.l.s4 1966171168
    %v1157 = vunpack.c.0.s8 %v1156
    %v1158 = vlaneseq
    %v1159 = vshrl.u32 %v1158, 7
    %v1160 = vsub.s32 %v1157, %v1159
    %v1161 = vrot.slane %v1145, %v1160
    %v1163 = vunpack.c.l.s4 1966171168
    %v1164 = vunpack.c.0.s8 %v1163
    %v1165 = vlaneseq
    %v1166 = vshrl.u32 %v1165, 7
    %v1167 = vsub.s32 %v1164, %v1166
    %v1168 = vrot.slane %v1146, %v1167
    %v1170 = vunpack.c.l.s4 1966171168
    %v1171 = vunpack.c.0.s8 %v1170
    %v1172 = vlaneseq
    %v1173 = vshrl.u32 %v1172, 7
    %v1174 = vsub.s32 %v1171, %v1173
    %v1175 = vrot.slane %v1147, %v1174
    %v1176 = vcombine.low %v1154, %v1168
    %v1177 = vcombine.low %v1161, %v1175
    %v1178 = vcombine.low %v828, %v829
    %v1179 = vcombine.low %v830, %v831
    %v1180 = vcombine.low %v832, %v833
    %v1181 = vcombine.low %v834, %v835
    %v1183 = vunpack.c.l.s4 1966171168
    %v1184 = vunpack.c.0.s8 %v1183
    %v1185 = vlaneseq
    %v1186 = vshrl.u32 %v1185, 7
    %v1187 = vsub.s32 %v1184, %v1186
    %v1188 = vrot.slane %v1178, %v1187
    %v1190 = vunpack.c.l.s4 1966171168
    %v1191 = vunpack.c.0.s8 %v1190
    %v1192 = vlaneseq
    %v1193 = vshrl.u32 %v1192, 7
    %v1194 = vsub.s32 %v1191, %v1193
    %v1195 = vrot.slane %v1179, %v1194
    %v1197 = vunpack.c.l.s4 1966171168
    %v1198 = vunpack.c.0.s8 %v1197
    %v1199 = vlaneseq
    %v1200 = vshrl.u32 %v1199, 7
    %v1201 = vsub.s32 %v1198, %v1200
    %v1202 = vrot.slane %v1180, %v1201
    %v1204 = vunpack.c.l.s4 1966171168
    %v1205 = vunpack.c.0.s8 %v1204
    %v1206 = vlaneseq
    %v1207 = vshrl.u32 %v1206, 7
    %v1208 = vsub.s32 %v1205, %v1207
    %v1209 = vrot.slane %v1181, %v1208
    %v1210 = vcombine.low %v1188, %v1195
    %v1211 = vcombine.high %v1188, %v1195
    %v1212 = vcombine.low %v1202, %v1209
    %v1213 = vcombine.high %v1202, %v1209
    %v1215 = vunpack.c.l.s4 1966171168
    %v1216 = vunpack.c.0.s8 %v1215
    %v1217 = vlaneseq
    %v1218 = vshrl.u32 %v1217, 7
    %v1219 = vsub.s32 %v1216, %v1218
    %v1220 = vrot.slane %v1210, %v1219
    %v1222 = vunpack.c.l.s4 1966171168
    %v1223 = vunpack.c.0.s8 %v1222
    %v1224 = vlaneseq
    %v1225 = vshrl.u32 %v1224, 7
    %v1226 = vsub.s32 %v1223, %v1225
    %v1227 = vrot.slane %v1211, %v1226
    %v1229 = vunpack.c.l.s4 1966171168
    %v1230 = vunpack.c.0.s8 %v1229
    %v1231 = vlaneseq
    %v1232 = vshrl.u32 %v1231, 7
    %v1233 = vsub.s32 %v1230, %v1232
    %v1234 = vrot.slane %v1212, %v1233
    %v1236 = vunpack.c.l.s4 1966171168
    %v1237 = vunpack.c.0.s8 %v1236
    %v1238 = vlaneseq
    %v1239 = vshrl.u32 %v1238, 7
    %v1240 = vsub.s32 %v1237, %v1239
    %v1241 = vrot.slane %v1213, %v1240
    %v1242 = vcombine.low %v1220, %v1234
    %v1243 = vcombine.low %v1227, %v1241
    %v1244 = vcombine.low %v836, %v837
    %v1245 = vcombine.low %v838, %v839
    %v1246 = vcombine.low %v840, %v841
    %v1247 = vcombine.low %v842, %v843
    %v1249 = vunpack.c.l.s4 1966171168
    %v1250 = vunpack.c.0.s8 %v1249
    %v1251 = vlaneseq
    %v1252 = vshrl.u32 %v1251, 7
    %v1253 = vsub.s32 %v1250, %v1252
    %v1254 = vrot.slane %v1244, %v1253
    %v1256 = vunpack.c.l.s4 1966171168
    %v1257 = vunpack.c.0.s8 %v1256
    %v1258 = vlaneseq
    %v1259 = vshrl.u32 %v1258, 7
    %v1260 = vsub.s32 %v1257, %v1259
    %v1261 = vrot.slane %v1245, %v1260
    %v1263 = vunpack.c.l.s4 1966171168
    %v1264 = vunpack.c.0.s8 %v1263
    %v1265 = vlaneseq
    %v1266 = vshrl.u32 %v1265, 7
    %v1267 = vsub.s32 %v1264, %v1266
    %v1268 = vrot.slane %v1246, %v1267
    %v1270 = vunpack.c.l.s4 1966171168
    %v1271 = vunpack.c.0.s8 %v1270
    %v1272 = vlaneseq
    %v1273 = vshrl.u32 %v1272, 7
    %v1274 = vsub.s32 %v1271, %v1273
    %v1275 = vrot.slane %v1247, %v1274
    %v1276 = vcombine.low %v1254, %v1261
    %v1277 = vcombine.high %v1254, %v1261
    %v1278 = vcombine.low %v1268, %v1275
    %v1279 = vcombine.high %v1268, %v1275
    %v1281 = vunpack.c.l.s4 1966171168
    %v1282 = vunpack.c.0.s8 %v1281
    %v1283 = vlaneseq
    %v1284 = vshrl.u32 %v1283, 7
    %v1285 = vsub.s32 %v1282, %v1284
    %v1286 = vrot.slane %v1276, %v1285
    %v1288 = vunpack.c.l.s4 1966171168
    %v1289 = vunpack.c.0.s8 %v1288
    %v1290 = vlaneseq
    %v1291 = vshrl.u32 %v1290, 7
    %v1292 = vsub.s32 %v1289, %v1291
    %v1293 = vrot.slane %v1277, %v1292
    %v1295 = vunpack.c.l.s4 1966171168
    %v1296 = vunpack.c.0.s8 %v1295
    %v1297 = vlaneseq
    %v1298 = vshrl.u32 %v1297, 7
    %v1299 = vsub.s32 %v1296, %v1298
    %v1300 = vrot.slane %v1278, %v1299
    %v1302 = vunpack.c.l.s4 1966171168
    %v1303 = vunpack.c.0.s8 %v1302
    %v1304 = vlaneseq
    %v1305 = vshrl.u32 %v1304, 7
    %v1306 = vsub.s32 %v1303, %v1305
    %v1307 = vrot.slane %v1279, %v1306
    %v1308 = vcombine.low %v1286, %v1300
    %v1309 = vcombine.low %v1293, %v1307
    %v1310 = vcombine.low %v844, %v845
    %v1311 = vcombine.low %v846, %v847
    %v1313 = vunpack.c.l.s4 1966171168
    %v1314 = vunpack.c.0.s8 %v1313
    %v1315 = vlaneseq
    %v1316 = vshrl.u32 %v1315, 7
    %v1317 = vsub.s32 %v1314, %v1316
    %v1318 = vrot.slane %v1310, %v1317
    %v1320 = vunpack.c.l.s4 1966171168
    %v1321 = vunpack.c.0.s8 %v1320
    %v1322 = vlaneseq
    %v1323 = vshrl.u32 %v1322, 7
    %v1324 = vsub.s32 %v1321, %v1323
    %v1325 = vrot.slane %v1311, %v1324
    %v1326 = vcombine.low %v1318, %v1325
    %v1327 = vcombine.high %v1318, %v1325
    %v1329 = vunpack.c.l.s4 1966171168
    %v1330 = vunpack.c.0.s8 %v1329
    %v1331 = vlaneseq
    %v1332 = vshrl.u32 %v1331, 7
    %v1333 = vsub.s32 %v1330, %v1332
    %v1334 = vrot.slane %v1326, %v1333
    %v1336 = vunpack.c.l.s4 1966171168
    %v1337 = vunpack.c.0.s8 %v1336
    %v1338 = vlaneseq
    %v1339 = vshrl.u32 %v1338, 7
    %v1340 = vsub.s32 %v1337, %v1339
    %v1341 = vrot.slane %v1327, %v1340
    %v1390 = vunpack.c.l.b16 %v756
    %v1391 = vunpack.c.l.b16 %v757
    %v1392 = vunpack.c.l.b16 %v758
    %v1393 = vunpack.c.l.b16 %v759
    %v1394 = vunpack.c.l.b16 %v760
    %v1395 = vunpack.c.l.b16 %v761
    %v1396 = vunpack.c.l.b16 %v762
    %v1397 = vunpack.c.l.b16 %v763
    %v1398 = vunpack.c.l.b16 %v764
    %v1399 = vunpack.c.l.b16 %v765
    %v1400 = vunpack.c.l.b16 %v766
    %v1401 = vunpack.c.l.b16 %v767
    %v1402 = vunpack.c.l.b16 %v768
    %v1403 = vunpack.c.l.b16 %v769
    %v1404 = vunpack.c.l.b16 %v770
    %v1405 = vunpack.c.l.b16 %v771
    %v1406 = vunpack.c.l.b16 %v772
    %v1407 = vunpack.c.l.b16 %v773
    %v1408 = vunpack.c.l.b16 %v774
    %v1409 = vunpack.c.l.b16 %v775
    %v1410 = vunpack.c.l.b16 %v776
    %v1411 = vunpack.c.l.b16 %v777
    %v1412 = vunpack.c.l.b16 %v778
    %v1413 = vunpack.c.l.b16 %v779
    %v1414 = vunpack.c.l.b16 %v780
    %v1415 = vunpack.c.l.b16 %v781
    %v1416 = vunpack.c.l.b16 %v782
    %v1417 = vunpack.c.l.b16 %v783
    %v1418 = vunpack.c.l.b16 %v784
    %v1419 = vunpack.c.l.b16 %v785
    %v1420 = vunpack.c.l.b16 %v786
    %v1421 = vunpack.c.l.b16 %v787
    %v1422 = vpack.c.b16 %v1391, %v1390
    %v1423 = vpack.c.b16 %v1393, %v1392
    %v1424 = vpack.c.b16 %v1395, %v1394
    %v1425 = vpack.c.b16 %v1397, %v1396
    %v1426 = vpack.c.b16 %v1399, %v1398
    %v1427 = vpack.c.b16 %v1401, %v1400
    %v1428 = vpack.c.b16 %v1403, %v1402
    %v1429 = vpack.c.b16 %v1405, %v1404
    %v1430 = vpack.c.b16 %v1407, %v1406
    %v1431 = vpack.c.b16 %v1409, %v1408
    %v1432 = vpack.c.b16 %v1411, %v1410
    %v1433 = vpack.c.b16 %v1413, %v1412
    %v1434 = vpack.c.b16 %v1415, %v1414
    %v1435 = vpack.c.b16 %v1417, %v1416
    %v1436 = vpack.c.b16 %v1419, %v1418
    %v1437 = vpack.c.b16 %v1421, %v1420
    %1454 = vmatprep.subr.bf16.mxu0 0
    %1455 = vmatpush1.bf16.msra.mxu0 %v1422
    %1456 = vmatprep.subr.bf16.mxu0 0
    %1457 = vmatpush1.bf16.msra.mxu0 %v1423
    %1458 = vmatprep.subr.bf16.mxu0 0
    %1459 = vmatpush1.bf16.msra.mxu0 %v1424
    %1460 = vmatprep.subr.bf16.mxu0 0
    %1461 = vmatpush1.bf16.msra.mxu0 %v1425
    %1462 = vmatprep.subr.bf16.mxu0 0
    %1463 = vmatpush1.bf16.msra.mxu0 %v1426
    %1464 = vmatprep.subr.bf16.mxu0 0
    %1465 = vmatpush1.bf16.msra.mxu0 %v1427
    %1466 = vmatprep.subr.bf16.mxu0 0
    %1467 = vmatpush1.bf16.msra.mxu0 %v1428
    %1468 = vmatprep.subr.bf16.mxu0 0
    %1469 = vmatpush1.bf16.msra.mxu0 %v1429
    %1470 = vmatprep.subr.bf16.mxu0 0
    %1471 = vmatpush1.bf16.msra.mxu0 %v1430
    %1472 = vmatprep.subr.bf16.mxu0 0
    %1473 = vmatpush1.bf16.msra.mxu0 %v1431
    %1474 = vmatprep.subr.bf16.mxu0 0
    %1475 = vmatpush1.bf16.msra.mxu0 %v1432
    %1476 = vmatprep.subr.bf16.mxu0 0
    %1477 = vmatpush1.bf16.msra.mxu0 %v1433
    %1478 = vmatprep.subr.bf16.mxu0 0
    %1479 = vmatpush1.bf16.msra.mxu0 %v1434
    %1480 = vmatprep.subr.bf16.mxu0 0
    %1481 = vmatpush1.bf16.msra.mxu0 %v1435
    %1482 = vmatprep.subr.bf16.mxu0 0
    %1483 = vmatpush1.bf16.msra.mxu0 %v1436
    %1484 = vmatprep.subr.bf16.mxu0 0
    %1485 = vmatpush1.bf16.msra.mxu0 %v1437
    %1486 = vmatprep.mubr.bf16.mxu0 %v913
    %1487 = vmatmul.mubr.bf16.gmra.mrb[0].mxu0 %v912
    %v1488 = vpop.f32.mrb[0].mxu0
    %v1489 = vadd.f32 0.0, %v1488
    %v1490 = vpop.f32.mrb[0].mxu0
    %v1491 = vpop.f32.mrb[0].mxu0
    %v1492 = vadd.f32 0.0, %v1491
    %v1493 = vpop.f32.mrb[0].mxu0
    %1494 = vmatprep.mubr.bf16.mxu0 %v979
    %1495 = vmatmul.mubr.bf16.gmra.mrb[0].mxu0 %v978
    %v1496 = vpop.f32.mrb[0].mxu0
    %v1497 = vadd.f32 0.0, %v1496
    %v1498 = vpop.f32.mrb[0].mxu0
    %v1499 = vpop.f32.mrb[0].mxu0
    %v1500 = vadd.f32 0.0, %v1499
    %v1501 = vpop.f32.mrb[0].mxu0
    %1502 = vmatprep.mubr.bf16.mxu0 %v1045
    %1503 = vmatmul.mubr.bf16.gmra.mrb[0].mxu0 %v1044
    %v1504 = vpop.f32.mrb[0].mxu0
    %v1505 = vadd.f32 0.0, %v1504
    %v1506 = vpop.f32.mrb[0].mxu0
    %v1507 = vpop.f32.mrb[0].mxu0
    %v1508 = vadd.f32 0.0, %v1507
    %v1509 = vpop.f32.mrb[0].mxu0
    %1510 = vmatprep.mubr.bf16.mxu0 %v1111
    %1511 = vmatmul.mubr.bf16.gmra.mrb[0].mxu0 %v1110
    %v1512 = vpop.f32.mrb[0].mxu0
    %v1513 = vadd.f32 0.0, %v1512
    %v1514 = vpop.f32.mrb[0].mxu0
    %v1515 = vpop.f32.mrb[0].mxu0
    %v1516 = vadd.f32 0.0, %v1515
    %v1517 = vpop.f32.mrb[0].mxu0
    %1518 = vmatprep.mubr.bf16.mxu0 %v1177
    %1519 = vmatmul.mubr.bf16.gmra.mrb[0].mxu0 %v1176
    %v1520 = vpop.f32.mrb[0].mxu0
    %v1521 = vadd.f32 0.0, %v1520
    %v1522 = vpop.f32.mrb[0].mxu0
    %v1523 = vpop.f32.mrb[0].mxu0
    %v1524 = vadd.f32 0.0, %v1523
    %v1525 = vpop.f32.mrb[0].mxu0
    %1526 = vmatprep.mubr.bf16.mxu0 %v1243
    %1527 = vmatmul.mubr.bf16.gmra.mrb[0].mxu0 %v1242
    %v1528 = vpop.f32.mrb[0].mxu0
    %v1529 = vadd.f32 0.0, %v1528
    %v1530 = vpop.f32.mrb[0].mxu0
    %v1531 = vpop.f32.mrb[0].mxu0
    %v1532 = vadd.f32 0.0, %v1531
    %v1533 = vpop.f32.mrb[0].mxu0
    %1534 = vmatprep.mubr.bf16.mxu0 %v1309
    %1535 = vmatmul.mubr.bf16.gmra.mrb[0].mxu0 %v1308
    %v1536 = vpop.f32.mrb[0].mxu0
    %v1537 = vadd.f32 0.0, %v1536
    %v1538 = vpop.f32.mrb[0].mxu0
    %v1539 = vpop.f32.mrb[0].mxu0
    %v1540 = vadd.f32 0.0, %v1539
    %v1541 = vpop.f32.mrb[0].mxu0
    %1542 = vmatprep.mubr.bf16.mxu0 %v1341
    %1543 = vmatmul.mubr.bf16.gmra.mrb[0].mxu0 %v1334
    %v1544 = vpop.f32.mrb[0].mxu0
    %v1545 = vadd.f32 0.0, %v1544
    %v1546 = vpop.f32.mrb[0].mxu0
    %v1547 = vpop.f32.mrb[0].mxu0
    %v1548 = vpop.f32.mrb[0].mxu0
    %1549 = vdwg.mxu0
    %v1550 = vmax.f32 %v1489, 0.0
    %v1551 = vmax.f32 %v1492, 0.0
    %v1552 = vmax.f32 %v1497, 0.0
    %v1553 = vmax.f32 %v1500, 0.0
    %v1554 = vmax.f32 %v1505, 0.0
    %v1555 = vmax.f32 %v1508, 0.0
    %v1556 = vmax.f32 %v1513, 0.0
    %v1557 = vmax.f32 %v1516, 0.0
    %v1558 = vmax.f32 %v1521, 0.0
    %v1559 = vmax.f32 %v1524, 0.0
    %v1560 = vmax.f32 %v1529, 0.0
    %v1561 = vmax.f32 %v1532, 0.0
    %v1562 = vmax.f32 %v1537, 0.0
    %v1563 = vmax.f32 %v1540, 0.0
    %v1564 = vmax.f32 %v1545, 0.0
    %v1565 = vpack.c.bf16 %v1551, %v1550
    %v1566 = vpack.c.bf16 %v1553, %v1552
    %v1567 = vpack.c.bf16 %v1555, %v1554
    %v1568 = vpack.c.bf16 %v1557, %v1556
    %v1569 = vpack.c.bf16 %v1559, %v1558
    %v1570 = vpack.c.bf16 %v1561, %v1560
    %v1571 = vpack.c.bf16 %v1563, %v1562
    %v1572 = vpack.c.bf16 %v1564, %v1564
    %v1581 = vcombine.high %v1565, %v1565
    %v1583 = vunpack.c.l.s4 1966171168
    %v1584 = vunpack.c.0.s8 %v1583
    %v1585 = vlaneseq
    %v1586 = vshrl.u32 %v1585, 7
    %v1587 = vsub.s32 %v1584, %v1586
    %v1588 = vrot.slane %v1565, %v1587
    %v1590 = vunpack.c.l.s4 1966171168
    %v1591 = vunpack.c.0.s8 %v1590
    %v1592 = vlaneseq
    %v1593 = vshrl.u32 %v1592, 7
    %v1594 = vsub.s32 %v1591, %v1593
    %v1595 = vrot.slane %v1581, %v1594
    %v1596 = vcombine.high %v1588, %v1588
    %v1597 = vcombine.high %v1595, %v1595
    %v1599 = vunpack.c.l.s4 1966171168
    %v1600 = vunpack.c.0.s8 %v1599
    %v1601 = vlaneseq
    %v1602 = vshrl.u32 %v1601, 7
    %v1603 = vsub.s32 %v1600, %v1602
    %v1604 = vrot.slane %v1588, %v1603
    %v1606 = vunpack.c.l.s4 1966171168
    %v1607 = vunpack.c.0.s8 %v1606
    %v1608 = vlaneseq
    %v1609 = vshrl.u32 %v1608, 7
    %v1610 = vsub.s32 %v1607, %v1609
    %v1611 = vrot.slane %v1595, %v1610
    %v1613 = vunpack.c.l.s4 1966171168
    %v1614 = vunpack.c.0.s8 %v1613
    %v1615 = vlaneseq
    %v1616 = vshrl.u32 %v1615, 7
    %v1617 = vsub.s32 %v1614, %v1616
    %v1618 = vrot.slane %v1596, %v1617
    %v1620 = vunpack.c.l.s4 1966171168
    %v1621 = vunpack.c.0.s8 %v1620
    %v1622 = vlaneseq
    %v1623 = vshrl.u32 %v1622, 7
    %v1624 = vsub.s32 %v1621, %v1623
    %v1625 = vrot.slane %v1597, %v1624
    %v1626 = vcombine.high %v1604, %v1604
    %v1627 = vcombine.high %v1611, %v1611
    %v1628 = vcombine.high %v1618, %v1618
    %v1629 = vcombine.high %v1625, %v1625
    %v1630 = vcombine.high %v1566, %v1566
    %v1632 = vunpack.c.l.s4 1966171168
    %v1633 = vunpack.c.0.s8 %v1632
    %v1634 = vlaneseq
    %v1635 = vshrl.u32 %v1634, 7
    %v1636 = vsub.s32 %v1633, %v1635
    %v1637 = vrot.slane %v1566, %v1636
    %v1639 = vunpack.c.l.s4 1966171168
    %v1640 = vunpack.c.0.s8 %v1639
    %v1641 = vlaneseq
    %v1642 = vshrl.u32 %v1641, 7
    %v1643 = vsub.s32 %v1640, %v1642
    %v1644 = vrot.slane %v1630, %v1643
    %v1645 = vcombine.high %v1637, %v1637
    %v1646 = vcombine.high %v1644, %v1644
    %v1648 = vunpack.c.l.s4 1966171168
    %v1649 = vunpack.c.0.s8 %v1648
    %v1650 = vlaneseq
    %v1651 = vshrl.u32 %v1650, 7
    %v1652 = vsub.s32 %v1649, %v1651
    %v1653 = vrot.slane %v1637, %v1652
    %v1655 = vunpack.c.l.s4 1966171168
    %v1656 = vunpack.c.0.s8 %v1655
    %v1657 = vlaneseq
    %v1658 = vshrl.u32 %v1657, 7
    %v1659 = vsub.s32 %v1656, %v1658
    %v1660 = vrot.slane %v1644, %v1659
    %v1662 = vunpack.c.l.s4 1966171168
    %v1663 = vunpack.c.0.s8 %v1662
    %v1664 = vlaneseq
    %v1665 = vshrl.u32 %v1664, 7
    %v1666 = vsub.s32 %v1663, %v1665
    %v1667 = vrot.slane %v1645, %v1666
    %v1669 = vunpack.c.l.s4 1966171168
    %v1670 = vunpack.c.0.s8 %v1669
    %v1671 = vlaneseq
    %v1672 = vshrl.u32 %v1671, 7
    %v1673 = vsub.s32 %v1670, %v1672
    %v1674 = vrot.slane %v1646, %v1673
    %v1675 = vcombine.high %v1653, %v1653
    %v1676 = vcombine.high %v1660, %v1660
    %v1677 = vcombine.high %v1667, %v1667
    %v1678 = vcombine.high %v1674, %v1674
    %v1679 = vcombine.high %v1567, %v1567
    %v1681 = vunpack.c.l.s4 1966171168
    %v1682 = vunpack.c.0.s8 %v1681
    %v1683 = vlaneseq
    %v1684 = vshrl.u32 %v1683, 7
    %v1685 = vsub.s32 %v1682, %v1684
    %v1686 = vrot.slane %v1567, %v1685
    %v1688 = vunpack.c.l.s4 1966171168
    %v1689 = vunpack.c.0.s8 %v1688
    %v1690 = vlaneseq
    %v1691 = vshrl.u32 %v1690, 7
    %v1692 = vsub.s32 %v1689, %v1691
    %v1693 = vrot.slane %v1679, %v1692
    %v1694 = vcombine.high %v1686, %v1686
    %v1695 = vcombine.high %v1693, %v1693
    %v1697 = vunpack.c.l.s4 1966171168
    %v1698 = vunpack.c.0.s8 %v1697
    %v1699 = vlaneseq
    %v1700 = vshrl.u32 %v1699, 7
    %v1701 = vsub.s32 %v1698, %v1700
    %v1702 = vrot.slane %v1686, %v1701
    %v1704 = vunpack.c.l.s4 1966171168
    %v1705 = vunpack.c.0.s8 %v1704
    %v1706 = vlaneseq
    %v1707 = vshrl.u32 %v1706, 7
    %v1708 = vsub.s32 %v1705, %v1707
    %v1709 = vrot.slane %v1693, %v1708
    %v1711 = vunpack.c.l.s4 1966171168
    %v1712 = vunpack.c.0.s8 %v1711
    %v1713 = vlaneseq
    %v1714 = vshrl.u32 %v1713, 7
    %v1715 = vsub.s32 %v1712, %v1714
    %v1716 = vrot.slane %v1694, %v1715
    %v1718 = vunpack.c.l.s4 1966171168
    %v1719 = vunpack.c.0.s8 %v1718
    %v1720 = vlaneseq
    %v1721 = vshrl.u32 %v1720, 7
    %v1722 = vsub.s32 %v1719, %v1721
    %v1723 = vrot.slane %v1695, %v1722
    %v1724 = vcombine.high %v1702, %v1702
    %v1725 = vcombine.high %v1709, %v1709
    %v1726 = vcombine.high %v1716, %v1716
    %v1727 = vcombine.high %v1723, %v1723
    %v1728 = vcombine.high %v1568, %v1568
    %v1730 = vunpack.c.l.s4 1966171168
    %v1731 = vunpack.c.0.s8 %v1730
    %v1732 = vlaneseq
    %v1733 = vshrl.u32 %v1732, 7
    %v1734 = vsub.s32 %v1731, %v1733
    %v1735 = vrot.slane %v1568, %v1734
    %v1737 = vunpack.c.l.s4 1966171168
    %v1738 = vunpack.c.0.s8 %v1737
    %v1739 = vlaneseq
    %v1740 = vshrl.u32 %v1739, 7
    %v1741 = vsub.s32 %v1738, %v1740
    %v1742 = vrot.slane %v1728, %v1741
    %v1743 = vcombine.high %v1735, %v1735
    %v1744 = vcombine.high %v1742, %v1742
    %v1746 = vunpack.c.l.s4 1966171168
    %v1747 = vunpack.c.0.s8 %v1746
    %v1748 = vlaneseq
    %v1749 = vshrl.u32 %v1748, 7
    %v1750 = vsub.s32 %v1747, %v1749
    %v1751 = vrot.slane %v1735, %v1750
    %v1753 = vunpack.c.l.s4 1966171168
    %v1754 = vunpack.c.0.s8 %v1753
    %v1755 = vlaneseq
    %v1756 = vshrl.u32 %v1755, 7
    %v1757 = vsub.s32 %v1754, %v1756
    %v1758 = vrot.slane %v1742, %v1757
    %v1760 = vunpack.c.l.s4 1966171168
    %v1761 = vunpack.c.0.s8 %v1760
    %v1762 = vlaneseq
    %v1763 = vshrl.u32 %v1762, 7
    %v1764 = vsub.s32 %v1761, %v1763
    %v1765 = vrot.slane %v1743, %v1764
    %v1767 = vunpack.c.l.s4 1966171168
    %v1768 = vunpack.c.0.s8 %v1767
    %v1769 = vlaneseq
    %v1770 = vshrl.u32 %v1769, 7
    %v1771 = vsub.s32 %v1768, %v1770
    %v1772 = vrot.slane %v1744, %v1771
    %v1773 = vcombine.high %v1751, %v1751
    %v1774 = vcombine.high %v1758, %v1758
    %v1775 = vcombine.high %v1765, %v1765
    %v1776 = vcombine.high %v1772, %v1772
    %v1777 = vcombine.high %v1569, %v1569
    %v1779 = vunpack.c.l.s4 1966171168
    %v1780 = vunpack.c.0.s8 %v1779
    %v1781 = vlaneseq
    %v1782 = vshrl.u32 %v1781, 7
    %v1783 = vsub.s32 %v1780, %v1782
    %v1784 = vrot.slane %v1569, %v1783
    %v1786 = vunpack.c.l.s4 1966171168
    %v1787 = vunpack.c.0.s8 %v1786
    %v1788 = vlaneseq
    %v1789 = vshrl.u32 %v1788, 7
    %v1790 = vsub.s32 %v1787, %v1789
    %v1791 = vrot.slane %v1777, %v1790
    %v1792 = vcombine.high %v1784, %v1784
    %v1793 = vcombine.high %v1791, %v1791
    %v1795 = vunpack.c.l.s4 1966171168
    %v1796 = vunpack.c.0.s8 %v1795
    %v1797 = vlaneseq
    %v1798 = vshrl.u32 %v1797, 7
    %v1799 = vsub.s32 %v1796, %v1798
    %v1800 = vrot.slane %v1784, %v1799
    %v1802 = vunpack.c.l.s4 1966171168
    %v1803 = vunpack.c.0.s8 %v1802
    %v1804 = vlaneseq
    %v1805 = vshrl.u32 %v1804, 7
    %v1806 = vsub.s32 %v1803, %v1805
    %v1807 = vrot.slane %v1791, %v1806
    %v1809 = vunpack.c.l.s4 1966171168
    %v1810 = vunpack.c.0.s8 %v1809
    %v1811 = vlaneseq
    %v1812 = vshrl.u32 %v1811, 7
    %v1813 = vsub.s32 %v1810, %v1812
    %v1814 = vrot.slane %v1792, %v1813
    %v1816 = vunpack.c.l.s4 1966171168
    %v1817 = vunpack.c.0.s8 %v1816
    %v1818 = vlaneseq
    %v1819 = vshrl.u32 %v1818, 7
    %v1820 = vsub.s32 %v1817, %v1819
    %v1821 = vrot.slane %v1793, %v1820
    %v1822 = vcombine.high %v1800, %v1800
    %v1823 = vcombine.high %v1807, %v1807
    %v1824 = vcombine.high %v1814, %v1814
    %v1825 = vcombine.high %v1821, %v1821
    %v1826 = vcombine.high %v1570, %v1570
    %v1828 = vunpack.c.l.s4 1966171168
    %v1829 = vunpack.c.0.s8 %v1828
    %v1830 = vlaneseq
    %v1831 = vshrl.u32 %v1830, 7
    %v1832 = vsub.s32 %v1829, %v1831
    %v1833 = vrot.slane %v1570, %v1832
    %v1835 = vunpack.c.l.s4 1966171168
    %v1836 = vunpack.c.0.s8 %v1835
    %v1837 = vlaneseq
    %v1838 = vshrl.u32 %v1837, 7
    %v1839 = vsub.s32 %v1836, %v1838
    %v1840 = vrot.slane %v1826, %v1839
    %v1841 = vcombine.high %v1833, %v1833
    %v1842 = vcombine.high %v1840, %v1840
    %v1844 = vunpack.c.l.s4 1966171168
    %v1845 = vunpack.c.0.s8 %v1844
    %v1846 = vlaneseq
    %v1847 = vshrl.u32 %v1846, 7
    %v1848 = vsub.s32 %v1845, %v1847
    %v1849 = vrot.slane %v1833, %v1848
    %v1851 = vunpack.c.l.s4 1966171168
    %v1852 = vunpack.c.0.s8 %v1851
    %v1853 = vlaneseq
    %v1854 = vshrl.u32 %v1853, 7
    %v1855 = vsub.s32 %v1852, %v1854
    %v1856 = vrot.slane %v1840, %v1855
    %v1858 = vunpack.c.l.s4 1966171168
    %v1859 = vunpack.c.0.s8 %v1858
    %v1860 = vlaneseq
    %v1861 = vshrl.u32 %v1860, 7
    %v1862 = vsub.s32 %v1859, %v1861
    %v1863 = vrot.slane %v1841, %v1862
    %v1865 = vunpack.c.l.s4 1966171168
    %v1866 = vunpack.c.0.s8 %v1865
    %v1867 = vlaneseq
    %v1868 = vshrl.u32 %v1867, 7
    %v1869 = vsub.s32 %v1866, %v1868
    %v1870 = vrot.slane %v1842, %v1869
    %v1871 = vcombine.high %v1849, %v1849
    %v1872 = vcombine.high %v1856, %v1856
    %v1873 = vcombine.high %v1863, %v1863
    %v1874 = vcombine.high %v1870, %v1870
    %v1875 = vcombine.high %v1571, %v1571
    %v1877 = vunpack.c.l.s4 1966171168
    %v1878 = vunpack.c.0.s8 %v1877
    %v1879 = vlaneseq
    %v1880 = vshrl.u32 %v1879, 7
    %v1881 = vsub.s32 %v1878, %v1880
    %v1882 = vrot.slane %v1571, %v1881
    %v1884 = vunpack.c.l.s4 1966171168
    %v1885 = vunpack.c.0.s8 %v1884
    %v1886 = vlaneseq
    %v1887 = vshrl.u32 %v1886, 7
    %v1888 = vsub.s32 %v1885, %v1887
    %v1889 = vrot.slane %v1875, %v1888
    %v1890 = vcombine.high %v1882, %v1882
    %v1891 = vcombine.high %v1889, %v1889
    %v1893 = vunpack.c.l.s4 1966171168
    %v1894 = vunpack.c.0.s8 %v1893
    %v1895 = vlaneseq
    %v1896 = vshrl.u32 %v1895, 7
    %v1897 = vsub.s32 %v1894, %v1896
    %v1898 = vrot.slane %v1882, %v1897
    %v1900 = vunpack.c.l.s4 1966171168
    %v1901 = vunpack.c.0.s8 %v1900
    %v1902 = vlaneseq
    %v1903 = vshrl.u32 %v1902, 7
    %v1904 = vsub.s32 %v1901, %v1903
    %v1905 = vrot.slane %v1889, %v1904
    %v1907 = vunpack.c.l.s4 1966171168
    %v1908 = vunpack.c.0.s8 %v1907
    %v1909 = vlaneseq
    %v1910 = vshrl.u32 %v1909, 7
    %v1911 = vsub.s32 %v1908, %v1910
    %v1912 = vrot.slane %v1890, %v1911
    %v1914 = vunpack.c.l.s4 1966171168
    %v1915 = vunpack.c.0.s8 %v1914
    %v1916 = vlaneseq
    %v1917 = vshrl.u32 %v1916, 7
    %v1918 = vsub.s32 %v1915, %v1917
    %v1919 = vrot.slane %v1891, %v1918
    %v1920 = vcombine.high %v1898, %v1898
    %v1921 = vcombine.high %v1905, %v1905
    %v1922 = vcombine.high %v1912, %v1912
    %v1923 = vcombine.high %v1919, %v1919
    %v1925 = vunpack.c.l.s4 1966171168
    %v1926 = vunpack.c.0.s8 %v1925
    %v1927 = vlaneseq
    %v1928 = vshrl.u32 %v1927, 7
    %v1929 = vsub.s32 %v1926, %v1928
    %v1930 = vrot.slane %v1572, %v1929
    %v1931 = vcombine.high %v1930, %v1930
    %v1933 = vunpack.c.l.s4 1966171168
    %v1934 = vunpack.c.0.s8 %v1933
    %v1935 = vlaneseq
    %v1936 = vshrl.u32 %v1935, 7
    %v1937 = vsub.s32 %v1934, %v1936
    %v1938 = vrot.slane %v1930, %v1937
    %v1940 = vunpack.c.l.s4 1966171168
    %v1941 = vunpack.c.0.s8 %v1940
    %v1942 = vlaneseq
    %v1943 = vshrl.u32 %v1942, 7
    %v1944 = vsub.s32 %v1941, %v1943
    %v1945 = vrot.slane %v1931, %v1944
    %v1946 = vcombine.high %v1938, %v1938
    %v1947 = vcombine.high %v1945, %v1945
    %v1948 = vunpack.i.l.s16 %v1604
    %v1949 = vunpack.i.h.s16 %v1604
    %v1950 = vunpack.i.l.s16 %v1618
    %v1951 = vunpack.i.h.s16 %v1618
    %v1952 = vunpack.i.l.s16 %v1626
    %v1953 = vunpack.i.h.s16 %v1626
    %v1954 = vunpack.i.l.s16 %v1628
    %v1955 = vunpack.i.h.s16 %v1628
    %v1956 = vunpack.i.l.s16 %v1611
    %v1957 = vunpack.i.h.s16 %v1611
    %v1958 = vunpack.i.l.s16 %v1625
    %v1959 = vunpack.i.h.s16 %v1625
    %v1960 = vunpack.i.l.s16 %v1627
    %v1961 = vunpack.i.h.s16 %v1627
    %v1962 = vunpack.i.l.s16 %v1629
    %v1963 = vunpack.i.h.s16 %v1629
    %v1964 = vunpack.i.l.s16 %v1653
    %v1965 = vunpack.i.h.s16 %v1653
    %v1966 = vunpack.i.l.s16 %v1667
    %v1967 = vunpack.i.h.s16 %v1667
    %v1968 = vunpack.i.l.s16 %v1675
    %v1969 = vunpack.i.h.s16 %v1675
    %v1970 = vunpack.i.l.s16 %v1677
    %v1971 = vunpack.i.h.s16 %v1677
    %v1972 = vunpack.i.l.s16 %v1660
    %v1973 = vunpack.i.h.s16 %v1660
    %v1974 = vunpack.i.l.s16 %v1674
    %v1975 = vunpack.i.h.s16 %v1674
    %v1976 = vunpack.i.l.s16 %v1676
    %v1977 = vunpack.i.h.s16 %v1676
    %v1978 = vunpack.i.l.s16 %v1678
    %v1979 = vunpack.i.h.s16 %v1678
    %v1980 = vunpack.i.l.s16 %v1702
    %v1981 = vunpack.i.h.s16 %v1702
    %v1982 = vunpack.i.l.s16 %v1716
    %v1983 = vunpack.i.h.s16 %v1716
    %v1984 = vunpack.i.l.s16 %v1724
    %v1985 = vunpack.i.h.s16 %v1724
    %v1986 = vunpack.i.l.s16 %v1726
    %v1987 = vunpack.i.h.s16 %v1726
    %v1988 = vunpack.i.l.s16 %v1709
    %v1989 = vunpack.i.h.s16 %v1709
    %v1990 = vunpack.i.l.s16 %v1723
    %v1991 = vunpack.i.h.s16 %v1723
    %v1992 = vunpack.i.l.s16 %v1725
    %v1993 = vunpack.i.h.s16 %v1725
    %v1994 = vunpack.i.l.s16 %v1727
    %v1995 = vunpack.i.h.s16 %v1727
    %v1996 = vunpack.i.l.s16 %v1751
    %v1997 = vunpack.i.h.s16 %v1751
    %v1998 = vunpack.i.l.s16 %v1765
    %v1999 = vunpack.i.h.s16 %v1765
    %v2000 = vunpack.i.l.s16 %v1773
    %v2001 = vunpack.i.h.s16 %v1773
    %v2002 = vunpack.i.l.s16 %v1775
    %v2003 = vunpack.i.h.s16 %v1775
    %v2004 = vunpack.i.l.s16 %v1758
    %v2005 = vunpack.i.h.s16 %v1758
    %v2006 = vunpack.i.l.s16 %v1772
    %v2007 = vunpack.i.h.s16 %v1772
    %v2008 = vunpack.i.l.s16 %v1774
    %v2009 = vunpack.i.h.s16 %v1774
    %v2010 = vunpack.i.l.s16 %v1776
    %v2011 = vunpack.i.h.s16 %v1776
    %v2012 = vunpack.i.l.s16 %v1800
    %v2013 = vunpack.i.h.s16 %v1800
    %v2014 = vunpack.i.l.s16 %v1814
    %v2015 = vunpack.i.h.s16 %v1814
    %v2016 = vunpack.i.l.s16 %v1822
    %v2017 = vunpack.i.h.s16 %v1822
    %v2018 = vunpack.i.l.s16 %v1824
    %v2019 = vunpack.i.h.s16 %v1824
    %v2020 = vunpack.i.l.s16 %v1807
    %v2021 = vunpack.i.h.s16 %v1807
    %v2022 = vunpack.i.l.s16 %v1821
    %v2023 = vunpack.i.h.s16 %v1821
    %v2024 = vunpack.i.l.s16 %v1823
    %v2025 = vunpack.i.h.s16 %v1823
    %v2026 = vunpack.i.l.s16 %v1825
    %v2027 = vunpack.i.h.s16 %v1825
    %v2028 = vunpack.i.l.s16 %v1849
    %v2029 = vunpack.i.h.s16 %v1849
    %v2030 = vunpack.i.l.s16 %v1863
    %v2031 = vunpack.i.h.s16 %v1863
    %v2032 = vunpack.i.l.s16 %v1871
    %v2033 = vunpack.i.h.s16 %v1871
    %v2034 = vunpack.i.l.s16 %v1873
    %v2035 = vunpack.i.h.s16 %v1873
    %v2036 = vunpack.i.l.s16 %v1856
    %v2037 = vunpack.i.h.s16 %v1856
    %v2038 = vunpack.i.l.s16 %v1870
    %v2039 = vunpack.i.h.s16 %v1870
    %v2040 = vunpack.i.l.s16 %v1872
    %v2041 = vunpack.i.h.s16 %v1872
    %v2042 = vunpack.i.l.s16 %v1874
    %v2043 = vunpack.i.h.s16 %v1874
    %v2044 = vunpack.i.l.s16 %v1898
    %v2045 = vunpack.i.h.s16 %v1898
    %v2046 = vunpack.i.l.s16 %v1912
    %v2047 = vunpack.i.h.s16 %v1912
    %v2048 = vunpack.i.l.s16 %v1920
    %v2049 = vunpack.i.h.s16 %v1920
    %v2050 = vunpack.i.l.s16 %v1922
    %v2051 = vunpack.i.h.s16 %v1922
    %v2052 = vunpack.i.l.s16 %v1905
    %v2053 = vunpack.i.h.s16 %v1905
    %v2054 = vunpack.i.l.s16 %v1919
    %v2055 = vunpack.i.h.s16 %v1919
    %v2056 = vunpack.i.l.s16 %v1921
    %v2057 = vunpack.i.h.s16 %v1921
    %v2058 = vunpack.i.l.s16 %v1923
    %v2059 = vunpack.i.h.s16 %v1923
    %v2060 = vunpack.i.l.s16 %v1938
    %v2061 = vunpack.i.h.s16 %v1938
    %v2062 = vunpack.i.l.s16 %v1945
    %v2063 = vunpack.i.h.s16 %v1945
    %v2064 = vunpack.i.l.s16 %v1946
    %v2065 = vunpack.i.h.s16 %v1946
    %v2066 = vunpack.i.l.s16 %v1947
    %v2067 = vunpack.i.h.s16 %v1947
    %v2068 = vpack.i.b16 %v1949, %v1948
    %v2069 = vpack.i.b16 %v1951, %v1950
    %v2070 = vpack.i.b16 %v1953, %v1952
    %v2071 = vpack.i.b16 %v1955, %v1954
    %v2072 = vpack.i.b16 %v1957, %v1956
    %v2073 = vpack.i.b16 %v1959, %v1958
    %v2074 = vpack.i.b16 %v1961, %v1960
    %v2075 = vpack.i.b16 %v1964, %v1963
    %v2076 = vpack.i.b16 %v1966, %v1965
    %v2077 = vpack.i.b16 %v1968, %v1967
    %v2078 = vpack.i.b16 %v1970, %v1969
    %v2079 = vpack.i.b16 %v1972, %v1971
    %v2080 = vpack.i.b16 %v1974, %v1973
    %v2081 = vpack.i.b16 %v1976, %v1975
    %v2082 = vpack.i.b16 %v1979, %v1978
    %v2083 = vpack.i.b16 %v1981, %v1980
    %v2084 = vpack.i.b16 %v1983, %v1982
    %v2085 = vpack.i.b16 %v1985, %v1984
    %v2086 = vpack.i.b16 %v1987, %v1986
    %v2087 = vpack.i.b16 %v1989, %v1988
    %v2088 = vpack.i.b16 %v1991, %v1990
    %v2089 = vpack.i.b16 %v1994, %v1993
    %v2090 = vpack.i.b16 %v1996, %v1995
    %v2091 = vpack.i.b16 %v1998, %v1997
    %v2092 = vpack.i.b16 %v2000, %v1999
    %v2093 = vpack.i.b16 %v2002, %v2001
    %v2094 = vpack.i.b16 %v2004, %v2003
    %v2095 = vpack.i.b16 %v2006, %v2005
    %v2096 = vpack.i.b16 %v2009, %v2008
    %v2097 = vpack.i.b16 %v2011, %v2010
    %v2098 = vpack.i.b16 %v2013, %v2012
    %v2099 = vpack.i.b16 %v2015, %v2014
    %v2100 = vpack.i.b16 %v2017, %v2016
    %v2101 = vpack.i.b16 %v2019, %v2018
    %v2102 = vpack.i.b16 %v2021, %v2020
    %v2103 = vpack.i.b16 %v2024, %v2023
    %v2104 = vpack.i.b16 %v2026, %v2025
    %v2105 = vpack.i.b16 %v2028, %v2027
    %v2106 = vpack.i.b16 %v2030, %v2029
    %v2107 = vpack.i.b16 %v2032, %v2031
    %v2108 = vpack.i.b16 %v2034, %v2033
    %v2109 = vpack.i.b16 %v2036, %v2035
    %v2110 = vpack.i.b16 %v2039, %v2038
    %v2111 = vpack.i.b16 %v2041, %v2040
    %v2112 = vpack.i.b16 %v2043, %v2042
    %v2113 = vpack.i.b16 %v2045, %v2044
    %v2114 = vpack.i.b16 %v2047, %v2046
    %v2115 = vpack.i.b16 %v2049, %v2048
    %v2116 = vpack.i.b16 %v2051, %v2050
    %v2117 = vpack.i.b16 %v2054, %v2053
    %v2118 = vpack.i.b16 %v2056, %v2055
    %v2119 = vpack.i.b16 %v2058, %v2057
    %v2120 = vpack.i.b16 %v2060, %v2059
    %v2121 = vpack.i.b16 %v2062, %v2061
    %v2122 = vpack.i.b16 %v2064, %v2063
    %v2123 = vpack.i.b16 %v2066, %v2065
    %v2124 = vcombine.low %v2068, %v2069
    %v2125 = vcombine.low %v2070, %v2071
    %v2126 = vcombine.low %v2072, %v2073
    %v2128 = vunpack.c.l.s4 1966171168
    %v2129 = vunpack.c.0.s8 %v2128
    %v2130 = vlaneseq
    %v2131 = vshrl.u32 %v2130, 7
    %v2132 = vsub.s32 %v2129, %v2131
    %v2133 = vrot.slane %v2124, %v2132
    %v2135 = vunpack.c.l.s4 1966171168
    %v2136 = vunpack.c.0.s8 %v2135
    %v2137 = vlaneseq
    %v2138 = vshrl.u32 %v2137, 7
    %v2139 = vsub.s32 %v2136, %v2138
    %v2140 = vrot.slane %v2125, %v2139
    %v2142 = vunpack.c.l.s4 1966171168
    %v2143 = vunpack.c.0.s8 %v2142
    %v2144 = vlaneseq
    %v2145 = vshrl.u32 %v2144, 7
    %v2146 = vsub.s32 %v2143, %v2145
    %v2147 = vrot.slane %v2126, %v2146
    %v2149 = vunpack.c.l.s4 1966171168
    %v2150 = vunpack.c.0.s8 %v2149
    %v2151 = vlaneseq
    %v2152 = vshrl.u32 %v2151, 7
    %v2153 = vsub.s32 %v2150, %v2152
    %v2154 = vrot.slane %v2074, %v2153
    %v2155 = vcombine.low %v2133, %v2140
    %v2156 = vcombine.low %v2147, %v2154
    %v2158 = vunpack.c.l.s4 1966171168
    %v2159 = vunpack.c.0.s8 %v2158
    %v2160 = vlaneseq
    %v2161 = vshrl.u32 %v2160, 7
    %v2162 = vsub.s32 %v2159, %v2161
    %v2163 = vrot.slane %v2155, %v2162
    %v2165 = vunpack.c.l.s4 1966171168
    %v2166 = vunpack.c.0.s8 %v2165
    %v2167 = vlaneseq
    %v2168 = vshrl.u32 %v2167, 7
    %v2169 = vsub.s32 %v2166, %v2168
    %v2170 = vrot.slane %v2156, %v2169
    %v2171 = vcombine.low %v2163, %v2170
    %v2172 = vcombine.low %v2075, %v2076
    %v2173 = vcombine.low %v2077, %v2078
    %v2174 = vcombine.low %v2079, %v2080
    %v2176 = vunpack.c.l.s4 1966171168
    %v2177 = vunpack.c.0.s8 %v2176
    %v2178 = vlaneseq
    %v2179 = vshrl.u32 %v2178, 7
    %v2180 = vsub.s32 %v2177, %v2179
    %v2181 = vrot.slane %v2172, %v2180
    %v2183 = vunpack.c.l.s4 1966171168
    %v2184 = vunpack.c.0.s8 %v2183
    %v2185 = vlaneseq
    %v2186 = vshrl.u32 %v2185, 7
    %v2187 = vsub.s32 %v2184, %v2186
    %v2188 = vrot.slane %v2173, %v2187
    %v2190 = vunpack.c.l.s4 1966171168
    %v2191 = vunpack.c.0.s8 %v2190
    %v2192 = vlaneseq
    %v2193 = vshrl.u32 %v2192, 7
    %v2194 = vsub.s32 %v2191, %v2193
    %v2195 = vrot.slane %v2174, %v2194
    %v2197 = vunpack.c.l.s4 1966171168
    %v2198 = vunpack.c.0.s8 %v2197
    %v2199 = vlaneseq
    %v2200 = vshrl.u32 %v2199, 7
    %v2201 = vsub.s32 %v2198, %v2200
    %v2202 = vrot.slane %v2081, %v2201
    %v2203 = vcombine.low %v2181, %v2188
    %v2204 = vcombine.low %v2195, %v2202
    %v2206 = vunpack.c.l.s4 1966171168
    %v2207 = vunpack.c.0.s8 %v2206
    %v2208 = vlaneseq
    %v2209 = vshrl.u32 %v2208, 7
    %v2210 = vsub.s32 %v2207, %v2209
    %v2211 = vrot.slane %v2203, %v2210
    %v2213 = vunpack.c.l.s4 1966171168
    %v2214 = vunpack.c.0.s8 %v2213
    %v2215 = vlaneseq
    %v2216 = vshrl.u32 %v2215, 7
    %v2217 = vsub.s32 %v2214, %v2216
    %v2218 = vrot.slane %v2204, %v2217
    %v2219 = vcombine.low %v2211, %v2218
    %v2220 = vcombine.low %v2082, %v2083
    %v2221 = vcombine.low %v2084, %v2085
    %v2222 = vcombine.low %v2086, %v2087
    %v2224 = vunpack.c.l.s4 1966171168
    %v2225 = vunpack.c.0.s8 %v2224
    %v2226 = vlaneseq
    %v2227 = vshrl.u32 %v2226, 7
    %v2228 = vsub.s32 %v2225, %v2227
    %v2229 = vrot.slane %v2220, %v2228
    %v2231 = vunpack.c.l.s4 1966171168
    %v2232 = vunpack.c.0.s8 %v2231
    %v2233 = vlaneseq
    %v2234 = vshrl.u32 %v2233, 7
    %v2235 = vsub.s32 %v2232, %v2234
    %v2236 = vrot.slane %v2221, %v2235
    %v2238 = vunpack.c.l.s4 1966171168
    %v2239 = vunpack.c.0.s8 %v2238
    %v2240 = vlaneseq
    %v2241 = vshrl.u32 %v2240, 7
    %v2242 = vsub.s32 %v2239, %v2241
    %v2243 = vrot.slane %v2222, %v2242
    %v2245 = vunpack.c.l.s4 1966171168
    %v2246 = vunpack.c.0.s8 %v2245
    %v2247 = vlaneseq
    %v2248 = vshrl.u32 %v2247, 7
    %v2249 = vsub.s32 %v2246, %v2248
    %v2250 = vrot.slane %v2088, %v2249
    %v2251 = vcombine.low %v2229, %v2236
    %v2252 = vcombine.low %v2243, %v2250
    %v2254 = vunpack.c.l.s4 1966171168
    %v2255 = vunpack.c.0.s8 %v2254
    %v2256 = vlaneseq
    %v2257 = vshrl.u32 %v2256, 7
    %v2258 = vsub.s32 %v2255, %v2257
    %v2259 = vrot.slane %v2251, %v2258
    %v2261 = vunpack.c.l.s4 1966171168
    %v2262 = vunpack.c.0.s8 %v2261
    %v2263 = vlaneseq
    %v2264 = vshrl.u32 %v2263, 7
    %v2265 = vsub.s32 %v2262, %v2264
    %v2266 = vrot.slane %v2252, %v2265
    %v2267 = vcombine.low %v2259, %v2266
    %v2268 = vcombine.low %v2089, %v2090
    %v2269 = vcombine.low %v2091, %v2092
    %v2270 = vcombine.low %v2093, %v2094
    %v2272 = vunpack.c.l.s4 1966171168
    %v2273 = vunpack.c.0.s8 %v2272
    %v2274 = vlaneseq
    %v2275 = vshrl.u32 %v2274, 7
    %v2276 = vsub.s32 %v2273, %v2275
    %v2277 = vrot.slane %v2268, %v2276
    %v2279 = vunpack.c.l.s4 1966171168
    %v2280 = vunpack.c.0.s8 %v2279
    %v2281 = vlaneseq
    %v2282 = vshrl.u32 %v2281, 7
    %v2283 = vsub.s32 %v2280, %v2282
    %v2284 = vrot.slane %v2269, %v2283
    %v2286 = vunpack.c.l.s4 1966171168
    %v2287 = vunpack.c.0.s8 %v2286
    %v2288 = vlaneseq
    %v2289 = vshrl.u32 %v2288, 7
    %v2290 = vsub.s32 %v2287, %v2289
    %v2291 = vrot.slane %v2270, %v2290
    %v2293 = vunpack.c.l.s4 1966171168
    %v2294 = vunpack.c.0.s8 %v2293
    %v2295 = vlaneseq
    %v2296 = vshrl.u32 %v2295, 7
    %v2297 = vsub.s32 %v2294, %v2296
    %v2298 = vrot.slane %v2095, %v2297
    %v2299 = vcombine.low %v2277, %v2284
    %v2300 = vcombine.low %v2291, %v2298
    %v2302 = vunpack.c.l.s4 1966171168
    %v2303 = vunpack.c.0.s8 %v2302
    %v2304 = vlaneseq
    %v2305 = vshrl.u32 %v2304, 7
    %v2306 = vsub.s32 %v2303, %v2305
    %v2307 = vrot.slane %v2299, %v2306
    %v2309 = vunpack.c.l.s4 1966171168
    %v2310 = vunpack.c.0.s8 %v2309
    %v2311 = vlaneseq
    %v2312 = vshrl.u32 %v2311, 7
    %v2313 = vsub.s32 %v2310, %v2312
    %v2314 = vrot.slane %v2300, %v2313
    %v2315 = vcombine.low %v2307, %v2314
    %v2316 = vcombine.low %v2096, %v2097
    %v2317 = vcombine.low %v2098, %v2099
    %v2318 = vcombine.low %v2100, %v2101
    %v2320 = vunpack.c.l.s4 1966171168
    %v2321 = vunpack.c.0.s8 %v2320
    %v2322 = vlaneseq
    %v2323 = vshrl.u32 %v2322, 7
    %v2324 = vsub.s32 %v2321, %v2323
    %v2325 = vrot.slane %v2316, %v2324
    %v2327 = vunpack.c.l.s4 1966171168
    %v2328 = vunpack.c.0.s8 %v2327
    %v2329 = vlaneseq
    %v2330 = vshrl.u32 %v2329, 7
    %v2331 = vsub.s32 %v2328, %v2330
    %v2332 = vrot.slane %v2317, %v2331
    %v2334 = vunpack.c.l.s4 1966171168
    %v2335 = vunpack.c.0.s8 %v2334
    %v2336 = vlaneseq
    %v2337 = vshrl.u32 %v2336, 7
    %v2338 = vsub.s32 %v2335, %v2337
    %v2339 = vrot.slane %v2318, %v2338
    %v2341 = vunpack.c.l.s4 1966171168
    %v2342 = vunpack.c.0.s8 %v2341
    %v2343 = vlaneseq
    %v2344 = vshrl.u32 %v2343, 7
    %v2345 = vsub.s32 %v2342, %v2344
    %v2346 = vrot.slane %v2102, %v2345
    %v2347 = vcombine.low %v2325, %v2332
    %v2348 = vcombine.low %v2339, %v2346
    %v2350 = vunpack.c.l.s4 1966171168
    %v2351 = vunpack.c.0.s8 %v2350
    %v2352 = vlaneseq
    %v2353 = vshrl.u32 %v2352, 7
    %v2354 = vsub.s32 %v2351, %v2353
    %v2355 = vrot.slane %v2347, %v2354
    %v2357 = vunpack.c.l.s4 1966171168
    %v2358 = vunpack.c.0.s8 %v2357
    %v2359 = vlaneseq
    %v2360 = vshrl.u32 %v2359, 7
    %v2361 = vsub.s32 %v2358, %v2360
    %v2362 = vrot.slane %v2348, %v2361
    %v2363 = vcombine.low %v2355, %v2362
    %v2364 = vcombine.low %v2103, %v2104
    %v2365 = vcombine.low %v2105, %v2106
    %v2366 = vcombine.low %v2107, %v2108
    %v2368 = vunpack.c.l.s4 1966171168
    %v2369 = vunpack.c.0.s8 %v2368
    %v2370 = vlaneseq
    %v2371 = vshrl.u32 %v2370, 7
    %v2372 = vsub.s32 %v2369, %v2371
    %v2373 = vrot.slane %v2364, %v2372
    %v2375 = vunpack.c.l.s4 1966171168
    %v2376 = vunpack.c.0.s8 %v2375
    %v2377 = vlaneseq
    %v2378 = vshrl.u32 %v2377, 7
    %v2379 = vsub.s32 %v2376, %v2378
    %v2380 = vrot.slane %v2365, %v2379
    %v2382 = vunpack.c.l.s4 1966171168
    %v2383 = vunpack.c.0.s8 %v2382
    %v2384 = vlaneseq
    %v2385 = vshrl.u32 %v2384, 7
    %v2386 = vsub.s32 %v2383, %v2385
    %v2387 = vrot.slane %v2366, %v2386
    %v2389 = vunpack.c.l.s4 1966171168
    %v2390 = vunpack.c.0.s8 %v2389
    %v2391 = vlaneseq
    %v2392 = vshrl.u32 %v2391, 7
    %v2393 = vsub.s32 %v2390, %v2392
    %v2394 = vrot.slane %v2109, %v2393
    %v2395 = vcombine.low %v2373, %v2380
    %v2396 = vcombine.low %v2387, %v2394
    %v2398 = vunpack.c.l.s4 1966171168
    %v2399 = vunpack.c.0.s8 %v2398
    %v2400 = vlaneseq
    %v2401 = vshrl.u32 %v2400, 7
    %v2402 = vsub.s32 %v2399, %v2401
    %v2403 = vrot.slane %v2395, %v2402
    %v2405 = vunpack.c.l.s4 1966171168
    %v2406 = vunpack.c.0.s8 %v2405
    %v2407 = vlaneseq
    %v2408 = vshrl.u32 %v2407, 7
    %v2409 = vsub.s32 %v2406, %v2408
    %v2410 = vrot.slane %v2396, %v2409
    %v2411 = vcombine.low %v2403, %v2410
    %v2412 = vcombine.low %v2110, %v2111
    %v2413 = vcombine.low %v2112, %v2113
    %v2414 = vcombine.low %v2114, %v2115
    %v2416 = vunpack.c.l.s4 1966171168
    %v2417 = vunpack.c.0.s8 %v2416
    %v2418 = vlaneseq
    %v2419 = vshrl.u32 %v2418, 7
    %v2420 = vsub.s32 %v2417, %v2419
    %v2421 = vrot.slane %v2412, %v2420
    %v2423 = vunpack.c.l.s4 1966171168
    %v2424 = vunpack.c.0.s8 %v2423
    %v2425 = vlaneseq
    %v2426 = vshrl.u32 %v2425, 7
    %v2427 = vsub.s32 %v2424, %v2426
    %v2428 = vrot.slane %v2413, %v2427
    %v2430 = vunpack.c.l.s4 1966171168
    %v2431 = vunpack.c.0.s8 %v2430
    %v2432 = vlaneseq
    %v2433 = vshrl.u32 %v2432, 7
    %v2434 = vsub.s32 %v2431, %v2433
    %v2435 = vrot.slane %v2414, %v2434
    %v2437 = vunpack.c.l.s4 1966171168
    %v2438 = vunpack.c.0.s8 %v2437
    %v2439 = vlaneseq
    %v2440 = vshrl.u32 %v2439, 7
    %v2441 = vsub.s32 %v2438, %v2440
    %v2442 = vrot.slane %v2116, %v2441
    %v2443 = vcombine.low %v2421, %v2428
    %v2444 = vcombine.low %v2435, %v2442
    %v2446 = vunpack.c.l.s4 1966171168
    %v2447 = vunpack.c.0.s8 %v2446
    %v2448 = vlaneseq
    %v2449 = vshrl.u32 %v2448, 7
    %v2450 = vsub.s32 %v2447, %v2449
    %v2451 = vrot.slane %v2443, %v2450
    %v2453 = vunpack.c.l.s4 1966171168
    %v2454 = vunpack.c.0.s8 %v2453
    %v2455 = vlaneseq
    %v2456 = vshrl.u32 %v2455, 7
    %v2457 = vsub.s32 %v2454, %v2456
    %v2458 = vrot.slane %v2444, %v2457
    %v2459 = vcombine.low %v2451, %v2458
    %v2460 = vcombine.low %v2117, %v2118
    %v2461 = vcombine.low %v2119, %v2120
    %v2462 = vcombine.low %v2121, %v2122
    %v2464 = vunpack.c.l.s4 1966171168
    %v2465 = vunpack.c.0.s8 %v2464
    %v2466 = vlaneseq
    %v2467 = vshrl.u32 %v2466, 7
    %v2468 = vsub.s32 %v2465, %v2467
    %v2469 = vrot.slane %v2460, %v2468
    %v2471 = vunpack.c.l.s4 1966171168
    %v2472 = vunpack.c.0.s8 %v2471
    %v2473 = vlaneseq
    %v2474 = vshrl.u32 %v2473, 7
    %v2475 = vsub.s32 %v2472, %v2474
    %v2476 = vrot.slane %v2461, %v2475
    %v2478 = vunpack.c.l.s4 1966171168
    %v2479 = vunpack.c.0.s8 %v2478
    %v2480 = vlaneseq
    %v2481 = vshrl.u32 %v2480, 7
    %v2482 = vsub.s32 %v2479, %v2481
    %v2483 = vrot.slane %v2462, %v2482
    %v2485 = vunpack.c.l.s4 1966171168
    %v2486 = vunpack.c.0.s8 %v2485
    %v2487 = vlaneseq
    %v2488 = vshrl.u32 %v2487, 7
    %v2489 = vsub.s32 %v2486, %v2488
    %v2490 = vrot.slane %v2123, %v2489
    %v2491 = vcombine.low %v2469, %v2476
    %v2492 = vcombine.low %v2483, %v2490
    %v2494 = vunpack.c.l.s4 1966171168
    %v2495 = vunpack.c.0.s8 %v2494
    %v2496 = vlaneseq
    %v2497 = vshrl.u32 %v2496, 7
    %v2498 = vsub.s32 %v2495, %v2497
    %v2499 = vrot.slane %v2491, %v2498
    %v2501 = vunpack.c.l.s4 1966171168
    %v2502 = vunpack.c.0.s8 %v2501
    %v2503 = vlaneseq
    %v2504 = vshrl.u32 %v2503, 7
    %v2505 = vsub.s32 %v2502, %v2504
    %v2506 = vrot.slane %v2492, %v2505
    %v2507 = vcombine.low %v2499, %v2506
    %v2508 = vpack.i.b16 %v1950, %v1949
    %v2509 = vpack.i.b16 %v1952, %v1951
    %v2510 = vpack.i.b16 %v1954, %v1953
    %v2511 = vpack.i.b16 %v1956, %v1955
    %v2512 = vpack.i.b16 %v1958, %v1957
    %v2513 = vpack.i.b16 %v1960, %v1959
    %v2514 = vpack.i.b16 %v1962, %v1961
    %v2515 = vpack.i.b16 %v1965, %v1964
    %v2516 = vpack.i.b16 %v1967, %v1966
    %v2517 = vpack.i.b16 %v1969, %v1968
    %v2518 = vpack.i.b16 %v1971, %v1970
    %v2519 = vpack.i.b16 %v1973, %v1972
    %v2520 = vpack.i.b16 %v1975, %v1974
    %v2521 = vpack.i.b16 %v1977, %v1976
    %v2522 = vpack.i.b16 %v1980, %v1979
    %v2523 = vpack.i.b16 %v1982, %v1981
    %v2524 = vpack.i.b16 %v1984, %v1983
    %v2525 = vpack.i.b16 %v1986, %v1985
    %v2526 = vpack.i.b16 %v1988, %v1987
    %v2527 = vpack.i.b16 %v1990, %v1989
    %v2528 = vpack.i.b16 %v1992, %v1991
    %v2529 = vpack.i.b16 %v1995, %v1994
    %v2530 = vpack.i.b16 %v1997, %v1996
    %v2531 = vpack.i.b16 %v1999, %v1998
    %v2532 = vpack.i.b16 %v2001, %v2000
    %v2533 = vpack.i.b16 %v2003, %v2002
    %v2534 = vpack.i.b16 %v2005, %v2004
    %v2535 = vpack.i.b16 %v2007, %v2006
    %v2536 = vpack.i.b16 %v2010, %v2009
    %v2537 = vpack.i.b16 %v2012, %v2011
    %v2538 = vpack.i.b16 %v2014, %v2013
    %v2539 = vpack.i.b16 %v2016, %v2015
    %v2540 = vpack.i.b16 %v2018, %v2017
    %v2541 = vpack.i.b16 %v2020, %v2019
    %v2542 = vpack.i.b16 %v2022, %v2021
    %v2543 = vpack.i.b16 %v2025, %v2024
    %v2544 = vpack.i.b16 %v2027, %v2026
    %v2545 = vpack.i.b16 %v2029, %v2028
    %v2546 = vpack.i.b16 %v2031, %v2030
    %v2547 = vpack.i.b16 %v2033, %v2032
    %v2548 = vpack.i.b16 %v2035, %v2034
    %v2549 = vpack.i.b16 %v2037, %v2036
    %v2550 = vpack.i.b16 %v2040, %v2039
    %v2551 = vpack.i.b16 %v2042, %v2041
    %v2552 = vpack.i.b16 %v2044, %v2043
    %v2553 = vpack.i.b16 %v2046, %v2045
    %v2554 = vpack.i.b16 %v2048, %v2047
    %v2555 = vpack.i.b16 %v2050, %v2049
    %v2556 = vpack.i.b16 %v2052, %v2051
    %v2557 = vpack.i.b16 %v2055, %v2054
    %v2558 = vpack.i.b16 %v2057, %v2056
    %v2559 = vpack.i.b16 %v2059, %v2058
    %v2560 = vpack.i.b16 %v2061, %v2060
    %v2561 = vpack.i.b16 %v2063, %v2062
    %v2562 = vpack.i.b16 %v2065, %v2064
    %v2563 = vpack.i.b16 %v2067, %v2066
    %v2564 = vcombine.low %v2508, %v2509
    %v2565 = vcombine.low %v2510, %v2511
    %v2566 = vcombine.low %v2512, %v2513
    %v2568 = vunpack.c.l.s4 1966171168
    %v2569 = vunpack.c.0.s8 %v2568
    %v2570 = vlaneseq
    %v2571 = vshrl.u32 %v2570, 7
    %v2572 = vsub.s32 %v2569, %v2571
    %v2573 = vrot.slane %v2564, %v2572
    %v2575 = vunpack.c.l.s4 1966171168
    %v2576 = vunpack.c.0.s8 %v2575
    %v2577 = vlaneseq
    %v2578 = vshrl.u32 %v2577, 7
    %v2579 = vsub.s32 %v2576, %v2578
    %v2580 = vrot.slane %v2565, %v2579
    %v2582 = vunpack.c.l.s4 1966171168
    %v2583 = vunpack.c.0.s8 %v2582
    %v2584 = vlaneseq
    %v2585 = vshrl.u32 %v2584, 7
    %v2586 = vsub.s32 %v2583, %v2585
    %v2587 = vrot.slane %v2566, %v2586
    %v2589 = vunpack.c.l.s4 1966171168
    %v2590 = vunpack.c.0.s8 %v2589
    %v2591 = vlaneseq
    %v2592 = vshrl.u32 %v2591, 7
    %v2593 = vsub.s32 %v2590, %v2592
    %v2594 = vrot.slane %v2514, %v2593
    %v2595 = vcombine.low %v2573, %v2580
    %v2596 = vcombine.low %v2587, %v2594
    %v2598 = vunpack.c.l.s4 1966171168
    %v2599 = vunpack.c.0.s8 %v2598
    %v2600 = vlaneseq
    %v2601 = vshrl.u32 %v2600, 7
    %v2602 = vsub.s32 %v2599, %v2601
    %v2603 = vrot.slane %v2595, %v2602
    %v2605 = vunpack.c.l.s4 1966171168
    %v2606 = vunpack.c.0.s8 %v2605
    %v2607 = vlaneseq
    %v2608 = vshrl.u32 %v2607, 7
    %v2609 = vsub.s32 %v2606, %v2608
    %v2610 = vrot.slane %v2596, %v2609
    %v2611 = vcombine.low %v2603, %v2610
    %v2612 = vcombine.low %v2515, %v2516
    %v2613 = vcombine.low %v2517, %v2518
    %v2614 = vcombine.low %v2519, %v2520
    %v2616 = vunpack.c.l.s4 1966171168
    %v2617 = vunpack.c.0.s8 %v2616
    %v2618 = vlaneseq
    %v2619 = vshrl.u32 %v2618, 7
    %v2620 = vsub.s32 %v2617, %v2619
    %v2621 = vrot.slane %v2612, %v2620
    %v2623 = vunpack.c.l.s4 1966171168
    %v2624 = vunpack.c.0.s8 %v2623
    %v2625 = vlaneseq
    %v2626 = vshrl.u32 %v2625, 7
    %v2627 = vsub.s32 %v2624, %v2626
    %v2628 = vrot.slane %v2613, %v2627
    %v2630 = vunpack.c.l.s4 1966171168
    %v2631 = vunpack.c.0.s8 %v2630
    %v2632 = vlaneseq
    %v2633 = vshrl.u32 %v2632, 7
    %v2634 = vsub.s32 %v2631, %v2633
    %v2635 = vrot.slane %v2614, %v2634
    %v2637 = vunpack.c.l.s4 1966171168
    %v2638 = vunpack.c.0.s8 %v2637
    %v2639 = vlaneseq
    %v2640 = vshrl.u32 %v2639, 7
    %v2641 = vsub.s32 %v2638, %v2640
    %v2642 = vrot.slane %v2521, %v2641
    %v2643 = vcombine.low %v2621, %v2628
    %v2644 = vcombine.low %v2635, %v2642
    %v2646 = vunpack.c.l.s4 1966171168
    %v2647 = vunpack.c.0.s8 %v2646
    %v2648 = vlaneseq
    %v2649 = vshrl.u32 %v2648, 7
    %v2650 = vsub.s32 %v2647, %v2649
    %v2651 = vrot.slane %v2643, %v2650
    %v2653 = vunpack.c.l.s4 1966171168
    %v2654 = vunpack.c.0.s8 %v2653
    %v2655 = vlaneseq
    %v2656 = vshrl.u32 %v2655, 7
    %v2657 = vsub.s32 %v2654, %v2656
    %v2658 = vrot.slane %v2644, %v2657
    %v2659 = vcombine.low %v2651, %v2658
    %v2660 = vcombine.low %v2522, %v2523
    %v2661 = vcombine.low %v2524, %v2525
    %v2662 = vcombine.low %v2526, %v2527
    %v2664 = vunpack.c.l.s4 1966171168
    %v2665 = vunpack.c.0.s8 %v2664
    %v2666 = vlaneseq
    %v2667 = vshrl.u32 %v2666, 7
    %v2668 = vsub.s32 %v2665, %v2667
    %v2669 = vrot.slane %v2660, %v2668
    %v2671 = vunpack.c.l.s4 1966171168
    %v2672 = vunpack.c.0.s8 %v2671
    %v2673 = vlaneseq
    %v2674 = vshrl.u32 %v2673, 7
    %v2675 = vsub.s32 %v2672, %v2674
    %v2676 = vrot.slane %v2661, %v2675
    %v2678 = vunpack.c.l.s4 1966171168
    %v2679 = vunpack.c.0.s8 %v2678
    %v2680 = vlaneseq
    %v2681 = vshrl.u32 %v2680, 7
    %v2682 = vsub.s32 %v2679, %v2681
    %v2683 = vrot.slane %v2662, %v2682
    %v2685 = vunpack.c.l.s4 1966171168
    %v2686 = vunpack.c.0.s8 %v2685
    %v2687 = vlaneseq
    %v2688 = vshrl.u32 %v2687, 7
    %v2689 = vsub.s32 %v2686, %v2688
    %v2690 = vrot.slane %v2528, %v2689
    %v2691 = vcombine.low %v2669, %v2676
    %v2692 = vcombine.low %v2683, %v2690
    %v2694 = vunpack.c.l.s4 1966171168
    %v2695 = vunpack.c.0.s8 %v2694
    %v2696 = vlaneseq
    %v2697 = vshrl.u32 %v2696, 7
    %v2698 = vsub.s32 %v2695, %v2697
    %v2699 = vrot.slane %v2691, %v2698
    %v2701 = vunpack.c.l.s4 1966171168
    %v2702 = vunpack.c.0.s8 %v2701
    %v2703 = vlaneseq
    %v2704 = vshrl.u32 %v2703, 7
    %v2705 = vsub.s32 %v2702, %v2704
    %v2706 = vrot.slane %v2692, %v2705
    %v2707 = vcombine.low %v2699, %v2706
    %v2708 = vcombine.low %v2529, %v2530
    %v2709 = vcombine.low %v2531, %v2532
    %v2710 = vcombine.low %v2533, %v2534
    %v2712 = vunpack.c.l.s4 1966171168
    %v2713 = vunpack.c.0.s8 %v2712
    %v2714 = vlaneseq
    %v2715 = vshrl.u32 %v2714, 7
    %v2716 = vsub.s32 %v2713, %v2715
    %v2717 = vrot.slane %v2708, %v2716
    %v2719 = vunpack.c.l.s4 1966171168
    %v2720 = vunpack.c.0.s8 %v2719
    %v2721 = vlaneseq
    %v2722 = vshrl.u32 %v2721, 7
    %v2723 = vsub.s32 %v2720, %v2722
    %v2724 = vrot.slane %v2709, %v2723
    %v2726 = vunpack.c.l.s4 1966171168
    %v2727 = vunpack.c.0.s8 %v2726
    %v2728 = vlaneseq
    %v2729 = vshrl.u32 %v2728, 7
    %v2730 = vsub.s32 %v2727, %v2729
    %v2731 = vrot.slane %v2710, %v2730
    %v2733 = vunpack.c.l.s4 1966171168
    %v2734 = vunpack.c.0.s8 %v2733
    %v2735 = vlaneseq
    %v2736 = vshrl.u32 %v2735, 7
    %v2737 = vsub.s32 %v2734, %v2736
    %v2738 = vrot.slane %v2535, %v2737
    %v2739 = vcombine.low %v2717, %v2724
    %v2740 = vcombine.low %v2731, %v2738
    %v2742 = vunpack.c.l.s4 1966171168
    %v2743 = vunpack.c.0.s8 %v2742
    %v2744 = vlaneseq
    %v2745 = vshrl.u32 %v2744, 7
    %v2746 = vsub.s32 %v2743, %v2745
    %v2747 = vrot.slane %v2739, %v2746
    %v2749 = vunpack.c.l.s4 1966171168
    %v2750 = vunpack.c.0.s8 %v2749
    %v2751 = vlaneseq
    %v2752 = vshrl.u32 %v2751, 7
    %v2753 = vsub.s32 %v2750, %v2752
    %v2754 = vrot.slane %v2740, %v2753
    %v2755 = vcombine.low %v2747, %v2754
    %v2756 = vcombine.low %v2536, %v2537
    %v2757 = vcombine.low %v2538, %v2539
    %v2758 = vcombine.low %v2540, %v2541
    %v2760 = vunpack.c.l.s4 1966171168
    %v2761 = vunpack.c.0.s8 %v2760
    %v2762 = vlaneseq
    %v2763 = vshrl.u32 %v2762, 7
    %v2764 = vsub.s32 %v2761, %v2763
    %v2765 = vrot.slane %v2756, %v2764
    %v2767 = vunpack.c.l.s4 1966171168
    %v2768 = vunpack.c.0.s8 %v2767
    %v2769 = vlaneseq
    %v2770 = vshrl.u32 %v2769, 7
    %v2771 = vsub.s32 %v2768, %v2770
    %v2772 = vrot.slane %v2757, %v2771
    %v2774 = vunpack.c.l.s4 1966171168
    %v2775 = vunpack.c.0.s8 %v2774
    %v2776 = vlaneseq
    %v2777 = vshrl.u32 %v2776, 7
    %v2778 = vsub.s32 %v2775, %v2777
    %v2779 = vrot.slane %v2758, %v2778
    %v2781 = vunpack.c.l.s4 1966171168
    %v2782 = vunpack.c.0.s8 %v2781
    %v2783 = vlaneseq
    %v2784 = vshrl.u32 %v2783, 7
    %v2785 = vsub.s32 %v2782, %v2784
    %v2786 = vrot.slane %v2542, %v2785
    %v2787 = vcombine.low %v2765, %v2772
    %v2788 = vcombine.low %v2779, %v2786
    %v2790 = vunpack.c.l.s4 1966171168
    %v2791 = vunpack.c.0.s8 %v2790
    %v2792 = vlaneseq
    %v2793 = vshrl.u32 %v2792, 7
    %v2794 = vsub.s32 %v2791, %v2793
    %v2795 = vrot.slane %v2787, %v2794
    %v2797 = vunpack.c.l.s4 1966171168
    %v2798 = vunpack.c.0.s8 %v2797
    %v2799 = vlaneseq
    %v2800 = vshrl.u32 %v2799, 7
    %v2801 = vsub.s32 %v2798, %v2800
    %v2802 = vrot.slane %v2788, %v2801
    %v2803 = vcombine.low %v2795, %v2802
    %v2804 = vcombine.low %v2543, %v2544
    %v2805 = vcombine.low %v2545, %v2546
    %v2806 = vcombine.low %v2547, %v2548
    %v2808 = vunpack.c.l.s4 1966171168
    %v2809 = vunpack.c.0.s8 %v2808
    %v2810 = vlaneseq
    %v2811 = vshrl.u32 %v2810, 7
    %v2812 = vsub.s32 %v2809, %v2811
    %v2813 = vrot.slane %v2804, %v2812
    %v2815 = vunpack.c.l.s4 1966171168
    %v2816 = vunpack.c.0.s8 %v2815
    %v2817 = vlaneseq
    %v2818 = vshrl.u32 %v2817, 7
    %v2819 = vsub.s32 %v2816, %v2818
    %v2820 = vrot.slane %v2805, %v2819
    %v2822 = vunpack.c.l.s4 1966171168
    %v2823 = vunpack.c.0.s8 %v2822
    %v2824 = vlaneseq
    %v2825 = vshrl.u32 %v2824, 7
    %v2826 = vsub.s32 %v2823, %v2825
    %v2827 = vrot.slane %v2806, %v2826
    %v2829 = vunpack.c.l.s4 1966171168
    %v2830 = vunpack.c.0.s8 %v2829
    %v2831 = vlaneseq
    %v2832 = vshrl.u32 %v2831, 7
    %v2833 = vsub.s32 %v2830, %v2832
    %v2834 = vrot.slane %v2549, %v2833
    %v2835 = vcombine.low %v2813, %v2820
    %v2836 = vcombine.low %v2827, %v2834
    %v2838 = vunpack.c.l.s4 1966171168
    %v2839 = vunpack.c.0.s8 %v2838
    %v2840 = vlaneseq
    %v2841 = vshrl.u32 %v2840, 7
    %v2842 = vsub.s32 %v2839, %v2841
    %v2843 = vrot.slane %v2835, %v2842
    %v2845 = vunpack.c.l.s4 1966171168
    %v2846 = vunpack.c.0.s8 %v2845
    %v2847 = vlaneseq
    %v2848 = vshrl.u32 %v2847, 7
    %v2849 = vsub.s32 %v2846, %v2848
    %v2850 = vrot.slane %v2836, %v2849
    %v2851 = vcombine.low %v2843, %v2850
    %v2852 = vcombine.low %v2550, %v2551
    %v2853 = vcombine.low %v2552, %v2553
    %v2854 = vcombine.low %v2554, %v2555
    %v2856 = vunpack.c.l.s4 1966171168
    %v2857 = vunpack.c.0.s8 %v2856
    %v2858 = vlaneseq
    %v2859 = vshrl.u32 %v2858, 7
    %v2860 = vsub.s32 %v2857, %v2859
    %v2861 = vrot.slane %v2852, %v2860
    %v2863 = vunpack.c.l.s4 1966171168
    %v2864 = vunpack.c.0.s8 %v2863
    %v2865 = vlaneseq
    %v2866 = vshrl.u32 %v2865, 7
    %v2867 = vsub.s32 %v2864, %v2866
    %v2868 = vrot.slane %v2853, %v2867
    %v2870 = vunpack.c.l.s4 1966171168
    %v2871 = vunpack.c.0.s8 %v2870
    %v2872 = vlaneseq
    %v2873 = vshrl.u32 %v2872, 7
    %v2874 = vsub.s32 %v2871, %v2873
    %v2875 = vrot.slane %v2854, %v2874
    %v2877 = vunpack.c.l.s4 1966171168
    %v2878 = vunpack.c.0.s8 %v2877
    %v2879 = vlaneseq
    %v2880 = vshrl.u32 %v2879, 7
    %v2881 = vsub.s32 %v2878, %v2880
    %v2882 = vrot.slane %v2556, %v2881
    %v2883 = vcombine.low %v2861, %v2868
    %v2884 = vcombine.low %v2875, %v2882
    %v2886 = vunpack.c.l.s4 1966171168
    %v2887 = vunpack.c.0.s8 %v2886
    %v2888 = vlaneseq
    %v2889 = vshrl.u32 %v2888, 7
    %v2890 = vsub.s32 %v2887, %v2889
    %v2891 = vrot.slane %v2883, %v2890
    %v2893 = vunpack.c.l.s4 1966171168
    %v2894 = vunpack.c.0.s8 %v2893
    %v2895 = vlaneseq
    %v2896 = vshrl.u32 %v2895, 7
    %v2897 = vsub.s32 %v2894, %v2896
    %v2898 = vrot.slane %v2884, %v2897
    %v2899 = vcombine.low %v2891, %v2898
    %v2900 = vcombine.low %v2557, %v2558
    %v2901 = vcombine.low %v2559, %v2560
    %v2902 = vcombine.low %v2561, %v2562
    %v2904 = vunpack.c.l.s4 1966171168
    %v2905 = vunpack.c.0.s8 %v2904
    %v2906 = vlaneseq
    %v2907 = vshrl.u32 %v2906, 7
    %v2908 = vsub.s32 %v2905, %v2907
    %v2909 = vrot.slane %v2900, %v2908
    %v2911 = vunpack.c.l.s4 1966171168
    %v2912 = vunpack.c.0.s8 %v2911
    %v2913 = vlaneseq
    %v2914 = vshrl.u32 %v2913, 7
    %v2915 = vsub.s32 %v2912, %v2914
    %v2916 = vrot.slane %v2901, %v2915
    %v2918 = vunpack.c.l.s4 1966171168
    %v2919 = vunpack.c.0.s8 %v2918
    %v2920 = vlaneseq
    %v2921 = vshrl.u32 %v2920, 7
    %v2922 = vsub.s32 %v2919, %v2921
    %v2923 = vrot.slane %v2902, %v2922
    %v2925 = vunpack.c.l.s4 1966171168
    %v2926 = vunpack.c.0.s8 %v2925
    %v2927 = vlaneseq
    %v2928 = vshrl.u32 %v2927, 7
    %v2929 = vsub.s32 %v2926, %v2928
    %v2930 = vrot.slane %v2563, %v2929
    %v2931 = vcombine.low %v2909, %v2916
    %v2932 = vcombine.low %v2923, %v2930
    %v2934 = vunpack.c.l.s4 1966171168
    %v2935 = vunpack.c.0.s8 %v2934
    %v2936 = vlaneseq
    %v2937 = vshrl.u32 %v2936, 7
    %v2938 = vsub.s32 %v2935, %v2937
    %v2939 = vrot.slane %v2931, %v2938
    %v2941 = vunpack.c.l.s4 1966171168
    %v2942 = vunpack.c.0.s8 %v2941
    %v2943 = vlaneseq
    %v2944 = vshrl.u32 %v2943, 7
    %v2945 = vsub.s32 %v2942, %v2944
    %v2946 = vrot.slane %v2932, %v2945
    %v2947 = vcombine.low %v2939, %v2946
    %v2948 = vcombine.low %v2171, %v2611
    %v2949 = vcombine.high %v2171, %v2611
    %v2951 = vunpack.c.l.s4 1966171168
    %v2952 = vunpack.c.0.s8 %v2951
    %v2953 = vlaneseq
    %v2954 = vshrl.u32 %v2953, 7
    %v2955 = vsub.s32 %v2952, %v2954
    %v2956 = vrot.slane %v2948, %v2955
    %v2958 = vunpack.c.l.s4 1966171168
    %v2959 = vunpack.c.0.s8 %v2958
    %v2960 = vlaneseq
    %v2961 = vshrl.u32 %v2960, 7
    %v2962 = vsub.s32 %v2959, %v2961
    %v2963 = vrot.slane %v2949, %v2962
    %v2964 = vcombine.high %v2956, %v2956
    %v2965 = vcombine.high %v2963, %v2963
    %v2967 = vunpack.c.l.s4 1966171168
    %v2968 = vunpack.c.0.s8 %v2967
    %v2969 = vlaneseq
    %v2970 = vshrl.u32 %v2969, 7
    %v2971 = vsub.s32 %v2968, %v2970
    %v2972 = vrot.slane %v2956, %v2971
    %v2974 = vunpack.c.l.s4 1966171168
    %v2975 = vunpack.c.0.s8 %v2974
    %v2976 = vlaneseq
    %v2977 = vshrl.u32 %v2976, 7
    %v2978 = vsub.s32 %v2975, %v2977
    %v2979 = vrot.slane %v2963, %v2978
    %v2981 = vunpack.c.l.s4 1966171168
    %v2982 = vunpack.c.0.s8 %v2981
    %v2983 = vlaneseq
    %v2984 = vshrl.u32 %v2983, 7
    %v2985 = vsub.s32 %v2982, %v2984
    %v2986 = vrot.slane %v2964, %v2985
    %v2988 = vunpack.c.l.s4 1966171168
    %v2989 = vunpack.c.0.s8 %v2988
    %v2990 = vlaneseq
    %v2991 = vshrl.u32 %v2990, 7
    %v2992 = vsub.s32 %v2989, %v2991
    %v2993 = vrot.slane %v2965, %v2992
    %v2994 = vcombine.high %v2972, %v2972
    %v2995 = vcombine.high %v2979, %v2979
    %v2996 = vcombine.high %v2986, %v2986
    %v2997 = vcombine.low %v2219, %v2659
    %v2998 = vcombine.high %v2219, %v2659
    %v3000 = vunpack.c.l.s4 1966171168
    %v3001 = vunpack.c.0.s8 %v3000
    %v3002 = vlaneseq
    %v3003 = vshrl.u32 %v3002, 7
    %v3004 = vsub.s32 %v3001, %v3003
    %v3005 = vrot.slane %v2997, %v3004
    %v3007 = vunpack.c.l.s4 1966171168
    %v3008 = vunpack.c.0.s8 %v3007
    %v3009 = vlaneseq
    %v3010 = vshrl.u32 %v3009, 7
    %v3011 = vsub.s32 %v3008, %v3010
    %v3012 = vrot.slane %v2998, %v3011
    %v3013 = vcombine.high %v3005, %v3005
    %v3014 = vcombine.high %v3012, %v3012
    %v3016 = vunpack.c.l.s4 1966171168
    %v3017 = vunpack.c.0.s8 %v3016
    %v3018 = vlaneseq
    %v3019 = vshrl.u32 %v3018, 7
    %v3020 = vsub.s32 %v3017, %v3019
    %v3021 = vrot.slane %v3005, %v3020
    %v3023 = vunpack.c.l.s4 1966171168
    %v3024 = vunpack.c.0.s8 %v3023
    %v3025 = vlaneseq
    %v3026 = vshrl.u32 %v3025, 7
    %v3027 = vsub.s32 %v3024, %v3026
    %v3028 = vrot.slane %v3012, %v3027
    %v3030 = vunpack.c.l.s4 1966171168
    %v3031 = vunpack.c.0.s8 %v3030
    %v3032 = vlaneseq
    %v3033 = vshrl.u32 %v3032, 7
    %v3034 = vsub.s32 %v3031, %v3033
    %v3035 = vrot.slane %v3013, %v3034
    %v3037 = vunpack.c.l.s4 1966171168
    %v3038 = vunpack.c.0.s8 %v3037
    %v3039 = vlaneseq
    %v3040 = vshrl.u32 %v3039, 7
    %v3041 = vsub.s32 %v3038, %v3040
    %v3042 = vrot.slane %v3014, %v3041
    %v3043 = vcombine.high %v3021, %v3021
    %v3044 = vcombine.high %v3028, %v3028
    %v3045 = vcombine.high %v3035, %v3035
    %v3046 = vcombine.low %v2267, %v2707
    %v3047 = vcombine.high %v2267, %v2707
    %v3049 = vunpack.c.l.s4 1966171168
    %v3050 = vunpack.c.0.s8 %v3049
    %v3051 = vlaneseq
    %v3052 = vshrl.u32 %v3051, 7
    %v3053 = vsub.s32 %v3050, %v3052
    %v3054 = vrot.slane %v3046, %v3053
    %v3056 = vunpack.c.l.s4 1966171168
    %v3057 = vunpack.c.0.s8 %v3056
    %v3058 = vlaneseq
    %v3059 = vshrl.u32 %v3058, 7
    %v3060 = vsub.s32 %v3057, %v3059
    %v3061 = vrot.slane %v3047, %v3060
    %v3062 = vcombine.high %v3054, %v3054
    %v3063 = vcombine.high %v3061, %v3061
    %v3065 = vunpack.c.l.s4 1966171168
    %v3066 = vunpack.c.0.s8 %v3065
    %v3067 = vlaneseq
    %v3068 = vshrl.u32 %v3067, 7
    %v3069 = vsub.s32 %v3066, %v3068
    %v3070 = vrot.slane %v3054, %v3069
    %v3072 = vunpack.c.l.s4 1966171168
    %v3073 = vunpack.c.0.s8 %v3072
    %v3074 = vlaneseq
    %v3075 = vshrl.u32 %v3074, 7
    %v3076 = vsub.s32 %v3073, %v3075
    %v3077 = vrot.slane %v3061, %v3076
    %v3079 = vunpack.c.l.s4 1966171168
    %v3080 = vunpack.c.0.s8 %v3079
    %v3081 = vlaneseq
    %v3082 = vshrl.u32 %v3081, 7
    %v3083 = vsub.s32 %v3080, %v3082
    %v3084 = vrot.slane %v3062, %v3083
    %v3086 = vunpack.c.l.s4 1966171168
    %v3087 = vunpack.c.0.s8 %v3086
    %v3088 = vlaneseq
    %v3089 = vshrl.u32 %v3088, 7
    %v3090 = vsub.s32 %v3087, %v3089
    %v3091 = vrot.slane %v3063, %v3090
    %v3092 = vcombine.high %v3070, %v3070
    %v3093 = vcombine.high %v3077, %v3077
    %v3094 = vcombine.high %v3084, %v3084
    %v3095 = vcombine.low %v2315, %v2755
    %v3096 = vcombine.high %v2315, %v2755
    %v3098 = vunpack.c.l.s4 1966171168
    %v3099 = vunpack.c.0.s8 %v3098
    %v3100 = vlaneseq
    %v3101 = vshrl.u32 %v3100, 7
    %v3102 = vsub.s32 %v3099, %v3101
    %v3103 = vrot.slane %v3095, %v3102
    %v3105 = vunpack.c.l.s4 1966171168
    %v3106 = vunpack.c.0.s8 %v3105
    %v3107 = vlaneseq
    %v3108 = vshrl.u32 %v3107, 7
    %v3109 = vsub.s32 %v3106, %v3108
    %v3110 = vrot.slane %v3096, %v3109
    %v3111 = vcombine.high %v3103, %v3103
    %v3112 = vcombine.high %v3110, %v3110
    %v3114 = vunpack.c.l.s4 1966171168
    %v3115 = vunpack.c.0.s8 %v3114
    %v3116 = vlaneseq
    %v3117 = vshrl.u32 %v3116, 7
    %v3118 = vsub.s32 %v3115, %v3117
    %v3119 = vrot.slane %v3103, %v3118
    %v3121 = vunpack.c.l.s4 1966171168
    %v3122 = vunpack.c.0.s8 %v3121
    %v3123 = vlaneseq
    %v3124 = vshrl.u32 %v3123, 7
    %v3125 = vsub.s32 %v3122, %v3124
    %v3126 = vrot.slane %v3110, %v3125
    %v3128 = vunpack.c.l.s4 1966171168
    %v3129 = vunpack.c.0.s8 %v3128
    %v3130 = vlaneseq
    %v3131 = vshrl.u32 %v3130, 7
    %v3132 = vsub.s32 %v3129, %v3131
    %v3133 = vrot.slane %v3111, %v3132
    %v3135 = vunpack.c.l.s4 1966171168
    %v3136 = vunpack.c.0.s8 %v3135
    %v3137 = vlaneseq
    %v3138 = vshrl.u32 %v3137, 7
    %v3139 = vsub.s32 %v3136, %v3138
    %v3140 = vrot.slane %v3112, %v3139
    %v3141 = vcombine.high %v3119, %v3119
    %v3142 = vcombine.high %v3126, %v3126
    %v3143 = vcombine.high %v3133, %v3133
    %v3144 = vcombine.low %v2363, %v2803
    %v3145 = vcombine.high %v2363, %v2803
    %v3147 = vunpack.c.l.s4 1966171168
    %v3148 = vunpack.c.0.s8 %v3147
    %v3149 = vlaneseq
    %v3150 = vshrl.u32 %v3149, 7
    %v3151 = vsub.s32 %v3148, %v3150
    %v3152 = vrot.slane %v3144, %v3151
    %v3154 = vunpack.c.l.s4 1966171168
    %v3155 = vunpack.c.0.s8 %v3154
    %v3156 = vlaneseq
    %v3157 = vshrl.u32 %v3156, 7
    %v3158 = vsub.s32 %v3155, %v3157
    %v3159 = vrot.slane %v3145, %v3158
    %v3160 = vcombine.high %v3152, %v3152
    %v3161 = vcombine.high %v3159, %v3159
    %v3163 = vunpack.c.l.s4 1966171168
    %v3164 = vunpack.c.0.s8 %v3163
    %v3165 = vlaneseq
    %v3166 = vshrl.u32 %v3165, 7
    %v3167 = vsub.s32 %v3164, %v3166
    %v3168 = vrot.slane %v3152, %v3167
    %v3170 = vunpack.c.l.s4 1966171168
    %v3171 = vunpack.c.0.s8 %v3170
    %v3172 = vlaneseq
    %v3173 = vshrl.u32 %v3172, 7
    %v3174 = vsub.s32 %v3171, %v3173
    %v3175 = vrot.slane %v3159, %v3174
    %v3177 = vunpack.c.l.s4 1966171168
    %v3178 = vunpack.c.0.s8 %v3177
    %v3179 = vlaneseq
    %v3180 = vshrl.u32 %v3179, 7
    %v3181 = vsub.s32 %v3178, %v3180
    %v3182 = vrot.slane %v3160, %v3181
    %v3184 = vunpack.c.l.s4 1966171168
    %v3185 = vunpack.c.0.s8 %v3184
    %v3186 = vlaneseq
    %v3187 = vshrl.u32 %v3186, 7
    %v3188 = vsub.s32 %v3185, %v3187
    %v3189 = vrot.slane %v3161, %v3188
    %v3190 = vcombine.high %v3168, %v3168
    %v3191 = vcombine.high %v3175, %v3175
    %v3192 = vcombine.high %v3182, %v3182
    %v3193 = vcombine.low %v2411, %v2851
    %v3194 = vcombine.high %v2411, %v2851
    %v3196 = vunpack.c.l.s4 1966171168
    %v3197 = vunpack.c.0.s8 %v3196
    %v3198 = vlaneseq
    %v3199 = vshrl.u32 %v3198, 7
    %v3200 = vsub.s32 %v3197, %v3199
    %v3201 = vrot.slane %v3193, %v3200
    %v3203 = vunpack.c.l.s4 1966171168
    %v3204 = vunpack.c.0.s8 %v3203
    %v3205 = vlaneseq
    %v3206 = vshrl.u32 %v3205, 7
    %v3207 = vsub.s32 %v3204, %v3206
    %v3208 = vrot.slane %v3194, %v3207
    %v3209 = vcombine.high %v3201, %v3201
    %v3210 = vcombine.high %v3208, %v3208
    %v3212 = vunpack.c.l.s4 1966171168
    %v3213 = vunpack.c.0.s8 %v3212
    %v3214 = vlaneseq
    %v3215 = vshrl.u32 %v3214, 7
    %v3216 = vsub.s32 %v3213, %v3215
    %v3217 = vrot.slane %v3201, %v3216
    %v3219 = vunpack.c.l.s4 1966171168
    %v3220 = vunpack.c.0.s8 %v3219
    %v3221 = vlaneseq
    %v3222 = vshrl.u32 %v3221, 7
    %v3223 = vsub.s32 %v3220, %v3222
    %v3224 = vrot.slane %v3208, %v3223
    %v3226 = vunpack.c.l.s4 1966171168
    %v3227 = vunpack.c.0.s8 %v3226
    %v3228 = vlaneseq
    %v3229 = vshrl.u32 %v3228, 7
    %v3230 = vsub.s32 %v3227, %v3229
    %v3231 = vrot.slane %v3209, %v3230
    %v3233 = vunpack.c.l.s4 1966171168
    %v3234 = vunpack.c.0.s8 %v3233
    %v3235 = vlaneseq
    %v3236 = vshrl.u32 %v3235, 7
    %v3237 = vsub.s32 %v3234, %v3236
    %v3238 = vrot.slane %v3210, %v3237
    %v3239 = vcombine.high %v3217, %v3217
    %v3240 = vcombine.high %v3224, %v3224
    %v3241 = vcombine.high %v3231, %v3231
    %v3242 = vcombine.low %v2459, %v2899
    %v3243 = vcombine.high %v2459, %v2899
    %v3245 = vunpack.c.l.s4 1966171168
    %v3246 = vunpack.c.0.s8 %v3245
    %v3247 = vlaneseq
    %v3248 = vshrl.u32 %v3247, 7
    %v3249 = vsub.s32 %v3246, %v3248
    %v3250 = vrot.slane %v3242, %v3249
    %v3252 = vunpack.c.l.s4 1966171168
    %v3253 = vunpack.c.0.s8 %v3252
    %v3254 = vlaneseq
    %v3255 = vshrl.u32 %v3254, 7
    %v3256 = vsub.s32 %v3253, %v3255
    %v3257 = vrot.slane %v3243, %v3256
    %v3258 = vcombine.high %v3250, %v3250
    %v3259 = vcombine.high %v3257, %v3257
    %v3261 = vunpack.c.l.s4 1966171168
    %v3262 = vunpack.c.0.s8 %v3261
    %v3263 = vlaneseq
    %v3264 = vshrl.u32 %v3263, 7
    %v3265 = vsub.s32 %v3262, %v3264
    %v3266 = vrot.slane %v3250, %v3265
    %v3268 = vunpack.c.l.s4 1966171168
    %v3269 = vunpack.c.0.s8 %v3268
    %v3270 = vlaneseq
    %v3271 = vshrl.u32 %v3270, 7
    %v3272 = vsub.s32 %v3269, %v3271
    %v3273 = vrot.slane %v3257, %v3272
    %v3275 = vunpack.c.l.s4 1966171168
    %v3276 = vunpack.c.0.s8 %v3275
    %v3277 = vlaneseq
    %v3278 = vshrl.u32 %v3277, 7
    %v3279 = vsub.s32 %v3276, %v3278
    %v3280 = vrot.slane %v3258, %v3279
    %v3282 = vunpack.c.l.s4 1966171168
    %v3283 = vunpack.c.0.s8 %v3282
    %v3284 = vlaneseq
    %v3285 = vshrl.u32 %v3284, 7
    %v3286 = vsub.s32 %v3283, %v3285
    %v3287 = vrot.slane %v3259, %v3286
    %v3288 = vcombine.high %v3266, %v3266
    %v3289 = vcombine.high %v3273, %v3273
    %v3290 = vcombine.high %v3280, %v3280
    %v3291 = vcombine.low %v2507, %v2947
    %v3292 = vcombine.high %v2507, %v2947
    %v3294 = vunpack.c.l.s4 1966171168
    %v3295 = vunpack.c.0.s8 %v3294
    %v3296 = vlaneseq
    %v3297 = vshrl.u32 %v3296, 7
    %v3298 = vsub.s32 %v3295, %v3297
    %v3299 = vrot.slane %v3291, %v3298
    %v3301 = vunpack.c.l.s4 1966171168
    %v3302 = vunpack.c.0.s8 %v3301
    %v3303 = vlaneseq
    %v3304 = vshrl.u32 %v3303, 7
    %v3305 = vsub.s32 %v3302, %v3304
    %v3306 = vrot.slane %v3292, %v3305
    %v3307 = vcombine.high %v3299, %v3299
    %v3308 = vcombine.high %v3306, %v3306
    %v3310 = vunpack.c.l.s4 1966171168
    %v3311 = vunpack.c.0.s8 %v3310
    %v3312 = vlaneseq
    %v3313 = vshrl.u32 %v3312, 7
    %v3314 = vsub.s32 %v3311, %v3313
    %v3315 = vrot.slane %v3299, %v3314
    %v3317 = vunpack.c.l.s4 1966171168
    %v3318 = vunpack.c.0.s8 %v3317
    %v3319 = vlaneseq
    %v3320 = vshrl.u32 %v3319, 7
    %v3321 = vsub.s32 %v3318, %v3320
    %v3322 = vrot.slane %v3306, %v3321
    %v3324 = vunpack.c.l.s4 1966171168
    %v3325 = vunpack.c.0.s8 %v3324
    %v3326 = vlaneseq
    %v3327 = vshrl.u32 %v3326, 7
    %v3328 = vsub.s32 %v3325, %v3327
    %v3329 = vrot.slane %v3307, %v3328
    %v3331 = vunpack.c.l.s4 1966171168
    %v3332 = vunpack.c.0.s8 %v3331
    %v3333 = vlaneseq
    %v3334 = vshrl.u32 %v3333, 7
    %v3335 = vsub.s32 %v3332, %v3334
    %v3336 = vrot.slane %v3308, %v3335
    %v3337 = vcombine.high %v3315, %v3315
    %v3338 = vcombine.high %v3322, %v3322
    %v3339 = vcombine.high %v3329, %v3329
    %v3340 = vld [vmem:[#allocation5] sm:$0xff]
    %v3341 = vld [vmem:[#allocation5 + $0x8] sm:$0xff]
    %v3342 = vld [vmem:[#allocation5 + $0x10] sm:$0xff]
    %v3343 = vld [vmem:[#allocation5 + $0x18] sm:$0xff]
    %v3344 = vld [vmem:[#allocation5 + $0x20] sm:$0xff]
    %v3345 = vld [vmem:[#allocation5 + $0x28] sm:$0xff]
    %v3346 = vld [vmem:[#allocation5 + $0x30] sm:$0xff]
    %v3347 = vld [vmem:[#allocation5 + $0x38] sm:$0xff]
    %v3348 = vld [vmem:[#allocation5 + $0x40] sm:$0xff]
    %v3349 = vld [vmem:[#allocation5 + $0x48] sm:$0xff]
    %v3350 = vld [vmem:[#allocation5 + $0x50] sm:$0xff]
    %v3351 = vld [vmem:[#allocation5 + $0x58] sm:$0xff]
    %v3352 = vld [vmem:[#allocation5 + $0x60] sm:$0xff]
    %v3353 = vld [vmem:[#allocation5 + $0x68] sm:$0xff]
    %v3354 = vld [vmem:[#allocation5 + $0x70] sm:$0xff]
    %v3355 = vld [vmem:[#allocation5 + $0x78] sm:$0xff]
    %v3356 = vld [vmem:[#allocation5 + $0x80] sm:$0xff]
    %v3357 = vld [vmem:[#allocation5 + $0x88] sm:$0xff]
    %v3358 = vld [vmem:[#allocation5 + $0x90] sm:$0xff]
    %v3359 = vld [vmem:[#allocation5 + $0x98] sm:$0xff]
    %v3360 = vld [vmem:[#allocation5 + $0xa0] sm:$0xff]
    %v3361 = vld [vmem:[#allocation5 + $0xa8] sm:$0xff]
    %v3362 = vld [vmem:[#allocation5 + $0xb0] sm:$0xff]
    %v3363 = vld [vmem:[#allocation5 + $0xb8] sm:$0xff]
    %v3364 = vld [vmem:[#allocation5 + $0xc0] sm:$0xff]
    %v3365 = vld [vmem:[#allocation5 + $0xc8] sm:$0xff]
    %v3366 = vld [vmem:[#allocation5 + $0xd0] sm:$0xff]
    %v3367 = vld [vmem:[#allocation5 + $0xd8] sm:$0xff]
    %v3368 = vld [vmem:[#allocation5 + $0xe0] sm:$0xff]
    %v3369 = vld [vmem:[#allocation5 + $0xe8] sm:$0xff]
    %v3370 = vld [vmem:[#allocation5 + $0xf0] sm:$0xff]
    %v3371 = vld [vmem:[#allocation5 + $0xf8] sm:$0xff]
    %v3372 = vcombine.low %v2972, %v2986
    %v3373 = vcombine.low %v2994, %v2996
    %v3374 = vcombine.low %v2979, %v2993
    %v3375 = vcombine.low %v2995, %v3021
    %v3377 = vunpack.c.l.s4 1966171168
    %v3378 = vunpack.c.0.s8 %v3377
    %v3379 = vlaneseq
    %v3380 = vshrl.u32 %v3379, 7
    %v3381 = vsub.s32 %v3378, %v3380
    %v3382 = vrot.slane %v3372, %v3381
    %v3384 = vunpack.c.l.s4 1966171168
    %v3385 = vunpack.c.0.s8 %v3384
    %v3386 = vlaneseq
    %v3387 = vshrl.u32 %v3386, 7
    %v3388 = vsub.s32 %v3385, %v3387
    %v3389 = vrot.slane %v3373, %v3388
    %v3391 = vunpack.c.l.s4 1966171168
    %v3392 = vunpack.c.0.s8 %v3391
    %v3393 = vlaneseq
    %v3394 = vshrl.u32 %v3393, 7
    %v3395 = vsub.s32 %v3392, %v3394
    %v3396 = vrot.slane %v3374, %v3395
    %v3398 = vunpack.c.l.s4 1966171168
    %v3399 = vunpack.c.0.s8 %v3398
    %v3400 = vlaneseq
    %v3401 = vshrl.u32 %v3400, 7
    %v3402 = vsub.s32 %v3399, %v3401
    %v3403 = vrot.slane %v3375, %v3402
    %v3404 = vcombine.low %v3382, %v3389
    %v3405 = vcombine.high %v3382, %v3389
    %v3406 = vcombine.low %v3396, %v3403
    %v3407 = vcombine.high %v3396, %v3403
    %v3409 = vunpack.c.l.s4 1966171168
    %v3410 = vunpack.c.0.s8 %v3409
    %v3411 = vlaneseq
    %v3412 = vshrl.u32 %v3411, 7
    %v3413 = vsub.s32 %v3410, %v3412
    %v3414 = vrot.slane %v3404, %v3413
    %v3416 = vunpack.c.l.s4 1966171168
    %v3417 = vunpack.c.0.s8 %v3416
    %v3418 = vlaneseq
    %v3419 = vshrl.u32 %v3418, 7
    %v3420 = vsub.s32 %v3417, %v3419
    %v3421 = vrot.slane %v3405, %v3420
    %v3423 = vunpack.c.l.s4 1966171168
    %v3424 = vunpack.c.0.s8 %v3423
    %v3425 = vlaneseq
    %v3426 = vshrl.u32 %v3425, 7
    %v3427 = vsub.s32 %v3424, %v3426
    %v3428 = vrot.slane %v3406, %v3427
    %v3430 = vunpack.c.l.s4 1966171168
    %v3431 = vunpack.c.0.s8 %v3430
    %v3432 = vlaneseq
    %v3433 = vshrl.u32 %v3432, 7
    %v3434 = vsub.s32 %v3431, %v3433
    %v3435 = vrot.slane %v3407, %v3434
    %v3436 = vcombine.low %v3414, %v3428
    %v3437 = vcombine.low %v3421, %v3435
    %v3438 = vcombine.low %v3035, %v3043
    %v3439 = vcombine.low %v3045, %v3028
    %v3440 = vcombine.low %v3042, %v3044
    %v3441 = vcombine.low %v3070, %v3084
    %v3443 = vunpack.c.l.s4 1966171168
    %v3444 = vunpack.c.0.s8 %v3443
    %v3445 = vlaneseq
    %v3446 = vshrl.u32 %v3445, 7
    %v3447 = vsub.s32 %v3444, %v3446
    %v3448 = vrot.slane %v3438, %v3447
    %v3450 = vunpack.c.l.s4 1966171168
    %v3451 = vunpack.c.0.s8 %v3450
    %v3452 = vlaneseq
    %v3453 = vshrl.u32 %v3452, 7
    %v3454 = vsub.s32 %v3451, %v3453
    %v3455 = vrot.slane %v3439, %v3454
    %v3457 = vunpack.c.l.s4 1966171168
    %v3458 = vunpack.c.0.s8 %v3457
    %v3459 = vlaneseq
    %v3460 = vshrl.u32 %v3459, 7
    %v3461 = vsub.s32 %v3458, %v3460
    %v3462 = vrot.slane %v3440, %v3461
    %v3464 = vunpack.c.l.s4 1966171168
    %v3465 = vunpack.c.0.s8 %v3464
    %v3466 = vlaneseq
    %v3467 = vshrl.u32 %v3466, 7
    %v3468 = vsub.s32 %v3465, %v3467
    %v3469 = vrot.slane %v3441, %v3468
    %v3470 = vcombine.low %v3448, %v3455
    %v3471 = vcombine.high %v3448, %v3455
    %v3472 = vcombine.low %v3462, %v3469
    %v3473 = vcombine.high %v3462, %v3469
    %v3475 = vunpack.c.l.s4 1966171168
    %v3476 = vunpack.c.0.s8 %v3475
    %v3477 = vlaneseq
    %v3478 = vshrl.u32 %v3477, 7
    %v3479 = vsub.s32 %v3476, %v3478
    %v3480 = vrot.slane %v3470, %v3479
    %v3482 = vunpack.c.l.s4 1966171168
    %v3483 = vunpack.c.0.s8 %v3482
    %v3484 = vlaneseq
    %v3485 = vshrl.u32 %v3484, 7
    %v3486 = vsub.s32 %v3483, %v3485
    %v3487 = vrot.slane %v3471, %v3486
    %v3489 = vunpack.c.l.s4 1966171168
    %v3490 = vunpack.c.0.s8 %v3489
    %v3491 = vlaneseq
    %v3492 = vshrl.u32 %v3491, 7
    %v3493 = vsub.s32 %v3490, %v3492
    %v3494 = vrot.slane %v3472, %v3493
    %v3496 = vunpack.c.l.s4 1966171168
    %v3497 = vunpack.c.0.s8 %v3496
    %v3498 = vlaneseq
    %v3499 = vshrl.u32 %v3498, 7
    %v3500 = vsub.s32 %v3497, %v3499
    %v3501 = vrot.slane %v3473, %v3500
    %v3502 = vcombine.low %v3480, %v3494
    %v3503 = vcombine.low %v3487, %v3501
    %v3504 = vcombine.low %v3092, %v3094
    %v3505 = vcombine.low %v3077, %v3091
    %v3506 = vcombine.low %v3093, %v3119
    %v3507 = vcombine.low %v3133, %v3141
    %v3509 = vunpack.c.l.s4 1966171168
    %v3510 = vunpack.c.0.s8 %v3509
    %v3511 = vlaneseq
    %v3512 = vshrl.u32 %v3511, 7
    %v3513 = vsub.s32 %v3510, %v3512
    %v3514 = vrot.slane %v3504, %v3513
    %v3516 = vunpack.c.l.s4 1966171168
    %v3517 = vunpack.c.0.s8 %v3516
    %v3518 = vlaneseq
    %v3519 = vshrl.u32 %v3518, 7
    %v3520 = vsub.s32 %v3517, %v3519
    %v3521 = vrot.slane %v3505, %v3520
    %v3523 = vunpack.c.l.s4 1966171168
    %v3524 = vunpack.c.0.s8 %v3523
    %v3525 = vlaneseq
    %v3526 = vshrl.u32 %v3525, 7
    %v3527 = vsub.s32 %v3524, %v3526
    %v3528 = vrot.slane %v3506, %v3527
    %v3530 = vunpack.c.l.s4 1966171168
    %v3531 = vunpack.c.0.s8 %v3530
    %v3532 = vlaneseq
    %v3533 = vshrl.u32 %v3532, 7
    %v3534 = vsub.s32 %v3531, %v3533
    %v3535 = vrot.slane %v3507, %v3534
    %v3536 = vcombine.low %v3514, %v3521
    %v3537 = vcombine.high %v3514, %v3521
    %v3538 = vcombine.low %v3528, %v3535
    %v3539 = vcombine.high %v3528, %v3535
    %v3541 = vunpack.c.l.s4 1966171168
    %v3542 = vunpack.c.0.s8 %v3541
    %v3543 = vlaneseq
    %v3544 = vshrl.u32 %v3543, 7
    %v3545 = vsub.s32 %v3542, %v3544
    %v3546 = vrot.slane %v3536, %v3545
    %v3548 = vunpack.c.l.s4 1966171168
    %v3549 = vunpack.c.0.s8 %v3548
    %v3550 = vlaneseq
    %v3551 = vshrl.u32 %v3550, 7
    %v3552 = vsub.s32 %v3549, %v3551
    %v3553 = vrot.slane %v3537, %v3552
    %v3555 = vunpack.c.l.s4 1966171168
    %v3556 = vunpack.c.0.s8 %v3555
    %v3557 = vlaneseq
    %v3558 = vshrl.u32 %v3557, 7
    %v3559 = vsub.s32 %v3556, %v3558
    %v3560 = vrot.slane %v3538, %v3559
    %v3562 = vunpack.c.l.s4 1966171168
    %v3563 = vunpack.c.0.s8 %v3562
    %v3564 = vlaneseq
    %v3565 = vshrl.u32 %v3564, 7
    %v3566 = vsub.s32 %v3563, %v3565
    %v3567 = vrot.slane %v3539, %v3566
    %v3568 = vcombine.low %v3546, %v3560
    %v3569 = vcombine.low %v3553, %v3567
    %v3570 = vcombine.low %v3143, %v3126
    %v3571 = vcombine.low %v3140, %v3142
    %v3572 = vcombine.low %v3168, %v3182
    %v3573 = vcombine.low %v3190, %v3192
    %v3575 = vunpack.c.l.s4 1966171168
    %v3576 = vunpack.c.0.s8 %v3575
    %v3577 = vlaneseq
    %v3578 = vshrl.u32 %v3577, 7
    %v3579 = vsub.s32 %v3576, %v3578
    %v3580 = vrot.slane %v3570, %v3579
    %v3582 = vunpack.c.l.s4 1966171168
    %v3583 = vunpack.c.0.s8 %v3582
    %v3584 = vlaneseq
    %v3585 = vshrl.u32 %v3584, 7
    %v3586 = vsub.s32 %v3583, %v3585
    %v3587 = vrot.slane %v3571, %v3586
    %v3589 = vunpack.c.l.s4 1966171168
    %v3590 = vunpack.c.0.s8 %v3589
    %v3591 = vlaneseq
    %v3592 = vshrl.u32 %v3591, 7
    %v3593 = vsub.s32 %v3590, %v3592
    %v3594 = vrot.slane %v3572, %v3593
    %v3596 = vunpack.c.l.s4 1966171168
    %v3597 = vunpack.c.0.s8 %v3596
    %v3598 = vlaneseq
    %v3599 = vshrl.u32 %v3598, 7
    %v3600 = vsub.s32 %v3597, %v3599
    %v3601 = vrot.slane %v3573, %v3600
    %v3602 = vcombine.low %v3580, %v3587
    %v3603 = vcombine.high %v3580, %v3587
    %v3604 = vcombine.low %v3594, %v3601
    %v3605 = vcombine.high %v3594, %v3601
    %v3607 = vunpack.c.l.s4 1966171168
    %v3608 = vunpack.c.0.s8 %v3607
    %v3609 = vlaneseq
    %v3610 = vshrl.u32 %v3609, 7
    %v3611 = vsub.s32 %v3608, %v3610
    %v3612 = vrot.slane %v3602, %v3611
    %v3614 = vunpack.c.l.s4 1966171168
    %v3615 = vunpack.c.0.s8 %v3614
    %v3616 = vlaneseq
    %v3617 = vshrl.u32 %v3616, 7
    %v3618 = vsub.s32 %v3615, %v3617
    %v3619 = vrot.slane %v3603, %v3618
    %v3621 = vunpack.c.l.s4 1966171168
    %v3622 = vunpack.c.0.s8 %v3621
    %v3623 = vlaneseq
    %v3624 = vshrl.u32 %v3623, 7
    %v3625 = vsub.s32 %v3622, %v3624
    %v3626 = vrot.slane %v3604, %v3625
    %v3628 = vunpack.c.l.s4 1966171168
    %v3629 = vunpack.c.0.s8 %v3628
    %v3630 = vlaneseq
    %v3631 = vshrl.u32 %v3630, 7
    %v3632 = vsub.s32 %v3629, %v3631
    %v3633 = vrot.slane %v3605, %v3632
    %v3634 = vcombine.low %v3612, %v3626
    %v3635 = vcombine.low %v3619, %v3633
    %v3636 = vcombine.low %v3175, %v3189
    %v3637 = vcombine.low %v3191, %v3217
    %v3638 = vcombine.low %v3231, %v3239
    %v3639 = vcombine.low %v3241, %v3224
    %v3641 = vunpack.c.l.s4 1966171168
    %v3642 = vunpack.c.0.s8 %v3641
    %v3643 = vlaneseq
    %v3644 = vshrl.u32 %v3643, 7
    %v3645 = vsub.s32 %v3642, %v3644
    %v3646 = vrot.slane %v3636, %v3645
    %v3648 = vunpack.c.l.s4 1966171168
    %v3649 = vunpack.c.0.s8 %v3648
    %v3650 = vlaneseq
    %v3651 = vshrl.u32 %v3650, 7
    %v3652 = vsub.s32 %v3649, %v3651
    %v3653 = vrot.slane %v3637, %v3652
    %v3655 = vunpack.c.l.s4 1966171168
    %v3656 = vunpack.c.0.s8 %v3655
    %v3657 = vlaneseq
    %v3658 = vshrl.u32 %v3657, 7
    %v3659 = vsub.s32 %v3656, %v3658
    %v3660 = vrot.slane %v3638, %v3659
    %v3662 = vunpack.c.l.s4 1966171168
    %v3663 = vunpack.c.0.s8 %v3662
    %v3664 = vlaneseq
    %v3665 = vshrl.u32 %v3664, 7
    %v3666 = vsub.s32 %v3663, %v3665
    %v3667 = vrot.slane %v3639, %v3666
    %v3668 = vcombine.low %v3646, %v3653
    %v3669 = vcombine.high %v3646, %v3653
    %v3670 = vcombine.low %v3660, %v3667
    %v3671 = vcombine.high %v3660, %v3667
    %v3673 = vunpack.c.l.s4 1966171168
    %v3674 = vunpack.c.0.s8 %v3673
    %v3675 = vlaneseq
    %v3676 = vshrl.u32 %v3675, 7
    %v3677 = vsub.s32 %v3674, %v3676
    %v3678 = vrot.slane %v3668, %v3677
    %v3680 = vunpack.c.l.s4 1966171168
    %v3681 = vunpack.c.0.s8 %v3680
    %v3682 = vlaneseq
    %v3683 = vshrl.u32 %v3682, 7
    %v3684 = vsub.s32 %v3681, %v3683
    %v3685 = vrot.slane %v3669, %v3684
    %v3687 = vunpack.c.l.s4 1966171168
    %v3688 = vunpack.c.0.s8 %v3687
    %v3689 = vlaneseq
    %v3690 = vshrl.u32 %v3689, 7
    %v3691 = vsub.s32 %v3688, %v3690
    %v3692 = vrot.slane %v3670, %v3691
    %v3694 = vunpack.c.l.s4 1966171168
    %v3695 = vunpack.c.0.s8 %v3694
    %v3696 = vlaneseq
    %v3697 = vshrl.u32 %v3696, 7
    %v3698 = vsub.s32 %v3695, %v3697
    %v3699 = vrot.slane %v3671, %v3698
    %v3700 = vcombine.low %v3678, %v3692
    %v3701 = vcombine.low %v3685, %v3699
    %v3702 = vcombine.low %v3238, %v3240
    %v3703 = vcombine.low %v3266, %v3280
    %v3704 = vcombine.low %v3288, %v3290
    %v3705 = vcombine.low %v3273, %v3287
    %v3707 = vunpack.c.l.s4 1966171168
    %v3708 = vunpack.c.0.s8 %v3707
    %v3709 = vlaneseq
    %v3710 = vshrl.u32 %v3709, 7
    %v3711 = vsub.s32 %v3708, %v3710
    %v3712 = vrot.slane %v3702, %v3711
    %v3714 = vunpack.c.l.s4 1966171168
    %v3715 = vunpack.c.0.s8 %v3714
    %v3716 = vlaneseq
    %v3717 = vshrl.u32 %v3716, 7
    %v3718 = vsub.s32 %v3715, %v3717
    %v3719 = vrot.slane %v3703, %v3718
    %v3721 = vunpack.c.l.s4 1966171168
    %v3722 = vunpack.c.0.s8 %v3721
    %v3723 = vlaneseq
    %v3724 = vshrl.u32 %v3723, 7
    %v3725 = vsub.s32 %v3722, %v3724
    %v3726 = vrot.slane %v3704, %v3725
    %v3728 = vunpack.c.l.s4 1966171168
    %v3729 = vunpack.c.0.s8 %v3728
    %v3730 = vlaneseq
    %v3731 = vshrl.u32 %v3730, 7
    %v3732 = vsub.s32 %v3729, %v3731
    %v3733 = vrot.slane %v3705, %v3732
    %v3734 = vcombine.low %v3712, %v3719
    %v3735 = vcombine.high %v3712, %v3719
    %v3736 = vcombine.low %v3726, %v3733
    %v3737 = vcombine.high %v3726, %v3733
    %v3739 = vunpack.c.l.s4 1966171168
    %v3740 = vunpack.c.0.s8 %v3739
    %v3741 = vlaneseq
    %v3742 = vshrl.u32 %v3741, 7
    %v3743 = vsub.s32 %v3740, %v3742
    %v3744 = vrot.slane %v3734, %v3743
    %v3746 = vunpack.c.l.s4 1966171168
    %v3747 = vunpack.c.0.s8 %v3746
    %v3748 = vlaneseq
    %v3749 = vshrl.u32 %v3748, 7
    %v3750 = vsub.s32 %v3747, %v3749
    %v3751 = vrot.slane %v3735, %v3750
    %v3753 = vunpack.c.l.s4 1966171168
    %v3754 = vunpack.c.0.s8 %v3753
    %v3755 = vlaneseq
    %v3756 = vshrl.u32 %v3755, 7
    %v3757 = vsub.s32 %v3754, %v3756
    %v3758 = vrot.slane %v3736, %v3757
    %v3760 = vunpack.c.l.s4 1966171168
    %v3761 = vunpack.c.0.s8 %v3760
    %v3762 = vlaneseq
    %v3763 = vshrl.u32 %v3762, 7
    %v3764 = vsub.s32 %v3761, %v3763
    %v3765 = vrot.slane %v3737, %v3764
    %v3766 = vcombine.low %v3744, %v3758
    %v3767 = vcombine.low %v3751, %v3765
    %v3768 = vcombine.low %v3289, %v3315
    %v3769 = vcombine.low %v3329, %v3337
    %v3770 = vcombine.low %v3339, %v3322
    %v3771 = vcombine.low %v3336, %v3338
    %v3773 = vunpack.c.l.s4 1966171168
    %v3774 = vunpack.c.0.s8 %v3773
    %v3775 = vlaneseq
    %v3776 = vshrl.u32 %v3775, 7
    %v3777 = vsub.s32 %v3774, %v3776
    %v3778 = vrot.slane %v3768, %v3777
    %v3780 = vunpack.c.l.s4 1966171168
    %v3781 = vunpack.c.0.s8 %v3780
    %v3782 = vlaneseq
    %v3783 = vshrl.u32 %v3782, 7
    %v3784 = vsub.s32 %v3781, %v3783
    %v3785 = vrot.slane %v3769, %v3784
    %v3787 = vunpack.c.l.s4 1966171168
    %v3788 = vunpack.c.0.s8 %v3787
    %v3789 = vlaneseq
    %v3790 = vshrl.u32 %v3789, 7
    %v3791 = vsub.s32 %v3788, %v3790
    %v3792 = vrot.slane %v3770, %v3791
    %v3794 = vunpack.c.l.s4 1966171168
    %v3795 = vunpack.c.0.s8 %v3794
    %v3796 = vlaneseq
    %v3797 = vshrl.u32 %v3796, 7
    %v3798 = vsub.s32 %v3795, %v3797
    %v3799 = vrot.slane %v3771, %v3798
    %v3800 = vcombine.low %v3778, %v3785
    %v3801 = vcombine.high %v3778, %v3785
    %v3802 = vcombine.low %v3792, %v3799
    %v3803 = vcombine.high %v3792, %v3799
    %v3805 = vunpack.c.l.s4 1966171168
    %v3806 = vunpack.c.0.s8 %v3805
    %v3807 = vlaneseq
    %v3808 = vshrl.u32 %v3807, 7
    %v3809 = vsub.s32 %v3806, %v3808
    %v3810 = vrot.slane %v3800, %v3809
    %v3812 = vunpack.c.l.s4 1966171168
    %v3813 = vunpack.c.0.s8 %v3812
    %v3814 = vlaneseq
    %v3815 = vshrl.u32 %v3814, 7
    %v3816 = vsub.s32 %v3813, %v3815
    %v3817 = vrot.slane %v3801, %v3816
    %v3819 = vunpack.c.l.s4 1966171168
    %v3820 = vunpack.c.0.s8 %v3819
    %v3821 = vlaneseq
    %v3822 = vshrl.u32 %v3821, 7
    %v3823 = vsub.s32 %v3820, %v3822
    %v3824 = vrot.slane %v3802, %v3823
    %v3826 = vunpack.c.l.s4 1966171168
    %v3827 = vunpack.c.0.s8 %v3826
    %v3828 = vlaneseq
    %v3829 = vshrl.u32 %v3828, 7
    %v3830 = vsub.s32 %v3827, %v3829
    %v3831 = vrot.slane %v3803, %v3830
    %v3832 = vcombine.low %v3810, %v3824
    %v3833 = vcombine.low %v3817, %v3831
    %v3880 = vunpack.c.l.b16 %v3340
    %v3881 = vunpack.c.h.b16 %v3340
    %v3882 = vunpack.c.l.b16 %v3341
    %v3883 = vunpack.c.h.b16 %v3341
    %v3884 = vunpack.c.l.b16 %v3342
    %v3885 = vunpack.c.h.b16 %v3342
    %v3886 = vunpack.c.l.b16 %v3343
    %v3887 = vunpack.c.h.b16 %v3343
    %v3888 = vunpack.c.l.b16 %v3344
    %v3889 = vunpack.c.h.b16 %v3344
    %v3890 = vunpack.c.l.b16 %v3345
    %v3891 = vunpack.c.h.b16 %v3345
    %v3892 = vunpack.c.l.b16 %v3346
    %v3893 = vunpack.c.h.b16 %v3346
    %v3894 = vunpack.c.l.b16 %v3347
    %v3895 = vunpack.c.h.b16 %v3347
    %v3896 = vunpack.c.l.b16 %v3348
    %v3897 = vunpack.c.h.b16 %v3348
    %v3898 = vunpack.c.l.b16 %v3349
    %v3899 = vunpack.c.h.b16 %v3349
    %v3900 = vunpack.c.l.b16 %v3350
    %v3901 = vunpack.c.h.b16 %v3350
    %v3902 = vunpack.c.l.b16 %v3351
    %v3903 = vunpack.c.h.b16 %v3351
    %v3904 = vunpack.c.l.b16 %v3352
    %v3905 = vunpack.c.h.b16 %v3352
    %v3906 = vunpack.c.l.b16 %v3353
    %v3907 = vunpack.c.h.b16 %v3353
    %v3908 = vunpack.c.l.b16 %v3354
    %v3909 = vunpack.c.h.b16 %v3354
    %v3910 = vunpack.c.l.b16 %v3355
    %v3911 = vunpack.c.h.b16 %v3355
    %v3912 = vunpack.c.l.b16 %v3356
    %v3913 = vunpack.c.h.b16 %v3356
    %v3914 = vunpack.c.l.b16 %v3357
    %v3915 = vunpack.c.h.b16 %v3357
    %v3916 = vunpack.c.l.b16 %v3358
    %v3917 = vunpack.c.h.b16 %v3358
    %v3918 = vunpack.c.l.b16 %v3359
    %v3919 = vunpack.c.h.b16 %v3359
    %v3920 = vunpack.c.l.b16 %v3360
    %v3921 = vunpack.c.h.b16 %v3360
    %v3922 = vunpack.c.l.b16 %v3361
    %v3923 = vunpack.c.h.b16 %v3361
    %v3924 = vunpack.c.l.b16 %v3362
    %v3925 = vunpack.c.h.b16 %v3362
    %v3926 = vunpack.c.l.b16 %v3363
    %v3927 = vunpack.c.h.b16 %v3363
    %v3928 = vunpack.c.l.b16 %v3364
    %v3929 = vunpack.c.h.b16 %v3364
    %v3930 = vunpack.c.l.b16 %v3365
    %v3931 = vunpack.c.h.b16 %v3365
    %v3932 = vunpack.c.l.b16 %v3366
    %v3933 = vunpack.c.h.b16 %v3366
    %v3934 = vunpack.c.l.b16 %v3367
    %v3935 = vunpack.c.h.b16 %v3367
    %v3936 = vunpack.c.l.b16 %v3368
    %v3937 = vunpack.c.h.b16 %v3368
    %v3938 = vunpack.c.l.b16 %v3369
    %v3939 = vunpack.c.h.b16 %v3369
    %v3940 = vunpack.c.l.b16 %v3370
    %v3941 = vunpack.c.h.b16 %v3370
    %v3942 = vunpack.c.l.b16 %v3371
    %v3943 = vunpack.c.h.b16 %v3371
    %v3944 = vpack.c.b16 %v3882, %v3880
    %v3945 = vpack.c.b16 %v3883, %v3881
    %v3946 = vpack.c.b16 %v3886, %v3884
    %v3947 = vpack.c.b16 %v3887, %v3885
    %v3948 = vpack.c.b16 %v3890, %v3888
    %v3949 = vpack.c.b16 %v3891, %v3889
    %v3950 = vpack.c.b16 %v3894, %v3892
    %v3951 = vpack.c.b16 %v3895, %v3893
    %v3952 = vpack.c.b16 %v3898, %v3896
    %v3953 = vpack.c.b16 %v3899, %v3897
    %v3954 = vpack.c.b16 %v3902, %v3900
    %v3955 = vpack.c.b16 %v3903, %v3901
    %v3956 = vpack.c.b16 %v3906, %v3904
    %v3957 = vpack.c.b16 %v3907, %v3905
    %v3958 = vpack.c.b16 %v3910, %v3908
    %v3959 = vpack.c.b16 %v3911, %v3909
    %v3960 = vpack.c.b16 %v3914, %v3912
    %v3961 = vpack.c.b16 %v3915, %v3913
    %v3962 = vpack.c.b16 %v3918, %v3916
    %v3963 = vpack.c.b16 %v3919, %v3917
    %v3964 = vpack.c.b16 %v3922, %v3920
    %v3965 = vpack.c.b16 %v3923, %v3921
    %v3966 = vpack.c.b16 %v3926, %v3924
    %v3967 = vpack.c.b16 %v3927, %v3925
    %v3968 = vpack.c.b16 %v3930, %v3928
    %v3969 = vpack.c.b16 %v3931, %v3929
    %v3970 = vpack.c.b16 %v3934, %v3932
    %v3971 = vpack.c.b16 %v3935, %v3933
    %v3972 = vpack.c.b16 %v3938, %v3936
    %v3973 = vpack.c.b16 %v3939, %v3937
    %v3974 = vpack.c.b16 %v3942, %v3940
    %v3975 = vpack.c.b16 %v3943, %v3941
    %4008 = vmatprep.subr.bf16.mxu0 %v3945
    %4009 = vmatpush1.bf16.msra.mxu0 %v3944
    %4010 = vmatprep.subr.bf16.mxu0 %v3947
    %4011 = vmatpush1.bf16.msra.mxu0 %v3946
    %4012 = vmatprep.subr.bf16.mxu0 %v3949
    %4013 = vmatpush1.bf16.msra.mxu0 %v3948
    %4014 = vmatprep.subr.bf16.mxu0 %v3951
    %4015 = vmatpush1.bf16.msra.mxu0 %v3950
    %4016 = vmatprep.subr.bf16.mxu0 %v3953
    %4017 = vmatpush1.bf16.msra.mxu0 %v3952
    %4018 = vmatprep.subr.bf16.mxu0 %v3955
    %4019 = vmatpush1.bf16.msra.mxu0 %v3954
    %4020 = vmatprep.subr.bf16.mxu0 %v3957
    %4021 = vmatpush1.bf16.msra.mxu0 %v3956
    %4022 = vmatprep.subr.bf16.mxu0 %v3959
    %4023 = vmatpush1.bf16.msra.mxu0 %v3958
    %4024 = vmatprep.subr.bf16.mxu0 %v3961
    %4025 = vmatpush1.bf16.msra.mxu0 %v3960
    %4026 = vmatprep.subr.bf16.mxu0 %v3963
    %4027 = vmatpush1.bf16.msra.mxu0 %v3962
    %4028 = vmatprep.subr.bf16.mxu0 %v3965
    %4029 = vmatpush1.bf16.msra.mxu0 %v3964
    %4030 = vmatprep.subr.bf16.mxu0 %v3967
    %4031 = vmatpush1.bf16.msra.mxu0 %v3966
    %4032 = vmatprep.subr.bf16.mxu0 %v3969
    %4033 = vmatpush1.bf16.msra.mxu0 %v3968
    %4034 = vmatprep.subr.bf16.mxu0 %v3971
    %4035 = vmatpush1.bf16.msra.mxu0 %v3970
    %4036 = vmatprep.subr.bf16.mxu0 %v3973
    %4037 = vmatpush1.bf16.msra.mxu0 %v3972
    %4038 = vmatprep.subr.bf16.mxu0 %v3975
    %4039 = vmatpush1.bf16.msra.mxu0 %v3974
    %4040 = vmatprep.mubr.bf16.mxu0 %v3437
    %4041 = vmatmul.mubr.bf16.gmra.mrb[0].mxu0 %v3436
    %v4042 = vpop.f32.mrb[0].mxu0
    %v4043 = vadd.f32 0.0, %v4042
    %v4044 = vpop.f32.mrb[0].mxu0
    %v4045 = vadd.f32 0.0, %v4044
    %v4046 = vpop.f32.mrb[0].mxu0
    %v4047 = vadd.f32 0.0, %v4046
    %v4048 = vpop.f32.mrb[0].mxu0
    %v4049 = vadd.f32 0.0, %v4048
    %4050 = vmatprep.mubr.bf16.mxu0 %v3503
    %4051 = vmatmul.mubr.bf16.gmra.mrb[0].mxu0 %v3502
    %v4052 = vpop.f32.mrb[0].mxu0
    %v4053 = vadd.f32 0.0, %v4052
    %v4054 = vpop.f32.mrb[0].mxu0
    %v4055 = vadd.f32 0.0, %v4054
    %v4056 = vpop.f32.mrb[0].mxu0
    %v4057 = vadd.f32 0.0, %v4056
    %v4058 = vpop.f32.mrb[0].mxu0
    %v4059 = vadd.f32 0.0, %v4058
    %4060 = vmatprep.mubr.bf16.mxu0 %v3569
    %4061 = vmatmul.mubr.bf16.gmra.mrb[0].mxu0 %v3568
    %v4062 = vpop.f32.mrb[0].mxu0
    %v4063 = vadd.f32 0.0, %v4062
    %v4064 = vpop.f32.mrb[0].mxu0
    %v4065 = vadd.f32 0.0, %v4064
    %v4066 = vpop.f32.mrb[0].mxu0
    %v4067 = vadd.f32 0.0, %v4066
    %v4068 = vpop.f32.mrb[0].mxu0
    %v4069 = vadd.f32 0.0, %v4068
    %4070 = vmatprep.mubr.bf16.mxu0 %v3635
    %4071 = vmatmul.mubr.bf16.gmra.mrb[0].mxu0 %v3634
    %v4072 = vpop.f32.mrb[0].mxu0
    %v4073 = vadd.f32 0.0, %v4072
    %v4074 = vpop.f32.mrb[0].mxu0
    %v4075 = vadd.f32 0.0, %v4074
    %v4076 = vpop.f32.mrb[0].mxu0
    %v4077 = vadd.f32 0.0, %v4076
    %v4078 = vpop.f32.mrb[0].mxu0
    %v4079 = vadd.f32 0.0, %v4078
    %4080 = vmatprep.mubr.bf16.mxu0 %v3701
    %4081 = vmatmul.mubr.bf16.gmra.mrb[0].mxu0 %v3700
    %v4082 = vpop.f32.mrb[0].mxu0
    %v4083 = vadd.f32 0.0, %v4082
    %v4084 = vpop.f32.mrb[0].mxu0
    %v4085 = vadd.f32 0.0, %v4084
    %v4086 = vpop.f32.mrb[0].mxu0
    %v4087 = vadd.f32 0.0, %v4086
    %v4088 = vpop.f32.mrb[0].mxu0
    %v4089 = vadd.f32 0.0, %v4088
    %4090 = vmatprep.mubr.bf16.mxu0 %v3767
    %4091 = vmatmul.mubr.bf16.gmra.mrb[0].mxu0 %v3766
    %v4092 = vpop.f32.mrb[0].mxu0
    %v4093 = vadd.f32 0.0, %v4092
    %v4094 = vpop.f32.mrb[0].mxu0
    %v4095 = vadd.f32 0.0, %v4094
    %v4096 = vpop.f32.mrb[0].mxu0
    %v4097 = vadd.f32 0.0, %v4096
    %v4098 = vpop.f32.mrb[0].mxu0
    %v4099 = vadd.f32 0.0, %v4098
    %4100 = vmatprep.mubr.bf16.mxu0 %v3833
    %4101 = vmatmul.mubr.bf16.gmra.mrb[0].mxu0 %v3832
    %v4102 = vpop.f32.mrb[0].mxu0
    %v4103 = vadd.f32 0.0, %v4102
    %v4104 = vpop.f32.mrb[0].mxu0
    %v4105 = vadd.f32 0.0, %v4104
    %v4106 = vpop.f32.mrb[0].mxu0
    %v4107 = vadd.f32 0.0, %v4106
    %v4108 = vpop.f32.mrb[0].mxu0
    %v4109 = vadd.f32 0.0, %v4108
    %4110 = vdwg.mxu0
    %v4111 = vmax.f32 %v4043, 0.0
    %v4112 = vmax.f32 %v4045, 0.0
    %v4113 = vmax.f32 %v4047, 0.0
    %v4114 = vmax.f32 %v4049, 0.0
    %v4115 = vmax.f32 %v4053, 0.0
    %v4116 = vmax.f32 %v4055, 0.0
    %v4117 = vmax.f32 %v4057, 0.0
    %v4118 = vmax.f32 %v4059, 0.0
    %v4119 = vmax.f32 %v4063, 0.0
    %v4120 = vmax.f32 %v4065, 0.0
    %v4121 = vmax.f32 %v4067, 0.0
    %v4122 = vmax.f32 %v4069, 0.0
    %v4123 = vmax.f32 %v4073, 0.0
    %v4124 = vmax.f32 %v4075, 0.0
    %v4125 = vmax.f32 %v4077, 0.0
    %v4126 = vmax.f32 %v4079, 0.0
    %v4127 = vmax.f32 %v4083, 0.0
    %v4128 = vmax.f32 %v4085, 0.0
    %v4129 = vmax.f32 %v4087, 0.0
    %v4130 = vmax.f32 %v4089, 0.0
    %v4131 = vmax.f32 %v4093, 0.0
    %v4132 = vmax.f32 %v4095, 0.0
    %v4133 = vmax.f32 %v4097, 0.0
    %v4134 = vmax.f32 %v4099, 0.0
    %v4135 = vmax.f32 %v4103, 0.0
    %v4136 = vmax.f32 %v4105, 0.0
    %v4137 = vmax.f32 %v4107, 0.0
    %v4138 = vmax.f32 %v4109, 0.0
    %v4139 = vpack.c.bf16 %v4113, %v4111
    %v4140 = vpack.c.bf16 %v4114, %v4112
    %v4141 = vpack.c.bf16 %v4117, %v4115
    %v4142 = vpack.c.bf16 %v4118, %v4116
    %v4143 = vpack.c.bf16 %v4121, %v4119
    %v4144 = vpack.c.bf16 %v4122, %v4120
    %v4145 = vpack.c.bf16 %v4125, %v4123
    %v4146 = vpack.c.bf16 %v4126, %v4124
    %v4147 = vpack.c.bf16 %v4129, %v4127
    %v4148 = vpack.c.bf16 %v4130, %v4128
    %v4149 = vpack.c.bf16 %v4133, %v4131
    %v4150 = vpack.c.bf16 %v4134, %v4132
    %v4151 = vpack.c.bf16 %v4137, %v4135
    %v4152 = vpack.c.bf16 %v4138, %v4136
    %vm4153 = vsmask.f32 256
    %v4154 = vsel %vm4153, %v4139, 0
    %v4155 = vrot.slane %v4139, 7
    %v4157 = vshll.u32 %v4155, 16
    %vm4159 = vsmask.f32 770
    %v4160 = vsel %vm4159, %v4157, %v4154
    %v4161 = vrot.slane %v4141, 5
    %vm4162 = vsmask.f32 1284
    %v4163 = vsel %vm4162, %v4161, %v4160
    %v4164 = vrot.slane %v4143, 4
    %v4166 = vshll.u32 %v4164, 16
    %vm4168 = vsmask.f32 1798
    %v4169 = vsel %vm4168, %v4166, %v4163
    %v4170 = vrot.slane %v4145, 2
    %vm4171 = vsmask.f32 2312
    %v4172 = vsel %vm4171, %v4170, %v4169
    %v4173 = vrot.slane %v4147, 1
    %v4175 = vshll.u32 %v4173, 16
    %vm4177 = vsmask.f32 2826
    %v4178 = vsel %vm4177, %v4175, %v4172
    %v4179 = vrot.slane %v4149, 7
    %vm4180 = vsmask.f32 3340
    %v4181 = vsel %vm4180, %v4179, %v4178
    %v4182 = vrot.slane %v4151, 6
    %v4184 = vshll.u32 %v4182, 16
    %vm4186 = vsmask.f32 3854
    %v4187 = vsel %vm4186, %v4184, %v4181
    %v4188 = vsel %vm4153, %v4140, 0
    %v4189 = vrot.slane %v4140, 7
    %v4191 = vshll.u32 %v4189, 16
    %v4193 = vsel %vm4159, %v4191, %v4188
    %v4194 = vrot.slane %v4142, 5
    %v4195 = vsel %vm4162, %v4194, %v4193
    %v4196 = vrot.slane %v4144, 4
    %v4198 = vshll.u32 %v4196, 16
    %v4200 = vsel %vm4168, %v4198, %v4195
    %v4201 = vrot.slane %v4146, 2
    %v4202 = vsel %vm4171, %v4201, %v4200
    %v4203 = vrot.slane %v4148, 1
    %v4205 = vshll.u32 %v4203, 16
    %v4207 = vsel %vm4177, %v4205, %v4202
    %v4208 = vrot.slane %v4150, 7
    %v4209 = vsel %vm4180, %v4208, %v4207
    %v4210 = vrot.slane %v4152, 6
    %v4212 = vshll.u32 %v4210, 16
    %v4214 = vsel %vm4186, %v4212, %v4209
    %v4216 = vshrl.u32 %v4139, 16
    %v4218 = vsel %vm4153, %v4216, 0
    %v4219 = vsel %vm4159, %v4155, %v4218
    %v4221 = vshrl.u32 %v4161, 16
    %v4223 = vsel %vm4162, %v4221, %v4219
    %v4224 = vsel %vm4168, %v4164, %v4223
    %v4226 = vshrl.u32 %v4170, 16
    %v4228 = vsel %vm4171, %v4226, %v4224
    %v4229 = vsel %vm4177, %v4173, %v4228
    %v4231 = vshrl.u32 %v4179, 16
    %v4233 = vsel %vm4180, %v4231, %v4229
    %v4234 = vsel %vm4186, %v4182, %v4233
    %v4236 = vshrl.u32 %v4140, 16
    %v4238 = vsel %vm4153, %v4236, 0
    %v4239 = vsel %vm4159, %v4189, %v4238
    %v4241 = vshrl.u32 %v4194, 16
    %v4243 = vsel %vm4162, %v4241, %v4239
    %v4244 = vsel %vm4168, %v4196, %v4243
    %v4246 = vshrl.u32 %v4201, 16
    %v4248 = vsel %vm4171, %v4246, %v4244
    %v4249 = vsel %vm4177, %v4203, %v4248
    %v4251 = vshrl.u32 %v4208, 16
    %v4253 = vsel %vm4180, %v4251, %v4249
    %v4254 = vsel %vm4186, %v4210, %v4253
    %v4255 = vrot.slane %v4139, 1
    %v4256 = vsel %vm4153, %v4255, 0
    %v4258 = vshll.u32 %v4141, 16
    %v4260 = vsel %vm4159, %v4258, %v4256
    %v4261 = vrot.slane %v4141, 6
    %v4262 = vsel %vm4162, %v4261, %v4260
    %v4263 = vrot.slane %v4143, 5
    %v4265 = vshll.u32 %v4263, 16
    %v4267 = vsel %vm4168, %v4265, %v4262
    %v4268 = vrot.slane %v4145, 3
    %v4269 = vsel %vm4171, %v4268, %v4267
    %v4270 = vrot.slane %v4147, 2
    %v4272 = vshll.u32 %v4270, 16
    %v4274 = vsel %vm4177, %v4272, %v4269
    %v4275 = vsel %vm4180, %v4149, %v4274
    %v4276 = vrot.slane %v4151, 7
    %v4278 = vshll.u32 %v4276, 16
    %v4280 = vsel %vm4186, %v4278, %v4275
    %v4281 = vrot.slane %v4140, 1
    %v4282 = vsel %vm4153, %v4281, 0
    %v4284 = vshll.u32 %v4142, 16
    %v4286 = vsel %vm4159, %v4284, %v4282
    %v4287 = vrot.slane %v4142, 6
    %v4288 = vsel %vm4162, %v4287, %v4286
    %v4289 = vrot.slane %v4144, 5
    %v4291 = vshll.u32 %v4289, 16
    %v4293 = vsel %vm4168, %v4291, %v4288
    %v4294 = vrot.slane %v4146, 3
    %v4295 = vsel %vm4171, %v4294, %v4293
    %v4296 = vrot.slane %v4148, 2
    %v4298 = vshll.u32 %v4296, 16
    %v4300 = vsel %vm4177, %v4298, %v4295
    %v4301 = vsel %vm4180, %v4150, %v4300
    %v4302 = vrot.slane %v4152, 7
    %v4304 = vshll.u32 %v4302, 16
    %v4306 = vsel %vm4186, %v4304, %v4301
    %v4308 = vshrl.u32 %v4255, 16
    %v4310 = vsel %vm4153, %v4308, 0
    %v4311 = vsel %vm4159, %v4141, %v4310
    %v4313 = vshrl.u32 %v4261, 16
    %v4315 = vsel %vm4162, %v4313, %v4311
    %v4316 = vsel %vm4168, %v4263, %v4315
    %v4318 = vshrl.u32 %v4268, 16
    %v4320 = vsel %vm4171, %v4318, %v4316
    %v4321 = vsel %vm4177, %v4270, %v4320
    %v4323 = vshrl.u32 %v4149, 16
    %v4325 = vsel %vm4180, %v4323, %v4321
    %v4326 = vsel %vm4186, %v4276, %v4325
    %v4328 = vshrl.u32 %v4281, 16
    %v4330 = vsel %vm4153, %v4328, 0
    %v4331 = vsel %vm4159, %v4142, %v4330
    %v4333 = vshrl.u32 %v4287, 16
    %v4335 = vsel %vm4162, %v4333, %v4331
    %v4336 = vsel %vm4168, %v4289, %v4335
    %v4338 = vshrl.u32 %v4294, 16
    %v4340 = vsel %vm4171, %v4338, %v4336
    %v4341 = vsel %vm4177, %v4296, %v4340
    %v4343 = vshrl.u32 %v4150, 16
    %v4345 = vsel %vm4180, %v4343, %v4341
    %v4346 = vsel %vm4186, %v4302, %v4345
    %v4347 = vrot.slane %v4139, 2
    %v4348 = vsel %vm4153, %v4347, 0
    %v4349 = vrot.slane %v4141, 1
    %v4351 = vshll.u32 %v4349, 16
    %v4353 = vsel %vm4159, %v4351, %v4348
    %v4354 = vrot.slane %v4143, 7
    %v4355 = vsel %vm4162, %v4354, %v4353
    %v4356 = vrot.slane %v4143, 6
    %v4358 = vshll.u32 %v4356, 16
    %v4360 = vsel %vm4168, %v4358, %v4355
    %v4361 = vrot.slane %v4145, 4
    %v4362 = vsel %vm4171, %v4361, %v4360
    %v4363 = vrot.slane %v4147, 3
    %v4365 = vshll.u32 %v4363, 16
    %v4367 = vsel %vm4177, %v4365, %v4362
    %v4368 = vrot.slane %v4149, 1
    %v4369 = vsel %vm4180, %v4368, %v4367
    %v4371 = vshll.u32 %v4151, 16
    %v4373 = vsel %vm4186, %v4371, %v4369
    %v4374 = vrot.slane %v4140, 2
    %v4375 = vsel %vm4153, %v4374, 0
    %v4376 = vrot.slane %v4142, 1
    %v4378 = vshll.u32 %v4376, 16
    %v4380 = vsel %vm4159, %v4378, %v4375
    %v4381 = vrot.slane %v4144, 7
    %v4382 = vsel %vm4162, %v4381, %v4380
    %v4383 = vrot.slane %v4144, 6
    %v4385 = vshll.u32 %v4383, 16
    %v4387 = vsel %vm4168, %v4385, %v4382
    %v4388 = vrot.slane %v4146, 4
    %v4389 = vsel %vm4171, %v4388, %v4387
    %v4390 = vrot.slane %v4148, 3
    %v4392 = vshll.u32 %v4390, 16
    %v4394 = vsel %vm4177, %v4392, %v4389
    %v4395 = vrot.slane %v4150, 1
    %v4396 = vsel %vm4180, %v4395, %v4394
    %v4398 = vshll.u32 %v4152, 16
    %v4400 = vsel %vm4186, %v4398, %v4396
    %v4402 = vshrl.u32 %v4347, 16
    %v4404 = vsel %vm4153, %v4402, 0
    %v4405 = vsel %vm4159, %v4349, %v4404
    %v4407 = vshrl.u32 %v4354, 16
    %v4409 = vsel %vm4162, %v4407, %v4405
    %v4410 = vsel %vm4168, %v4356, %v4409
    %v4412 = vshrl.u32 %v4361, 16
    %v4414 = vsel %vm4171, %v4412, %v4410
    %v4415 = vsel %vm4177, %v4363, %v4414
    %v4417 = vshrl.u32 %v4368, 16
    %v4419 = vsel %vm4180, %v4417, %v4415
    %v4420 = vsel %vm4186, %v4151, %v4419
    %v4422 = vshrl.u32 %v4374, 16
    %v4424 = vsel %vm4153, %v4422, 0
    %v4425 = vsel %vm4159, %v4376, %v4424
    %v4427 = vshrl.u32 %v4381, 16
    %v4429 = vsel %vm4162, %v4427, %v4425
    %v4430 = vsel %vm4168, %v4383, %v4429
    %v4432 = vshrl.u32 %v4388, 16
    %v4434 = vsel %vm4171, %v4432, %v4430
    %v4435 = vsel %vm4177, %v4390, %v4434
    %v4437 = vshrl.u32 %v4395, 16
    %v4439 = vsel %vm4180, %v4437, %v4435
    %v4440 = vsel %vm4186, %v4152, %v4439
    %v4441 = vrot.slane %v4139, 3
    %v4442 = vsel %vm4153, %v4441, 0
    %v4443 = vrot.slane %v4141, 2
    %v4445 = vshll.u32 %v4443, 16
    %v4447 = vsel %vm4159, %v4445, %v4442
    %v4448 = vsel %vm4162, %v4143, %v4447
    %v4449 = vrot.slane %v4145, 7
    %v4451 = vshll.u32 %v4449, 16
    %v4453 = vsel %vm4168, %v4451, %v4448
    %v4454 = vrot.slane %v4145, 5
    %v4455 = vsel %vm4171, %v4454, %v4453
    %v4456 = vrot.slane %v4147, 4
    %v4458 = vshll.u32 %v4456, 16
    %v4460 = vsel %vm4177, %v4458, %v4455
    %v4461 = vrot.slane %v4149, 2
    %v4462 = vsel %vm4180, %v4461, %v4460
    %v4463 = vrot.slane %v4151, 1
    %v4465 = vshll.u32 %v4463, 16
    %v4467 = vsel %vm4186, %v4465, %v4462
    %v4468 = vrot.slane %v4140, 3
    %v4469 = vsel %vm4153, %v4468, 0
    %v4470 = vrot.slane %v4142, 2
    %v4472 = vshll.u32 %v4470, 16
    %v4474 = vsel %vm4159, %v4472, %v4469
    %v4475 = vsel %vm4162, %v4144, %v4474
    %v4476 = vrot.slane %v4146, 7
    %v4478 = vshll.u32 %v4476, 16
    %v4480 = vsel %vm4168, %v4478, %v4475
    %v4481 = vrot.slane %v4146, 5
    %v4482 = vsel %vm4171, %v4481, %v4480
    %v4483 = vrot.slane %v4148, 4
    %v4485 = vshll.u32 %v4483, 16
    %v4487 = vsel %vm4177, %v4485, %v4482
    %v4488 = vrot.slane %v4150, 2
    %v4489 = vsel %vm4180, %v4488, %v4487
    %v4490 = vrot.slane %v4152, 1
    %v4492 = vshll.u32 %v4490, 16
    %v4494 = vsel %vm4186, %v4492, %v4489
    %v4496 = vshrl.u32 %v4441, 16
    %v4498 = vsel %vm4153, %v4496, 0
    %v4499 = vsel %vm4159, %v4443, %v4498
    %v4501 = vshrl.u32 %v4143, 16
    %v4503 = vsel %vm4162, %v4501, %v4499
    %v4504 = vsel %vm4168, %v4449, %v4503
    %v4506 = vshrl.u32 %v4454, 16
    %v4508 = vsel %vm4171, %v4506, %v4504
    %v4509 = vsel %vm4177, %v4456, %v4508
    %v4511 = vshrl.u32 %v4461, 16
    %v4513 = vsel %vm4180, %v4511, %v4509
    %v4514 = vsel %vm4186, %v4463, %v4513
    %v4516 = vshrl.u32 %v4468, 16
    %v4518 = vsel %vm4153, %v4516, 0
    %v4519 = vsel %vm4159, %v4470, %v4518
    %v4521 = vshrl.u32 %v4144, 16
    %v4523 = vsel %vm4162, %v4521, %v4519
    %v4524 = vsel %vm4168, %v4476, %v4523
    %v4526 = vshrl.u32 %v4481, 16
    %v4528 = vsel %vm4171, %v4526, %v4524
    %v4529 = vsel %vm4177, %v4483, %v4528
    %v4531 = vshrl.u32 %v4488, 16
    %v4533 = vsel %vm4180, %v4531, %v4529
    %v4534 = vsel %vm4186, %v4490, %v4533
    %v4535 = vrot.slane %v4139, 4
    %v4536 = vsel %vm4153, %v4535, 0
    %v4537 = vrot.slane %v4141, 3
    %v4539 = vshll.u32 %v4537, 16
    %v4541 = vsel %vm4159, %v4539, %v4536
    %v4542 = vrot.slane %v4143, 1
    %v4543 = vsel %vm4162, %v4542, %v4541
    %v4545 = vshll.u32 %v4145, 16
    %v4547 = vsel %vm4168, %v4545, %v4543
    %v4548 = vrot.slane %v4147, 6
    %v4549 = vsel %vm4171, %v4548, %v4547
    %v4550 = vrot.slane %v4147, 5
    %v4552 = vshll.u32 %v4550, 16
    %v4554 = vsel %vm4177, %v4552, %v4549
    %v4555 = vrot.slane %v4149, 3
    %v4556 = vsel %vm4180, %v4555, %v4554
    %v4557 = vrot.slane %v4151, 2
    %v4559 = vshll.u32 %v4557, 16
    %v4561 = vsel %vm4186, %v4559, %v4556
    %v4562 = vrot.slane %v4140, 4
    %v4563 = vsel %vm4153, %v4562, 0
    %v4564 = vrot.slane %v4142, 3
    %v4566 = vshll.u32 %v4564, 16
    %v4568 = vsel %vm4159, %v4566, %v4563
    %v4569 = vrot.slane %v4144, 1
    %v4570 = vsel %vm4162, %v4569, %v4568
    %v4572 = vshll.u32 %v4146, 16
    %v4574 = vsel %vm4168, %v4572, %v4570
    %v4575 = vrot.slane %v4148, 6
    %v4576 = vsel %vm4171, %v4575, %v4574
    %v4577 = vrot.slane %v4148, 5
    %v4579 = vshll.u32 %v4577, 16
    %v4581 = vsel %vm4177, %v4579, %v4576
    %v4582 = vrot.slane %v4150, 3
    %v4583 = vsel %vm4180, %v4582, %v4581
    %v4584 = vrot.slane %v4152, 2
    %v4586 = vshll.u32 %v4584, 16
    %v4588 = vsel %vm4186, %v4586, %v4583
    %v4590 = vshrl.u32 %v4535, 16
    %v4592 = vsel %vm4153, %v4590, 0
    %v4593 = vsel %vm4159, %v4537, %v4592
    %v4595 = vshrl.u32 %v4542, 16
    %v4597 = vsel %vm4162, %v4595, %v4593
    %v4598 = vsel %vm4168, %v4145, %v4597
    %v4600 = vshrl.u32 %v4548, 16
    %v4602 = vsel %vm4171, %v4600, %v4598
    %v4603 = vsel %vm4177, %v4550, %v4602
    %v4605 = vshrl.u32 %v4555, 16
    %v4607 = vsel %vm4180, %v4605, %v4603
    %v4608 = vsel %vm4186, %v4557, %v4607
    %v4610 = vshrl.u32 %v4562, 16
    %v4612 = vsel %vm4153, %v4610, 0
    %v4613 = vsel %vm4159, %v4564, %v4612
    %v4615 = vshrl.u32 %v4569, 16
    %v4617 = vsel %vm4162, %v4615, %v4613
    %v4618 = vsel %vm4168, %v4146, %v4617
    %v4620 = vshrl.u32 %v4575, 16
    %v4622 = vsel %vm4171, %v4620, %v4618
    %v4623 = vsel %vm4177, %v4577, %v4622
    %v4625 = vshrl.u32 %v4582, 16
    %v4627 = vsel %vm4180, %v4625, %v4623
    %v4628 = vsel %vm4186, %v4584, %v4627
    %v4629 = vrot.slane %v4139, 5
    %v4630 = vsel %vm4153, %v4629, 0
    %v4631 = vrot.slane %v4141, 4
    %v4633 = vshll.u32 %v4631, 16
    %v4635 = vsel %vm4159, %v4633, %v4630
    %v4636 = vrot.slane %v4143, 2
    %v4637 = vsel %vm4162, %v4636, %v4635
    %v4638 = vrot.slane %v4145, 1
    %v4640 = vshll.u32 %v4638, 16
    %v4642 = vsel %vm4168, %v4640, %v4637
    %v4643 = vrot.slane %v4147, 7
    %v4644 = vsel %vm4171, %v4643, %v4642
    %v4645 = vrot.slane %v4149, 6
    %v4647 = vshll.u32 %v4645, 16
    %v4649 = vsel %vm4177, %v4647, %v4644
    %v4650 = vrot.slane %v4149, 4
    %v4651 = vsel %vm4180, %v4650, %v4649
    %v4652 = vrot.slane %v4151, 3
    %v4654 = vshll.u32 %v4652, 16
    %v4656 = vsel %vm4186, %v4654, %v4651
    %v4657 = vrot.slane %v4140, 5
    %v4658 = vsel %vm4153, %v4657, 0
    %v4659 = vrot.slane %v4142, 4
    %v4661 = vshll.u32 %v4659, 16
    %v4663 = vsel %vm4159, %v4661, %v4658
    %v4664 = vrot.slane %v4144, 2
    %v4665 = vsel %vm4162, %v4664, %v4663
    %v4666 = vrot.slane %v4146, 1
    %v4668 = vshll.u32 %v4666, 16
    %v4670 = vsel %vm4168, %v4668, %v4665
    %v4671 = vrot.slane %v4148, 7
    %v4672 = vsel %vm4171, %v4671, %v4670
    %v4673 = vrot.slane %v4150, 6
    %v4675 = vshll.u32 %v4673, 16
    %v4677 = vsel %vm4177, %v4675, %v4672
    %v4678 = vrot.slane %v4150, 4
    %v4679 = vsel %vm4180, %v4678, %v4677
    %v4680 = vrot.slane %v4152, 3
    %v4682 = vshll.u32 %v4680, 16
    %v4684 = vsel %vm4186, %v4682, %v4679
    %v4686 = vshrl.u32 %v4629, 16
    %v4688 = vsel %vm4153, %v4686, 0
    %v4689 = vsel %vm4159, %v4631, %v4688
    %v4691 = vshrl.u32 %v4636, 16
    %v4693 = vsel %vm4162, %v4691, %v4689
    %v4694 = vsel %vm4168, %v4638, %v4693
    %v4696 = vshrl.u32 %v4643, 16
    %v4698 = vsel %vm4171, %v4696, %v4694
    %v4699 = vsel %vm4177, %v4645, %v4698
    %v4701 = vshrl.u32 %v4650, 16
    %v4703 = vsel %vm4180, %v4701, %v4699
    %v4704 = vsel %vm4186, %v4652, %v4703
    %v4706 = vshrl.u32 %v4657, 16
    %v4708 = vsel %vm4153, %v4706, 0
    %v4709 = vsel %vm4159, %v4659, %v4708
    %v4711 = vshrl.u32 %v4664, 16
    %v4713 = vsel %vm4162, %v4711, %v4709
    %v4714 = vsel %vm4168, %v4666, %v4713
    %v4716 = vshrl.u32 %v4671, 16
    %v4718 = vsel %vm4171, %v4716, %v4714
    %v4719 = vsel %vm4177, %v4673, %v4718
    %v4721 = vshrl.u32 %v4678, 16
    %v4723 = vsel %vm4180, %v4721, %v4719
    %v4724 = vsel %vm4186, %v4680, %v4723
    %v4725 = vrot.slane %v4139, 6
    %v4726 = vsel %vm4153, %v4725, 0
    %v4727 = vshll.u32 %v4161, 16
    %v4729 = vsel %vm4159, %v4727, %v4726
    %v4730 = vrot.slane %v4143, 3
    %v4731 = vsel %vm4162, %v4730, %v4729
    %v4732 = vshll.u32 %v4170, 16
    %v4734 = vsel %vm4168, %v4732, %v4731
    %v4735 = vsel %vm4171, %v4147, %v4734
    %v4736 = vshll.u32 %v4179, 16
    %v4738 = vsel %vm4177, %v4736, %v4735
    %v4739 = vrot.slane %v4151, 5
    %v4740 = vsel %vm4180, %v4739, %v4738
    %v4741 = vrot.slane %v4151, 4
    %v4743 = vshll.u32 %v4741, 16
    %v4745 = vsel %vm4186, %v4743, %v4740
    %v4746 = vrot.slane %v4140, 6
    %v4747 = vsel %vm4153, %v4746, 0
    %v4748 = vshll.u32 %v4194, 16
    %v4750 = vsel %vm4159, %v4748, %v4747
    %v4751 = vrot.slane %v4144, 3
    %v4752 = vsel %vm4162, %v4751, %v4750
    %v4753 = vshll.u32 %v4201, 16
    %v4755 = vsel %vm4168, %v4753, %v4752
    %v4756 = vsel %vm4171, %v4148, %v4755
    %v4757 = vshll.u32 %v4208, 16
    %v4759 = vsel %vm4177, %v4757, %v4756
    %v4760 = vrot.slane %v4152, 5
    %v4761 = vsel %vm4180, %v4760, %v4759
    %v4762 = vrot.slane %v4152, 4
    %v4764 = vshll.u32 %v4762, 16
    %v4766 = vsel %vm4186, %v4764, %v4761
    %v4768 = vshrl.u32 %v4725, 16
    %v4770 = vsel %vm4153, %v4768, 0
    %v4771 = vsel %vm4159, %v4161, %v4770
    %v4773 = vshrl.u32 %v4730, 16
    %v4775 = vsel %vm4162, %v4773, %v4771
    %v4776 = vsel %vm4168, %v4170, %v4775
    %v4778 = vshrl.u32 %v4147, 16
    %v4780 = vsel %vm4171, %v4778, %v4776
    %v4781 = vsel %vm4177, %v4179, %v4780
    %v4783 = vshrl.u32 %v4739, 16
    %v4785 = vsel %vm4180, %v4783, %v4781
    %v4786 = vsel %vm4186, %v4741, %v4785
    %v4788 = vshrl.u32 %v4746, 16
    %v4790 = vsel %vm4153, %v4788, 0
    %v4791 = vsel %vm4159, %v4194, %v4790
    %v4793 = vshrl.u32 %v4751, 16
    %v4795 = vsel %vm4162, %v4793, %v4791
    %v4796 = vsel %vm4168, %v4201, %v4795
    %v4798 = vshrl.u32 %v4148, 16
    %v4800 = vsel %vm4171, %v4798, %v4796
    %v4801 = vsel %vm4177, %v4208, %v4800
    %v4803 = vshrl.u32 %v4760, 16
    %v4805 = vsel %vm4180, %v4803, %v4801
    %v4806 = vsel %vm4186, %v4762, %v4805
    %v4807 = vld [vmem:[#allocation7] sm:$0xff]
    %v4808 = vld [vmem:[#allocation7 + $0x8] sm:$0xff]
    %v4809 = vld [vmem:[#allocation7 + $0x10] sm:$0xff]
    %v4810 = vld [vmem:[#allocation7 + $0x18] sm:$0xff]
    %v4811 = vld [vmem:[#allocation7 + $0x20] sm:$0xff]
    %v4812 = vld [vmem:[#allocation7 + $0x28] sm:$0xff]
    %v4813 = vld [vmem:[#allocation7 + $0x30] sm:$0xff]
    %v4814 = vld [vmem:[#allocation7 + $0x38] sm:$0xff]
    %v4815 = vld [vmem:[#allocation7 + $0x40] sm:$0xff]
    %v4816 = vld [vmem:[#allocation7 + $0x48] sm:$0xff]
    %v4817 = vld [vmem:[#allocation7 + $0x50] sm:$0xff]
    %v4818 = vld [vmem:[#allocation7 + $0x58] sm:$0xff]
    %v4819 = vld [vmem:[#allocation7 + $0x60] sm:$0xff]
    %v4820 = vld [vmem:[#allocation7 + $0x68] sm:$0xff]
    %v4821 = vld [vmem:[#allocation7 + $0x70] sm:$0xff]
    %v4822 = vld [vmem:[#allocation7 + $0x78] sm:$0xff]
    %v4823 = vld [vmem:[#allocation7 + $0x80] sm:$0xff]
    %v4824 = vld [vmem:[#allocation7 + $0x88] sm:$0xff]
    %v4825 = vld [vmem:[#allocation7 + $0x90] sm:$0xff]
    %v4826 = vld [vmem:[#allocation7 + $0x98] sm:$0xff]
    %v4827 = vld [vmem:[#allocation7 + $0xa0] sm:$0xff]
    %v4828 = vld [vmem:[#allocation7 + $0xa8] sm:$0xff]
    %v4829 = vld [vmem:[#allocation7 + $0xb0] sm:$0xff]
    %v4830 = vld [vmem:[#allocation7 + $0xb8] sm:$0xff]
    %v4831 = vld [vmem:[#allocation7 + $0xc0] sm:$0xff]
    %v4832 = vld [vmem:[#allocation7 + $0xc8] sm:$0xff]
    %v4833 = vld [vmem:[#allocation7 + $0xd0] sm:$0xff]
    %v4834 = vld [vmem:[#allocation7 + $0xd8] sm:$0xff]
    %v4835 = vld [vmem:[#allocation7 + $0xe0] sm:$0xff]
    %v4836 = vld [vmem:[#allocation7 + $0xe8] sm:$0xff]
    %v4837 = vld [vmem:[#allocation7 + $0xf0] sm:$0xff]
    %v4838 = vld [vmem:[#allocation7 + $0xf8] sm:$0xff]
    %v4839 = vld [vmem:[#allocation7 + $0x100] sm:$0xff]
    %v4840 = vld [vmem:[#allocation7 + $0x108] sm:$0xff]
    %v4841 = vld [vmem:[#allocation7 + $0x110] sm:$0xff]
    %v4842 = vld [vmem:[#allocation7 + $0x118] sm:$0xff]
    %v4843 = vld [vmem:[#allocation7 + $0x120] sm:$0xff]
    %v4844 = vld [vmem:[#allocation7 + $0x128] sm:$0xff]
    %v4845 = vld [vmem:[#allocation7 + $0x130] sm:$0xff]
    %v4846 = vld [vmem:[#allocation7 + $0x138] sm:$0xff]
    %v4847 = vld [vmem:[#allocation7 + $0x140] sm:$0xff]
    %v4848 = vld [vmem:[#allocation7 + $0x148] sm:$0xff]
    %v4849 = vld [vmem:[#allocation7 + $0x150] sm:$0xff]
    %v4850 = vld [vmem:[#allocation7 + $0x158] sm:$0xff]
    %v4851 = vld [vmem:[#allocation7 + $0x160] sm:$0xff]
    %v4852 = vld [vmem:[#allocation7 + $0x168] sm:$0xff]
    %v4853 = vld [vmem:[#allocation7 + $0x170] sm:$0xff]
    %v4854 = vld [vmem:[#allocation7 + $0x178] sm:$0xff]
    %v4855 = vld [vmem:[#allocation7 + $0x180] sm:$0xff]
    %v4856 = vld [vmem:[#allocation7 + $0x188] sm:$0xff]
    %v4857 = vld [vmem:[#allocation7 + $0x190] sm:$0xff]
    %v4858 = vld [vmem:[#allocation7 + $0x198] sm:$0xff]
    %v4859 = vld [vmem:[#allocation7 + $0x1a0] sm:$0xff]
    %v4860 = vld [vmem:[#allocation7 + $0x1a8] sm:$0xff]
    %v4861 = vld [vmem:[#allocation7 + $0x1b0] sm:$0xff]
    %v4862 = vld [vmem:[#allocation7 + $0x1b8] sm:$0xff]
    %v4863 = vld [vmem:[#allocation7 + $0x1c0] sm:$0xff]
    %v4864 = vld [vmem:[#allocation7 + $0x1c8] sm:$0xff]
    %v4865 = vld [vmem:[#allocation7 + $0x1d0] sm:$0xff]
    %v4866 = vld [vmem:[#allocation7 + $0x1d8] sm:$0xff]
    %v4867 = vld [vmem:[#allocation7 + $0x1e0] sm:$0xff]
    %v4868 = vld [vmem:[#allocation7 + $0x1e8] sm:$0xff]
    %v4869 = vld [vmem:[#allocation7 + $0x1f0] sm:$0xff]
    %v4870 = vld [vmem:[#allocation7 + $0x1f8] sm:$0xff]
    %v4871 = vld [vmem:[#allocation7 + $0x200] sm:$0xff]
    %v4872 = vld [vmem:[#allocation7 + $0x208] sm:$0xff]
    %v4873 = vld [vmem:[#allocation7 + $0x210] sm:$0xff]
    %v4874 = vld [vmem:[#allocation7 + $0x218] sm:$0xff]
    %v4875 = vld [vmem:[#allocation7 + $0x220] sm:$0xff]
    %v4876 = vld [vmem:[#allocation7 + $0x228] sm:$0xff]
    %v4877 = vld [vmem:[#allocation7 + $0x230] sm:$0xff]
    %v4878 = vld [vmem:[#allocation7 + $0x238] sm:$0xff]
    %v4879 = vld [vmem:[#allocation7 + $0x240] sm:$0xff]
    %v4880 = vld [vmem:[#allocation7 + $0x248] sm:$0xff]
    %v4881 = vld [vmem:[#allocation7 + $0x250] sm:$0xff]
    %v4882 = vld [vmem:[#allocation7 + $0x258] sm:$0xff]
    %v4883 = vld [vmem:[#allocation7 + $0x260] sm:$0xff]
    %v4884 = vld [vmem:[#allocation7 + $0x268] sm:$0xff]
    %v4885 = vld [vmem:[#allocation7 + $0x270] sm:$0xff]
    %v4886 = vld [vmem:[#allocation7 + $0x278] sm:$0xff]
    %v4887 = vld [vmem:[#allocation7 + $0x280] sm:$0xff]
    %v4888 = vld [vmem:[#allocation7 + $0x288] sm:$0xff]
    %v4889 = vld [vmem:[#allocation7 + $0x290] sm:$0xff]
    %v4890 = vld [vmem:[#allocation7 + $0x298] sm:$0xff]
    %v4891 = vld [vmem:[#allocation7 + $0x2a0] sm:$0xff]
    %v4892 = vld [vmem:[#allocation7 + $0x2a8] sm:$0xff]
    %v4893 = vld [vmem:[#allocation7 + $0x2b0] sm:$0xff]
    %v4894 = vld [vmem:[#allocation7 + $0x2b8] sm:$0xff]
    %v4895 = vld [vmem:[#allocation7 + $0x2c0] sm:$0xff]
    %v4896 = vld [vmem:[#allocation7 + $0x2c8] sm:$0xff]
    %v4897 = vld [vmem:[#allocation7 + $0x2d0] sm:$0xff]
    %v4898 = vld [vmem:[#allocation7 + $0x2d8] sm:$0xff]
    %v4899 = vld [vmem:[#allocation7 + $0x2e0] sm:$0xff]
    %v4900 = vld [vmem:[#allocation7 + $0x2e8] sm:$0xff]
    %v4901 = vld [vmem:[#allocation7 + $0x2f0] sm:$0xff]
    %v4902 = vld [vmem:[#allocation7 + $0x2f8] sm:$0xff]
    %v4903 = vld [vmem:[#allocation7 + $0x300] sm:$0xff]
    %v4904 = vld [vmem:[#allocation7 + $0x308] sm:$0xff]
    %v4905 = vld [vmem:[#allocation7 + $0x310] sm:$0xff]
    %v4906 = vld [vmem:[#allocation7 + $0x318] sm:$0xff]
    %v4907 = vld [vmem:[#allocation7 + $0x320] sm:$0xff]
    %v4908 = vld [vmem:[#allocation7 + $0x328] sm:$0xff]
    %v4909 = vld [vmem:[#allocation7 + $0x330] sm:$0xff]
    %v4910 = vld [vmem:[#allocation7 + $0x338] sm:$0xff]
    %v4911 = vld [vmem:[#allocation7 + $0x340] sm:$0xff]
    %v4912 = vld [vmem:[#allocation7 + $0x348] sm:$0xff]
    %v4913 = vld [vmem:[#allocation7 + $0x350] sm:$0xff]
    %v4914 = vld [vmem:[#allocation7 + $0x358] sm:$0xff]
    %v4915 = vld [vmem:[#allocation7 + $0x360] sm:$0xff]
    %v4916 = vld [vmem:[#allocation7 + $0x368] sm:$0xff]
    %v4917 = vld [vmem:[#allocation7 + $0x370] sm:$0xff]
    %v4918 = vld [vmem:[#allocation7 + $0x378] sm:$0xff]
    %v4919 = vld [vmem:[#allocation7 + $0x380] sm:$0xff]
    %v4920 = vld [vmem:[#allocation7 + $0x388] sm:$0xff]
    %v4921 = vld [vmem:[#allocation7 + $0x390] sm:$0xff]
    %v4922 = vld [vmem:[#allocation7 + $0x398] sm:$0xff]
    %v4923 = vld [vmem:[#allocation7 + $0x3a0] sm:$0xff]
    %v4924 = vld [vmem:[#allocation7 + $0x3a8] sm:$0xff]
    %v4925 = vld [vmem:[#allocation7 + $0x3b0] sm:$0xff]
    %v4926 = vld [vmem:[#allocation7 + $0x3b8] sm:$0xff]
    %v4927 = vld [vmem:[#allocation7 + $0x3c0] sm:$0xff]
    %v4928 = vld [vmem:[#allocation7 + $0x3c8] sm:$0xff]
    %v4929 = vld [vmem:[#allocation7 + $0x3d0] sm:$0xff]
    %v4930 = vld [vmem:[#allocation7 + $0x3d8] sm:$0xff]
    %v4931 = vld [vmem:[#allocation7 + $0x3e0] sm:$0xff]
    %v4932 = vld [vmem:[#allocation7 + $0x3e8] sm:$0xff]
    %v4933 = vld [vmem:[#allocation7 + $0x3f0] sm:$0xff]
    %v4934 = vld [vmem:[#allocation7 + $0x3f8] sm:$0xff]
    %v4935 = vld [vmem:[#allocation7 + $0x400] sm:$0xff]
    %v4936 = vld [vmem:[#allocation7 + $0x408] sm:$0xff]
    %v4937 = vld [vmem:[#allocation7 + $0x410] sm:$0xff]
    %v4938 = vld [vmem:[#allocation7 + $0x418] sm:$0xff]
    %v4939 = vld [vmem:[#allocation7 + $0x420] sm:$0xff]
    %v4940 = vld [vmem:[#allocation7 + $0x428] sm:$0xff]
    %v4941 = vld [vmem:[#allocation7 + $0x430] sm:$0xff]
    %v4942 = vld [vmem:[#allocation7 + $0x438] sm:$0xff]
    %v4943 = vld [vmem:[#allocation7 + $0x440] sm:$0xff]
    %v4944 = vld [vmem:[#allocation7 + $0x448] sm:$0xff]
    %v4945 = vld [vmem:[#allocation7 + $0x450] sm:$0xff]
    %v4946 = vld [vmem:[#allocation7 + $0x458] sm:$0xff]
    %v4947 = vld [vmem:[#allocation7 + $0x460] sm:$0xff]
    %v4948 = vld [vmem:[#allocation7 + $0x468] sm:$0xff]
    %v4949 = vld [vmem:[#allocation7 + $0x470] sm:$0xff]
    %v4950 = vld [vmem:[#allocation7 + $0x478] sm:$0xff]
    %v4951 = vld [vmem:[#allocation7 + $0x480] sm:$0xff]
    %v4952 = vld [vmem:[#allocation7 + $0x488] sm:$0xff]
    %v4953 = vld [vmem:[#allocation7 + $0x490] sm:$0xff]
    %v4954 = vld [vmem:[#allocation7 + $0x498] sm:$0xff]
    %v4955 = vld [vmem:[#allocation7 + $0x4a0] sm:$0xff]
    %v4956 = vld [vmem:[#allocation7 + $0x4a8] sm:$0xff]
    %v4957 = vld [vmem:[#allocation7 + $0x4b0] sm:$0xff]
    %v4958 = vld [vmem:[#allocation7 + $0x4b8] sm:$0xff]
    %v4959 = vld [vmem:[#allocation7 + $0x4c0] sm:$0xff]
    %v4960 = vld [vmem:[#allocation7 + $0x4c8] sm:$0xff]
    %v4961 = vld [vmem:[#allocation7 + $0x4d0] sm:$0xff]
    %v4962 = vld [vmem:[#allocation7 + $0x4d8] sm:$0xff]
    %v4963 = vld [vmem:[#allocation7 + $0x4e0] sm:$0xff]
    %v4964 = vld [vmem:[#allocation7 + $0x4e8] sm:$0xff]
    %v4965 = vld [vmem:[#allocation7 + $0x4f0] sm:$0xff]
    %v4966 = vld [vmem:[#allocation7 + $0x4f8] sm:$0xff]
    %v4967 = vld [vmem:[#allocation7 + $0x500] sm:$0xff]
    %v4968 = vld [vmem:[#allocation7 + $0x508] sm:$0xff]
    %v4969 = vld [vmem:[#allocation7 + $0x510] sm:$0xff]
    %v4970 = vld [vmem:[#allocation7 + $0x518] sm:$0xff]
    %v4971 = vld [vmem:[#allocation7 + $0x520] sm:$0xff]
    %v4972 = vld [vmem:[#allocation7 + $0x528] sm:$0xff]
    %v4973 = vld [vmem:[#allocation7 + $0x530] sm:$0xff]
    %v4974 = vld [vmem:[#allocation7 + $0x538] sm:$0xff]
    %v4975 = vld [vmem:[#allocation7 + $0x540] sm:$0xff]
    %v4976 = vld [vmem:[#allocation7 + $0x548] sm:$0xff]
    %v4977 = vld [vmem:[#allocation7 + $0x550] sm:$0xff]
    %v4978 = vld [vmem:[#allocation7 + $0x558] sm:$0xff]
    %v4979 = vld [vmem:[#allocation7 + $0x560] sm:$0xff]
    %v4980 = vld [vmem:[#allocation7 + $0x568] sm:$0xff]
    %v4981 = vld [vmem:[#allocation7 + $0x570] sm:$0xff]
    %v4982 = vld [vmem:[#allocation7 + $0x578] sm:$0xff]
    %v4983 = vld [vmem:[#allocation7 + $0x580] sm:$0xff]
    %v4984 = vld [vmem:[#allocation7 + $0x588] sm:$0xff]
    %v4985 = vld [vmem:[#allocation7 + $0x590] sm:$0xff]
    %v4986 = vld [vmem:[#allocation7 + $0x598] sm:$0xff]
    %v4987 = vld [vmem:[#allocation7 + $0x5a0] sm:$0xff]
    %v4988 = vld [vmem:[#allocation7 + $0x5a8] sm:$0xff]
    %v4989 = vld [vmem:[#allocation7 + $0x5b0] sm:$0xff]
    %v4990 = vld [vmem:[#allocation7 + $0x5b8] sm:$0xff]
    %v4991 = vld [vmem:[#allocation7 + $0x5c0] sm:$0xff]
    %v4992 = vld [vmem:[#allocation7 + $0x5c8] sm:$0xff]
    %v4993 = vld [vmem:[#allocation7 + $0x5d0] sm:$0xff]
    %v4994 = vld [vmem:[#allocation7 + $0x5d8] sm:$0xff]
    %v4995 = vld [vmem:[#allocation7 + $0x5e0] sm:$0xff]
    %v4996 = vld [vmem:[#allocation7 + $0x5e8] sm:$0xff]
    %v4997 = vld [vmem:[#allocation7 + $0x5f0] sm:$0xff]
    %v4998 = vld [vmem:[#allocation7 + $0x5f8] sm:$0xff]
    %v4999 = vld [vmem:[#allocation7 + $0x600] sm:$0xff]
    %v5000 = vld [vmem:[#allocation7 + $0x608] sm:$0xff]
    %v5001 = vld [vmem:[#allocation7 + $0x610] sm:$0xff]
    %v5002 = vld [vmem:[#allocation7 + $0x618] sm:$0xff]
    %v5003 = vld [vmem:[#allocation7 + $0x620] sm:$0xff]
    %v5004 = vld [vmem:[#allocation7 + $0x628] sm:$0xff]
    %v5005 = vld [vmem:[#allocation7 + $0x630] sm:$0xff]
    %v5006 = vld [vmem:[#allocation7 + $0x638] sm:$0xff]
    %v5007 = vld [vmem:[#allocation7 + $0x640] sm:$0xff]
    %v5008 = vld [vmem:[#allocation7 + $0x648] sm:$0xff]
    %v5009 = vld [vmem:[#allocation7 + $0x650] sm:$0xff]
    %v5010 = vld [vmem:[#allocation7 + $0x658] sm:$0xff]
    %v5011 = vld [vmem:[#allocation7 + $0x660] sm:$0xff]
    %v5012 = vld [vmem:[#allocation7 + $0x668] sm:$0xff]
    %v5013 = vld [vmem:[#allocation7 + $0x670] sm:$0xff]
    %v5014 = vld [vmem:[#allocation7 + $0x678] sm:$0xff]
    %v5015 = vld [vmem:[#allocation7 + $0x680] sm:$0xff]
    %v5016 = vld [vmem:[#allocation7 + $0x688] sm:$0xff]
    %v5017 = vld [vmem:[#allocation7 + $0x690] sm:$0xff]
    %v5018 = vld [vmem:[#allocation7 + $0x698] sm:$0xff]
    %v5019 = vld [vmem:[#allocation7 + $0x6a0] sm:$0xff]
    %v5020 = vld [vmem:[#allocation7 + $0x6a8] sm:$0xff]
    %v5021 = vld [vmem:[#allocation7 + $0x6b0] sm:$0xff]
    %v5022 = vld [vmem:[#allocation7 + $0x6b8] sm:$0xff]
    %v5023 = vld [vmem:[#allocation7 + $0x6c0] sm:$0xff]
    %v5024 = vld [vmem:[#allocation7 + $0x6c8] sm:$0xff]
    %v5025 = vld [vmem:[#allocation7 + $0x6d0] sm:$0xff]
    %v5026 = vld [vmem:[#allocation7 + $0x6d8] sm:$0xff]
    %v5027 = vld [vmem:[#allocation7 + $0x6e0] sm:$0xff]
    %v5028 = vld [vmem:[#allocation7 + $0x6e8] sm:$0xff]
    %v5029 = vld [vmem:[#allocation7 + $0x6f0] sm:$0xff]
    %v5030 = vld [vmem:[#allocation7 + $0x6f8] sm:$0xff]
    %v5031 = vld [vmem:[#allocation7 + $0x700] sm:$0xff]
    %v5032 = vld [vmem:[#allocation7 + $0x708] sm:$0xff]
    %v5033 = vld [vmem:[#allocation7 + $0x710] sm:$0xff]
    %v5034 = vld [vmem:[#allocation7 + $0x718] sm:$0xff]
    %v5035 = vld [vmem:[#allocation7 + $0x720] sm:$0xff]
    %v5036 = vld [vmem:[#allocation7 + $0x728] sm:$0xff]
    %v5037 = vld [vmem:[#allocation7 + $0x730] sm:$0xff]
    %v5038 = vld [vmem:[#allocation7 + $0x738] sm:$0xff]
    %v5039 = vld [vmem:[#allocation7 + $0x740] sm:$0xff]
    %v5040 = vld [vmem:[#allocation7 + $0x748] sm:$0xff]
    %v5041 = vld [vmem:[#allocation7 + $0x750] sm:$0xff]
    %v5042 = vld [vmem:[#allocation7 + $0x758] sm:$0xff]
    %v5043 = vld [vmem:[#allocation7 + $0x760] sm:$0xff]
    %v5044 = vld [vmem:[#allocation7 + $0x768] sm:$0xff]
    %v5045 = vld [vmem:[#allocation7 + $0x770] sm:$0xff]
    %v5046 = vld [vmem:[#allocation7 + $0x778] sm:$0xff]
    %v5047 = vld [vmem:[#allocation7 + $0x780] sm:$0xff]
    %v5048 = vld [vmem:[#allocation7 + $0x788] sm:$0xff]
    %v5049 = vld [vmem:[#allocation7 + $0x790] sm:$0xff]
    %v5050 = vld [vmem:[#allocation7 + $0x798] sm:$0xff]
    %v5051 = vld [vmem:[#allocation7 + $0x7a0] sm:$0xff]
    %v5052 = vld [vmem:[#allocation7 + $0x7a8] sm:$0xff]
    %v5053 = vld [vmem:[#allocation7 + $0x7b0] sm:$0xff]
    %v5054 = vld [vmem:[#allocation7 + $0x7b8] sm:$0xff]
    %v5055 = vld [vmem:[#allocation7 + $0x7c0] sm:$0xff]
    %v5056 = vld [vmem:[#allocation7 + $0x7c8] sm:$0xff]
    %v5057 = vld [vmem:[#allocation7 + $0x7d0] sm:$0xff]
    %v5058 = vld [vmem:[#allocation7 + $0x7d8] sm:$0xff]
    %v5059 = vld [vmem:[#allocation7 + $0x7e0] sm:$0xff]
    %v5060 = vld [vmem:[#allocation7 + $0x7e8] sm:$0xff]
    %v5061 = vld [vmem:[#allocation7 + $0x7f0] sm:$0xff]
    %v5062 = vld [vmem:[#allocation7 + $0x7f8] sm:$0xff]
    %v5063 = vld [vmem:[#allocation7 + $0x800] sm:$0xff]
    %v5064 = vld [vmem:[#allocation7 + $0x808] sm:$0xff]
    %v5065 = vld [vmem:[#allocation7 + $0x810] sm:$0xff]
    %v5066 = vld [vmem:[#allocation7 + $0x818] sm:$0xff]
    %v5067 = vld [vmem:[#allocation7 + $0x820] sm:$0xff]
    %v5068 = vld [vmem:[#allocation7 + $0x828] sm:$0xff]
    %v5069 = vld [vmem:[#allocation7 + $0x830] sm:$0xff]
    %v5070 = vld [vmem:[#allocation7 + $0x838] sm:$0xff]
    %v5071 = vld [vmem:[#allocation7 + $0x840] sm:$0xff]
    %v5072 = vld [vmem:[#allocation7 + $0x848] sm:$0xff]
    %v5073 = vld [vmem:[#allocation7 + $0x850] sm:$0xff]
    %v5074 = vld [vmem:[#allocation7 + $0x858] sm:$0xff]
    %v5075 = vld [vmem:[#allocation7 + $0x860] sm:$0xff]
    %v5076 = vld [vmem:[#allocation7 + $0x868] sm:$0xff]
    %v5077 = vld [vmem:[#allocation7 + $0x870] sm:$0xff]
    %v5078 = vld [vmem:[#allocation7 + $0x878] sm:$0xff]
    %v5079 = vld [vmem:[#allocation7 + $0x880] sm:$0xff]
    %v5080 = vld [vmem:[#allocation7 + $0x888] sm:$0xff]
    %v5081 = vld [vmem:[#allocation7 + $0x890] sm:$0xff]
    %v5082 = vld [vmem:[#allocation7 + $0x898] sm:$0xff]
    %v5083 = vld [vmem:[#allocation7 + $0x8a0] sm:$0xff]
    %v5084 = vld [vmem:[#allocation7 + $0x8a8] sm:$0xff]
    %v5085 = vld [vmem:[#allocation7 + $0x8b0] sm:$0xff]
    %v5086 = vld [vmem:[#allocation7 + $0x8b8] sm:$0xff]
    %v5087 = vld [vmem:[#allocation7 + $0x8c0] sm:$0xff]
    %v5088 = vld [vmem:[#allocation7 + $0x8c8] sm:$0xff]
    %v5089 = vld [vmem:[#allocation7 + $0x8d0] sm:$0xff]
    %v5090 = vld [vmem:[#allocation7 + $0x8d8] sm:$0xff]
    %v5091 = vld [vmem:[#allocation7 + $0x8e0] sm:$0xff]
    %v5092 = vld [vmem:[#allocation7 + $0x8e8] sm:$0xff]
    %v5093 = vld [vmem:[#allocation7 + $0x8f0] sm:$0xff]
    %v5094 = vld [vmem:[#allocation7 + $0x8f8] sm:$0xff]
    %v5095 = vld [vmem:[#allocation7 + $0x900] sm:$0xff]
    %v5096 = vld [vmem:[#allocation7 + $0x908] sm:$0xff]
    %v5097 = vld [vmem:[#allocation7 + $0x910] sm:$0xff]
    %v5098 = vld [vmem:[#allocation7 + $0x918] sm:$0xff]
    %v5099 = vld [vmem:[#allocation7 + $0x920] sm:$0xff]
    %v5100 = vld [vmem:[#allocation7 + $0x928] sm:$0xff]
    %v5101 = vld [vmem:[#allocation7 + $0x930] sm:$0xff]
    %v5102 = vld [vmem:[#allocation7 + $0x938] sm:$0xff]
    %v5103 = vld [vmem:[#allocation7 + $0x940] sm:$0xff]
    %v5104 = vld [vmem:[#allocation7 + $0x948] sm:$0xff]
    %v5105 = vld [vmem:[#allocation7 + $0x950] sm:$0xff]
    %v5106 = vld [vmem:[#allocation7 + $0x958] sm:$0xff]
    %v5107 = vld [vmem:[#allocation7 + $0x960] sm:$0xff]
    %v5108 = vld [vmem:[#allocation7 + $0x968] sm:$0xff]
    %v5109 = vld [vmem:[#allocation7 + $0x970] sm:$0xff]
    %v5110 = vld [vmem:[#allocation7 + $0x978] sm:$0xff]
    %v5111 = vld [vmem:[#allocation7 + $0x980] sm:$0xff]
    %v5112 = vld [vmem:[#allocation7 + $0x988] sm:$0xff]
    %v5113 = vld [vmem:[#allocation7 + $0x990] sm:$0xff]
    %v5114 = vld [vmem:[#allocation7 + $0x998] sm:$0xff]
    %v5115 = vld [vmem:[#allocation7 + $0x9a0] sm:$0xff]
    %v5116 = vld [vmem:[#allocation7 + $0x9a8] sm:$0xff]
    %v5117 = vld [vmem:[#allocation7 + $0x9b0] sm:$0xff]
    %v5118 = vld [vmem:[#allocation7 + $0x9b8] sm:$0xff]
    %v5119 = vld [vmem:[#allocation7 + $0x9c0] sm:$0xff]
    %v5120 = vld [vmem:[#allocation7 + $0x9c8] sm:$0xff]
    %v5121 = vld [vmem:[#allocation7 + $0x9d0] sm:$0xff]
    %v5122 = vld [vmem:[#allocation7 + $0x9d8] sm:$0xff]
    %v5123 = vld [vmem:[#allocation7 + $0x9e0] sm:$0xff]
    %v5124 = vld [vmem:[#allocation7 + $0x9e8] sm:$0xff]
    %v5125 = vld [vmem:[#allocation7 + $0x9f0] sm:$0xff]
    %v5126 = vld [vmem:[#allocation7 + $0x9f8] sm:$0xff]
    %v5127 = vld [vmem:[#allocation7 + $0xa00] sm:$0xff]
    %v5128 = vld [vmem:[#allocation7 + $0xa08] sm:$0xff]
    %v5129 = vld [vmem:[#allocation7 + $0xa10] sm:$0xff]
    %v5130 = vld [vmem:[#allocation7 + $0xa18] sm:$0xff]
    %v5131 = vld [vmem:[#allocation7 + $0xa20] sm:$0xff]
    %v5132 = vld [vmem:[#allocation7 + $0xa28] sm:$0xff]
    %v5133 = vld [vmem:[#allocation7 + $0xa30] sm:$0xff]
    %v5134 = vld [vmem:[#allocation7 + $0xa38] sm:$0xff]
    %v5135 = vld [vmem:[#allocation7 + $0xa40] sm:$0xff]
    %v5136 = vld [vmem:[#allocation7 + $0xa48] sm:$0xff]
    %v5137 = vld [vmem:[#allocation7 + $0xa50] sm:$0xff]
    %v5138 = vld [vmem:[#allocation7 + $0xa58] sm:$0xff]
    %v5139 = vld [vmem:[#allocation7 + $0xa60] sm:$0xff]
    %v5140 = vld [vmem:[#allocation7 + $0xa68] sm:$0xff]
    %v5141 = vld [vmem:[#allocation7 + $0xa70] sm:$0xff]
    %v5142 = vld [vmem:[#allocation7 + $0xa78] sm:$0xff]
    %v5143 = vld [vmem:[#allocation7 + $0xa80] sm:$0xff]
    %v5144 = vld [vmem:[#allocation7 + $0xa88] sm:$0xff]
    %v5145 = vld [vmem:[#allocation7 + $0xa90] sm:$0xff]
    %v5146 = vld [vmem:[#allocation7 + $0xa98] sm:$0xff]
    %v5147 = vld [vmem:[#allocation7 + $0xaa0] sm:$0xff]
    %v5148 = vld [vmem:[#allocation7 + $0xaa8] sm:$0xff]
    %v5149 = vld [vmem:[#allocation7 + $0xab0] sm:$0xff]
    %v5150 = vld [vmem:[#allocation7 + $0xab8] sm:$0xff]
    %v5151 = vld [vmem:[#allocation7 + $0xac0] sm:$0xff]
    %v5152 = vld [vmem:[#allocation7 + $0xac8] sm:$0xff]
    %v5153 = vld [vmem:[#allocation7 + $0xad0] sm:$0xff]
    %v5154 = vld [vmem:[#allocation7 + $0xad8] sm:$0xff]
    %v5155 = vld [vmem:[#allocation7 + $0xae0] sm:$0xff]
    %v5156 = vld [vmem:[#allocation7 + $0xae8] sm:$0xff]
    %v5157 = vld [vmem:[#allocation7 + $0xaf0] sm:$0xff]
    %v5158 = vld [vmem:[#allocation7 + $0xaf8] sm:$0xff]
    %v5159 = vld [vmem:[#allocation7 + $0xb00] sm:$0xff]
    %v5160 = vld [vmem:[#allocation7 + $0xb08] sm:$0xff]
    %v5161 = vld [vmem:[#allocation7 + $0xb10] sm:$0xff]
    %v5162 = vld [vmem:[#allocation7 + $0xb18] sm:$0xff]
    %v5163 = vld [vmem:[#allocation7 + $0xb20] sm:$0xff]
    %v5164 = vld [vmem:[#allocation7 + $0xb28] sm:$0xff]
    %v5165 = vld [vmem:[#allocation7 + $0xb30] sm:$0xff]
    %v5166 = vld [vmem:[#allocation7 + $0xb38] sm:$0xff]
    %v5167 = vld [vmem:[#allocation7 + $0xb40] sm:$0xff]
    %v5168 = vld [vmem:[#allocation7 + $0xb48] sm:$0xff]
    %v5169 = vld [vmem:[#allocation7 + $0xb50] sm:$0xff]
    %v5170 = vld [vmem:[#allocation7 + $0xb58] sm:$0xff]
    %v5171 = vld [vmem:[#allocation7 + $0xb60] sm:$0xff]
    %v5172 = vld [vmem:[#allocation7 + $0xb68] sm:$0xff]
    %v5173 = vld [vmem:[#allocation7 + $0xb70] sm:$0xff]
    %v5174 = vld [vmem:[#allocation7 + $0xb78] sm:$0xff]
    %v5175 = vld [vmem:[#allocation7 + $0xb80] sm:$0xff]
    %v5176 = vld [vmem:[#allocation7 + $0xb88] sm:$0xff]
    %v5177 = vld [vmem:[#allocation7 + $0xb90] sm:$0xff]
    %v5178 = vld [vmem:[#allocation7 + $0xb98] sm:$0xff]
    %v5179 = vld [vmem:[#allocation7 + $0xba0] sm:$0xff]
    %v5180 = vld [vmem:[#allocation7 + $0xba8] sm:$0xff]
    %v5181 = vld [vmem:[#allocation7 + $0xbb0] sm:$0xff]
    %v5182 = vld [vmem:[#allocation7 + $0xbb8] sm:$0xff]
    %v5183 = vld [vmem:[#allocation7 + $0xbc0] sm:$0xff]
    %v5184 = vld [vmem:[#allocation7 + $0xbc8] sm:$0xff]
    %v5185 = vld [vmem:[#allocation7 + $0xbd0] sm:$0xff]
    %v5186 = vld [vmem:[#allocation7 + $0xbd8] sm:$0xff]
    %v5187 = vld [vmem:[#allocation7 + $0xbe0] sm:$0xff]
    %v5188 = vld [vmem:[#allocation7 + $0xbe8] sm:$0xff]
    %v5189 = vld [vmem:[#allocation7 + $0xbf0] sm:$0xff]
    %v5190 = vld [vmem:[#allocation7 + $0xbf8] sm:$0xff]
    %v5191 = vld [vmem:[#allocation7 + $0xc00] sm:$0xff]
    %v5192 = vld [vmem:[#allocation7 + $0xc08] sm:$0xff]
    %v5193 = vld [vmem:[#allocation7 + $0xc10] sm:$0xff]
    %v5194 = vld [vmem:[#allocation7 + $0xc18] sm:$0xff]
    %v5195 = vld [vmem:[#allocation7 + $0xc20] sm:$0xff]
    %v5196 = vld [vmem:[#allocation7 + $0xc28] sm:$0xff]
    %v5197 = vld [vmem:[#allocation7 + $0xc30] sm:$0xff]
    %v5198 = vld [vmem:[#allocation7 + $0xc38] sm:$0xff]
    %v5199 = vld [vmem:[#allocation7 + $0xc40] sm:$0xff]
    %v5200 = vld [vmem:[#allocation7 + $0xc48] sm:$0xff]
    %v5201 = vld [vmem:[#allocation7 + $0xc50] sm:$0xff]
    %v5202 = vld [vmem:[#allocation7 + $0xc58] sm:$0xff]
    %v5203 = vld [vmem:[#allocation7 + $0xc60] sm:$0xff]
    %v5204 = vld [vmem:[#allocation7 + $0xc68] sm:$0xff]
    %v5205 = vld [vmem:[#allocation7 + $0xc70] sm:$0xff]
    %v5206 = vld [vmem:[#allocation7 + $0xc78] sm:$0xff]
    %v5207 = vld [vmem:[#allocation7 + $0xc80] sm:$0xff]
    %v5208 = vld [vmem:[#allocation7 + $0xc88] sm:$0xff]
    %v5209 = vld [vmem:[#allocation7 + $0xc90] sm:$0xff]
    %v5210 = vld [vmem:[#allocation7 + $0xc98] sm:$0xff]
    %v5211 = vld [vmem:[#allocation7 + $0xca0] sm:$0xff]
    %v5212 = vld [vmem:[#allocation7 + $0xca8] sm:$0xff]
    %v5213 = vld [vmem:[#allocation7 + $0xcb0] sm:$0xff]
    %v5214 = vld [vmem:[#allocation7 + $0xcb8] sm:$0xff]
    %v5215 = vld [vmem:[#allocation7 + $0xcc0] sm:$0xff]
    %v5216 = vld [vmem:[#allocation7 + $0xcc8] sm:$0xff]
    %v5217 = vld [vmem:[#allocation7 + $0xcd0] sm:$0xff]
    %v5218 = vld [vmem:[#allocation7 + $0xcd8] sm:$0xff]
    %v5219 = vld [vmem:[#allocation7 + $0xce0] sm:$0xff]
    %v5220 = vld [vmem:[#allocation7 + $0xce8] sm:$0xff]
    %v5221 = vld [vmem:[#allocation7 + $0xcf0] sm:$0xff]
    %v5222 = vld [vmem:[#allocation7 + $0xcf8] sm:$0xff]
    %v5223 = vld [vmem:[#allocation7 + $0xd00] sm:$0xff]
    %v5224 = vld [vmem:[#allocation7 + $0xd08] sm:$0xff]
    %v5225 = vld [vmem:[#allocation7 + $0xd10] sm:$0xff]
    %v5226 = vld [vmem:[#allocation7 + $0xd18] sm:$0xff]
    %v5227 = vld [vmem:[#allocation7 + $0xd20] sm:$0xff]
    %v5228 = vld [vmem:[#allocation7 + $0xd28] sm:$0xff]
    %v5229 = vld [vmem:[#allocation7 + $0xd30] sm:$0xff]
    %v5230 = vld [vmem:[#allocation7 + $0xd38] sm:$0xff]
    %v5231 = vld [vmem:[#allocation7 + $0xd40] sm:$0xff]
    %v5232 = vld [vmem:[#allocation7 + $0xd48] sm:$0xff]
    %v5233 = vld [vmem:[#allocation7 + $0xd50] sm:$0xff]
    %v5234 = vld [vmem:[#allocation7 + $0xd58] sm:$0xff]
    %v5235 = vld [vmem:[#allocation7 + $0xd60] sm:$0xff]
    %v5236 = vld [vmem:[#allocation7 + $0xd68] sm:$0xff]
    %v5237 = vld [vmem:[#allocation7 + $0xd70] sm:$0xff]
    %v5238 = vld [vmem:[#allocation7 + $0xd78] sm:$0xff]
    %v5239 = vld [vmem:[#allocation7 + $0xd80] sm:$0xff]
    %v5240 = vld [vmem:[#allocation7 + $0xd88] sm:$0xff]
    %v5241 = vld [vmem:[#allocation7 + $0xd90] sm:$0xff]
    %v5242 = vld [vmem:[#allocation7 + $0xd98] sm:$0xff]
    %v5243 = vld [vmem:[#allocation7 + $0xda0] sm:$0xff]
    %v5244 = vld [vmem:[#allocation7 + $0xda8] sm:$0xff]
    %v5245 = vld [vmem:[#allocation7 + $0xdb0] sm:$0xff]
    %v5246 = vld [vmem:[#allocation7 + $0xdb8] sm:$0xff]
    %v5247 = vld [vmem:[#allocation7 + $0xdc0] sm:$0xff]
    %v5248 = vld [vmem:[#allocation7 + $0xdc8] sm:$0xff]
    %v5249 = vld [vmem:[#allocation7 + $0xdd0] sm:$0xff]
    %v5250 = vld [vmem:[#allocation7 + $0xdd8] sm:$0xff]
    %v5251 = vld [vmem:[#allocation7 + $0xde0] sm:$0xff]
    %v5252 = vld [vmem:[#allocation7 + $0xde8] sm:$0xff]
    %v5253 = vld [vmem:[#allocation7 + $0xdf0] sm:$0xff]
    %v5254 = vld [vmem:[#allocation7 + $0xdf8] sm:$0xff]
    %v5255 = vld [vmem:[#allocation8] sm:$0x3]
    %v5257 = vlaneseq
    %v5258 = vshrl.u32 %v5257, 7
    %v5259 = vsub.s32 0, %v5258
    %v5260 = vrot.slane %v5255, %v5259
    %v5261 = vlaneseq
    %v5262 = vshrl.u32 %v5261, 7
    %v5263 = vsub.s32 1, %v5262
    %v5264 = vrot.slane %v5255, %v5263
    %v5715 = vunpack.c.l.b16 %v4807
    %v5716 = vunpack.c.h.b16 %v4807
    %v5717 = vunpack.c.l.b16 %v4808
    %v5718 = vunpack.c.h.b16 %v4808
    %v5719 = vunpack.c.l.b16 %v4809
    %v5720 = vunpack.c.h.b16 %v4809
    %v5721 = vunpack.c.l.b16 %v4810
    %v5722 = vunpack.c.h.b16 %v4810
    %v5723 = vunpack.c.l.b16 %v4811
    %v5724 = vunpack.c.h.b16 %v4811
    %v5725 = vunpack.c.l.b16 %v4812
    %v5726 = vunpack.c.h.b16 %v4812
    %v5727 = vunpack.c.l.b16 %v4813
    %v5728 = vunpack.c.h.b16 %v4813
    %v5729 = vunpack.c.l.b16 %v4814
    %v5730 = vunpack.c.h.b16 %v4814
    %v5731 = vunpack.c.l.b16 %v4815
    %v5732 = vunpack.c.h.b16 %v4815
    %v5733 = vunpack.c.l.b16 %v4816
    %v5734 = vunpack.c.h.b16 %v4816
    %v5735 = vunpack.c.l.b16 %v4817
    %v5736 = vunpack.c.h.b16 %v4817
    %v5737 = vunpack.c.l.b16 %v4818
    %v5738 = vunpack.c.h.b16 %v4818
    %v5739 = vunpack.c.l.b16 %v4819
    %v5740 = vunpack.c.h.b16 %v4819
    %v5741 = vunpack.c.l.b16 %v4820
    %v5742 = vunpack.c.h.b16 %v4820
    %v5743 = vunpack.c.l.b16 %v4821
    %v5744 = vunpack.c.h.b16 %v4821
    %v5745 = vunpack.c.l.b16 %v4822
    %v5746 = vunpack.c.h.b16 %v4822
    %v5747 = vunpack.c.l.b16 %v4823
    %v5748 = vunpack.c.h.b16 %v4823
    %v5749 = vunpack.c.l.b16 %v4824
    %v5750 = vunpack.c.h.b16 %v4824
    %v5751 = vunpack.c.l.b16 %v4825
    %v5752 = vunpack.c.h.b16 %v4825
    %v5753 = vunpack.c.l.b16 %v4826
    %v5754 = vunpack.c.h.b16 %v4826
    %v5755 = vunpack.c.l.b16 %v4827
    %v5756 = vunpack.c.h.b16 %v4827
    %v5757 = vunpack.c.l.b16 %v4828
    %v5758 = vunpack.c.h.b16 %v4828
    %v5759 = vunpack.c.l.b16 %v4829
    %v5760 = vunpack.c.h.b16 %v4829
    %v5761 = vunpack.c.l.b16 %v4830
    %v5762 = vunpack.c.h.b16 %v4830
    %v5763 = vunpack.c.l.b16 %v4831
    %v5764 = vunpack.c.h.b16 %v4831
    %v5765 = vunpack.c.l.b16 %v4832
    %v5766 = vunpack.c.h.b16 %v4832
    %v5767 = vunpack.c.l.b16 %v4833
    %v5768 = vunpack.c.h.b16 %v4833
    %v5769 = vunpack.c.l.b16 %v4834
    %v5770 = vunpack.c.h.b16 %v4834
    %v5771 = vunpack.c.l.b16 %v4835
    %v5772 = vunpack.c.h.b16 %v4835
    %v5773 = vunpack.c.l.b16 %v4836
    %v5774 = vunpack.c.h.b16 %v4836
    %v5775 = vunpack.c.l.b16 %v4837
    %v5776 = vunpack.c.h.b16 %v4837
    %v5777 = vunpack.c.l.b16 %v4838
    %v5778 = vunpack.c.h.b16 %v4838
    %v5779 = vunpack.c.l.b16 %v4839
    %v5780 = vunpack.c.h.b16 %v4839
    %v5781 = vunpack.c.l.b16 %v4840
    %v5782 = vunpack.c.h.b16 %v4840
    %v5783 = vunpack.c.l.b16 %v4841
    %v5784 = vunpack.c.h.b16 %v4841
    %v5785 = vunpack.c.l.b16 %v4842
    %v5786 = vunpack.c.h.b16 %v4842
    %v5787 = vunpack.c.l.b16 %v4843
    %v5788 = vunpack.c.h.b16 %v4843
    %v5789 = vunpack.c.l.b16 %v4844
    %v5790 = vunpack.c.h.b16 %v4844
    %v5791 = vunpack.c.l.b16 %v4845
    %v5792 = vunpack.c.h.b16 %v4845
    %v5793 = vunpack.c.l.b16 %v4846
    %v5794 = vunpack.c.h.b16 %v4846
    %v5795 = vunpack.c.l.b16 %v4847
    %v5796 = vunpack.c.h.b16 %v4847
    %v5797 = vunpack.c.l.b16 %v4848
    %v5798 = vunpack.c.h.b16 %v4848
    %v5799 = vunpack.c.l.b16 %v4849
    %v5800 = vunpack.c.h.b16 %v4849
    %v5801 = vunpack.c.l.b16 %v4850
    %v5802 = vunpack.c.h.b16 %v4850
    %v5803 = vunpack.c.l.b16 %v4851
    %v5804 = vunpack.c.h.b16 %v4851
    %v5805 = vunpack.c.l.b16 %v4852
    %v5806 = vunpack.c.h.b16 %v4852
    %v5807 = vunpack.c.l.b16 %v4853
    %v5808 = vunpack.c.h.b16 %v4853
    %v5809 = vunpack.c.l.b16 %v4854
    %v5810 = vunpack.c.h.b16 %v4854
    %v5811 = vunpack.c.l.b16 %v4855
    %v5812 = vunpack.c.h.b16 %v4855
    %v5813 = vunpack.c.l.b16 %v4856
    %v5814 = vunpack.c.h.b16 %v4856
    %v5815 = vunpack.c.l.b16 %v4857
    %v5816 = vunpack.c.h.b16 %v4857
    %v5817 = vunpack.c.l.b16 %v4858
    %v5818 = vunpack.c.h.b16 %v4858
    %v5819 = vunpack.c.l.b16 %v4859
    %v5820 = vunpack.c.h.b16 %v4859
    %v5821 = vunpack.c.l.b16 %v4860
    %v5822 = vunpack.c.h.b16 %v4860
    %v5823 = vunpack.c.l.b16 %v4861
    %v5824 = vunpack.c.h.b16 %v4861
    %v5825 = vunpack.c.l.b16 %v4862
    %v5826 = vunpack.c.h.b16 %v4862
    %v5827 = vunpack.c.l.b16 %v4863
    %v5828 = vunpack.c.h.b16 %v4863
    %v5829 = vunpack.c.l.b16 %v4864
    %v5830 = vunpack.c.h.b16 %v4864
    %v5831 = vunpack.c.l.b16 %v4865
    %v5832 = vunpack.c.h.b16 %v4865
    %v5833 = vunpack.c.l.b16 %v4866
    %v5834 = vunpack.c.h.b16 %v4866
    %v5835 = vunpack.c.l.b16 %v4867
    %v5836 = vunpack.c.h.b16 %v4867
    %v5837 = vunpack.c.l.b16 %v4868
    %v5838 = vunpack.c.h.b16 %v4868
    %v5839 = vunpack.c.l.b16 %v4869
    %v5840 = vunpack.c.h.b16 %v4869
    %v5841 = vunpack.c.l.b16 %v4870
    %v5842 = vunpack.c.h.b16 %v4870
    %v5843 = vunpack.c.l.b16 %v4871
    %v5844 = vunpack.c.h.b16 %v4871
    %v5845 = vunpack.c.l.b16 %v4872
    %v5846 = vunpack.c.h.b16 %v4872
    %v5847 = vunpack.c.l.b16 %v4873
    %v5848 = vunpack.c.h.b16 %v4873
    %v5849 = vunpack.c.l.b16 %v4874
    %v5850 = vunpack.c.h.b16 %v4874
    %v5851 = vunpack.c.l.b16 %v4875
    %v5852 = vunpack.c.h.b16 %v4875
    %v5853 = vunpack.c.l.b16 %v4876
    %v5854 = vunpack.c.h.b16 %v4876
    %v5855 = vunpack.c.l.b16 %v4877
    %v5856 = vunpack.c.h.b16 %v4877
    %v5857 = vunpack.c.l.b16 %v4878
    %v5858 = vunpack.c.h.b16 %v4878
    %v5859 = vunpack.c.l.b16 %v4879
    %v5860 = vunpack.c.h.b16 %v4879
    %v5861 = vunpack.c.l.b16 %v4880
    %v5862 = vunpack.c.h.b16 %v4880
    %v5863 = vunpack.c.l.b16 %v4881
    %v5864 = vunpack.c.h.b16 %v4881
    %v5865 = vunpack.c.l.b16 %v4882
    %v5866 = vunpack.c.h.b16 %v4882
    %v5867 = vunpack.c.l.b16 %v4883
    %v5868 = vunpack.c.h.b16 %v4883
    %v5869 = vunpack.c.l.b16 %v4884
    %v5870 = vunpack.c.h.b16 %v4884
    %v5871 = vunpack.c.l.b16 %v4885
    %v5872 = vunpack.c.h.b16 %v4885
    %v5873 = vunpack.c.l.b16 %v4886
    %v5874 = vunpack.c.h.b16 %v4886
    %v5875 = vunpack.c.l.b16 %v4887
    %v5876 = vunpack.c.h.b16 %v4887
    %v5877 = vunpack.c.l.b16 %v4888
    %v5878 = vunpack.c.h.b16 %v4888
    %v5879 = vunpack.c.l.b16 %v4889
    %v5880 = vunpack.c.h.b16 %v4889
    %v5881 = vunpack.c.l.b16 %v4890
    %v5882 = vunpack.c.h.b16 %v4890
    %v5883 = vunpack.c.l.b16 %v4891
    %v5884 = vunpack.c.h.b16 %v4891
    %v5885 = vunpack.c.l.b16 %v4892
    %v5886 = vunpack.c.h.b16 %v4892
    %v5887 = vunpack.c.l.b16 %v4893
    %v5888 = vunpack.c.h.b16 %v4893
    %v5889 = vunpack.c.l.b16 %v4894
    %v5890 = vunpack.c.h.b16 %v4894
    %v5891 = vunpack.c.l.b16 %v4895
    %v5892 = vunpack.c.h.b16 %v4895
    %v5893 = vunpack.c.l.b16 %v4896
    %v5894 = vunpack.c.h.b16 %v4896
    %v5895 = vunpack.c.l.b16 %v4897
    %v5896 = vunpack.c.h.b16 %v4897
    %v5897 = vunpack.c.l.b16 %v4898
    %v5898 = vunpack.c.h.b16 %v4898
    %v5899 = vunpack.c.l.b16 %v4899
    %v5900 = vunpack.c.h.b16 %v4899
    %v5901 = vunpack.c.l.b16 %v4900
    %v5902 = vunpack.c.h.b16 %v4900
    %v5903 = vunpack.c.l.b16 %v4901
    %v5904 = vunpack.c.h.b16 %v4901
    %v5905 = vunpack.c.l.b16 %v4902
    %v5906 = vunpack.c.h.b16 %v4902
    %v5907 = vunpack.c.l.b16 %v4903
    %v5908 = vunpack.c.h.b16 %v4903
    %v5909 = vunpack.c.l.b16 %v4904
    %v5910 = vunpack.c.h.b16 %v4904
    %v5911 = vunpack.c.l.b16 %v4905
    %v5912 = vunpack.c.h.b16 %v4905
    %v5913 = vunpack.c.l.b16 %v4906
    %v5914 = vunpack.c.h.b16 %v4906
    %v5915 = vunpack.c.l.b16 %v4907
    %v5916 = vunpack.c.h.b16 %v4907
    %v5917 = vunpack.c.l.b16 %v4908
    %v5918 = vunpack.c.h.b16 %v4908
    %v5919 = vunpack.c.l.b16 %v4909
    %v5920 = vunpack.c.h.b16 %v4909
    %v5921 = vunpack.c.l.b16 %v4910
    %v5922 = vunpack.c.h.b16 %v4910
    %v5923 = vunpack.c.l.b16 %v4911
    %v5924 = vunpack.c.h.b16 %v4911
    %v5925 = vunpack.c.l.b16 %v4912
    %v5926 = vunpack.c.h.b16 %v4912
    %v5927 = vunpack.c.l.b16 %v4913
    %v5928 = vunpack.c.h.b16 %v4913
    %v5929 = vunpack.c.l.b16 %v4914
    %v5930 = vunpack.c.h.b16 %v4914
    %v5931 = vunpack.c.l.b16 %v4915
    %v5932 = vunpack.c.h.b16 %v4915
    %v5933 = vunpack.c.l.b16 %v4916
    %v5934 = vunpack.c.h.b16 %v4916
    %v5935 = vunpack.c.l.b16 %v4917
    %v5936 = vunpack.c.h.b16 %v4917
    %v5937 = vunpack.c.l.b16 %v4918
    %v5938 = vunpack.c.h.b16 %v4918
    %v5939 = vunpack.c.l.b16 %v4919
    %v5940 = vunpack.c.h.b16 %v4919
    %v5941 = vunpack.c.l.b16 %v4920
    %v5942 = vunpack.c.h.b16 %v4920
    %v5943 = vunpack.c.l.b16 %v4921
    %v5944 = vunpack.c.h.b16 %v4921
    %v5945 = vunpack.c.l.b16 %v4922
    %v5946 = vunpack.c.h.b16 %v4922
    %v5947 = vunpack.c.l.b16 %v4923
    %v5948 = vunpack.c.h.b16 %v4923
    %v5949 = vunpack.c.l.b16 %v4924
    %v5950 = vunpack.c.h.b16 %v4924
    %v5951 = vunpack.c.l.b16 %v4925
    %v5952 = vunpack.c.h.b16 %v4925
    %v5953 = vunpack.c.l.b16 %v4926
    %v5954 = vunpack.c.h.b16 %v4926
    %v5955 = vunpack.c.l.b16 %v4927
    %v5956 = vunpack.c.h.b16 %v4927
    %v5957 = vunpack.c.l.b16 %v4928
    %v5958 = vunpack.c.h.b16 %v4928
    %v5959 = vunpack.c.l.b16 %v4929
    %v5960 = vunpack.c.h.b16 %v4929
    %v5961 = vunpack.c.l.b16 %v4930
    %v5962 = vunpack.c.h.b16 %v4930
    %v5963 = vunpack.c.l.b16 %v4931
    %v5964 = vunpack.c.h.b16 %v4931
    %v5965 = vunpack.c.l.b16 %v4932
    %v5966 = vunpack.c.h.b16 %v4932
    %v5967 = vunpack.c.l.b16 %v4933
    %v5968 = vunpack.c.h.b16 %v4933
    %v5969 = vunpack.c.l.b16 %v4934
    %v5970 = vunpack.c.h.b16 %v4934
    %v5971 = vunpack.c.l.b16 %v4935
    %v5972 = vunpack.c.h.b16 %v4935
    %v5973 = vunpack.c.l.b16 %v4936
    %v5974 = vunpack.c.h.b16 %v4936
    %v5975 = vunpack.c.l.b16 %v4937
    %v5976 = vunpack.c.h.b16 %v4937
    %v5977 = vunpack.c.l.b16 %v4938
    %v5978 = vunpack.c.h.b16 %v4938
    %v5979 = vunpack.c.l.b16 %v4939
    %v5980 = vunpack.c.h.b16 %v4939
    %v5981 = vunpack.c.l.b16 %v4940
    %v5982 = vunpack.c.h.b16 %v4940
    %v5983 = vunpack.c.l.b16 %v4941
    %v5984 = vunpack.c.h.b16 %v4941
    %v5985 = vunpack.c.l.b16 %v4942
    %v5986 = vunpack.c.h.b16 %v4942
    %v5987 = vunpack.c.l.b16 %v4943
    %v5988 = vunpack.c.h.b16 %v4943
    %v5989 = vunpack.c.l.b16 %v4944
    %v5990 = vunpack.c.h.b16 %v4944
    %v5991 = vunpack.c.l.b16 %v4945
    %v5992 = vunpack.c.h.b16 %v4945
    %v5993 = vunpack.c.l.b16 %v4946
    %v5994 = vunpack.c.h.b16 %v4946
    %v5995 = vunpack.c.l.b16 %v4947
    %v5996 = vunpack.c.h.b16 %v4947
    %v5997 = vunpack.c.l.b16 %v4948
    %v5998 = vunpack.c.h.b16 %v4948
    %v5999 = vunpack.c.l.b16 %v4949
    %v6000 = vunpack.c.h.b16 %v4949
    %v6001 = vunpack.c.l.b16 %v4950
    %v6002 = vunpack.c.h.b16 %v4950
    %v6003 = vunpack.c.l.b16 %v4951
    %v6004 = vunpack.c.h.b16 %v4951
    %v6005 = vunpack.c.l.b16 %v4952
    %v6006 = vunpack.c.h.b16 %v4952
    %v6007 = vunpack.c.l.b16 %v4953
    %v6008 = vunpack.c.h.b16 %v4953
    %v6009 = vunpack.c.l.b16 %v4954
    %v6010 = vunpack.c.h.b16 %v4954
    %v6011 = vunpack.c.l.b16 %v4955
    %v6012 = vunpack.c.h.b16 %v4955
    %v6013 = vunpack.c.l.b16 %v4956
    %v6014 = vunpack.c.h.b16 %v4956
    %v6015 = vunpack.c.l.b16 %v4957
    %v6016 = vunpack.c.h.b16 %v4957
    %v6017 = vunpack.c.l.b16 %v4958
    %v6018 = vunpack.c.h.b16 %v4958
    %v6019 = vunpack.c.l.b16 %v4959
    %v6020 = vunpack.c.h.b16 %v4959
    %v6021 = vunpack.c.l.b16 %v4960
    %v6022 = vunpack.c.h.b16 %v4960
    %v6023 = vunpack.c.l.b16 %v4961
    %v6024 = vunpack.c.h.b16 %v4961
    %v6025 = vunpack.c.l.b16 %v4962
    %v6026 = vunpack.c.h.b16 %v4962
    %v6027 = vunpack.c.l.b16 %v4963
    %v6028 = vunpack.c.h.b16 %v4963
    %v6029 = vunpack.c.l.b16 %v4964
    %v6030 = vunpack.c.h.b16 %v4964
    %v6031 = vunpack.c.l.b16 %v4965
    %v6032 = vunpack.c.h.b16 %v4965
    %v6033 = vunpack.c.l.b16 %v4966
    %v6034 = vunpack.c.h.b16 %v4966
    %v6035 = vunpack.c.l.b16 %v4967
    %v6036 = vunpack.c.h.b16 %v4967
    %v6037 = vunpack.c.l.b16 %v4968
    %v6038 = vunpack.c.h.b16 %v4968
    %v6039 = vunpack.c.l.b16 %v4969
    %v6040 = vunpack.c.h.b16 %v4969
    %v6041 = vunpack.c.l.b16 %v4970
    %v6042 = vunpack.c.h.b16 %v4970
    %v6043 = vunpack.c.l.b16 %v4971
    %v6044 = vunpack.c.h.b16 %v4971
    %v6045 = vunpack.c.l.b16 %v4972
    %v6046 = vunpack.c.h.b16 %v4972
    %v6047 = vunpack.c.l.b16 %v4973
    %v6048 = vunpack.c.h.b16 %v4973
    %v6049 = vunpack.c.l.b16 %v4974
    %v6050 = vunpack.c.h.b16 %v4974
    %v6051 = vunpack.c.l.b16 %v4975
    %v6052 = vunpack.c.h.b16 %v4975
    %v6053 = vunpack.c.l.b16 %v4976
    %v6054 = vunpack.c.h.b16 %v4976
    %v6055 = vunpack.c.l.b16 %v4977
    %v6056 = vunpack.c.h.b16 %v4977
    %v6057 = vunpack.c.l.b16 %v4978
    %v6058 = vunpack.c.h.b16 %v4978
    %v6059 = vunpack.c.l.b16 %v4979
    %v6060 = vunpack.c.h.b16 %v4979
    %v6061 = vunpack.c.l.b16 %v4980
    %v6062 = vunpack.c.h.b16 %v4980
    %v6063 = vunpack.c.l.b16 %v4981
    %v6064 = vunpack.c.h.b16 %v4981
    %v6065 = vunpack.c.l.b16 %v4982
    %v6066 = vunpack.c.h.b16 %v4982
    %v6067 = vunpack.c.l.b16 %v4983
    %v6068 = vunpack.c.h.b16 %v4983
    %v6069 = vunpack.c.l.b16 %v4984
    %v6070 = vunpack.c.h.b16 %v4984
    %v6071 = vunpack.c.l.b16 %v4985
    %v6072 = vunpack.c.h.b16 %v4985
    %v6073 = vunpack.c.l.b16 %v4986
    %v6074 = vunpack.c.h.b16 %v4986
    %v6075 = vunpack.c.l.b16 %v4987
    %v6076 = vunpack.c.h.b16 %v4987
    %v6077 = vunpack.c.l.b16 %v4988
    %v6078 = vunpack.c.h.b16 %v4988
    %v6079 = vunpack.c.l.b16 %v4989
    %v6080 = vunpack.c.h.b16 %v4989
    %v6081 = vunpack.c.l.b16 %v4990
    %v6082 = vunpack.c.h.b16 %v4990
    %v6083 = vunpack.c.l.b16 %v4991
    %v6084 = vunpack.c.h.b16 %v4991
    %v6085 = vunpack.c.l.b16 %v4992
    %v6086 = vunpack.c.h.b16 %v4992
    %v6087 = vunpack.c.l.b16 %v4993
    %v6088 = vunpack.c.h.b16 %v4993
    %v6089 = vunpack.c.l.b16 %v4994
    %v6090 = vunpack.c.h.b16 %v4994
    %v6091 = vunpack.c.l.b16 %v4995
    %v6092 = vunpack.c.h.b16 %v4995
    %v6093 = vunpack.c.l.b16 %v4996
    %v6094 = vunpack.c.h.b16 %v4996
    %v6095 = vunpack.c.l.b16 %v4997
    %v6096 = vunpack.c.h.b16 %v4997
    %v6097 = vunpack.c.l.b16 %v4998
    %v6098 = vunpack.c.h.b16 %v4998
    %v6099 = vunpack.c.l.b16 %v4999
    %v6100 = vunpack.c.h.b16 %v4999
    %v6101 = vunpack.c.l.b16 %v5000
    %v6102 = vunpack.c.h.b16 %v5000
    %v6103 = vunpack.c.l.b16 %v5001
    %v6104 = vunpack.c.h.b16 %v5001
    %v6105 = vunpack.c.l.b16 %v5002
    %v6106 = vunpack.c.h.b16 %v5002
    %v6107 = vunpack.c.l.b16 %v5003
    %v6108 = vunpack.c.h.b16 %v5003
    %v6109 = vunpack.c.l.b16 %v5004
    %v6110 = vunpack.c.h.b16 %v5004
    %v6111 = vunpack.c.l.b16 %v5005
    %v6112 = vunpack.c.h.b16 %v5005
    %v6113 = vunpack.c.l.b16 %v5006
    %v6114 = vunpack.c.h.b16 %v5006
    %v6115 = vunpack.c.l.b16 %v5007
    %v6116 = vunpack.c.h.b16 %v5007
    %v6117 = vunpack.c.l.b16 %v5008
    %v6118 = vunpack.c.h.b16 %v5008
    %v6119 = vunpack.c.l.b16 %v5009
    %v6120 = vunpack.c.h.b16 %v5009
    %v6121 = vunpack.c.l.b16 %v5010
    %v6122 = vunpack.c.h.b16 %v5010
    %v6123 = vunpack.c.l.b16 %v5011
    %v6124 = vunpack.c.h.b16 %v5011
    %v6125 = vunpack.c.l.b16 %v5012
    %v6126 = vunpack.c.h.b16 %v5012
    %v6127 = vunpack.c.l.b16 %v5013
    %v6128 = vunpack.c.h.b16 %v5013
    %v6129 = vunpack.c.l.b16 %v5014
    %v6130 = vunpack.c.h.b16 %v5014
    %v6131 = vunpack.c.l.b16 %v5015
    %v6132 = vunpack.c.h.b16 %v5015
    %v6133 = vunpack.c.l.b16 %v5016
    %v6134 = vunpack.c.h.b16 %v5016
    %v6135 = vunpack.c.l.b16 %v5017
    %v6136 = vunpack.c.h.b16 %v5017
    %v6137 = vunpack.c.l.b16 %v5018
    %v6138 = vunpack.c.h.b16 %v5018
    %v6139 = vunpack.c.l.b16 %v5019
    %v6140 = vunpack.c.h.b16 %v5019
    %v6141 = vunpack.c.l.b16 %v5020
    %v6142 = vunpack.c.h.b16 %v5020
    %v6143 = vunpack.c.l.b16 %v5021
    %v6144 = vunpack.c.h.b16 %v5021
    %v6145 = vunpack.c.l.b16 %v5022
    %v6146 = vunpack.c.h.b16 %v5022
    %v6147 = vunpack.c.l.b16 %v5023
    %v6148 = vunpack.c.h.b16 %v5023
    %v6149 = vunpack.c.l.b16 %v5024
    %v6150 = vunpack.c.h.b16 %v5024
    %v6151 = vunpack.c.l.b16 %v5025
    %v6152 = vunpack.c.h.b16 %v5025
    %v6153 = vunpack.c.l.b16 %v5026
    %v6154 = vunpack.c.h.b16 %v5026
    %v6155 = vunpack.c.l.b16 %v5027
    %v6156 = vunpack.c.h.b16 %v5027
    %v6157 = vunpack.c.l.b16 %v5028
    %v6158 = vunpack.c.h.b16 %v5028
    %v6159 = vunpack.c.l.b16 %v5029
    %v6160 = vunpack.c.h.b16 %v5029
    %v6161 = vunpack.c.l.b16 %v5030
    %v6162 = vunpack.c.h.b16 %v5030
    %v6163 = vunpack.c.l.b16 %v5031
    %v6164 = vunpack.c.h.b16 %v5031
    %v6165 = vunpack.c.l.b16 %v5032
    %v6166 = vunpack.c.h.b16 %v5032
    %v6167 = vunpack.c.l.b16 %v5033
    %v6168 = vunpack.c.h.b16 %v5033
    %v6169 = vunpack.c.l.b16 %v5034
    %v6170 = vunpack.c.h.b16 %v5034
    %v6171 = vunpack.c.l.b16 %v5035
    %v6172 = vunpack.c.h.b16 %v5035
    %v6173 = vunpack.c.l.b16 %v5036
    %v6174 = vunpack.c.h.b16 %v5036
    %v6175 = vunpack.c.l.b16 %v5037
    %v6176 = vunpack.c.h.b16 %v5037
    %v6177 = vunpack.c.l.b16 %v5038
    %v6178 = vunpack.c.h.b16 %v5038
    %v6179 = vunpack.c.l.b16 %v5039
    %v6180 = vunpack.c.h.b16 %v5039
    %v6181 = vunpack.c.l.b16 %v5040
    %v6182 = vunpack.c.h.b16 %v5040
    %v6183 = vunpack.c.l.b16 %v5041
    %v6184 = vunpack.c.h.b16 %v5041
    %v6185 = vunpack.c.l.b16 %v5042
    %v6186 = vunpack.c.h.b16 %v5042
    %v6187 = vunpack.c.l.b16 %v5043
    %v6188 = vunpack.c.h.b16 %v5043
    %v6189 = vunpack.c.l.b16 %v5044
    %v6190 = vunpack.c.h.b16 %v5044
    %v6191 = vunpack.c.l.b16 %v5045
    %v6192 = vunpack.c.h.b16 %v5045
    %v6193 = vunpack.c.l.b16 %v5046
    %v6194 = vunpack.c.h.b16 %v5046
    %v6195 = vunpack.c.l.b16 %v5047
    %v6196 = vunpack.c.h.b16 %v5047
    %v6197 = vunpack.c.l.b16 %v5048
    %v6198 = vunpack.c.h.b16 %v5048
    %v6199 = vunpack.c.l.b16 %v5049
    %v6200 = vunpack.c.h.b16 %v5049
    %v6201 = vunpack.c.l.b16 %v5050
    %v6202 = vunpack.c.h.b16 %v5050
    %v6203 = vunpack.c.l.b16 %v5051
    %v6204 = vunpack.c.h.b16 %v5051
    %v6205 = vunpack.c.l.b16 %v5052
    %v6206 = vunpack.c.h.b16 %v5052
    %v6207 = vunpack.c.l.b16 %v5053
    %v6208 = vunpack.c.h.b16 %v5053
    %v6209 = vunpack.c.l.b16 %v5054
    %v6210 = vunpack.c.h.b16 %v5054
    %v6211 = vunpack.c.l.b16 %v5055
    %v6212 = vunpack.c.h.b16 %v5055
    %v6213 = vunpack.c.l.b16 %v5056
    %v6214 = vunpack.c.h.b16 %v5056
    %v6215 = vunpack.c.l.b16 %v5057
    %v6216 = vunpack.c.h.b16 %v5057
    %v6217 = vunpack.c.l.b16 %v5058
    %v6218 = vunpack.c.h.b16 %v5058
    %v6219 = vunpack.c.l.b16 %v5059
    %v6220 = vunpack.c.h.b16 %v5059
    %v6221 = vunpack.c.l.b16 %v5060
    %v6222 = vunpack.c.h.b16 %v5060
    %v6223 = vunpack.c.l.b16 %v5061
    %v6224 = vunpack.c.h.b16 %v5061
    %v6225 = vunpack.c.l.b16 %v5062
    %v6226 = vunpack.c.h.b16 %v5062
    %v6227 = vunpack.c.l.b16 %v5063
    %v6228 = vunpack.c.h.b16 %v5063
    %v6229 = vunpack.c.l.b16 %v5064
    %v6230 = vunpack.c.h.b16 %v5064
    %v6231 = vunpack.c.l.b16 %v5065
    %v6232 = vunpack.c.h.b16 %v5065
    %v6233 = vunpack.c.l.b16 %v5066
    %v6234 = vunpack.c.h.b16 %v5066
    %v6235 = vunpack.c.l.b16 %v5067
    %v6236 = vunpack.c.h.b16 %v5067
    %v6237 = vunpack.c.l.b16 %v5068
    %v6238 = vunpack.c.h.b16 %v5068
    %v6239 = vunpack.c.l.b16 %v5069
    %v6240 = vunpack.c.h.b16 %v5069
    %v6241 = vunpack.c.l.b16 %v5070
    %v6242 = vunpack.c.h.b16 %v5070
    %v6243 = vunpack.c.l.b16 %v5071
    %v6244 = vunpack.c.h.b16 %v5071
    %v6245 = vunpack.c.l.b16 %v5072
    %v6246 = vunpack.c.h.b16 %v5072
    %v6247 = vunpack.c.l.b16 %v5073
    %v6248 = vunpack.c.h.b16 %v5073
    %v6249 = vunpack.c.l.b16 %v5074
    %v6250 = vunpack.c.h.b16 %v5074
    %v6251 = vunpack.c.l.b16 %v5075
    %v6252 = vunpack.c.h.b16 %v5075
    %v6253 = vunpack.c.l.b16 %v5076
    %v6254 = vunpack.c.h.b16 %v5076
    %v6255 = vunpack.c.l.b16 %v5077
    %v6256 = vunpack.c.h.b16 %v5077
    %v6257 = vunpack.c.l.b16 %v5078
    %v6258 = vunpack.c.h.b16 %v5078
    %v6259 = vunpack.c.l.b16 %v5079
    %v6260 = vunpack.c.h.b16 %v5079
    %v6261 = vunpack.c.l.b16 %v5080
    %v6262 = vunpack.c.h.b16 %v5080
    %v6263 = vunpack.c.l.b16 %v5081
    %v6264 = vunpack.c.h.b16 %v5081
    %v6265 = vunpack.c.l.b16 %v5082
    %v6266 = vunpack.c.h.b16 %v5082
    %v6267 = vunpack.c.l.b16 %v5083
    %v6268 = vunpack.c.h.b16 %v5083
    %v6269 = vunpack.c.l.b16 %v5084
    %v6270 = vunpack.c.h.b16 %v5084
    %v6271 = vunpack.c.l.b16 %v5085
    %v6272 = vunpack.c.h.b16 %v5085
    %v6273 = vunpack.c.l.b16 %v5086
    %v6274 = vunpack.c.h.b16 %v5086
    %v6275 = vunpack.c.l.b16 %v5087
    %v6276 = vunpack.c.h.b16 %v5087
    %v6277 = vunpack.c.l.b16 %v5088
    %v6278 = vunpack.c.h.b16 %v5088
    %v6279 = vunpack.c.l.b16 %v5089
    %v6280 = vunpack.c.h.b16 %v5089
    %v6281 = vunpack.c.l.b16 %v5090
    %v6282 = vunpack.c.h.b16 %v5090
    %v6283 = vunpack.c.l.b16 %v5091
    %v6284 = vunpack.c.h.b16 %v5091
    %v6285 = vunpack.c.l.b16 %v5092
    %v6286 = vunpack.c.h.b16 %v5092
    %v6287 = vunpack.c.l.b16 %v5093
    %v6288 = vunpack.c.h.b16 %v5093
    %v6289 = vunpack.c.l.b16 %v5094
    %v6290 = vunpack.c.h.b16 %v5094
    %v6291 = vunpack.c.l.b16 %v5095
    %v6292 = vunpack.c.h.b16 %v5095
    %v6293 = vunpack.c.l.b16 %v5096
    %v6294 = vunpack.c.h.b16 %v5096
    %v6295 = vunpack.c.l.b16 %v5097
    %v6296 = vunpack.c.h.b16 %v5097
    %v6297 = vunpack.c.l.b16 %v5098
    %v6298 = vunpack.c.h.b16 %v5098
    %v6299 = vunpack.c.l.b16 %v5099
    %v6300 = vunpack.c.h.b16 %v5099
    %v6301 = vunpack.c.l.b16 %v5100
    %v6302 = vunpack.c.h.b16 %v5100
    %v6303 = vunpack.c.l.b16 %v5101
    %v6304 = vunpack.c.h.b16 %v5101
    %v6305 = vunpack.c.l.b16 %v5102
    %v6306 = vunpack.c.h.b16 %v5102
    %v6307 = vunpack.c.l.b16 %v5103
    %v6308 = vunpack.c.h.b16 %v5103
    %v6309 = vunpack.c.l.b16 %v5104
    %v6310 = vunpack.c.h.b16 %v5104
    %v6311 = vunpack.c.l.b16 %v5105
    %v6312 = vunpack.c.h.b16 %v5105
    %v6313 = vunpack.c.l.b16 %v5106
    %v6314 = vunpack.c.h.b16 %v5106
    %v6315 = vunpack.c.l.b16 %v5107
    %v6316 = vunpack.c.h.b16 %v5107
    %v6317 = vunpack.c.l.b16 %v5108
    %v6318 = vunpack.c.h.b16 %v5108
    %v6319 = vunpack.c.l.b16 %v5109
    %v6320 = vunpack.c.h.b16 %v5109
    %v6321 = vunpack.c.l.b16 %v5110
    %v6322 = vunpack.c.h.b16 %v5110
    %v6323 = vunpack.c.l.b16 %v5111
    %v6324 = vunpack.c.h.b16 %v5111
    %v6325 = vunpack.c.l.b16 %v5112
    %v6326 = vunpack.c.h.b16 %v5112
    %v6327 = vunpack.c.l.b16 %v5113
    %v6328 = vunpack.c.h.b16 %v5113
    %v6329 = vunpack.c.l.b16 %v5114
    %v6330 = vunpack.c.h.b16 %v5114
    %v6331 = vunpack.c.l.b16 %v5115
    %v6332 = vunpack.c.h.b16 %v5115
    %v6333 = vunpack.c.l.b16 %v5116
    %v6334 = vunpack.c.h.b16 %v5116
    %v6335 = vunpack.c.l.b16 %v5117
    %v6336 = vunpack.c.h.b16 %v5117
    %v6337 = vunpack.c.l.b16 %v5118
    %v6338 = vunpack.c.h.b16 %v5118
    %v6339 = vunpack.c.l.b16 %v5119
    %v6340 = vunpack.c.h.b16 %v5119
    %v6341 = vunpack.c.l.b16 %v5120
    %v6342 = vunpack.c.h.b16 %v5120
    %v6343 = vunpack.c.l.b16 %v5121
    %v6344 = vunpack.c.h.b16 %v5121
    %v6345 = vunpack.c.l.b16 %v5122
    %v6346 = vunpack.c.h.b16 %v5122
    %v6347 = vunpack.c.l.b16 %v5123
    %v6348 = vunpack.c.h.b16 %v5123
    %v6349 = vunpack.c.l.b16 %v5124
    %v6350 = vunpack.c.h.b16 %v5124
    %v6351 = vunpack.c.l.b16 %v5125
    %v6352 = vunpack.c.h.b16 %v5125
    %v6353 = vunpack.c.l.b16 %v5126
    %v6354 = vunpack.c.h.b16 %v5126
    %v6355 = vunpack.c.l.b16 %v5127
    %v6356 = vunpack.c.h.b16 %v5127
    %v6357 = vunpack.c.l.b16 %v5128
    %v6358 = vunpack.c.h.b16 %v5128
    %v6359 = vunpack.c.l.b16 %v5129
    %v6360 = vunpack.c.h.b16 %v5129
    %v6361 = vunpack.c.l.b16 %v5130
    %v6362 = vunpack.c.h.b16 %v5130
    %v6363 = vunpack.c.l.b16 %v5131
    %v6364 = vunpack.c.h.b16 %v5131
    %v6365 = vunpack.c.l.b16 %v5132
    %v6366 = vunpack.c.h.b16 %v5132
    %v6367 = vunpack.c.l.b16 %v5133
    %v6368 = vunpack.c.h.b16 %v5133
    %v6369 = vunpack.c.l.b16 %v5134
    %v6370 = vunpack.c.h.b16 %v5134
    %v6371 = vunpack.c.l.b16 %v5135
    %v6372 = vunpack.c.h.b16 %v5135
    %v6373 = vunpack.c.l.b16 %v5136
    %v6374 = vunpack.c.h.b16 %v5136
    %v6375 = vunpack.c.l.b16 %v5137
    %v6376 = vunpack.c.h.b16 %v5137
    %v6377 = vunpack.c.l.b16 %v5138
    %v6378 = vunpack.c.h.b16 %v5138
    %v6379 = vunpack.c.l.b16 %v5139
    %v6380 = vunpack.c.h.b16 %v5139
    %v6381 = vunpack.c.l.b16 %v5140
    %v6382 = vunpack.c.h.b16 %v5140
    %v6383 = vunpack.c.l.b16 %v5141
    %v6384 = vunpack.c.h.b16 %v5141
    %v6385 = vunpack.c.l.b16 %v5142
    %v6386 = vunpack.c.h.b16 %v5142
    %v6387 = vunpack.c.l.b16 %v5143
    %v6388 = vunpack.c.h.b16 %v5143
    %v6389 = vunpack.c.l.b16 %v5144
    %v6390 = vunpack.c.h.b16 %v5144
    %v6391 = vunpack.c.l.b16 %v5145
    %v6392 = vunpack.c.h.b16 %v5145
    %v6393 = vunpack.c.l.b16 %v5146
    %v6394 = vunpack.c.h.b16 %v5146
    %v6395 = vunpack.c.l.b16 %v5147
    %v6396 = vunpack.c.h.b16 %v5147
    %v6397 = vunpack.c.l.b16 %v5148
    %v6398 = vunpack.c.h.b16 %v5148
    %v6399 = vunpack.c.l.b16 %v5149
    %v6400 = vunpack.c.h.b16 %v5149
    %v6401 = vunpack.c.l.b16 %v5150
    %v6402 = vunpack.c.h.b16 %v5150
    %v6403 = vunpack.c.l.b16 %v5151
    %v6404 = vunpack.c.h.b16 %v5151
    %v6405 = vunpack.c.l.b16 %v5152
    %v6406 = vunpack.c.h.b16 %v5152
    %v6407 = vunpack.c.l.b16 %v5153
    %v6408 = vunpack.c.h.b16 %v5153
    %v6409 = vunpack.c.l.b16 %v5154
    %v6410 = vunpack.c.h.b16 %v5154
    %v6411 = vunpack.c.l.b16 %v5155
    %v6412 = vunpack.c.h.b16 %v5155
    %v6413 = vunpack.c.l.b16 %v5156
    %v6414 = vunpack.c.h.b16 %v5156
    %v6415 = vunpack.c.l.b16 %v5157
    %v6416 = vunpack.c.h.b16 %v5157
    %v6417 = vunpack.c.l.b16 %v5158
    %v6418 = vunpack.c.h.b16 %v5158
    %v6419 = vunpack.c.l.b16 %v5159
    %v6420 = vunpack.c.h.b16 %v5159
    %v6421 = vunpack.c.l.b16 %v5160
    %v6422 = vunpack.c.h.b16 %v5160
    %v6423 = vunpack.c.l.b16 %v5161
    %v6424 = vunpack.c.h.b16 %v5161
    %v6425 = vunpack.c.l.b16 %v5162
    %v6426 = vunpack.c.h.b16 %v5162
    %v6427 = vunpack.c.l.b16 %v5163
    %v6428 = vunpack.c.h.b16 %v5163
    %v6429 = vunpack.c.l.b16 %v5164
    %v6430 = vunpack.c.h.b16 %v5164
    %v6431 = vunpack.c.l.b16 %v5165
    %v6432 = vunpack.c.h.b16 %v5165
    %v6433 = vunpack.c.l.b16 %v5166
    %v6434 = vunpack.c.h.b16 %v5166
    %v6435 = vunpack.c.l.b16 %v5167
    %v6436 = vunpack.c.h.b16 %v5167
    %v6437 = vunpack.c.l.b16 %v5168
    %v6438 = vunpack.c.h.b16 %v5168
    %v6439 = vunpack.c.l.b16 %v5169
    %v6440 = vunpack.c.h.b16 %v5169
    %v6441 = vunpack.c.l.b16 %v5170
    %v6442 = vunpack.c.h.b16 %v5170
    %v6443 = vunpack.c.l.b16 %v5171
    %v6444 = vunpack.c.h.b16 %v5171
    %v6445 = vunpack.c.l.b16 %v5172
    %v6446 = vunpack.c.h.b16 %v5172
    %v6447 = vunpack.c.l.b16 %v5173
    %v6448 = vunpack.c.h.b16 %v5173
    %v6449 = vunpack.c.l.b16 %v5174
    %v6450 = vunpack.c.h.b16 %v5174
    %v6451 = vunpack.c.l.b16 %v5175
    %v6452 = vunpack.c.h.b16 %v5175
    %v6453 = vunpack.c.l.b16 %v5176
    %v6454 = vunpack.c.h.b16 %v5176
    %v6455 = vunpack.c.l.b16 %v5177
    %v6456 = vunpack.c.h.b16 %v5177
    %v6457 = vunpack.c.l.b16 %v5178
    %v6458 = vunpack.c.h.b16 %v5178
    %v6459 = vunpack.c.l.b16 %v5179
    %v6460 = vunpack.c.h.b16 %v5179
    %v6461 = vunpack.c.l.b16 %v5180
    %v6462 = vunpack.c.h.b16 %v5180
    %v6463 = vunpack.c.l.b16 %v5181
    %v6464 = vunpack.c.h.b16 %v5181
    %v6465 = vunpack.c.l.b16 %v5182
    %v6466 = vunpack.c.h.b16 %v5182
    %v6467 = vunpack.c.l.b16 %v5183
    %v6468 = vunpack.c.h.b16 %v5183
    %v6469 = vunpack.c.l.b16 %v5184
    %v6470 = vunpack.c.h.b16 %v5184
    %v6471 = vunpack.c.l.b16 %v5185
    %v6472 = vunpack.c.h.b16 %v5185
    %v6473 = vunpack.c.l.b16 %v5186
    %v6474 = vunpack.c.h.b16 %v5186
    %v6475 = vunpack.c.l.b16 %v5187
    %v6476 = vunpack.c.h.b16 %v5187
    %v6477 = vunpack.c.l.b16 %v5188
    %v6478 = vunpack.c.h.b16 %v5188
    %v6479 = vunpack.c.l.b16 %v5189
    %v6480 = vunpack.c.h.b16 %v5189
    %v6481 = vunpack.c.l.b16 %v5190
    %v6482 = vunpack.c.h.b16 %v5190
    %v6483 = vunpack.c.l.b16 %v5191
    %v6484 = vunpack.c.h.b16 %v5191
    %v6485 = vunpack.c.l.b16 %v5192
    %v6486 = vunpack.c.h.b16 %v5192
    %v6487 = vunpack.c.l.b16 %v5193
    %v6488 = vunpack.c.h.b16 %v5193
    %v6489 = vunpack.c.l.b16 %v5194
    %v6490 = vunpack.c.h.b16 %v5194
    %v6491 = vunpack.c.l.b16 %v5195
    %v6492 = vunpack.c.h.b16 %v5195
    %v6493 = vunpack.c.l.b16 %v5196
    %v6494 = vunpack.c.h.b16 %v5196
    %v6495 = vunpack.c.l.b16 %v5197
    %v6496 = vunpack.c.h.b16 %v5197
    %v6497 = vunpack.c.l.b16 %v5198
    %v6498 = vunpack.c.h.b16 %v5198
    %v6499 = vunpack.c.l.b16 %v5199
    %v6500 = vunpack.c.h.b16 %v5199
    %v6501 = vunpack.c.l.b16 %v5200
    %v6502 = vunpack.c.h.b16 %v5200
    %v6503 = vunpack.c.l.b16 %v5201
    %v6504 = vunpack.c.h.b16 %v5201
    %v6505 = vunpack.c.l.b16 %v5202
    %v6506 = vunpack.c.h.b16 %v5202
    %v6507 = vunpack.c.l.b16 %v5203
    %v6508 = vunpack.c.h.b16 %v5203
    %v6509 = vunpack.c.l.b16 %v5204
    %v6510 = vunpack.c.h.b16 %v5204
    %v6511 = vunpack.c.l.b16 %v5205
    %v6512 = vunpack.c.h.b16 %v5205
    %v6513 = vunpack.c.l.b16 %v5206
    %v6514 = vunpack.c.h.b16 %v5206
    %v6515 = vunpack.c.l.b16 %v5207
    %v6516 = vunpack.c.h.b16 %v5207
    %v6517 = vunpack.c.l.b16 %v5208
    %v6518 = vunpack.c.h.b16 %v5208
    %v6519 = vunpack.c.l.b16 %v5209
    %v6520 = vunpack.c.h.b16 %v5209
    %v6521 = vunpack.c.l.b16 %v5210
    %v6522 = vunpack.c.h.b16 %v5210
    %v6523 = vunpack.c.l.b16 %v5211
    %v6524 = vunpack.c.h.b16 %v5211
    %v6525 = vunpack.c.l.b16 %v5212
    %v6526 = vunpack.c.h.b16 %v5212
    %v6527 = vunpack.c.l.b16 %v5213
    %v6528 = vunpack.c.h.b16 %v5213
    %v6529 = vunpack.c.l.b16 %v5214
    %v6530 = vunpack.c.h.b16 %v5214
    %v6531 = vunpack.c.l.b16 %v5215
    %v6532 = vunpack.c.h.b16 %v5215
    %v6533 = vunpack.c.l.b16 %v5216
    %v6534 = vunpack.c.h.b16 %v5216
    %v6535 = vunpack.c.l.b16 %v5217
    %v6536 = vunpack.c.h.b16 %v5217
    %v6537 = vunpack.c.l.b16 %v5218
    %v6538 = vunpack.c.h.b16 %v5218
    %v6539 = vunpack.c.l.b16 %v5219
    %v6540 = vunpack.c.h.b16 %v5219
    %v6541 = vunpack.c.l.b16 %v5220
    %v6542 = vunpack.c.h.b16 %v5220
    %v6543 = vunpack.c.l.b16 %v5221
    %v6544 = vunpack.c.h.b16 %v5221
    %v6545 = vunpack.c.l.b16 %v5222
    %v6546 = vunpack.c.h.b16 %v5222
    %v6547 = vunpack.c.l.b16 %v5223
    %v6548 = vunpack.c.h.b16 %v5223
    %v6549 = vunpack.c.l.b16 %v5224
    %v6550 = vunpack.c.h.b16 %v5224
    %v6551 = vunpack.c.l.b16 %v5225
    %v6552 = vunpack.c.h.b16 %v5225
    %v6553 = vunpack.c.l.b16 %v5226
    %v6554 = vunpack.c.h.b16 %v5226
    %v6555 = vunpack.c.l.b16 %v5227
    %v6556 = vunpack.c.h.b16 %v5227
    %v6557 = vunpack.c.l.b16 %v5228
    %v6558 = vunpack.c.h.b16 %v5228
    %v6559 = vunpack.c.l.b16 %v5229
    %v6560 = vunpack.c.h.b16 %v5229
    %v6561 = vunpack.c.l.b16 %v5230
    %v6562 = vunpack.c.h.b16 %v5230
    %v6563 = vunpack.c.l.b16 %v5231
    %v6564 = vunpack.c.h.b16 %v5231
    %v6565 = vunpack.c.l.b16 %v5232
    %v6566 = vunpack.c.h.b16 %v5232
    %v6567 = vunpack.c.l.b16 %v5233
    %v6568 = vunpack.c.h.b16 %v5233
    %v6569 = vunpack.c.l.b16 %v5234
    %v6570 = vunpack.c.h.b16 %v5234
    %v6571 = vunpack.c.l.b16 %v5235
    %v6572 = vunpack.c.h.b16 %v5235
    %v6573 = vunpack.c.l.b16 %v5236
    %v6574 = vunpack.c.h.b16 %v5236
    %v6575 = vunpack.c.l.b16 %v5237
    %v6576 = vunpack.c.h.b16 %v5237
    %v6577 = vunpack.c.l.b16 %v5238
    %v6578 = vunpack.c.h.b16 %v5238
    %v6579 = vunpack.c.l.b16 %v5239
    %v6580 = vunpack.c.h.b16 %v5239
    %v6581 = vunpack.c.l.b16 %v5240
    %v6582 = vunpack.c.h.b16 %v5240
    %v6583 = vunpack.c.l.b16 %v5241
    %v6584 = vunpack.c.h.b16 %v5241
    %v6585 = vunpack.c.l.b16 %v5242
    %v6586 = vunpack.c.h.b16 %v5242
    %v6587 = vunpack.c.l.b16 %v5243
    %v6588 = vunpack.c.h.b16 %v5243
    %v6589 = vunpack.c.l.b16 %v5244
    %v6590 = vunpack.c.h.b16 %v5244
    %v6591 = vunpack.c.l.b16 %v5245
    %v6592 = vunpack.c.h.b16 %v5245
    %v6593 = vunpack.c.l.b16 %v5246
    %v6594 = vunpack.c.h.b16 %v5246
    %v6595 = vunpack.c.l.b16 %v5247
    %v6596 = vunpack.c.h.b16 %v5247
    %v6597 = vunpack.c.l.b16 %v5248
    %v6598 = vunpack.c.h.b16 %v5248
    %v6599 = vunpack.c.l.b16 %v5249
    %v6600 = vunpack.c.h.b16 %v5249
    %v6601 = vunpack.c.l.b16 %v5250
    %v6602 = vunpack.c.h.b16 %v5250
    %v6603 = vunpack.c.l.b16 %v5251
    %v6604 = vunpack.c.h.b16 %v5251
    %v6605 = vunpack.c.l.b16 %v5252
    %v6606 = vunpack.c.h.b16 %v5252
    %v6607 = vunpack.c.l.b16 %v5253
    %v6608 = vunpack.c.h.b16 %v5253
    %v6609 = vunpack.c.l.b16 %v5254
    %v6610 = vunpack.c.h.b16 %v5254
    %v6611 = vpack.c.b16 %v5717, %v5715
    %v6612 = vpack.c.b16 %v5718, %v5716
    %v6613 = vpack.c.b16 %v5721, %v5719
    %v6614 = vpack.c.b16 %v5722, %v5720
    %v6615 = vpack.c.b16 %v5725, %v5723
    %v6616 = vpack.c.b16 %v5726, %v5724
    %v6617 = vpack.c.b16 %v5729, %v5727
    %v6618 = vpack.c.b16 %v5730, %v5728
    %v6619 = vpack.c.b16 %v5733, %v5731
    %v6620 = vpack.c.b16 %v5734, %v5732
    %v6621 = vpack.c.b16 %v5737, %v5735
    %v6622 = vpack.c.b16 %v5738, %v5736
    %v6623 = vpack.c.b16 %v5741, %v5739
    %v6624 = vpack.c.b16 %v5742, %v5740
    %v6625 = vpack.c.b16 %v5745, %v5743
    %v6626 = vpack.c.b16 %v5746, %v5744
    %v6627 = vpack.c.b16 %v5749, %v5747
    %v6628 = vpack.c.b16 %v5750, %v5748
    %v6629 = vpack.c.b16 %v5753, %v5751
    %v6630 = vpack.c.b16 %v5754, %v5752
    %v6631 = vpack.c.b16 %v5757, %v5755
    %v6632 = vpack.c.b16 %v5758, %v5756
    %v6633 = vpack.c.b16 %v5761, %v5759
    %v6634 = vpack.c.b16 %v5762, %v5760
    %v6635 = vpack.c.b16 %v5765, %v5763
    %v6636 = vpack.c.b16 %v5766, %v5764
    %v6637 = vpack.c.b16 %v5769, %v5767
    %v6638 = vpack.c.b16 %v5770, %v5768
    %v6639 = vpack.c.b16 %v5773, %v5771
    %v6640 = vpack.c.b16 %v5774, %v5772
    %v6641 = vpack.c.b16 %v5777, %v5775
    %v6642 = vpack.c.b16 %v5778, %v5776
    %v6643 = vpack.c.b16 %v5781, %v5779
    %v6644 = vpack.c.b16 %v5782, %v5780
    %v6645 = vpack.c.b16 %v5785, %v5783
    %v6646 = vpack.c.b16 %v5786, %v5784
    %v6647 = vpack.c.b16 %v5789, %v5787
    %v6648 = vpack.c.b16 %v5790, %v5788
    %v6649 = vpack.c.b16 %v5793, %v5791
    %v6650 = vpack.c.b16 %v5794, %v5792
    %v6651 = vpack.c.b16 %v5797, %v5795
    %v6652 = vpack.c.b16 %v5798, %v5796
    %v6653 = vpack.c.b16 %v5801, %v5799
    %v6654 = vpack.c.b16 %v5802, %v5800
    %v6655 = vpack.c.b16 %v5805, %v5803
    %v6656 = vpack.c.b16 %v5806, %v5804
    %v6657 = vpack.c.b16 %v5809, %v5807
    %v6658 = vpack.c.b16 %v5810, %v5808
    %v6659 = vpack.c.b16 %v5813, %v5811
    %v6660 = vpack.c.b16 %v5814, %v5812
    %v6661 = vpack.c.b16 %v5817, %v5815
    %v6662 = vpack.c.b16 %v5818, %v5816
    %v6663 = vpack.c.b16 %v5821, %v5819
    %v6664 = vpack.c.b16 %v5822, %v5820
    %v6665 = vpack.c.b16 %v5825, %v5823
    %v6666 = vpack.c.b16 %v5826, %v5824
    %v6667 = vpack.c.b16 %v5829, %v5827
    %v6668 = vpack.c.b16 %v5830, %v5828
    %v6669 = vpack.c.b16 %v5833, %v5831
    %v6670 = vpack.c.b16 %v5834, %v5832
    %v6671 = vpack.c.b16 %v5837, %v5835
    %v6672 = vpack.c.b16 %v5838, %v5836
    %v6673 = vpack.c.b16 %v5841, %v5839
    %v6674 = vpack.c.b16 %v5842, %v5840
    %v6675 = vpack.c.b16 %v5845, %v5843
    %v6676 = vpack.c.b16 %v5846, %v5844
    %v6677 = vpack.c.b16 %v5849, %v5847
    %v6678 = vpack.c.b16 %v5850, %v5848
    %v6679 = vpack.c.b16 %v5853, %v5851
    %v6680 = vpack.c.b16 %v5854, %v5852
    %v6681 = vpack.c.b16 %v5857, %v5855
    %v6682 = vpack.c.b16 %v5858, %v5856
    %v6683 = vpack.c.b16 %v5861, %v5859
    %v6684 = vpack.c.b16 %v5862, %v5860
    %v6685 = vpack.c.b16 %v5865, %v5863
    %v6686 = vpack.c.b16 %v5866, %v5864
    %v6687 = vpack.c.b16 %v5869, %v5867
    %v6688 = vpack.c.b16 %v5870, %v5868
    %v6689 = vpack.c.b16 %v5873, %v5871
    %v6690 = vpack.c.b16 %v5874, %v5872
    %v6691 = vpack.c.b16 %v5877, %v5875
    %v6692 = vpack.c.b16 %v5878, %v5876
    %v6693 = vpack.c.b16 %v5881, %v5879
    %v6694 = vpack.c.b16 %v5882, %v5880
    %v6695 = vpack.c.b16 %v5885, %v5883
    %v6696 = vpack.c.b16 %v5886, %v5884
    %v6697 = vpack.c.b16 %v5889, %v5887
    %v6698 = vpack.c.b16 %v5890, %v5888
    %v6699 = vpack.c.b16 %v5893, %v5891
    %v6700 = vpack.c.b16 %v5894, %v5892
    %v6701 = vpack.c.b16 %v5897, %v5895
    %v6702 = vpack.c.b16 %v5898, %v5896
    %v6703 = vpack.c.b16 %v5901, %v5899
    %v6704 = vpack.c.b16 %v5902, %v5900
    %v6705 = vpack.c.b16 %v5905, %v5903
    %v6706 = vpack.c.b16 %v5906, %v5904
    %v6707 = vpack.c.b16 %v5909, %v5907
    %v6708 = vpack.c.b16 %v5910, %v5908
    %v6709 = vpack.c.b16 %v5913, %v5911
    %v6710 = vpack.c.b16 %v5914, %v5912
    %v6711 = vpack.c.b16 %v5917, %v5915
    %v6712 = vpack.c.b16 %v5918, %v5916
    %v6713 = vpack.c.b16 %v5921, %v5919
    %v6714 = vpack.c.b16 %v5922, %v5920
    %v6715 = vpack.c.b16 %v5925, %v5923
    %v6716 = vpack.c.b16 %v5926, %v5924
    %v6717 = vpack.c.b16 %v5929, %v5927
    %v6718 = vpack.c.b16 %v5930, %v5928
    %v6719 = vpack.c.b16 %v5933, %v5931
    %v6720 = vpack.c.b16 %v5934, %v5932
    %v6721 = vpack.c.b16 %v5937, %v5935
    %v6722 = vpack.c.b16 %v5938, %v5936
    %v6723 = vpack.c.b16 %v5941, %v5939
    %v6724 = vpack.c.b16 %v5942, %v5940
    %v6725 = vpack.c.b16 %v5945, %v5943
    %v6726 = vpack.c.b16 %v5946, %v5944
    %v6727 = vpack.c.b16 %v5949, %v5947
    %v6728 = vpack.c.b16 %v5950, %v5948
    %v6729 = vpack.c.b16 %v5953, %v5951
    %v6730 = vpack.c.b16 %v5954, %v5952
    %v6731 = vpack.c.b16 %v5957, %v5955
    %v6732 = vpack.c.b16 %v5958, %v5956
    %v6733 = vpack.c.b16 %v5961, %v5959
    %v6734 = vpack.c.b16 %v5962, %v5960
    %v6735 = vpack.c.b16 %v5965, %v5963
    %v6736 = vpack.c.b16 %v5966, %v5964
    %v6737 = vpack.c.b16 %v5969, %v5967
    %v6738 = vpack.c.b16 %v5970, %v5968
    %v6739 = vpack.c.b16 %v5973, %v5971
    %v6740 = vpack.c.b16 %v5974, %v5972
    %v6741 = vpack.c.b16 %v5977, %v5975
    %v6742 = vpack.c.b16 %v5978, %v5976
    %v6743 = vpack.c.b16 %v5981, %v5979
    %v6744 = vpack.c.b16 %v5982, %v5980
    %v6745 = vpack.c.b16 %v5985, %v5983
    %v6746 = vpack.c.b16 %v5986, %v5984
    %v6747 = vpack.c.b16 %v5989, %v5987
    %v6748 = vpack.c.b16 %v5990, %v5988
    %v6749 = vpack.c.b16 %v5993, %v5991
    %v6750 = vpack.c.b16 %v5994, %v5992
    %v6751 = vpack.c.b16 %v5997, %v5995
    %v6752 = vpack.c.b16 %v5998, %v5996
    %v6753 = vpack.c.b16 %v6001, %v5999
    %v6754 = vpack.c.b16 %v6002, %v6000
    %v6755 = vpack.c.b16 %v6005, %v6003
    %v6756 = vpack.c.b16 %v6006, %v6004
    %v6757 = vpack.c.b16 %v6009, %v6007
    %v6758 = vpack.c.b16 %v6010, %v6008
    %v6759 = vpack.c.b16 %v6013, %v6011
    %v6760 = vpack.c.b16 %v6014, %v6012
    %v6761 = vpack.c.b16 %v6017, %v6015
    %v6762 = vpack.c.b16 %v6018, %v6016
    %v6763 = vpack.c.b16 %v6021, %v6019
    %v6764 = vpack.c.b16 %v6022, %v6020
    %v6765 = vpack.c.b16 %v6025, %v6023
    %v6766 = vpack.c.b16 %v6026, %v6024
    %v6767 = vpack.c.b16 %v6029, %v6027
    %v6768 = vpack.c.b16 %v6030, %v6028
    %v6769 = vpack.c.b16 %v6033, %v6031
    %v6770 = vpack.c.b16 %v6034, %v6032
    %v6771 = vpack.c.b16 %v6037, %v6035
    %v6772 = vpack.c.b16 %v6038, %v6036
    %v6773 = vpack.c.b16 %v6041, %v6039
    %v6774 = vpack.c.b16 %v6042, %v6040
    %v6775 = vpack.c.b16 %v6045, %v6043
    %v6776 = vpack.c.b16 %v6046, %v6044
    %v6777 = vpack.c.b16 %v6049, %v6047
    %v6778 = vpack.c.b16 %v6050, %v6048
    %v6779 = vpack.c.b16 %v6053, %v6051
    %v6780 = vpack.c.b16 %v6054, %v6052
    %v6781 = vpack.c.b16 %v6057, %v6055
    %v6782 = vpack.c.b16 %v6058, %v6056
    %v6783 = vpack.c.b16 %v6061, %v6059
    %v6784 = vpack.c.b16 %v6062, %v6060
    %v6785 = vpack.c.b16 %v6065, %v6063
    %v6786 = vpack.c.b16 %v6066, %v6064
    %v6787 = vpack.c.b16 %v6069, %v6067
    %v6788 = vpack.c.b16 %v6070, %v6068
    %v6789 = vpack.c.b16 %v6073, %v6071
    %v6790 = vpack.c.b16 %v6074, %v6072
    %v6791 = vpack.c.b16 %v6077, %v6075
    %v6792 = vpack.c.b16 %v6078, %v6076
    %v6793 = vpack.c.b16 %v6081, %v6079
    %v6794 = vpack.c.b16 %v6082, %v6080
    %v6795 = vpack.c.b16 %v6085, %v6083
    %v6796 = vpack.c.b16 %v6086, %v6084
    %v6797 = vpack.c.b16 %v6089, %v6087
    %v6798 = vpack.c.b16 %v6090, %v6088
    %v6799 = vpack.c.b16 %v6093, %v6091
    %v6800 = vpack.c.b16 %v6094, %v6092
    %v6801 = vpack.c.b16 %v6097, %v6095
    %v6802 = vpack.c.b16 %v6098, %v6096
    %v6803 = vpack.c.b16 %v6101, %v6099
    %v6804 = vpack.c.b16 %v6102, %v6100
    %v6805 = vpack.c.b16 %v6105, %v6103
    %v6806 = vpack.c.b16 %v6106, %v6104
    %v6807 = vpack.c.b16 %v6109, %v6107
    %v6808 = vpack.c.b16 %v6110, %v6108
    %v6809 = vpack.c.b16 %v6113, %v6111
    %v6810 = vpack.c.b16 %v6114, %v6112
    %v6811 = vpack.c.b16 %v6117, %v6115
    %v6812 = vpack.c.b16 %v6118, %v6116
    %v6813 = vpack.c.b16 %v6121, %v6119
    %v6814 = vpack.c.b16 %v6122, %v6120
    %v6815 = vpack.c.b16 %v6125, %v6123
    %v6816 = vpack.c.b16 %v6126, %v6124
    %v6817 = vpack.c.b16 %v6129, %v6127
    %v6818 = vpack.c.b16 %v6130, %v6128
    %v6819 = vpack.c.b16 %v6133, %v6131
    %v6820 = vpack.c.b16 %v6134, %v6132
    %v6821 = vpack.c.b16 %v6137, %v6135
    %v6822 = vpack.c.b16 %v6138, %v6136
    %v6823 = vpack.c.b16 %v6141, %v6139
    %v6824 = vpack.c.b16 %v6142, %v6140
    %v6825 = vpack.c.b16 %v6145, %v6143
    %v6826 = vpack.c.b16 %v6146, %v6144
    %v6827 = vpack.c.b16 %v6149, %v6147
    %v6828 = vpack.c.b16 %v6150, %v6148
    %v6829 = vpack.c.b16 %v6153, %v6151
    %v6830 = vpack.c.b16 %v6154, %v6152
    %v6831 = vpack.c.b16 %v6157, %v6155
    %v6832 = vpack.c.b16 %v6158, %v6156
    %v6833 = vpack.c.b16 %v6161, %v6159
    %v6834 = vpack.c.b16 %v6162, %v6160
    %v6835 = vpack.c.b16 %v6165, %v6163
    %v6836 = vpack.c.b16 %v6166, %v6164
    %v6837 = vpack.c.b16 %v6169, %v6167
    %v6838 = vpack.c.b16 %v6170, %v6168
    %v6839 = vpack.c.b16 %v6173, %v6171
    %v6840 = vpack.c.b16 %v6174, %v6172
    %v6841 = vpack.c.b16 %v6177, %v6175
    %v6842 = vpack.c.b16 %v6178, %v6176
    %v6843 = vpack.c.b16 %v6181, %v6179
    %v6844 = vpack.c.b16 %v6182, %v6180
    %v6845 = vpack.c.b16 %v6185, %v6183
    %v6846 = vpack.c.b16 %v6186, %v6184
    %v6847 = vpack.c.b16 %v6189, %v6187
    %v6848 = vpack.c.b16 %v6190, %v6188
    %v6849 = vpack.c.b16 %v6193, %v6191
    %v6850 = vpack.c.b16 %v6194, %v6192
    %v6851 = vpack.c.b16 %v6197, %v6195
    %v6852 = vpack.c.b16 %v6198, %v6196
    %v6853 = vpack.c.b16 %v6201, %v6199
    %v6854 = vpack.c.b16 %v6202, %v6200
    %v6855 = vpack.c.b16 %v6205, %v6203
    %v6856 = vpack.c.b16 %v6206, %v6204
    %v6857 = vpack.c.b16 %v6209, %v6207
    %v6858 = vpack.c.b16 %v6210, %v6208
    %v6859 = vpack.c.b16 %v6213, %v6211
    %v6860 = vpack.c.b16 %v6214, %v6212
    %v6861 = vpack.c.b16 %v6217, %v6215
    %v6862 = vpack.c.b16 %v6218, %v6216
    %v6863 = vpack.c.b16 %v6221, %v6219
    %v6864 = vpack.c.b16 %v6222, %v6220
    %v6865 = vpack.c.b16 %v6225, %v6223
    %v6866 = vpack.c.b16 %v6226, %v6224
    %v6867 = vpack.c.b16 %v6229, %v6227
    %v6868 = vpack.c.b16 %v6230, %v6228
    %v6869 = vpack.c.b16 %v6233, %v6231
    %v6870 = vpack.c.b16 %v6234, %v6232
    %v6871 = vpack.c.b16 %v6237, %v6235
    %v6872 = vpack.c.b16 %v6238, %v6236
    %v6873 = vpack.c.b16 %v6241, %v6239
    %v6874 = vpack.c.b16 %v6242, %v6240
    %v6875 = vpack.c.b16 %v6245, %v6243
    %v6876 = vpack.c.b16 %v6246, %v6244
    %v6877 = vpack.c.b16 %v6249, %v6247
    %v6878 = vpack.c.b16 %v6250, %v6248
    %v6879 = vpack.c.b16 %v6253, %v6251
    %v6880 = vpack.c.b16 %v6254, %v6252
    %v6881 = vpack.c.b16 %v6257, %v6255
    %v6882 = vpack.c.b16 %v6258, %v6256
    %v6883 = vpack.c.b16 %v6261, %v6259
    %v6884 = vpack.c.b16 %v6262, %v6260
    %v6885 = vpack.c.b16 %v6265, %v6263
    %v6886 = vpack.c.b16 %v6266, %v6264
    %v6887 = vpack.c.b16 %v6269, %v6267
    %v6888 = vpack.c.b16 %v6270, %v6268
    %v6889 = vpack.c.b16 %v6273, %v6271
    %v6890 = vpack.c.b16 %v6274, %v6272
    %v6891 = vpack.c.b16 %v6277, %v6275
    %v6892 = vpack.c.b16 %v6278, %v6276
    %v6893 = vpack.c.b16 %v6281, %v6279
    %v6894 = vpack.c.b16 %v6282, %v6280
    %v6895 = vpack.c.b16 %v6285, %v6283
    %v6896 = vpack.c.b16 %v6286, %v6284
    %v6897 = vpack.c.b16 %v6289, %v6287
    %v6898 = vpack.c.b16 %v6290, %v6288
    %v6899 = vpack.c.b16 %v6293, %v6291
    %v6900 = vpack.c.b16 %v6294, %v6292
    %v6901 = vpack.c.b16 %v6297, %v6295
    %v6902 = vpack.c.b16 %v6298, %v6296
    %v6903 = vpack.c.b16 %v6301, %v6299
    %v6904 = vpack.c.b16 %v6302, %v6300
    %v6905 = vpack.c.b16 %v6305, %v6303
    %v6906 = vpack.c.b16 %v6306, %v6304
    %v6907 = vpack.c.b16 %v6309, %v6307
    %v6908 = vpack.c.b16 %v6310, %v6308
    %v6909 = vpack.c.b16 %v6313, %v6311
    %v6910 = vpack.c.b16 %v6314, %v6312
    %v6911 = vpack.c.b16 %v6317, %v6315
    %v6912 = vpack.c.b16 %v6318, %v6316
    %v6913 = vpack.c.b16 %v6321, %v6319
    %v6914 = vpack.c.b16 %v6322, %v6320
    %v6915 = vpack.c.b16 %v6325, %v6323
    %v6916 = vpack.c.b16 %v6326, %v6324
    %v6917 = vpack.c.b16 %v6329, %v6327
    %v6918 = vpack.c.b16 %v6330, %v6328
    %v6919 = vpack.c.b16 %v6333, %v6331
    %v6920 = vpack.c.b16 %v6334, %v6332
    %v6921 = vpack.c.b16 %v6337, %v6335
    %v6922 = vpack.c.b16 %v6338, %v6336
    %v6923 = vpack.c.b16 %v6341, %v6339
    %v6924 = vpack.c.b16 %v6342, %v6340
    %v6925 = vpack.c.b16 %v6345, %v6343
    %v6926 = vpack.c.b16 %v6346, %v6344
    %v6927 = vpack.c.b16 %v6349, %v6347
    %v6928 = vpack.c.b16 %v6350, %v6348
    %v6929 = vpack.c.b16 %v6353, %v6351
    %v6930 = vpack.c.b16 %v6354, %v6352
    %v6931 = vpack.c.b16 %v6357, %v6355
    %v6932 = vpack.c.b16 %v6358, %v6356
    %v6933 = vpack.c.b16 %v6361, %v6359
    %v6934 = vpack.c.b16 %v6362, %v6360
    %v6935 = vpack.c.b16 %v6365, %v6363
    %v6936 = vpack.c.b16 %v6366, %v6364
    %v6937 = vpack.c.b16 %v6369, %v6367
    %v6938 = vpack.c.b16 %v6370, %v6368
    %v6939 = vpack.c.b16 %v6373, %v6371
    %v6940 = vpack.c.b16 %v6374, %v6372
    %v6941 = vpack.c.b16 %v6377, %v6375
    %v6942 = vpack.c.b16 %v6378, %v6376
    %v6943 = vpack.c.b16 %v6381, %v6379
    %v6944 = vpack.c.b16 %v6382, %v6380
    %v6945 = vpack.c.b16 %v6385, %v6383
    %v6946 = vpack.c.b16 %v6386, %v6384
    %v6947 = vpack.c.b16 %v6389, %v6387
    %v6948 = vpack.c.b16 %v6390, %v6388
    %v6949 = vpack.c.b16 %v6393, %v6391
    %v6950 = vpack.c.b16 %v6394, %v6392
    %v6951 = vpack.c.b16 %v6397, %v6395
    %v6952 = vpack.c.b16 %v6398, %v6396
    %v6953 = vpack.c.b16 %v6401, %v6399
    %v6954 = vpack.c.b16 %v6402, %v6400
    %v6955 = vpack.c.b16 %v6405, %v6403
    %v6956 = vpack.c.b16 %v6406, %v6404
    %v6957 = vpack.c.b16 %v6409, %v6407
    %v6958 = vpack.c.b16 %v6410, %v6408
    %v6959 = vpack.c.b16 %v6413, %v6411
    %v6960 = vpack.c.b16 %v6414, %v6412
    %v6961 = vpack.c.b16 %v6417, %v6415
    %v6962 = vpack.c.b16 %v6418, %v6416
    %v6963 = vpack.c.b16 %v6421, %v6419
    %v6964 = vpack.c.b16 %v6422, %v6420
    %v6965 = vpack.c.b16 %v6425, %v6423
    %v6966 = vpack.c.b16 %v6426, %v6424
    %v6967 = vpack.c.b16 %v6429, %v6427
    %v6968 = vpack.c.b16 %v6430, %v6428
    %v6969 = vpack.c.b16 %v6433, %v6431
    %v6970 = vpack.c.b16 %v6434, %v6432
    %v6971 = vpack.c.b16 %v6437, %v6435
    %v6972 = vpack.c.b16 %v6438, %v6436
    %v6973 = vpack.c.b16 %v6441, %v6439
    %v6974 = vpack.c.b16 %v6442, %v6440
    %v6975 = vpack.c.b16 %v6445, %v6443
    %v6976 = vpack.c.b16 %v6446, %v6444
    %v6977 = vpack.c.b16 %v6449, %v6447
    %v6978 = vpack.c.b16 %v6450, %v6448
    %v6979 = vpack.c.b16 %v6453, %v6451
    %v6980 = vpack.c.b16 %v6454, %v6452
    %v6981 = vpack.c.b16 %v6457, %v6455
    %v6982 = vpack.c.b16 %v6458, %v6456
    %v6983 = vpack.c.b16 %v6461, %v6459
    %v6984 = vpack.c.b16 %v6462, %v6460
    %v6985 = vpack.c.b16 %v6465, %v6463
    %v6986 = vpack.c.b16 %v6466, %v6464
    %v6987 = vpack.c.b16 %v6469, %v6467
    %v6988 = vpack.c.b16 %v6470, %v6468
    %v6989 = vpack.c.b16 %v6473, %v6471
    %v6990 = vpack.c.b16 %v6474, %v6472
    %v6991 = vpack.c.b16 %v6477, %v6475
    %v6992 = vpack.c.b16 %v6478, %v6476
    %v6993 = vpack.c.b16 %v6481, %v6479
    %v6994 = vpack.c.b16 %v6482, %v6480
    %v6995 = vpack.c.b16 %v6485, %v6483
    %v6996 = vpack.c.b16 %v6486, %v6484
    %v6997 = vpack.c.b16 %v6489, %v6487
    %v6998 = vpack.c.b16 %v6490, %v6488
    %v6999 = vpack.c.b16 %v6493, %v6491
    %v7000 = vpack.c.b16 %v6494, %v6492
    %v7001 = vpack.c.b16 %v6497, %v6495
    %v7002 = vpack.c.b16 %v6498, %v6496
    %v7003 = vpack.c.b16 %v6501, %v6499
    %v7004 = vpack.c.b16 %v6502, %v6500
    %v7005 = vpack.c.b16 %v6505, %v6503
    %v7006 = vpack.c.b16 %v6506, %v6504
    %v7007 = vpack.c.b16 %v6509, %v6507
    %v7008 = vpack.c.b16 %v6510, %v6508
    %v7009 = vpack.c.b16 %v6513, %v6511
    %v7010 = vpack.c.b16 %v6514, %v6512
    %v7011 = vpack.c.b16 %v6517, %v6515
    %v7012 = vpack.c.b16 %v6518, %v6516
    %v7013 = vpack.c.b16 %v6521, %v6519
    %v7014 = vpack.c.b16 %v6522, %v6520
    %v7015 = vpack.c.b16 %v6525, %v6523
    %v7016 = vpack.c.b16 %v6526, %v6524
    %v7017 = vpack.c.b16 %v6529, %v6527
    %v7018 = vpack.c.b16 %v6530, %v6528
    %v7019 = vpack.c.b16 %v6533, %v6531
    %v7020 = vpack.c.b16 %v6534, %v6532
    %v7021 = vpack.c.b16 %v6537, %v6535
    %v7022 = vpack.c.b16 %v6538, %v6536
    %v7023 = vpack.c.b16 %v6541, %v6539
    %v7024 = vpack.c.b16 %v6542, %v6540
    %v7025 = vpack.c.b16 %v6545, %v6543
    %v7026 = vpack.c.b16 %v6546, %v6544
    %v7027 = vpack.c.b16 %v6549, %v6547
    %v7028 = vpack.c.b16 %v6550, %v6548
    %v7029 = vpack.c.b16 %v6553, %v6551
    %v7030 = vpack.c.b16 %v6554, %v6552
    %v7031 = vpack.c.b16 %v6557, %v6555
    %v7032 = vpack.c.b16 %v6558, %v6556
    %v7033 = vpack.c.b16 %v6561, %v6559
    %v7034 = vpack.c.b16 %v6562, %v6560
    %v7035 = vpack.c.b16 %v6565, %v6563
    %v7036 = vpack.c.b16 %v6566, %v6564
    %v7037 = vpack.c.b16 %v6569, %v6567
    %v7038 = vpack.c.b16 %v6570, %v6568
    %v7039 = vpack.c.b16 %v6573, %v6571
    %v7040 = vpack.c.b16 %v6574, %v6572
    %v7041 = vpack.c.b16 %v6577, %v6575
    %v7042 = vpack.c.b16 %v6578, %v6576
    %v7043 = vpack.c.b16 %v6581, %v6579
    %v7044 = vpack.c.b16 %v6582, %v6580
    %v7045 = vpack.c.b16 %v6585, %v6583
    %v7046 = vpack.c.b16 %v6586, %v6584
    %v7047 = vpack.c.b16 %v6589, %v6587
    %v7048 = vpack.c.b16 %v6590, %v6588
    %v7049 = vpack.c.b16 %v6593, %v6591
    %v7050 = vpack.c.b16 %v6594, %v6592
    %v7051 = vpack.c.b16 %v6597, %v6595
    %v7052 = vpack.c.b16 %v6598, %v6596
    %v7053 = vpack.c.b16 %v6601, %v6599
    %v7054 = vpack.c.b16 %v6602, %v6600
    %v7055 = vpack.c.b16 %v6605, %v6603
    %v7056 = vpack.c.b16 %v6606, %v6604
    %v7057 = vpack.c.b16 %v6609, %v6607
    %v7058 = vpack.c.b16 %v6610, %v6608
    %7507 = vmatprep.subr.bf16.mxu0 %v6612
    %7508 = vmatpush1.bf16.msra.mxu0 %v6611
    %7509 = vmatprep.subr.bf16.mxu0 %v6614
    %7510 = vmatpush1.bf16.msra.mxu0 %v6613
    %7511 = vmatprep.subr.bf16.mxu0 %v6616
    %7512 = vmatpush1.bf16.msra.mxu0 %v6615
    %7513 = vmatprep.subr.bf16.mxu0 %v6618
    %7514 = vmatpush1.bf16.msra.mxu0 %v6617
    %7515 = vmatprep.subr.bf16.mxu0 %v6620
    %7516 = vmatpush1.bf16.msra.mxu0 %v6619
    %7517 = vmatprep.subr.bf16.mxu0 %v6622
    %7518 = vmatpush1.bf16.msra.mxu0 %v6621
    %7519 = vmatprep.subr.bf16.mxu0 %v6624
    %7520 = vmatpush1.bf16.msra.mxu0 %v6623
    %7521 = vmatprep.subr.bf16.mxu0 %v6626
    %7522 = vmatpush1.bf16.msra.mxu0 %v6625
    %7523 = vmatprep.subr.bf16.mxu0 %v6628
    %7524 = vmatpush1.bf16.msra.mxu0 %v6627
    %7525 = vmatprep.subr.bf16.mxu0 %v6630
    %7526 = vmatpush1.bf16.msra.mxu0 %v6629
    %7527 = vmatprep.subr.bf16.mxu0 %v6632
    %7528 = vmatpush1.bf16.msra.mxu0 %v6631
    %7529 = vmatprep.subr.bf16.mxu0 %v6634
    %7530 = vmatpush1.bf16.msra.mxu0 %v6633
    %7531 = vmatprep.subr.bf16.mxu0 %v6636
    %7532 = vmatpush1.bf16.msra.mxu0 %v6635
    %7533 = vmatprep.subr.bf16.mxu0 %v6638
    %7534 = vmatpush1.bf16.msra.mxu0 %v6637
    %7535 = vmatprep.subr.bf16.mxu0 %v6640
    %7536 = vmatpush1.bf16.msra.mxu0 %v6639
    %7537 = vmatprep.subr.bf16.mxu0 %v6642
    %7538 = vmatpush1.bf16.msra.mxu0 %v6641
    %7539 = vmatprep.mubr.bf16.mxu0 %v4214
    %7540 = vmatmul.mubr.bf16.gmra.mrb[0].mxu0 %v4187
    %v7541 = vpop.f32.mrb[0].mxu0
    %v7542 = vadd.f32 %v5260, %v7541
    %v7543 = vpop.f32.mrb[0].mxu0
    %v7544 = vadd.f32 %v5264, %v7543
    %v7545 = vpop.f32.mrb[0].mxu0
    %v7546 = vpop.f32.mrb[0].mxu0
    %7547 = vdwg.mxu0
    %7548 = vmatprep.subr.bf16.mxu0 %v6644
    %7549 = vmatpush1.bf16.msra.mxu0 %v6643
    %7550 = vmatprep.subr.bf16.mxu0 %v6646
    %7551 = vmatpush1.bf16.msra.mxu0 %v6645
    %7552 = vmatprep.subr.bf16.mxu0 %v6648
    %7553 = vmatpush1.bf16.msra.mxu0 %v6647
    %7554 = vmatprep.subr.bf16.mxu0 %v6650
    %7555 = vmatpush1.bf16.msra.mxu0 %v6649
    %7556 = vmatprep.subr.bf16.mxu0 %v6652
    %7557 = vmatpush1.bf16.msra.mxu0 %v6651
    %7558 = vmatprep.subr.bf16.mxu0 %v6654
    %7559 = vmatpush1.bf16.msra.mxu0 %v6653
    %7560 = vmatprep.subr.bf16.mxu0 %v6656
    %7561 = vmatpush1.bf16.msra.mxu0 %v6655
    %7562 = vmatprep.subr.bf16.mxu0 %v6658
    %7563 = vmatpush1.bf16.msra.mxu0 %v6657
    %7564 = vmatprep.subr.bf16.mxu0 %v6660
    %7565 = vmatpush1.bf16.msra.mxu0 %v6659
    %7566 = vmatprep.subr.bf16.mxu0 %v6662
    %7567 = vmatpush1.bf16.msra.mxu0 %v6661
    %7568 = vmatprep.subr.bf16.mxu0 %v6664
    %7569 = vmatpush1.bf16.msra.mxu0 %v6663
    %7570 = vmatprep.subr.bf16.mxu0 %v6666
    %7571 = vmatpush1.bf16.msra.mxu0 %v6665
    %7572 = vmatprep.subr.bf16.mxu0 %v6668
    %7573 = vmatpush1.bf16.msra.mxu0 %v6667
    %7574 = vmatprep.subr.bf16.mxu0 %v6670
    %7575 = vmatpush1.bf16.msra.mxu0 %v6669
    %7576 = vmatprep.subr.bf16.mxu0 %v6672
    %7577 = vmatpush1.bf16.msra.mxu0 %v6671
    %7578 = vmatprep.subr.bf16.mxu0 %v6674
    %7579 = vmatpush1.bf16.msra.mxu0 %v6673
    %7580 = vmatprep.mubr.bf16.mxu0 %v4254
    %7581 = vmatmul.mubr.bf16.gmra.mrb[0].mxu0 %v4234
    %v7582 = vpop.f32.mrb[0].mxu0
    %v7583 = vadd.f32 %v7542, %v7582
    %v7584 = vpop.f32.mrb[0].mxu0
    %v7585 = vadd.f32 %v7544, %v7584
    %v7586 = vpop.f32.mrb[0].mxu0
    %v7587 = vpop.f32.mrb[0].mxu0
    %7588 = vdwg.mxu0
    %7589 = vmatprep.subr.bf16.mxu0 %v6676
    %7590 = vmatpush1.bf16.msra.mxu0 %v6675
    %7591 = vmatprep.subr.bf16.mxu0 %v6678
    %7592 = vmatpush1.bf16.msra.mxu0 %v6677
    %7593 = vmatprep.subr.bf16.mxu0 %v6680
    %7594 = vmatpush1.bf16.msra.mxu0 %v6679
    %7595 = vmatprep.subr.bf16.mxu0 %v6682
    %7596 = vmatpush1.bf16.msra.mxu0 %v6681
    %7597 = vmatprep.subr.bf16.mxu0 %v6684
    %7598 = vmatpush1.bf16.msra.mxu0 %v6683
    %7599 = vmatprep.subr.bf16.mxu0 %v6686
    %7600 = vmatpush1.bf16.msra.mxu0 %v6685
    %7601 = vmatprep.subr.bf16.mxu0 %v6688
    %7602 = vmatpush1.bf16.msra.mxu0 %v6687
    %7603 = vmatprep.subr.bf16.mxu0 %v6690
    %7604 = vmatpush1.bf16.msra.mxu0 %v6689
    %7605 = vmatprep.subr.bf16.mxu0 %v6692
    %7606 = vmatpush1.bf16.msra.mxu0 %v6691
    %7607 = vmatprep.subr.bf16.mxu0 %v6694
    %7608 = vmatpush1.bf16.msra.mxu0 %v6693
    %7609 = vmatprep.subr.bf16.mxu0 %v6696
    %7610 = vmatpush1.bf16.msra.mxu0 %v6695
    %7611 = vmatprep.subr.bf16.mxu0 %v6698
    %7612 = vmatpush1.bf16.msra.mxu0 %v6697
    %7613 = vmatprep.subr.bf16.mxu0 %v6700
    %7614 = vmatpush1.bf16.msra.mxu0 %v6699
    %7615 = vmatprep.subr.bf16.mxu0 %v6702
    %7616 = vmatpush1.bf16.msra.mxu0 %v6701
    %7617 = vmatprep.subr.bf16.mxu0 %v6704
    %7618 = vmatpush1.bf16.msra.mxu0 %v6703
    %7619 = vmatprep.subr.bf16.mxu0 %v6706
    %7620 = vmatpush1.bf16.msra.mxu0 %v6705
    %7621 = vmatprep.mubr.bf16.mxu0 %v4306
    %7622 = vmatmul.mubr.bf16.gmra.mrb[0].mxu0 %v4280
    %v7623 = vpop.f32.mrb[0].mxu0
    %v7624 = vadd.f32 %v7583, %v7623
    %v7625 = vpop.f32.mrb[0].mxu0
    %v7626 = vadd.f32 %v7585, %v7625
    %v7627 = vpop.f32.mrb[0].mxu0
    %v7628 = vpop.f32.mrb[0].mxu0
    %7629 = vdwg.mxu0
    %7630 = vmatprep.subr.bf16.mxu0 %v6708
    %7631 = vmatpush1.bf16.msra.mxu0 %v6707
    %7632 = vmatprep.subr.bf16.mxu0 %v6710
    %7633 = vmatpush1.bf16.msra.mxu0 %v6709
    %7634 = vmatprep.subr.bf16.mxu0 %v6712
    %7635 = vmatpush1.bf16.msra.mxu0 %v6711
    %7636 = vmatprep.subr.bf16.mxu0 %v6714
    %7637 = vmatpush1.bf16.msra.mxu0 %v6713
    %7638 = vmatprep.subr.bf16.mxu0 %v6716
    %7639 = vmatpush1.bf16.msra.mxu0 %v6715
    %7640 = vmatprep.subr.bf16.mxu0 %v6718
    %7641 = vmatpush1.bf16.msra.mxu0 %v6717
    %7642 = vmatprep.subr.bf16.mxu0 %v6720
    %7643 = vmatpush1.bf16.msra.mxu0 %v6719
    %7644 = vmatprep.subr.bf16.mxu0 %v6722
    %7645 = vmatpush1.bf16.msra.mxu0 %v6721
    %7646 = vmatprep.subr.bf16.mxu0 %v6724
    %7647 = vmatpush1.bf16.msra.mxu0 %v6723
    %7648 = vmatprep.subr.bf16.mxu0 %v6726
    %7649 = vmatpush1.bf16.msra.mxu0 %v6725
    %7650 = vmatprep.subr.bf16.mxu0 %v6728
    %7651 = vmatpush1.bf16.msra.mxu0 %v6727
    %7652 = vmatprep.subr.bf16.mxu0 %v6730
    %7653 = vmatpush1.bf16.msra.mxu0 %v6729
    %7654 = vmatprep.subr.bf16.mxu0 %v6732
    %7655 = vmatpush1.bf16.msra.mxu0 %v6731
    %7656 = vmatprep.subr.bf16.mxu0 %v6734
    %7657 = vmatpush1.bf16.msra.mxu0 %v6733
    %7658 = vmatprep.subr.bf16.mxu0 %v6736
    %7659 = vmatpush1.bf16.msra.mxu0 %v6735
    %7660 = vmatprep.subr.bf16.mxu0 %v6738
    %7661 = vmatpush1.bf16.msra.mxu0 %v6737
    %7662 = vmatprep.mubr.bf16.mxu0 %v4346
    %7663 = vmatmul.mubr.bf16.gmra.mrb[0].mxu0 %v4326
    %v7664 = vpop.f32.mrb[0].mxu0
    %v7665 = vadd.f32 %v7624, %v7664
    %v7666 = vpop.f32.mrb[0].mxu0
    %v7667 = vadd.f32 %v7626, %v7666
    %v7668 = vpop.f32.mrb[0].mxu0
    %v7669 = vpop.f32.mrb[0].mxu0
    %7670 = vdwg.mxu0
    %7671 = vmatprep.subr.bf16.mxu0 %v6740
    %7672 = vmatpush1.bf16.msra.mxu0 %v6739
    %7673 = vmatprep.subr.bf16.mxu0 %v6742
    %7674 = vmatpush1.bf16.msra.mxu0 %v6741
    %7675 = vmatprep.subr.bf16.mxu0 %v6744
    %7676 = vmatpush1.bf16.msra.mxu0 %v6743
    %7677 = vmatprep.subr.bf16.mxu0 %v6746
    %7678 = vmatpush1.bf16.msra.mxu0 %v6745
    %7679 = vmatprep.subr.bf16.mxu0 %v6748
    %7680 = vmatpush1.bf16.msra.mxu0 %v6747
    %7681 = vmatprep.subr.bf16.mxu0 %v6750
    %7682 = vmatpush1.bf16.msra.mxu0 %v6749
    %7683 = vmatprep.subr.bf16.mxu0 %v6752
    %7684 = vmatpush1.bf16.msra.mxu0 %v6751
    %7685 = vmatprep.subr.bf16.mxu0 %v6754
    %7686 = vmatpush1.bf16.msra.mxu0 %v6753
    %7687 = vmatprep.subr.bf16.mxu0 %v6756
    %7688 = vmatpush1.bf16.msra.mxu0 %v6755
    %7689 = vmatprep.subr.bf16.mxu0 %v6758
    %7690 = vmatpush1.bf16.msra.mxu0 %v6757
    %7691 = vmatprep.subr.bf16.mxu0 %v6760
    %7692 = vmatpush1.bf16.msra.mxu0 %v6759
    %7693 = vmatprep.subr.bf16.mxu0 %v6762
    %7694 = vmatpush1.bf16.msra.mxu0 %v6761
    %7695 = vmatprep.subr.bf16.mxu0 %v6764
    %7696 = vmatpush1.bf16.msra.mxu0 %v6763
    %7697 = vmatprep.subr.bf16.mxu0 %v6766
    %7698 = vmatpush1.bf16.msra.mxu0 %v6765
    %7699 = vmatprep.subr.bf16.mxu0 %v6768
    %7700 = vmatpush1.bf16.msra.mxu0 %v6767
    %7701 = vmatprep.subr.bf16.mxu0 %v6770
    %7702 = vmatpush1.bf16.msra.mxu0 %v6769
    %7703 = vmatprep.mubr.bf16.mxu0 %v4400
    %7704 = vmatmul.mubr.bf16.gmra.mrb[0].mxu0 %v4373
    %v7705 = vpop.f32.mrb[0].mxu0
    %v7706 = vadd.f32 %v7665, %v7705
    %v7707 = vpop.f32.mrb[0].mxu0
    %v7708 = vadd.f32 %v7667, %v7707
    %v7709 = vpop.f32.mrb[0].mxu0
    %v7710 = vpop.f32.mrb[0].mxu0
    %7711 = vdwg.mxu0
    %7712 = vmatprep.subr.bf16.mxu0 %v6772
    %7713 = vmatpush1.bf16.msra.mxu0 %v6771
    %7714 = vmatprep.subr.bf16.mxu0 %v6774
    %7715 = vmatpush1.bf16.msra.mxu0 %v6773
    %7716 = vmatprep.subr.bf16.mxu0 %v6776
    %7717 = vmatpush1.bf16.msra.mxu0 %v6775
    %7718 = vmatprep.subr.bf16.mxu0 %v6778
    %7719 = vmatpush1.bf16.msra.mxu0 %v6777
    %7720 = vmatprep.subr.bf16.mxu0 %v6780
    %7721 = vmatpush1.bf16.msra.mxu0 %v6779
    %7722 = vmatprep.subr.bf16.mxu0 %v6782
    %7723 = vmatpush1.bf16.msra.mxu0 %v6781
    %7724 = vmatprep.subr.bf16.mxu0 %v6784
    %7725 = vmatpush1.bf16.msra.mxu0 %v6783
    %7726 = vmatprep.subr.bf16.mxu0 %v6786
    %7727 = vmatpush1.bf16.msra.mxu0 %v6785
    %7728 = vmatprep.subr.bf16.mxu0 %v6788
    %7729 = vmatpush1.bf16.msra.mxu0 %v6787
    %7730 = vmatprep.subr.bf16.mxu0 %v6790
    %7731 = vmatpush1.bf16.msra.mxu0 %v6789
    %7732 = vmatprep.subr.bf16.mxu0 %v6792
    %7733 = vmatpush1.bf16.msra.mxu0 %v6791
    %7734 = vmatprep.subr.bf16.mxu0 %v6794
    %7735 = vmatpush1.bf16.msra.mxu0 %v6793
    %7736 = vmatprep.subr.bf16.mxu0 %v6796
    %7737 = vmatpush1.bf16.msra.mxu0 %v6795
    %7738 = vmatprep.subr.bf16.mxu0 %v6798
    %7739 = vmatpush1.bf16.msra.mxu0 %v6797
    %7740 = vmatprep.subr.bf16.mxu0 %v6800
    %7741 = vmatpush1.bf16.msra.mxu0 %v6799
    %7742 = vmatprep.subr.bf16.mxu0 %v6802
    %7743 = vmatpush1.bf16.msra.mxu0 %v6801
    %7744 = vmatprep.mubr.bf16.mxu0 %v4440
    %7745 = vmatmul.mubr.bf16.gmra.mrb[0].mxu0 %v4420
    %v7746 = vpop.f32.mrb[0].mxu0
    %v7747 = vadd.f32 %v7706, %v7746
    %v7748 = vpop.f32.mrb[0].mxu0
    %v7749 = vadd.f32 %v7708, %v7748
    %v7750 = vpop.f32.mrb[0].mxu0
    %v7751 = vpop.f32.mrb[0].mxu0
    %7752 = vdwg.mxu0
    %7753 = vmatprep.subr.bf16.mxu0 %v6804
    %7754 = vmatpush1.bf16.msra.mxu0 %v6803
    %7755 = vmatprep.subr.bf16.mxu0 %v6806
    %7756 = vmatpush1.bf16.msra.mxu0 %v6805
    %7757 = vmatprep.subr.bf16.mxu0 %v6808
    %7758 = vmatpush1.bf16.msra.mxu0 %v6807
    %7759 = vmatprep.subr.bf16.mxu0 %v6810
    %7760 = vmatpush1.bf16.msra.mxu0 %v6809
    %7761 = vmatprep.subr.bf16.mxu0 %v6812
    %7762 = vmatpush1.bf16.msra.mxu0 %v6811
    %7763 = vmatprep.subr.bf16.mxu0 %v6814
    %7764 = vmatpush1.bf16.msra.mxu0 %v6813
    %7765 = vmatprep.subr.bf16.mxu0 %v6816
    %7766 = vmatpush1.bf16.msra.mxu0 %v6815
    %7767 = vmatprep.subr.bf16.mxu0 %v6818
    %7768 = vmatpush1.bf16.msra.mxu0 %v6817
    %7769 = vmatprep.subr.bf16.mxu0 %v6820
    %7770 = vmatpush1.bf16.msra.mxu0 %v6819
    %7771 = vmatprep.subr.bf16.mxu0 %v6822
    %7772 = vmatpush1.bf16.msra.mxu0 %v6821
    %7773 = vmatprep.subr.bf16.mxu0 %v6824
    %7774 = vmatpush1.bf16.msra.mxu0 %v6823
    %7775 = vmatprep.subr.bf16.mxu0 %v6826
    %7776 = vmatpush1.bf16.msra.mxu0 %v6825
    %7777 = vmatprep.subr.bf16.mxu0 %v6828
    %7778 = vmatpush1.bf16.msra.mxu0 %v6827
    %7779 = vmatprep.subr.bf16.mxu0 %v6830
    %7780 = vmatpush1.bf16.msra.mxu0 %v6829
    %7781 = vmatprep.subr.bf16.mxu0 %v6832
    %7782 = vmatpush1.bf16.msra.mxu0 %v6831
    %7783 = vmatprep.subr.bf16.mxu0 %v6834
    %7784 = vmatpush1.bf16.msra.mxu0 %v6833
    %7785 = vmatprep.mubr.bf16.mxu0 %v4494
    %7786 = vmatmul.mubr.bf16.gmra.mrb[0].mxu0 %v4467
    %v7787 = vpop.f32.mrb[0].mxu0
    %v7788 = vadd.f32 %v7747, %v7787
    %v7789 = vpop.f32.mrb[0].mxu0
    %v7790 = vadd.f32 %v7749, %v7789
    %v7791 = vpop.f32.mrb[0].mxu0
    %v7792 = vpop.f32.mrb[0].mxu0
    %7793 = vdwg.mxu0
    %7794 = vmatprep.subr.bf16.mxu0 %v6836
    %7795 = vmatpush1.bf16.msra.mxu0 %v6835
    %7796 = vmatprep.subr.bf16.mxu0 %v6838
    %7797 = vmatpush1.bf16.msra.mxu0 %v6837
    %7798 = vmatprep.subr.bf16.mxu0 %v6840
    %7799 = vmatpush1.bf16.msra.mxu0 %v6839
    %7800 = vmatprep.subr.bf16.mxu0 %v6842
    %7801 = vmatpush1.bf16.msra.mxu0 %v6841
    %7802 = vmatprep.subr.bf16.mxu0 %v6844
    %7803 = vmatpush1.bf16.msra.mxu0 %v6843
    %7804 = vmatprep.subr.bf16.mxu0 %v6846
    %7805 = vmatpush1.bf16.msra.mxu0 %v6845
    %7806 = vmatprep.subr.bf16.mxu0 %v6848
    %7807 = vmatpush1.bf16.msra.mxu0 %v6847
    %7808 = vmatprep.subr.bf16.mxu0 %v6850
    %7809 = vmatpush1.bf16.msra.mxu0 %v6849
    %7810 = vmatprep.subr.bf16.mxu0 %v6852
    %7811 = vmatpush1.bf16.msra.mxu0 %v6851
    %7812 = vmatprep.subr.bf16.mxu0 %v6854
    %7813 = vmatpush1.bf16.msra.mxu0 %v6853
    %7814 = vmatprep.subr.bf16.mxu0 %v6856
    %7815 = vmatpush1.bf16.msra.mxu0 %v6855
    %7816 = vmatprep.subr.bf16.mxu0 %v6858
    %7817 = vmatpush1.bf16.msra.mxu0 %v6857
    %7818 = vmatprep.subr.bf16.mxu0 %v6860
    %7819 = vmatpush1.bf16.msra.mxu0 %v6859
    %7820 = vmatprep.subr.bf16.mxu0 %v6862
    %7821 = vmatpush1.bf16.msra.mxu0 %v6861
    %7822 = vmatprep.subr.bf16.mxu0 %v6864
    %7823 = vmatpush1.bf16.msra.mxu0 %v6863
    %7824 = vmatprep.subr.bf16.mxu0 %v6866
    %7825 = vmatpush1.bf16.msra.mxu0 %v6865
    %7826 = vmatprep.mubr.bf16.mxu0 %v4534
    %7827 = vmatmul.mubr.bf16.gmra.mrb[0].mxu0 %v4514
    %v7828 = vpop.f32.mrb[0].mxu0
    %v7829 = vadd.f32 %v7788, %v7828
    %v7830 = vpop.f32.mrb[0].mxu0
    %v7831 = vadd.f32 %v7790, %v7830
    %v7832 = vpop.f32.mrb[0].mxu0
    %v7833 = vpop.f32.mrb[0].mxu0
    %7834 = vdwg.mxu0
    %7835 = vmatprep.subr.bf16.mxu0 %v6868
    %7836 = vmatpush1.bf16.msra.mxu0 %v6867
    %7837 = vmatprep.subr.bf16.mxu0 %v6870
    %7838 = vmatpush1.bf16.msra.mxu0 %v6869
    %7839 = vmatprep.subr.bf16.mxu0 %v6872
    %7840 = vmatpush1.bf16.msra.mxu0 %v6871
    %7841 = vmatprep.subr.bf16.mxu0 %v6874
    %7842 = vmatpush1.bf16.msra.mxu0 %v6873
    %7843 = vmatprep.subr.bf16.mxu0 %v6876
    %7844 = vmatpush1.bf16.msra.mxu0 %v6875
    %7845 = vmatprep.subr.bf16.mxu0 %v6878
    %7846 = vmatpush1.bf16.msra.mxu0 %v6877
    %7847 = vmatprep.subr.bf16.mxu0 %v6880
    %7848 = vmatpush1.bf16.msra.mxu0 %v6879
    %7849 = vmatprep.subr.bf16.mxu0 %v6882
    %7850 = vmatpush1.bf16.msra.mxu0 %v6881
    %7851 = vmatprep.subr.bf16.mxu0 %v6884
    %7852 = vmatpush1.bf16.msra.mxu0 %v6883
    %7853 = vmatprep.subr.bf16.mxu0 %v6886
    %7854 = vmatpush1.bf16.msra.mxu0 %v6885
    %7855 = vmatprep.subr.bf16.mxu0 %v6888
    %7856 = vmatpush1.bf16.msra.mxu0 %v6887
    %7857 = vmatprep.subr.bf16.mxu0 %v6890
    %7858 = vmatpush1.bf16.msra.mxu0 %v6889
    %7859 = vmatprep.subr.bf16.mxu0 %v6892
    %7860 = vmatpush1.bf16.msra.mxu0 %v6891
    %7861 = vmatprep.subr.bf16.mxu0 %v6894
    %7862 = vmatpush1.bf16.msra.mxu0 %v6893
    %7863 = vmatprep.subr.bf16.mxu0 %v6896
    %7864 = vmatpush1.bf16.msra.mxu0 %v6895
    %7865 = vmatprep.subr.bf16.mxu0 %v6898
    %7866 = vmatpush1.bf16.msra.mxu0 %v6897
    %7867 = vmatprep.mubr.bf16.mxu0 %v4588
    %7868 = vmatmul.mubr.bf16.gmra.mrb[0].mxu0 %v4561
    %v7869 = vpop.f32.mrb[0].mxu0
    %v7870 = vadd.f32 %v7829, %v7869
    %v7871 = vpop.f32.mrb[0].mxu0
    %v7872 = vadd.f32 %v7831, %v7871
    %v7873 = vpop.f32.mrb[0].mxu0
    %v7874 = vpop.f32.mrb[0].mxu0
    %7875 = vdwg.mxu0
    %7876 = vmatprep.subr.bf16.mxu0 %v6900
    %7877 = vmatpush1.bf16.msra.mxu0 %v6899
    %7878 = vmatprep.subr.bf16.mxu0 %v6902
    %7879 = vmatpush1.bf16.msra.mxu0 %v6901
    %7880 = vmatprep.subr.bf16.mxu0 %v6904
    %7881 = vmatpush1.bf16.msra.mxu0 %v6903
    %7882 = vmatprep.subr.bf16.mxu0 %v6906
    %7883 = vmatpush1.bf16.msra.mxu0 %v6905
    %7884 = vmatprep.subr.bf16.mxu0 %v6908
    %7885 = vmatpush1.bf16.msra.mxu0 %v6907
    %7886 = vmatprep.subr.bf16.mxu0 %v6910
    %7887 = vmatpush1.bf16.msra.mxu0 %v6909
    %7888 = vmatprep.subr.bf16.mxu0 %v6912
    %7889 = vmatpush1.bf16.msra.mxu0 %v6911
    %7890 = vmatprep.subr.bf16.mxu0 %v6914
    %7891 = vmatpush1.bf16.msra.mxu0 %v6913
    %7892 = vmatprep.subr.bf16.mxu0 %v6916
    %7893 = vmatpush1.bf16.msra.mxu0 %v6915
    %7894 = vmatprep.subr.bf16.mxu0 %v6918
    %7895 = vmatpush1.bf16.msra.mxu0 %v6917
    %7896 = vmatprep.subr.bf16.mxu0 %v6920
    %7897 = vmatpush1.bf16.msra.mxu0 %v6919
    %7898 = vmatprep.subr.bf16.mxu0 %v6922
    %7899 = vmatpush1.bf16.msra.mxu0 %v6921
    %7900 = vmatprep.subr.bf16.mxu0 %v6924
    %7901 = vmatpush1.bf16.msra.mxu0 %v6923
    %7902 = vmatprep.subr.bf16.mxu0 %v6926
    %7903 = vmatpush1.bf16.msra.mxu0 %v6925
    %7904 = vmatprep.subr.bf16.mxu0 %v6928
    %7905 = vmatpush1.bf16.msra.mxu0 %v6927
    %7906 = vmatprep.subr.bf16.mxu0 %v6930
    %7907 = vmatpush1.bf16.msra.mxu0 %v6929
    %7908 = vmatprep.mubr.bf16.mxu0 %v4628
    %7909 = vmatmul.mubr.bf16.gmra.mrb[0].mxu0 %v4608
    %v7910 = vpop.f32.mrb[0].mxu0
    %v7911 = vadd.f32 %v7870, %v7910
    %v7912 = vpop.f32.mrb[0].mxu0
    %v7913 = vadd.f32 %v7872, %v7912
    %v7914 = vpop.f32.mrb[0].mxu0
    %v7915 = vpop.f32.mrb[0].mxu0
    %7916 = vdwg.mxu0
    %7917 = vmatprep.subr.bf16.mxu0 %v6932
    %7918 = vmatpush1.bf16.msra.mxu0 %v6931
    %7919 = vmatprep.subr.bf16.mxu0 %v6934
    %7920 = vmatpush1.bf16.msra.mxu0 %v6933
    %7921 = vmatprep.subr.bf16.mxu0 %v6936
    %7922 = vmatpush1.bf16.msra.mxu0 %v6935
    %7923 = vmatprep.subr.bf16.mxu0 %v6938
    %7924 = vmatpush1.bf16.msra.mxu0 %v6937
    %7925 = vmatprep.subr.bf16.mxu0 %v6940
    %7926 = vmatpush1.bf16.msra.mxu0 %v6939
    %7927 = vmatprep.subr.bf16.mxu0 %v6942
    %7928 = vmatpush1.bf16.msra.mxu0 %v6941
    %7929 = vmatprep.subr.bf16.mxu0 %v6944
    %7930 = vmatpush1.bf16.msra.mxu0 %v6943
    %7931 = vmatprep.subr.bf16.mxu0 %v6946
    %7932 = vmatpush1.bf16.msra.mxu0 %v6945
    %7933 = vmatprep.subr.bf16.mxu0 %v6948
    %7934 = vmatpush1.bf16.msra.mxu0 %v6947
    %7935 = vmatprep.subr.bf16.mxu0 %v6950
    %7936 = vmatpush1.bf16.msra.mxu0 %v6949
    %7937 = vmatprep.subr.bf16.mxu0 %v6952
    %7938 = vmatpush1.bf16.msra.mxu0 %v6951
    %7939 = vmatprep.subr.bf16.mxu0 %v6954
    %7940 = vmatpush1.bf16.msra.mxu0 %v6953
    %7941 = vmatprep.subr.bf16.mxu0 %v6956
    %7942 = vmatpush1.bf16.msra.mxu0 %v6955
    %7943 = vmatprep.subr.bf16.mxu0 %v6958
    %7944 = vmatpush1.bf16.msra.mxu0 %v6957
    %7945 = vmatprep.subr.bf16.mxu0 %v6960
    %7946 = vmatpush1.bf16.msra.mxu0 %v6959
    %7947 = vmatprep.subr.bf16.mxu0 %v6962
    %7948 = vmatpush1.bf16.msra.mxu0 %v6961
    %7949 = vmatprep.mubr.bf16.mxu0 %v4684
    %7950 = vmatmul.mubr.bf16.gmra.mrb[0].mxu0 %v4656
    %v7951 = vpop.f32.mrb[0].mxu0
    %v7952 = vadd.f32 %v7911, %v7951
    %v7953 = vpop.f32.mrb[0].mxu0
    %v7954 = vadd.f32 %v7913, %v7953
    %v7955 = vpop.f32.mrb[0].mxu0
    %v7956 = vpop.f32.mrb[0].mxu0
    %7957 = vdwg.mxu0
    %7958 = vmatprep.subr.bf16.mxu0 %v6964
    %7959 = vmatpush1.bf16.msra.mxu0 %v6963
    %7960 = vmatprep.subr.bf16.mxu0 %v6966
    %7961 = vmatpush1.bf16.msra.mxu0 %v6965
    %7962 = vmatprep.subr.bf16.mxu0 %v6968
    %7963 = vmatpush1.bf16.msra.mxu0 %v6967
    %7964 = vmatprep.subr.bf16.mxu0 %v6970
    %7965 = vmatpush1.bf16.msra.mxu0 %v6969
    %7966 = vmatprep.subr.bf16.mxu0 %v6972
    %7967 = vmatpush1.bf16.msra.mxu0 %v6971
    %7968 = vmatprep.subr.bf16.mxu0 %v6974
    %7969 = vmatpush1.bf16.msra.mxu0 %v6973
    %7970 = vmatprep.subr.bf16.mxu0 %v6976
    %7971 = vmatpush1.bf16.msra.mxu0 %v6975
    %7972 = vmatprep.subr.bf16.mxu0 %v6978
    %7973 = vmatpush1.bf16.msra.mxu0 %v6977
    %7974 = vmatprep.subr.bf16.mxu0 %v6980
    %7975 = vmatpush1.bf16.msra.mxu0 %v6979
    %7976 = vmatprep.subr.bf16.mxu0 %v6982
    %7977 = vmatpush1.bf16.msra.mxu0 %v6981
    %7978 = vmatprep.subr.bf16.mxu0 %v6984
    %7979 = vmatpush1.bf16.msra.mxu0 %v6983
    %7980 = vmatprep.subr.bf16.mxu0 %v6986
    %7981 = vmatpush1.bf16.msra.mxu0 %v6985
    %7982 = vmatprep.subr.bf16.mxu0 %v6988
    %7983 = vmatpush1.bf16.msra.mxu0 %v6987
    %7984 = vmatprep.subr.bf16.mxu0 %v6990
    %7985 = vmatpush1.bf16.msra.mxu0 %v6989
    %7986 = vmatprep.subr.bf16.mxu0 %v6992
    %7987 = vmatpush1.bf16.msra.mxu0 %v6991
    %7988 = vmatprep.subr.bf16.mxu0 %v6994
    %7989 = vmatpush1.bf16.msra.mxu0 %v6993
    %7990 = vmatprep.mubr.bf16.mxu0 %v4724
    %7991 = vmatmul.mubr.bf16.gmra.mrb[0].mxu0 %v4704
    %v7992 = vpop.f32.mrb[0].mxu0
    %v7993 = vadd.f32 %v7952, %v7992
    %v7994 = vpop.f32.mrb[0].mxu0
    %v7995 = vadd.f32 %v7954, %v7994
    %v7996 = vpop.f32.mrb[0].mxu0
    %v7997 = vpop.f32.mrb[0].mxu0
    %7998 = vdwg.mxu0
    %7999 = vmatprep.subr.bf16.mxu0 %v6996
    %8000 = vmatpush1.bf16.msra.mxu0 %v6995
    %8001 = vmatprep.subr.bf16.mxu0 %v6998
    %8002 = vmatpush1.bf16.msra.mxu0 %v6997
    %8003 = vmatprep.subr.bf16.mxu0 %v7000
    %8004 = vmatpush1.bf16.msra.mxu0 %v6999
    %8005 = vmatprep.subr.bf16.mxu0 %v7002
    %8006 = vmatpush1.bf16.msra.mxu0 %v7001
    %8007 = vmatprep.subr.bf16.mxu0 %v7004
    %8008 = vmatpush1.bf16.msra.mxu0 %v7003
    %8009 = vmatprep.subr.bf16.mxu0 %v7006
    %8010 = vmatpush1.bf16.msra.mxu0 %v7005
    %8011 = vmatprep.subr.bf16.mxu0 %v7008
    %8012 = vmatpush1.bf16.msra.mxu0 %v7007
    %8013 = vmatprep.subr.bf16.mxu0 %v7010
    %8014 = vmatpush1.bf16.msra.mxu0 %v7009
    %8015 = vmatprep.subr.bf16.mxu0 %v7012
    %8016 = vmatpush1.bf16.msra.mxu0 %v7011
    %8017 = vmatprep.subr.bf16.mxu0 %v7014
    %8018 = vmatpush1.bf16.msra.mxu0 %v7013
    %8019 = vmatprep.subr.bf16.mxu0 %v7016
    %8020 = vmatpush1.bf16.msra.mxu0 %v7015
    %8021 = vmatprep.subr.bf16.mxu0 %v7018
    %8022 = vmatpush1.bf16.msra.mxu0 %v7017
    %8023 = vmatprep.subr.bf16.mxu0 %v7020
    %8024 = vmatpush1.bf16.msra.mxu0 %v7019
    %8025 = vmatprep.subr.bf16.mxu0 %v7022
    %8026 = vmatpush1.bf16.msra.mxu0 %v7021
    %8027 = vmatprep.subr.bf16.mxu0 %v7024
    %8028 = vmatpush1.bf16.msra.mxu0 %v7023
    %8029 = vmatprep.subr.bf16.mxu0 %v7026
    %8030 = vmatpush1.bf16.msra.mxu0 %v7025
    %8031 = vmatprep.mubr.bf16.mxu0 %v4766
    %8032 = vmatmul.mubr.bf16.gmra.mrb[0].mxu0 %v4745
    %v8033 = vpop.f32.mrb[0].mxu0
    %v8034 = vadd.f32 %v7993, %v8033
    %v8035 = vpop.f32.mrb[0].mxu0
    %v8036 = vadd.f32 %v7995, %v8035
    %v8037 = vpop.f32.mrb[0].mxu0
    %v8038 = vpop.f32.mrb[0].mxu0
    %8039 = vdwg.mxu0
    %8040 = vmatprep.subr.bf16.mxu0 %v7028
    %8041 = vmatpush1.bf16.msra.mxu0 %v7027
    %8042 = vmatprep.subr.bf16.mxu0 %v7030
    %8043 = vmatpush1.bf16.msra.mxu0 %v7029
    %8044 = vmatprep.subr.bf16.mxu0 %v7032
    %8045 = vmatpush1.bf16.msra.mxu0 %v7031
    %8046 = vmatprep.subr.bf16.mxu0 %v7034
    %8047 = vmatpush1.bf16.msra.mxu0 %v7033
    %8048 = vmatprep.subr.bf16.mxu0 %v7036
    %8049 = vmatpush1.bf16.msra.mxu0 %v7035
    %8050 = vmatprep.subr.bf16.mxu0 %v7038
    %8051 = vmatpush1.bf16.msra.mxu0 %v7037
    %8052 = vmatprep.subr.bf16.mxu0 %v7040
    %8053 = vmatpush1.bf16.msra.mxu0 %v7039
    %8054 = vmatprep.subr.bf16.mxu0 %v7042
    %8055 = vmatpush1.bf16.msra.mxu0 %v7041
    %8056 = vmatprep.subr.bf16.mxu0 %v7044
    %8057 = vmatpush1.bf16.msra.mxu0 %v7043
    %8058 = vmatprep.subr.bf16.mxu0 %v7046
    %8059 = vmatpush1.bf16.msra.mxu0 %v7045
    %8060 = vmatprep.subr.bf16.mxu0 %v7048
    %8061 = vmatpush1.bf16.msra.mxu0 %v7047
    %8062 = vmatprep.subr.bf16.mxu0 %v7050
    %8063 = vmatpush1.bf16.msra.mxu0 %v7049
    %8064 = vmatprep.subr.bf16.mxu0 %v7052
    %8065 = vmatpush1.bf16.msra.mxu0 %v7051
    %8066 = vmatprep.subr.bf16.mxu0 %v7054
    %8067 = vmatpush1.bf16.msra.mxu0 %v7053
    %8068 = vmatprep.subr.bf16.mxu0 %v7056
    %8069 = vmatpush1.bf16.msra.mxu0 %v7055
    %8070 = vmatprep.subr.bf16.mxu0 %v7058
    %8071 = vmatpush1.bf16.msra.mxu0 %v7057
    %8072 = vmatprep.mubr.bf16.mxu0 %v4806
    %8073 = vmatmul.mubr.bf16.gmra.mrb[0].mxu0 %v4786
    %v8074 = vpop.f32.mrb[0].mxu0
    %v8075 = vadd.f32 %v8034, %v8074
    %v8076 = vpop.f32.mrb[0].mxu0
    %v8077 = vadd.f32 %v8036, %v8076
    %v8078 = vpop.f32.mrb[0].mxu0
    %v8079 = vpop.f32.mrb[0].mxu0
    %8080 = vdwg.mxu0
    %v8081 = vmax.f32 %v8075, 0.0
    %v8082 = vmax.f32 %v8077, 0.0
    %v8083 = vpack.c.bf16 %v8081, %v8081
    %v8084 = vpack.c.bf16 %v8082, %v8082
    %v8085 = vld [vmem:[#allocation10] sm:$0xff]
    %v8086 = vld [vmem:[#allocation10 + $0x8] sm:$0xff]
    %v8087 = vld [vmem:[#allocation10 + $0x10] sm:$0xff]
    %v8088 = vld [vmem:[#allocation10 + $0x18] sm:$0xff]
    %v8089 = vld [vmem:[#allocation10 + $0x20] sm:$0xff]
    %v8090 = vld [vmem:[#allocation10 + $0x28] sm:$0xff]
    %v8091 = vld [vmem:[#allocation10 + $0x30] sm:$0xff]
    %v8092 = vld [vmem:[#allocation10 + $0x38] sm:$0xff]
    %v8093 = vld [vmem:[#allocation10 + $0x40] sm:$0xff]
    %v8094 = vld [vmem:[#allocation10 + $0x48] sm:$0xff]
    %v8095 = vld [vmem:[#allocation10 + $0x50] sm:$0xff]
    %v8096 = vld [vmem:[#allocation10 + $0x58] sm:$0xff]
    %v8097 = vld [vmem:[#allocation10 + $0x60] sm:$0xff]
    %v8098 = vld [vmem:[#allocation10 + $0x68] sm:$0xff]
    %v8099 = vld [vmem:[#allocation10 + $0x70] sm:$0xff]
    %v8100 = vld [vmem:[#allocation10 + $0x78] sm:$0xff]
    %v8101 = vld [vmem:[#allocation10 + $0x80] sm:$0xff]
    %v8102 = vld [vmem:[#allocation10 + $0x88] sm:$0xff]
    %v8103 = vld [vmem:[#allocation10 + $0x90] sm:$0xff]
    %v8104 = vld [vmem:[#allocation10 + $0x98] sm:$0xff]
    %v8105 = vld [vmem:[#allocation10 + $0xa0] sm:$0xff]
    %v8106 = vld [vmem:[#allocation10 + $0xa8] sm:$0xff]
    %v8107 = vld [vmem:[#allocation10 + $0xb0] sm:$0xff]
    %v8108 = vld [vmem:[#allocation10 + $0xb8] sm:$0xff]
    %v8109 = vld [vmem:[#allocation10 + $0xc0] sm:$0xff]
    %v8110 = vld [vmem:[#allocation10 + $0xc8] sm:$0xff]
    %v8111 = vld [vmem:[#allocation10 + $0xd0] sm:$0xff]
    %v8112 = vld [vmem:[#allocation10 + $0xd8] sm:$0xff]
    %v8113 = vld [vmem:[#allocation10 + $0xe0] sm:$0xff]
    %v8114 = vld [vmem:[#allocation10 + $0xe8] sm:$0xff]
    %v8115 = vld [vmem:[#allocation10 + $0xf0] sm:$0xff]
    %v8116 = vld [vmem:[#allocation10 + $0xf8] sm:$0xff]
    %v8117 = vld [vmem:[#allocation11] sm:$0x3]
    %v8119 = vlaneseq
    %v8120 = vshrl.u32 %v8119, 7
    %v8121 = vsub.s32 0, %v8120
    %v8122 = vrot.slane %v8117, %v8121
    %v8123 = vlaneseq
    %v8124 = vshrl.u32 %v8123, 7
    %v8125 = vsub.s32 1, %v8124
    %v8126 = vrot.slane %v8117, %v8125
    %v8161 = vunpack.c.l.b16 %v8085
    %v8162 = vunpack.c.h.b16 %v8085
    %v8163 = vunpack.c.l.b16 %v8086
    %v8164 = vunpack.c.h.b16 %v8086
    %v8165 = vunpack.c.l.b16 %v8087
    %v8166 = vunpack.c.h.b16 %v8087
    %v8167 = vunpack.c.l.b16 %v8088
    %v8168 = vunpack.c.h.b16 %v8088
    %v8169 = vunpack.c.l.b16 %v8089
    %v8170 = vunpack.c.h.b16 %v8089
    %v8171 = vunpack.c.l.b16 %v8090
    %v8172 = vunpack.c.h.b16 %v8090
    %v8173 = vunpack.c.l.b16 %v8091
    %v8174 = vunpack.c.h.b16 %v8091
    %v8175 = vunpack.c.l.b16 %v8092
    %v8176 = vunpack.c.h.b16 %v8092
    %v8177 = vunpack.c.l.b16 %v8093
    %v8178 = vunpack.c.h.b16 %v8093
    %v8179 = vunpack.c.l.b16 %v8094
    %v8180 = vunpack.c.h.b16 %v8094
    %v8181 = vunpack.c.l.b16 %v8095
    %v8182 = vunpack.c.h.b16 %v8095
    %v8183 = vunpack.c.l.b16 %v8096
    %v8184 = vunpack.c.h.b16 %v8096
    %v8185 = vunpack.c.l.b16 %v8097
    %v8186 = vunpack.c.h.b16 %v8097
    %v8187 = vunpack.c.l.b16 %v8098
    %v8188 = vunpack.c.h.b16 %v8098
    %v8189 = vunpack.c.l.b16 %v8099
    %v8190 = vunpack.c.h.b16 %v8099
    %v8191 = vunpack.c.l.b16 %v8100
    %v8192 = vunpack.c.h.b16 %v8100
    %v8193 = vunpack.c.l.b16 %v8101
    %v8194 = vunpack.c.h.b16 %v8101
    %v8195 = vunpack.c.l.b16 %v8102
    %v8196 = vunpack.c.h.b16 %v8102
    %v8197 = vunpack.c.l.b16 %v8103
    %v8198 = vunpack.c.h.b16 %v8103
    %v8199 = vunpack.c.l.b16 %v8104
    %v8200 = vunpack.c.h.b16 %v8104
    %v8201 = vunpack.c.l.b16 %v8105
    %v8202 = vunpack.c.h.b16 %v8105
    %v8203 = vunpack.c.l.b16 %v8106
    %v8204 = vunpack.c.h.b16 %v8106
    %v8205 = vunpack.c.l.b16 %v8107
    %v8206 = vunpack.c.h.b16 %v8107
    %v8207 = vunpack.c.l.b16 %v8108
    %v8208 = vunpack.c.h.b16 %v8108
    %v8209 = vunpack.c.l.b16 %v8109
    %v8210 = vunpack.c.h.b16 %v8109
    %v8211 = vunpack.c.l.b16 %v8110
    %v8212 = vunpack.c.h.b16 %v8110
    %v8213 = vunpack.c.l.b16 %v8111
    %v8214 = vunpack.c.h.b16 %v8111
    %v8215 = vunpack.c.l.b16 %v8112
    %v8216 = vunpack.c.h.b16 %v8112
    %v8217 = vunpack.c.l.b16 %v8113
    %v8218 = vunpack.c.h.b16 %v8113
    %v8219 = vunpack.c.l.b16 %v8114
    %v8220 = vunpack.c.h.b16 %v8114
    %v8221 = vunpack.c.l.b16 %v8115
    %v8222 = vunpack.c.h.b16 %v8115
    %v8223 = vunpack.c.l.b16 %v8116
    %v8224 = vunpack.c.h.b16 %v8116
    %v8225 = vpack.c.b16 %v8163, %v8161
    %v8226 = vpack.c.b16 %v8164, %v8162
    %v8227 = vpack.c.b16 %v8167, %v8165
    %v8228 = vpack.c.b16 %v8168, %v8166
    %v8229 = vpack.c.b16 %v8171, %v8169
    %v8230 = vpack.c.b16 %v8172, %v8170
    %v8231 = vpack.c.b16 %v8175, %v8173
    %v8232 = vpack.c.b16 %v8176, %v8174
    %v8233 = vpack.c.b16 %v8179, %v8177
    %v8234 = vpack.c.b16 %v8180, %v8178
    %v8235 = vpack.c.b16 %v8183, %v8181
    %v8236 = vpack.c.b16 %v8184, %v8182
    %v8237 = vpack.c.b16 %v8187, %v8185
    %v8238 = vpack.c.b16 %v8188, %v8186
    %v8239 = vpack.c.b16 %v8191, %v8189
    %v8240 = vpack.c.b16 %v8192, %v8190
    %v8241 = vpack.c.b16 %v8195, %v8193
    %v8242 = vpack.c.b16 %v8196, %v8194
    %v8243 = vpack.c.b16 %v8199, %v8197
    %v8244 = vpack.c.b16 %v8200, %v8198
    %v8245 = vpack.c.b16 %v8203, %v8201
    %v8246 = vpack.c.b16 %v8204, %v8202
    %v8247 = vpack.c.b16 %v8207, %v8205
    %v8248 = vpack.c.b16 %v8208, %v8206
    %v8249 = vpack.c.b16 %v8211, %v8209
    %v8250 = vpack.c.b16 %v8212, %v8210
    %v8251 = vpack.c.b16 %v8215, %v8213
    %v8252 = vpack.c.b16 %v8216, %v8214
    %v8253 = vpack.c.b16 %v8219, %v8217
    %v8254 = vpack.c.b16 %v8220, %v8218
    %v8255 = vpack.c.b16 %v8223, %v8221
    %v8256 = vpack.c.b16 %v8224, %v8222
    %8289 = vmatprep.subr.bf16.mxu0 %v8226
    %8290 = vmatpush1.bf16.msra.mxu0 %v8225
    %8291 = vmatprep.subr.bf16.mxu0 %v8228
    %8292 = vmatpush1.bf16.msra.mxu0 %v8227
    %8293 = vmatprep.subr.bf16.mxu0 %v8230
    %8294 = vmatpush1.bf16.msra.mxu0 %v8229
    %8295 = vmatprep.subr.bf16.mxu0 %v8232
    %8296 = vmatpush1.bf16.msra.mxu0 %v8231
    %8297 = vmatprep.subr.bf16.mxu0 %v8234
    %8298 = vmatpush1.bf16.msra.mxu0 %v8233
    %8299 = vmatprep.subr.bf16.mxu0 %v8236
    %8300 = vmatpush1.bf16.msra.mxu0 %v8235
    %8301 = vmatprep.subr.bf16.mxu0 %v8238
    %8302 = vmatpush1.bf16.msra.mxu0 %v8237
    %8303 = vmatprep.subr.bf16.mxu0 %v8240
    %8304 = vmatpush1.bf16.msra.mxu0 %v8239
    %8305 = vmatprep.subr.bf16.mxu0 %v8242
    %8306 = vmatpush1.bf16.msra.mxu0 %v8241
    %8307 = vmatprep.subr.bf16.mxu0 %v8244
    %8308 = vmatpush1.bf16.msra.mxu0 %v8243
    %8309 = vmatprep.subr.bf16.mxu0 %v8246
    %8310 = vmatpush1.bf16.msra.mxu0 %v8245
    %8311 = vmatprep.subr.bf16.mxu0 %v8248
    %8312 = vmatpush1.bf16.msra.mxu0 %v8247
    %8313 = vmatprep.subr.bf16.mxu0 %v8250
    %8314 = vmatpush1.bf16.msra.mxu0 %v8249
    %8315 = vmatprep.subr.bf16.mxu0 %v8252
    %8316 = vmatpush1.bf16.msra.mxu0 %v8251
    %8317 = vmatprep.subr.bf16.mxu0 %v8254
    %8318 = vmatpush1.bf16.msra.mxu0 %v8253
    %8319 = vmatprep.subr.bf16.mxu0 %v8256
    %8320 = vmatpush1.bf16.msra.mxu0 %v8255
    %8321 = vmatprep.mubr.bf16.mxu0 %v8084
    %8322 = vmatmul.mubr.bf16.gmra.mrb[0].mxu0 %v8083
    %v8323 = vpop.f32.mrb[0].mxu0
    %v8324 = vadd.f32 %v8122, %v8323
    %v8325 = vpop.f32.mrb[0].mxu0
    %v8326 = vadd.f32 %v8126, %v8325
    %v8327 = vpop.f32.mrb[0].mxu0
    %v8328 = vpop.f32.mrb[0].mxu0
    %8329 = vdwg.mxu0
    %v8330 = vmax.f32 %v8324, 0.0
    %v8331 = vmax.f32 %v8326, 0.0
    %v8332 = vld [vmem:[#allocation13] sm:$0x3]
    %v8334 = vlaneseq
    %v8335 = vshrl.u32 %v8334, 7
    %v8336 = vsub.s32 0, %v8335
    %v8337 = vrot.slane %v8332, %v8336
    %v8338 = vlaneseq
    %v8339 = vshrl.u32 %v8338, 7
    %v8340 = vsub.s32 1, %v8339
    %v8341 = vrot.slane %v8332, %v8340
    %v8344 = vmul.f32 %v8330, %v8337
    %v8345 = vmul.f32 %v8331, %v8341
    %v8346 = vadd.f32 %v8344, %v8345
    %8347 = vadd.xlane.f32.xlu0 %v8346
    %v8348 = vpop.xlane.xlu0 %8347
    %v8349 = vld [vmem:[#allocation2] sm:$0x1]
    %v8351 = vlaneseq
    %v8352 = vshrl.u32 %v8351, 7
    %v8353 = vsub.s32 0, %v8352
    %v8354 = vrot.slane %v8349, %v8353
    %v8356 = vadd.f32 %v8348, %v8354
    %8358 = vset.pattern.permute.xlu0 0
    %8359 = vperm.xlu0 %8358, %v8356
    %v8360 = vpop.permute.xlu0 %8359
    %v8361 = vlaneseq
    %v8362 = vand.u32 %v8361, 127
    %v8363 = vlaneseq
    %v8364 = vshrl.u32 %v8363, 7
    %v8365 = vsub.s32 %v8362, %v8364
    %v8366 = vrot.slane %v8360, %v8365
    %vm8368 = vcmask 57344
    %8369 = vst.msk [vmem:[%s9] sm:$0x1] %vm8368, %v8366
    // Predicated region
    $region66: #{value_net_forward.1} parent=1 // pred_check
      _
    $region67: #{value_net_forward.1} parent=1 // pred_check_branch
      %8371 = sbr.rel (0) target = $region69
    $region68: #{value_net_forward.1} parent=1 // pred_region
      _
    $region69: #{value_net_forward.1} parent=1 // pred_fallthru
      _
    // Predicated region
    $region70: #{value_net_forward.1} parent=1 // pred_check
      _
    $region71: #{value_net_forward.1} parent=1 // pred_check_branch
      %8373 = sbr.rel (0) target = $region73
    $region72: #{value_net_forward.1} parent=1 // pred_region
      _
    $region73: #{value_net_forward.1} parent=1 // pred_fallthru
      _
    %8374 = vsyncpa [#allocation4], 1
    %8375 = vsyncpa [#allocation6], 1
    %8376 = vsyncpa [#allocation9], 1
    %8377 = vsyncpa [#allocation12], 1

</llo_original>
